<compile_context>
chip_gen: v6e
topology: v6e:2x2x1
jax: 0.10.0
libtpu: 0.0.40
codegen_flags: <defaults>
</compile_context>

<pallas_src>
import jax
import jax.numpy as jnp
from jax import lax
from jax.experimental import pallas as pl
from jax.experimental.pallas import tpu as pltpu


def _round_up(x, m):
    return (x + m - 1) // m * m


def _make_kernel(bt, H, W, Ch, KH, KW, Cpad, woff):
    ph, pw = KH // 2, KW // 2
    R = bt * H * W
    KCOL = KH * KW * Cpad
    C_OFF, M_OFF = 0, Ch          # c / M lane slots inside the packed slab

    def sig(z):                   # tanh-form sigmoid -> EUP, no VPU divide
        return 0.5 * jnp.tanh(0.5 * z) + 0.5

    def kernel(packed_ref, w1_ref, b1_ref, w23_ref, b23_ref, w45_ref, b45_ref,
               out_ref, col_ref):

        def build_col():
            # im2col: KH*KW shifted interior views of the padded slab, each
            # written as a full-128-lane aligned store into the col scratch.
            # (The kw != pw taps are statically misaligned sublane *loads*;
            #  the stores into col_ref are fully aligned.)
            for kh in range(KH):
                for kw in range(KW):
                    tap = kh * KW + kw
                    cs = woff - pw + kw
                    col_ref[:, :, :, tap * Cpad:(tap + 1) * Cpad] = (
                        packed_ref[:, kh:kh + H, cs:cs + W, :])

        def conv_pass(w_ref, b_ref):
            # One deep-K MXU matmul per pass (K = KH*KW*Cpad).
            build_col()
            col2d = col_ref[...].reshape(R, KCOL)   # view-like: W % 8 == 0
            return (jnp.dot(col2d, w_ref[...],
                            preferred_element_type=jnp.float32)
                    + b_ref[...])                   # bias once per pass (f32)

        # old c, read from its lane slot BEFORE it is overwritten below
        c0 = (packed_ref[:, ph:ph + H, woff:woff + W, C_OFF:C_OFF + Ch]
              .reshape(R, Ch).astype(jnp.float32))

        # ---- pass 1: conv1([x, h, c]) -> i, f, g -> c_next ----
        cc1 = conv_pass(w1_ref, b1_ref)                     # (R, 3*Ch)
        i = sig(cc1[:, 0:Ch])
        f = sig(cc1[:, Ch:2 * Ch])
        g = jnp.tanh(cc1[:, 2 * Ch:3 * Ch])
        c1 = f * c0 + i * g

        # In-place update of the input block: safe because each grid step maps
        # a distinct batch block visited exactly once (no revisits).
        packed_ref[:, ph:ph + H, woff:woff + W, C_OFF:C_OFF + Ch] = (
            c1.reshape(bt, H, W, Ch).astype(packed_ref.dtype))

        # ---- pass 2: conv2([x, c', M]) fused with conv3([M]) ----
        cc23 = conv_pass(w23_ref, b23_ref)                  # (R, 4*Ch)
        i_ = sig(cc23[:, 0:Ch])
        f_ = sig(cc23[:, Ch:2 * Ch])
        g_ = jnp.tanh(cc23[:, 2 * Ch:3 * Ch])
        m_t = jnp.tanh(cc23[:, 3 * Ch:4 * Ch])              # tanh(conv3(M))
        m1 = f_ * m_t + i_ * g_

        packed_ref[:, ph:ph + H, woff:woff + W, M_OFF:M_OFF + Ch] = (
            m1.reshape(bt, H, W, Ch).astype(packed_ref.dtype))

        # ---- pass 3: conv4([x, c', M']) fused with conv5([c', M']) ----
        cc45 = conv_pass(w45_ref, b45_ref)                  # (R, 2*Ch)
        o = jnp.tanh(cc45[:, 0:Ch])
        h1 = o * jnp.tanh(cc45[:, Ch:2 * Ch])

        # fused lane-dense output slab [h | c | M]: one DMA stream
        out_ref[...] = (jnp.concatenate([h1, c1, m1], axis=-1)
                        .reshape(bt, H * W, 3 * Ch).astype(out_ref.dtype))

    return kernel


def ca_lstm_pallas(x, h, c, M, params, *, batch_tile=1, mm_dtype=jnp.float32):
    """x: (B,H,W,Cin); h,c,M: (B,H,W,Ch); params: HWIO weights + biases.

    mm_dtype: dtype of the MXU operands (packed activations + weights).
    jnp.bfloat16 exploits the bf16-native MXU on v6e/v7x at reduced accuracy
    (re-validate against the tolerance check before enabling).
    """
    B, H, W, Cin = x.shape
    Ch = h.shape[-1]
    KH, KW, _, _ = params["w1"].shape
    ph, pw = KH // 2, KW // 2
    assert B % batch_tile == 0
    bt = batch_tile

    Hp = H + KH - 1
    woff = 8                                   # sublane-aligned interior start
    Wpad = _round_up(woff + W + pw, 8)         # zero halo adjacent to interior

    # channel slots inside the packed slab: [c | M | h | x | zero-pad]
    C_OFF, M_OFF, H_OFF, X_OFF = 0, Ch, 2 * Ch, 3 * Ch
    Cpad = _round_up(3 * Ch + Cin, 128)
    KCOL = KH * KW * Cpad

    # ---- pack inputs into one lane-dense, spatially pre-padded slab ----
    packed = jnp.zeros((B, Hp, Wpad, Cpad), mm_dtype)
    interior = (slice(None), slice(ph, ph + H), slice(woff, woff + W))
    packed = packed.at[interior + (slice(C_OFF, C_OFF + Ch),)].set(c.astype(mm_dtype))
    packed = packed.at[interior + (slice(M_OFF, M_OFF + Ch),)].set(M.astype(mm_dtype))
    packed = packed.at[interior + (slice(H_OFF, H_OFF + Ch),)].set(h.astype(mm_dtype))
    packed = packed.at[interior + (slice(X_OFF, X_OFF + Cin),)].set(x.astype(mm_dtype))

    # ---- fold the 5 convs into 3 im2col weight slabs (K = KH*KW*Cpad) ----
    w1, w2, w3, w4, w5 = (params[f"w{k}"] for k in range(1, 6))
    b1, b2, b3, b4, b5 = (params[f"b{k}"] for k in range(1, 6))

    def place(dst, src, row_off, col_off):
        return dst.at[:, :, row_off:row_off + src.shape[2],
                      col_off:col_off + src.shape[3]].set(src)

    # pass 1: conv1(cat[x, h, c]) -> 3*Ch
    W1 = jnp.zeros((KH, KW, Cpad, 3 * Ch), jnp.float32)
    W1 = place(W1, w1[:, :, 0:Cin, :], X_OFF, 0)
    W1 = place(W1, w1[:, :, Cin:Cin + Ch, :], H_OFF, 0)
    W1 = place(W1, w1[:, :, Cin + Ch:Cin + 2 * Ch, :], C_OFF, 0)
    B1 = b1.reshape(1, -1)

    # pass 2: conv2(cat[x, c', M]) -> 3*Ch  fused with  conv3(M) -> Ch
    W23 = jnp.zeros((KH, KW, Cpad, 4 * Ch), jnp.float32)
    W23 = place(W23, w2[:, :, 0:Cin, :], X_OFF, 0)
    W23 = place(W23, w2[:, :, Cin:Cin + Ch, :], C_OFF, 0)
    W23 = place(W23, w2[:, :, Cin + Ch:Cin + 2 * Ch, :], M_OFF, 0)
    W23 = place(W23, w3, M_OFF, 3 * Ch)
    B23 = jnp.concatenate([b2, b3]).reshape(1, -1)

    # pass 3: conv4(cat[x, c', M']) -> Ch  fused with  conv5(cat[c', M']) -> Ch
    W45 = jnp.zeros((KH, KW, Cpad, 2 * Ch), jnp.float32)
    W45 = place(W45, w4[:, :, 0:Cin, :], X_OFF, 0)
    W45 = place(W45, w4[:, :, Cin:Cin + Ch, :], C_OFF, 0)
    W45 = place(W45, w4[:, :, Cin + Ch:Cin + 2 * Ch, :], M_OFF, 0)
    W45 = place(W45, w5[:, :, 0:Ch, :], C_OFF, Ch)
    W45 = place(W45, w5[:, :, Ch:2 * Ch, :], M_OFF, Ch)
    B45 = jnp.concatenate([b4, b5]).reshape(1, -1)

    # flatten to im2col form: row index = tap*Cpad + channel_slot
    W1c = W1.reshape(KCOL, 3 * Ch).astype(mm_dtype)
    W23c = W23.reshape(KCOL, 4 * Ch).astype(mm_dtype)
    W45c = W45.reshape(KCOL, 2 * Ch).astype(mm_dtype)

    kernel = _make_kernel(bt, H, W, Ch, KH, KW, Cpad, woff)

    fn = pl.pallas_call(
        kernel,
        out_shape=jax.ShapeDtypeStruct((B, H * W, 3 * Ch), jnp.float32),
        grid_spec=pltpu.PrefetchScalarGridSpec(
            num_scalar_prefetch=0,
            grid=(B // bt,),
            in_specs=[
                pl.BlockSpec((bt, Hp, Wpad, Cpad), lambda b: (b, 0, 0, 0)),
                pl.BlockSpec(W1c.shape, lambda b: (0, 0)),
                pl.BlockSpec(B1.shape, lambda b: (0, 0)),
                pl.BlockSpec(W23c.shape, lambda b: (0, 0)),
                pl.BlockSpec(B23.shape, lambda b: (0, 0)),
                pl.BlockSpec(W45c.shape, lambda b: (0, 0)),
                pl.BlockSpec(B45.shape, lambda b: (0, 0)),
            ],
            out_specs=pl.BlockSpec((bt, H * W, 3 * Ch), lambda b: (b, 0, 0)),
            # only scratch: the im2col buffer (rebuilt per pass)
            scratch_shapes=[pltpu.VMEM((bt, H, W, KCOL), mm_dtype)],
        ),
        compiler_params=pltpu.CompilerParams(
            dimension_semantics=("parallel",)),  # >=2 steps keeps both v7x TCs busy
    )
    out = fn(packed, W1c, B1, W23c, B23, W45c, B45)
    out = out.reshape(B, H, W, 3 * Ch)
    return out[..., 0:Ch], out[..., Ch:2 * Ch], out[..., 2 * Ch:3 * Ch]


# ----------------------------- pure-JAX reference -----------------------------
def _conv_ref(inp, w, b):
    y = lax.conv_general_dilated(
        inp, w, window_strides=(1, 1), padding="SAME",
        dimension_numbers=("NHWC", "HWIO", "NHWC"),
        precision=lax.Precision.HIGHEST)
    return y + b.reshape(1, 1, 1, -1)


def ca_lstm_ref(x, h, c, M, params, Ch):
    sig = jax.nn.sigmoid
    cc1 = _conv_ref(jnp.concatenate([x, h, c], -1), params["w1"], params["b1"])
    i, f, g = (sig(cc1[..., :Ch]), sig(cc1[..., Ch:2 * Ch]),
               jnp.tanh(cc1[..., 2 * Ch:]))
    c1 = f * c + i * g
    cc2 = _conv_ref(jnp.concatenate([x, c1, M], -1), params["w2"], params["b2"])
    i_, f_, g_ = (sig(cc2[..., :Ch]), sig(cc2[..., Ch:2 * Ch]),
                  jnp.tanh(cc2[..., 2 * Ch:]))
    Mt = jnp.tanh(_conv_ref(M, params["w3"], params["b3"]))
    M1 = f_ * Mt + i_ * g_
    o = jnp.tanh(_conv_ref(jnp.concatenate([x, c1, M1], -1),
                           params["w4"], params["b4"]))
    h1 = o * jnp.tanh(_conv_ref(jnp.concatenate([c1, M1], -1),
                                params["w5"], params["b5"]))
    return h1, c1, M1


# ------------------------------------ main ------------------------------------
if __name__ == "__main__":
    B, H, W = 2, 16, 16
    Cin, Ch = 4, 32
    KH, KW = 3, 3

    key = jax.random.PRNGKey(0)
    keys = jax.random.split(key, 16)

    def wshape(cin, cout):
        return (KH, KW, cin, cout)

    scale = 0.1
    params = {
        "w1": scale * jax.random.normal(keys[0], wshape(Cin + 2 * Ch, 3 * Ch), jnp.float32),
        "b1": scale * jax.random.normal(keys[1], (3 * Ch,), jnp.float32),
        "w2": scale * jax.random.normal(keys[2], wshape(Cin + 2 * Ch, 3 * Ch), jnp.float32),
        "b2": scale * jax.random.normal(keys[3], (3 * Ch,), jnp.float32),
        "w3": scale * jax.random.normal(keys[4], wshape(Ch, Ch), jnp.float32),
        "b3": scale * jax.random.normal(keys[5], (Ch,), jnp.float32),
        "w4": scale * jax.random.normal(keys[6], wshape(Cin + 2 * Ch, Ch), jnp.float32),
        "b4": scale * jax.random.normal(keys[7], (Ch,), jnp.float32),
        "w5": scale * jax.random.normal(keys[8], wshape(2 * Ch, Ch), jnp.float32),
        "b5": scale * jax.random.normal(keys[9], (Ch,), jnp.float32),
    }

    x = jax.random.normal(keys[10], (B, H, W, Cin), jnp.float32)
    h = jax.random.normal(keys[11], (B, H, W, Ch), jnp.float32)
    c = jax.random.normal(keys[12], (B, H, W, Ch), jnp.float32)
    M = jax.random.normal(keys[13], (B, H, W, Ch), jnp.float32)

    h_out, c_out, M_out = ca_lstm_pallas(x, h, c, M, params)
    jax.block_until_ready((h_out, c_out, M_out))

    h_ref, c_ref, M_ref = ca_lstm_ref(x, h, c, M, params, Ch)
    for got, ref in ((h_out, h_ref), (c_out, c_ref), (M_out, M_ref)):
        err = float(jnp.max(jnp.abs(got - ref)))
        assert err < 5e-3, f"mismatch vs reference: max abs err {err}"

    print("KERNEL_OK")
</pallas_src>

<mosaic_0001>
module attributes {stable_mosaic.version = 11 : i64} {
  func.func @kernel(%arg0: i32, %arg1: memref<1x18x32x128xf32, #tpu.memory_space<vmem>>, %arg2: memref<1152x96xf32, #tpu.memory_space<vmem>>, %arg3: memref<1x96xf32, #tpu.memory_space<vmem>>, %arg4: memref<1152x128xf32, #tpu.memory_space<vmem>>, %arg5: memref<1x128xf32, #tpu.memory_space<vmem>>, %arg6: memref<1152x64xf32, #tpu.memory_space<vmem>>, %arg7: memref<1x64xf32, #tpu.memory_space<vmem>>, %arg8: memref<1x256x96xf32, #tpu.memory_space<vmem>>, %arg9: memref<1x16x16x1152xf32, #tpu.memory_space<vmem>>) attributes {dimension_semantics = [#tpu.dimension_semantics<parallel>], iteration_bounds = array<i64: 2>, scalar_prefetch = 0 : i64, scratch_operands = 1 : i64, tpu.core_type = #tpu.core_type<tc>, window_params = [{transform_indices = @transform_0, window_bounds = array<i64: 1, 18, 32, 128>}, {pipeline_mode = #tpu.pipeline_mode<synchronous>, transform_indices = @transform_1, window_bounds = array<i64: 1152, 96>}, {pipeline_mode = #tpu.pipeline_mode<synchronous>, transform_indices = @transform_2, window_bounds = array<i64: 1, 96>}, {pipeline_mode = #tpu.pipeline_mode<synchronous>, transform_indices = @transform_3, window_bounds = array<i64: 1152, 128>}, {pipeline_mode = #tpu.pipeline_mode<synchronous>, transform_indices = @transform_4, window_bounds = array<i64: 1, 128>}, {pipeline_mode = #tpu.pipeline_mode<synchronous>, transform_indices = @transform_5, window_bounds = array<i64: 1152, 64>}, {pipeline_mode = #tpu.pipeline_mode<synchronous>, transform_indices = @transform_6, window_bounds = array<i64: 1, 64>}, {transform_indices = @transform_7, window_bounds = array<i64: 1, 256, 96>}]} {
    %c0 = arith.constant 0 : index
    %c1 = arith.constant 1 : index
    %c8 = arith.constant 8 : index
    %c0_0 = arith.constant 0 : index
    %0 = vector.load %arg1[%c0, %c1, %c8, %c0_0] : memref<1x18x32x128xf32, #tpu.memory_space<vmem>>, vector<1x16x16x32xf32>
    %1 = vector.shape_cast %0 : vector<1x16x16x32xf32> to vector<256x32xf32>
    %c0_1 = arith.constant 0 : index
    %c0_2 = arith.constant 0 : index
    %c7 = arith.constant 7 : index
    %c0_3 = arith.constant 0 : index
    %2 = vector.load %arg1[%c0_1, %c0_2, %c7, %c0_3] : memref<1x18x32x128xf32, #tpu.memory_space<vmem>>, vector<1x16x16x128xf32>
    %c0_4 = arith.constant 0 : index
    %c0_5 = arith.constant 0 : index
    %c0_6 = arith.constant 0 : index
    %c0_7 = arith.constant 0 : index
    %3 = vector.load %arg9[%c0_4, %c0_5, %c0_6, %c0_7] : memref<1x16x16x1152xf32, #tpu.memory_space<vmem>>, vector<1x16x16x128xf32>
    tpu.vector_store %arg9[%c0_4, %c0_5, %c0_6, %c0_7], %2 {strides = array<i32>} : memref<1x16x16x1152xf32, #tpu.memory_space<vmem>>, vector<1x16x16x128xf32>,
    %c0_8 = arith.constant 0 : index
    %c0_9 = arith.constant 0 : index
    %c8_10 = arith.constant 8 : index
    %c0_11 = arith.constant 0 : index
    %4 = vector.load %arg1[%c0_8, %c0_9, %c8_10, %c0_11] : memref<1x18x32x128xf32, #tpu.memory_space<vmem>>, vector<1x16x16x128xf32>
    %c0_12 = arith.constant 0 : index
    %c0_13 = arith.constant 0 : index
    %c0_14 = arith.constant 0 : index
    %c128 = arith.constant 128 : index
    %5 = vector.load %arg9[%c0_12, %c0_13, %c0_14, %c128] : memref<1x16x16x1152xf32, #tpu.memory_space<vmem>>, vector<1x16x16x128xf32>
    tpu.vector_store %arg9[%c0_12, %c0_13, %c0_14, %c128], %4 {strides = array<i32>} : memref<1x16x16x1152xf32, #tpu.memory_space<vmem>>, vector<1x16x16x128xf32>,
    %c0_15 = arith.constant 0 : index
    %c0_16 = arith.constant 0 : index
    %c9 = arith.constant 9 : index
    %c0_17 = arith.constant 0 : index
    %6 = vector.load %arg1[%c0_15, %c0_16, %c9, %c0_17] : memref<1x18x32x128xf32, #tpu.memory_space<vmem>>, vector<1x16x16x128xf32>
    %c0_18 = arith.constant 0 : index
    %c0_19 = arith.constant 0 : index
    %c0_20 = arith.constant 0 : index
    %c256 = arith.constant 256 : index
    %7 = vector.load %arg9[%c0_18, %c0_19, %c0_20, %c256] : memref<1x16x16x1152xf32, #tpu.memory_space<vmem>>, vector<1x16x16x128xf32>
    tpu.vector_store %arg9[%c0_18, %c0_19, %c0_20, %c256], %6 {strides = array<i32>} : memref<1x16x16x1152xf32, #tpu.memory_space<vmem>>, vector<1x16x16x128xf32>,
    %c0_21 = arith.constant 0 : index
    %c1_22 = arith.constant 1 : index
    %c7_23 = arith.constant 7 : index
    %c0_24 = arith.constant 0 : index
    %8 = vector.load %arg1[%c0_21, %c1_22, %c7_23, %c0_24] : memref<1x18x32x128xf32, #tpu.memory_space<vmem>>, vector<1x16x16x128xf32>
    %c0_25 = arith.constant 0 : index
    %c0_26 = arith.constant 0 : index
    %c0_27 = arith.constant 0 : index
    %c384 = arith.constant 384 : index
    %9 = vector.load %arg9[%c0_25, %c0_26, %c0_27, %c384] : memref<1x16x16x1152xf32, #tpu.memory_space<vmem>>, vector<1x16x16x128xf32>
    tpu.vector_store %arg9[%c0_25, %c0_26, %c0_27, %c384], %8 {strides = array<i32>} : memref<1x16x16x1152xf32, #tpu.memory_space<vmem>>, vector<1x16x16x128xf32>,
    %c0_28 = arith.constant 0 : index
    %c1_29 = arith.constant 1 : index
    %c8_30 = arith.constant 8 : index
    %c0_31 = arith.constant 0 : index
    %10 = vector.load %arg1[%c0_28, %c1_29, %c8_30, %c0_31] : memref<1x18x32x128xf32, #tpu.memory_space<vmem>>, vector<1x16x16x128xf32>
    %c0_32 = arith.constant 0 : index
    %c0_33 = arith.constant 0 : index
    %c0_34 = arith.constant 0 : index
    %c512 = arith.constant 512 : index
    %11 = vector.load %arg9[%c0_32, %c0_33, %c0_34, %c512] : memref<1x16x16x1152xf32, #tpu.memory_space<vmem>>, vector<1x16x16x128xf32>
    tpu.vector_store %arg9[%c0_32, %c0_33, %c0_34, %c512], %10 {strides = array<i32>} : memref<1x16x16x1152xf32, #tpu.memory_space<vmem>>, vector<1x16x16x128xf32>,
    %c0_35 = arith.constant 0 : index
    %c1_36 = arith.constant 1 : index
    %c9_37 = arith.constant 9 : index
    %c0_38 = arith.constant 0 : index
    %12 = vector.load %arg1[%c0_35, %c1_36, %c9_37, %c0_38] : memref<1x18x32x128xf32, #tpu.memory_space<vmem>>, vector<1x16x16x128xf32>
    %c0_39 = arith.constant 0 : index
    %c0_40 = arith.constant 0 : index
    %c0_41 = arith.constant 0 : index
    %c640 = arith.constant 640 : index
    %13 = vector.load %arg9[%c0_39, %c0_40, %c0_41, %c640] : memref<1x16x16x1152xf32, #tpu.memory_space<vmem>>, vector<1x16x16x128xf32>
    tpu.vector_store %arg9[%c0_39, %c0_40, %c0_41, %c640], %12 {strides = array<i32>} : memref<1x16x16x1152xf32, #tpu.memory_space<vmem>>, vector<1x16x16x128xf32>,
    %c0_42 = arith.constant 0 : index
    %c2 = arith.constant 2 : index
    %c7_43 = arith.constant 7 : index
    %c0_44 = arith.constant 0 : index
    %14 = vector.load %arg1[%c0_42, %c2, %c7_43, %c0_44] : memref<1x18x32x128xf32, #tpu.memory_space<vmem>>, vector<1x16x16x128xf32>
    %c0_45 = arith.constant 0 : index
    %c0_46 = arith.constant 0 : index
    %c0_47 = arith.constant 0 : index
    %c768 = arith.constant 768 : index
    %15 = vector.load %arg9[%c0_45, %c0_46, %c0_47, %c768] : memref<1x16x16x1152xf32, #tpu.memory_space<vmem>>, vector<1x16x16x128xf32>
    tpu.vector_store %arg9[%c0_45, %c0_46, %c0_47, %c768], %14 {strides = array<i32>} : memref<1x16x16x1152xf32, #tpu.memory_space<vmem>>, vector<1x16x16x128xf32>,
    %c0_48 = arith.constant 0 : index
    %c2_49 = arith.constant 2 : index
    %c8_50 = arith.constant 8 : index
    %c0_51 = arith.constant 0 : index
    %16 = vector.load %arg1[%c0_48, %c2_49, %c8_50, %c0_51] : memref<1x18x32x128xf32, #tpu.memory_space<vmem>>, vector<1x16x16x128xf32>
    %c0_52 = arith.constant 0 : index
    %c0_53 = arith.constant 0 : index
    %c0_54 = arith.constant 0 : index
    %c896 = arith.constant 896 : index
    %17 = vector.load %arg9[%c0_52, %c0_53, %c0_54, %c896] : memref<1x16x16x1152xf32, #tpu.memory_space<vmem>>, vector<1x16x16x128xf32>
    tpu.vector_store %arg9[%c0_52, %c0_53, %c0_54, %c896], %16 {strides = array<i32>} : memref<1x16x16x1152xf32, #tpu.memory_space<vmem>>, vector<1x16x16x128xf32>,
    %c0_55 = arith.constant 0 : index
    %c2_56 = arith.constant 2 : index
    %c9_57 = arith.constant 9 : index
    %c0_58 = arith.constant 0 : index
    %18 = vector.load %arg1[%c0_55, %c2_56, %c9_57, %c0_58] : memref<1x18x32x128xf32, #tpu.memory_space<vmem>>, vector<1x16x16x128xf32>
    %c0_59 = arith.constant 0 : index
    %c0_60 = arith.constant 0 : index
    %c0_61 = arith.constant 0 : index
    %c1024 = arith.constant 1024 : index
    %19 = vector.load %arg9[%c0_59, %c0_60, %c0_61, %c1024] : memref<1x16x16x1152xf32, #tpu.memory_space<vmem>>, vector<1x16x16x128xf32>
    tpu.vector_store %arg9[%c0_59, %c0_60, %c0_61, %c1024], %18 {strides = array<i32>} : memref<1x16x16x1152xf32, #tpu.memory_space<vmem>>, vector<1x16x16x128xf32>,
    %c0_62 = arith.constant 0 : index
    %c0_63 = arith.constant 0 : index
    %c0_64 = arith.constant 0 : index
    %c0_65 = arith.constant 0 : index
    %20 = vector.load %arg9[%c0_62, %c0_63, %c0_64, %c0_65] : memref<1x16x16x1152xf32, #tpu.memory_space<vmem>>, vector<1x16x16x1152xf32>
    %21 = vector.shape_cast %20 : vector<1x16x16x1152xf32> to vector<256x1152xf32>
    %c0_66 = arith.constant 0 : index
    %c0_67 = arith.constant 0 : index
    %22 = vector.load %arg2[%c0_66, %c0_67] : memref<1152x96xf32, #tpu.memory_space<vmem>>, vector<1152x96xf32>
    %cst = arith.constant dense<0.000000e+00> : vector<256x96xf32>
    %23 = tpu.matmul %21, %22, %cst {dimension_numbers = #tpu.dot_dimension_numbers<[1], [0], [0], [1], [0, 0, 1, 1], [], []>} : vector<256x1152xf32>, vector<1152x96xf32>, vector<256x96xf32> -> vector<256x96xf32>
    %c0_68 = arith.constant 0 : index
    %c0_69 = arith.constant 0 : index
    %24 = vector.load %arg3[%c0_68, %c0_69] : memref<1x96xf32, #tpu.memory_space<vmem>>, vector<1x96xf32>
    %25 = vector.broadcast %24 : vector<1x96xf32> to vector<256x96xf32>
    %26 = arith.addf %23, %25 : vector<256x96xf32>
    %27 = vector.extract_strided_slice %26 {offsets = [0, 0], sizes = [256, 32], strides = [1, 1]} : vector<256x96xf32> to vector<256x32xf32>
    %cst_70 = arith.constant 5.000000e-01 : f32
    %28 = vector.broadcast %cst_70 : f32 to vector<256x32xf32>
    %29 = arith.mulf %28, %27 : vector<256x32xf32>
    %30 = math.tanh %29 : vector<256x32xf32>
    %cst_71 = arith.constant 5.000000e-01 : f32
    %31 = vector.broadcast %cst_71 : f32 to vector<256x32xf32>
    %32 = arith.mulf %31, %30 : vector<256x32xf32>
    %cst_72 = arith.constant 5.000000e-01 : f32
    %33 = vector.broadcast %cst_72 : f32 to vector<256x32xf32>
    %34 = arith.addf %32, %33 : vector<256x32xf32>
    %35 = vector.extract_strided_slice %26 {offsets = [0, 32], sizes = [256, 32], strides = [1, 1]} : vector<256x96xf32> to vector<256x32xf32>
    %cst_73 = arith.constant 5.000000e-01 : f32
    %36 = vector.broadcast %cst_73 : f32 to vector<256x32xf32>
    %37 = arith.mulf %36, %35 : vector<256x32xf32>
    %38 = math.tanh %37 : vector<256x32xf32>
    %cst_74 = arith.constant 5.000000e-01 : f32
    %39 = vector.broadcast %cst_74 : f32 to vector<256x32xf32>
    %40 = arith.mulf %39, %38 : vector<256x32xf32>
    %cst_75 = arith.constant 5.000000e-01 : f32
    %41 = vector.broadcast %cst_75 : f32 to vector<256x32xf32>
    %42 = arith.addf %40, %41 : vector<256x32xf32>
    %43 = vector.extract_strided_slice %26 {offsets = [0, 64], sizes = [256, 32], strides = [1, 1]} : vector<256x96xf32> to vector<256x32xf32>
    %44 = math.tanh %43 : vector<256x32xf32>
    %45 = arith.mulf %42, %1 : vector<256x32xf32>
    %46 = arith.mulf %34, %44 : vector<256x32xf32>
    %47 = arith.addf %45, %46 : vector<256x32xf32>
    %48 = vector.shape_cast %47 : vector<256x32xf32> to vector<1x16x16x32xf32>
    %c0_76 = arith.constant 0 : index
    %c1_77 = arith.constant 1 : index
    %c8_78 = arith.constant 8 : index
    %c0_79 = arith.constant 0 : index
    %49 = vector.load %arg1[%c0_76, %c1_77, %c8_78, %c0_79] : memref<1x18x32x128xf32, #tpu.memory_space<vmem>>, vector<1x16x16x32xf32>
    tpu.vector_store %arg1[%c0_76, %c1_77, %c8_78, %c0_79], %48 {strides = array<i32>} : memref<1x18x32x128xf32, #tpu.memory_space<vmem>>, vector<1x16x16x32xf32>,
    %c0_80 = arith.constant 0 : index
    %c0_81 = arith.constant 0 : index
    %c7_82 = arith.constant 7 : index
    %c0_83 = arith.constant 0 : index
    %50 = vector.load %arg1[%c0_80, %c0_81, %c7_82, %c0_83] : memref<1x18x32x128xf32, #tpu.memory_space<vmem>>, vector<1x16x16x128xf32>
    %c0_84 = arith.constant 0 : index
    %c0_85 = arith.constant 0 : index
    %c0_86 = arith.constant 0 : index
    %c0_87 = arith.constant 0 : index
    %51 = vector.load %arg9[%c0_84, %c0_85, %c0_86, %c0_87] : memref<1x16x16x1152xf32, #tpu.memory_space<vmem>>, vector<1x16x16x128xf32>
    tpu.vector_store %arg9[%c0_84, %c0_85, %c0_86, %c0_87], %50 {strides = array<i32>} : memref<1x16x16x1152xf32, #tpu.memory_space<vmem>>, vector<1x16x16x128xf32>,
    %c0_88 = arith.constant 0 : index
    %c0_89 = arith.constant 0 : index
    %c8_90 = arith.constant 8 : index
    %c0_91 = arith.constant 0 : index
    %52 = vector.load %arg1[%c0_88, %c0_89, %c8_90, %c0_91] : memref<1x18x32x128xf32, #tpu.memory_space<vmem>>, vector<1x16x16x128xf32>
    %c0_92 = arith.constant 0 : index
    %c0_93 = arith.constant 0 : index
    %c0_94 = arith.constant 0 : index
    %c128_95 = arith.constant 128 : index
    %53 = vector.load %arg9[%c0_92, %c0_93, %c0_94, %c128_95] : memref<1x16x16x1152xf32, #tpu.memory_space<vmem>>, vector<1x16x16x128xf32>
    tpu.vector_store %arg9[%c0_92, %c0_93, %c0_94, %c128_95], %52 {strides = array<i32>} : memref<1x16x16x1152xf32, #tpu.memory_space<vmem>>, vector<1x16x16x128xf32>,
    %c0_96 = arith.constant 0 : index
    %c0_97 = arith.constant 0 : index
    %c9_98 = arith.constant 9 : index
    %c0_99 = arith.constant 0 : index
    %54 = vector.load %arg1[%c0_96, %c0_97, %c9_98, %c0_99] : memref<1x18x32x128xf32, #tpu.memory_space<vmem>>, vector<1x16x16x128xf32>
    %c0_100 = arith.constant 0 : index
    %c0_101 = arith.constant 0 : index
    %c0_102 = arith.constant 0 : index
    %c256_103 = arith.constant 256 : index
    %55 = vector.load %arg9[%c0_100, %c0_101, %c0_102, %c256_103] : memref<1x16x16x1152xf32, #tpu.memory_space<vmem>>, vector<1x16x16x128xf32>
    tpu.vector_store %arg9[%c0_100, %c0_101, %c0_102, %c256_103], %54 {strides = array<i32>} : memref<1x16x16x1152xf32, #tpu.memory_space<vmem>>, vector<1x16x16x128xf32>,
    %c0_104 = arith.constant 0 : index
    %c1_105 = arith.constant 1 : index
    %c7_106 = arith.constant 7 : index
    %c0_107 = arith.constant 0 : index
    %56 = vector.load %arg1[%c0_104, %c1_105, %c7_106, %c0_107] : memref<1x18x32x128xf32, #tpu.memory_space<vmem>>, vector<1x16x16x128xf32>
    %c0_108 = arith.constant 0 : index
    %c0_109 = arith.constant 0 : index
    %c0_110 = arith.constant 0 : index
    %c384_111 = arith.constant 384 : index
    %57 = vector.load %arg9[%c0_108, %c0_109, %c0_110, %c384_111] : memref<1x16x16x1152xf32, #tpu.memory_space<vmem>>, vector<1x16x16x128xf32>
    tpu.vector_store %arg9[%c0_108, %c0_109, %c0_110, %c384_111], %56 {strides = array<i32>} : memref<1x16x16x1152xf32, #tpu.memory_space<vmem>>, vector<1x16x16x128xf32>,
    %c0_112 = arith.constant 0 : index
    %c1_113 = arith.constant 1 : index
    %c8_114 = arith.constant 8 : index
    %c0_115 = arith.constant 0 : index
    %58 = vector.load %arg1[%c0_112, %c1_113, %c8_114, %c0_115] : memref<1x18x32x128xf32, #tpu.memory_space<vmem>>, vector<1x16x16x128xf32>
    %c0_116 = arith.constant 0 : index
    %c0_117 = arith.constant 0 : index
    %c0_118 = arith.constant 0 : index
    %c512_119 = arith.constant 512 : index
    %59 = vector.load %arg9[%c0_116, %c0_117, %c0_118, %c512_119] : memref<1x16x16x1152xf32, #tpu.memory_space<vmem>>, vector<1x16x16x128xf32>
    tpu.vector_store %arg9[%c0_116, %c0_117, %c0_118, %c512_119], %58 {strides = array<i32>} : memref<1x16x16x1152xf32, #tpu.memory_space<vmem>>, vector<1x16x16x128xf32>,
    %c0_120 = arith.constant 0 : index
    %c1_121 = arith.constant 1 : index
    %c9_122 = arith.constant 9 : index
    %c0_123 = arith.constant 0 : index
    %60 = vector.load %arg1[%c0_120, %c1_121, %c9_122, %c0_123] : memref<1x18x32x128xf32, #tpu.memory_space<vmem>>, vector<1x16x16x128xf32>
    %c0_124 = arith.constant 0 : index
    %c0_125 = arith.constant 0 : index
    %c0_126 = arith.constant 0 : index
    %c640_127 = arith.constant 640 : index
    %61 = vector.load %arg9[%c0_124, %c0_125, %c0_126, %c640_127] : memref<1x16x16x1152xf32, #tpu.memory_space<vmem>>, vector<1x16x16x128xf32>
    tpu.vector_store %arg9[%c0_124, %c0_125, %c0_126, %c640_127], %60 {strides = array<i32>} : memref<1x16x16x1152xf32, #tpu.memory_space<vmem>>, vector<1x16x16x128xf32>,
    %c0_128 = arith.constant 0 : index
    %c2_129 = arith.constant 2 : index
    %c7_130 = arith.constant 7 : index
    %c0_131 = arith.constant 0 : index
    %62 = vector.load %arg1[%c0_128, %c2_129, %c7_130, %c0_131] : memref<1x18x32x128xf32, #tpu.memory_space<vmem>>, vector<1x16x16x128xf32>
    %c0_132 = arith.constant 0 : index
    %c0_133 = arith.constant 0 : index
    %c0_134 = arith.constant 0 : index
    %c768_135 = arith.constant 768 : index
    %63 = vector.load %arg9[%c0_132, %c0_133, %c0_134, %c768_135] : memref<1x16x16x1152xf32, #tpu.memory_space<vmem>>, vector<1x16x16x128xf32>
    tpu.vector_store %arg9[%c0_132, %c0_133, %c0_134, %c768_135], %62 {strides = array<i32>} : memref<1x16x16x1152xf32, #tpu.memory_space<vmem>>, vector<1x16x16x128xf32>,
    %c0_136 = arith.constant 0 : index
    %c2_137 = arith.constant 2 : index
    %c8_138 = arith.constant 8 : index
    %c0_139 = arith.constant 0 : index
    %64 = vector.load %arg1[%c0_136, %c2_137, %c8_138, %c0_139] : memref<1x18x32x128xf32, #tpu.memory_space<vmem>>, vector<1x16x16x128xf32>
    %c0_140 = arith.constant 0 : index
    %c0_141 = arith.constant 0 : index
    %c0_142 = arith.constant 0 : index
    %c896_143 = arith.constant 896 : index
    %65 = vector.load %arg9[%c0_140, %c0_141, %c0_142, %c896_143] : memref<1x16x16x1152xf32, #tpu.memory_space<vmem>>, vector<1x16x16x128xf32>
    tpu.vector_store %arg9[%c0_140, %c0_141, %c0_142, %c896_143], %64 {strides = array<i32>} : memref<1x16x16x1152xf32, #tpu.memory_space<vmem>>, vector<1x16x16x128xf32>,
    %c0_144 = arith.constant 0 : index
    %c2_145 = arith.constant 2 : index
    %c9_146 = arith.constant 9 : index
    %c0_147 = arith.constant 0 : index
    %66 = vector.load %arg1[%c0_144, %c2_145, %c9_146, %c0_147] : memref<1x18x32x128xf32, #tpu.memory_space<vmem>>, vector<1x16x16x128xf32>
    %c0_148 = arith.constant 0 : index
    %c0_149 = arith.constant 0 : index
    %c0_150 = arith.constant 0 : index
    %c1024_151 = arith.constant 1024 : index
    %67 = vector.load %arg9[%c0_148, %c0_149, %c0_150, %c1024_151] : memref<1x16x16x1152xf32, #tpu.memory_space<vmem>>, vector<1x16x16x128xf32>
    tpu.vector_store %arg9[%c0_148, %c0_149, %c0_150, %c1024_151], %66 {strides = array<i32>} : memref<1x16x16x1152xf32, #tpu.memory_space<vmem>>, vector<1x16x16x128xf32>,
    %c0_152 = arith.constant 0 : index
    %c0_153 = arith.constant 0 : index
    %c0_154 = arith.constant 0 : index
    %c0_155 = arith.constant 0 : index
    %68 = vector.load %arg9[%c0_152, %c0_153, %c0_154, %c0_155] : memref<1x16x16x1152xf32, #tpu.memory_space<vmem>>, vector<1x16x16x1152xf32>
    %69 = vector.shape_cast %68 : vector<1x16x16x1152xf32> to vector<256x1152xf32>
    %c0_156 = arith.constant 0 : index
    %c0_157 = arith.constant 0 : index
    %70 = vector.load %arg4[%c0_156, %c0_157] : memref<1152x128xf32, #tpu.memory_space<vmem>>, vector<1152x128xf32>
    %cst_158 = arith.constant dense<0.000000e+00> : vector<256x128xf32>
    %71 = tpu.matmul %69, %70, %cst_158 {dimension_numbers = #tpu.dot_dimension_numbers<[1], [0], [0], [1], [0, 0, 1, 1], [], []>} : vector<256x1152xf32>, vector<1152x128xf32>, vector<256x128xf32> -> vector<256x128xf32>
    %c0_159 = arith.constant 0 : index
    %c0_160 = arith.constant 0 : index
    %72 = vector.load %arg5[%c0_159, %c0_160] : memref<1x128xf32, #tpu.memory_space<vmem>>, vector<1x128xf32>
    %73 = vector.broadcast %72 : vector<1x128xf32> to vector<256x128xf32>
    %74 = arith.addf %71, %73 : vector<256x128xf32>
    %75 = vector.extract_strided_slice %74 {offsets = [0, 0], sizes = [256, 32], strides = [1, 1]} : vector<256x128xf32> to vector<256x32xf32>
    %cst_161 = arith.constant 5.000000e-01 : f32
    %76 = vector.broadcast %cst_161 : f32 to vector<256x32xf32>
    %77 = arith.mulf %76, %75 : vector<256x32xf32>
    %78 = math.tanh %77 : vector<256x32xf32>
    %cst_162 = arith.constant 5.000000e-01 : f32
    %79 = vector.broadcast %cst_162 : f32 to vector<256x32xf32>
    %80 = arith.mulf %79, %78 : vector<256x32xf32>
    %cst_163 = arith.constant 5.000000e-01 : f32
    %81 = vector.broadcast %cst_163 : f32 to vector<256x32xf32>
    %82 = arith.addf %80, %81 : vector<256x32xf32>
    %83 = vector.extract_strided_slice %74 {offsets = [0, 32], sizes = [256, 32], strides = [1, 1]} : vector<256x128xf32> to vector<256x32xf32>
    %cst_164 = arith.constant 5.000000e-01 : f32
    %84 = vector.broadcast %cst_164 : f32 to vector<256x32xf32>
    %85 = arith.mulf %84, %83 : vector<256x32xf32>
    %86 = math.tanh %85 : vector<256x32xf32>
    %cst_165 = arith.constant 5.000000e-01 : f32
    %87 = vector.broadcast %cst_165 : f32 to vector<256x32xf32>
    %88 = arith.mulf %87, %86 : vector<256x32xf32>
    %cst_166 = arith.constant 5.000000e-01 : f32
    %89 = vector.broadcast %cst_166 : f32 to vector<256x32xf32>
    %90 = arith.addf %88, %89 : vector<256x32xf32>
    %91 = vector.extract_strided_slice %74 {offsets = [0, 64], sizes = [256, 32], strides = [1, 1]} : vector<256x128xf32> to vector<256x32xf32>
    %92 = math.tanh %91 : vector<256x32xf32>
    %93 = vector.extract_strided_slice %74 {offsets = [0, 96], sizes = [256, 32], strides = [1, 1]} : vector<256x128xf32> to vector<256x32xf32>
    %94 = math.tanh %93 : vector<256x32xf32>
    %95 = arith.mulf %90, %94 : vector<256x32xf32>
    %96 = arith.mulf %82, %92 : vector<256x32xf32>
    %97 = arith.addf %95, %96 : vector<256x32xf32>
    %98 = vector.shape_cast %97 : vector<256x32xf32> to vector<1x16x16x32xf32>
    %c0_167 = arith.constant 0 : index
    %c1_168 = arith.constant 1 : index
    %c8_169 = arith.constant 8 : index
    %c32 = arith.constant 32 : index
    %99 = vector.load %arg1[%c0_167, %c1_168, %c8_169, %c32] : memref<1x18x32x128xf32, #tpu.memory_space<vmem>>, vector<1x16x16x32xf32>
    tpu.vector_store %arg1[%c0_167, %c1_168, %c8_169, %c32], %98 {strides = array<i32>} : memref<1x18x32x128xf32, #tpu.memory_space<vmem>>, vector<1x16x16x32xf32>,
    %c0_170 = arith.constant 0 : index
    %c0_171 = arith.constant 0 : index
    %c7_172 = arith.constant 7 : index
    %c0_173 = arith.constant 0 : index
    %100 = vector.load %arg1[%c0_170, %c0_171, %c7_172, %c0_173] : memref<1x18x32x128xf32, #tpu.memory_space<vmem>>, vector<1x16x16x128xf32>
    %c0_174 = arith.constant 0 : index
    %c0_175 = arith.constant 0 : index
    %c0_176 = arith.constant 0 : index
    %c0_177 = arith.constant 0 : index
    %101 = vector.load %arg9[%c0_174, %c0_175, %c0_176, %c0_177] : memref<1x16x16x1152xf32, #tpu.memory_space<vmem>>, vector<1x16x16x128xf32>
    tpu.vector_store %arg9[%c0_174, %c0_175, %c0_176, %c0_177], %100 {strides = array<i32>} : memref<1x16x16x1152xf32, #tpu.memory_space<vmem>>, vector<1x16x16x128xf32>,
    %c0_178 = arith.constant 0 : index
    %c0_179 = arith.constant 0 : index
    %c8_180 = arith.constant 8 : index
    %c0_181 = arith.constant 0 : index
    %102 = vector.load %arg1[%c0_178, %c0_179, %c8_180, %c0_181] : memref<1x18x32x128xf32, #tpu.memory_space<vmem>>, vector<1x16x16x128xf32>
    %c0_182 = arith.constant 0 : index
    %c0_183 = arith.constant 0 : index
    %c0_184 = arith.constant 0 : index
    %c128_185 = arith.constant 128 : index
    %103 = vector.load %arg9[%c0_182, %c0_183, %c0_184, %c128_185] : memref<1x16x16x1152xf32, #tpu.memory_space<vmem>>, vector<1x16x16x128xf32>
    tpu.vector_store %arg9[%c0_182, %c0_183, %c0_184, %c128_185], %102 {strides = array<i32>} : memref<1x16x16x1152xf32, #tpu.memory_space<vmem>>, vector<1x16x16x128xf32>,
    %c0_186 = arith.constant 0 : index
    %c0_187 = arith.constant 0 : index
    %c9_188 = arith.constant 9 : index
    %c0_189 = arith.constant 0 : index
    %104 = vector.load %arg1[%c0_186, %c0_187, %c9_188, %c0_189] : memref<1x18x32x128xf32, #tpu.memory_space<vmem>>, vector<1x16x16x128xf32>
    %c0_190 = arith.constant 0 : index
    %c0_191 = arith.constant 0 : index
    %c0_192 = arith.constant 0 : index
    %c256_193 = arith.constant 256 : index
    %105 = vector.load %arg9[%c0_190, %c0_191, %c0_192, %c256_193] : memref<1x16x16x1152xf32, #tpu.memory_space<vmem>>, vector<1x16x16x128xf32>
    tpu.vector_store %arg9[%c0_190, %c0_191, %c0_192, %c256_193], %104 {strides = array<i32>} : memref<1x16x16x1152xf32, #tpu.memory_space<vmem>>, vector<1x16x16x128xf32>,
    %c0_194 = arith.constant 0 : index
    %c1_195 = arith.constant 1 : index
    %c7_196 = arith.constant 7 : index
    %c0_197 = arith.constant 0 : index
    %106 = vector.load %arg1[%c0_194, %c1_195, %c7_196, %c0_197] : memref<1x18x32x128xf32, #tpu.memory_space<vmem>>, vector<1x16x16x128xf32>
    %c0_198 = arith.constant 0 : index
    %c0_199 = arith.constant 0 : index
    %c0_200 = arith.constant 0 : index
    %c384_201 = arith.constant 384 : index
    %107 = vector.load %arg9[%c0_198, %c0_199, %c0_200, %c384_201] : memref<1x16x16x1152xf32, #tpu.memory_space<vmem>>, vector<1x16x16x128xf32>
    tpu.vector_store %arg9[%c0_198, %c0_199, %c0_200, %c384_201], %106 {strides = array<i32>} : memref<1x16x16x1152xf32, #tpu.memory_space<vmem>>, vector<1x16x16x128xf32>,
    %c0_202 = arith.constant 0 : index
    %c1_203 = arith.constant 1 : index
    %c8_204 = arith.constant 8 : index
    %c0_205 = arith.constant 0 : index
    %108 = vector.load %arg1[%c0_202, %c1_203, %c8_204, %c0_205] : memref<1x18x32x128xf32, #tpu.memory_space<vmem>>, vector<1x16x16x128xf32>
    %c0_206 = arith.constant 0 : index
    %c0_207 = arith.constant 0 : index
    %c0_208 = arith.constant 0 : index
    %c512_209 = arith.constant 512 : index
    %109 = vector.load %arg9[%c0_206, %c0_207, %c0_208, %c512_209] : memref<1x16x16x1152xf32, #tpu.memory_space<vmem>>, vector<1x16x16x128xf32>
    tpu.vector_store %arg9[%c0_206, %c0_207, %c0_208, %c512_209], %108 {strides = array<i32>} : memref<1x16x16x1152xf32, #tpu.memory_space<vmem>>, vector<1x16x16x128xf32>,
    %c0_210 = arith.constant 0 : index
    %c1_211 = arith.constant 1 : index
    %c9_212 = arith.constant 9 : index
    %c0_213 = arith.constant 0 : index
    %110 = vector.load %arg1[%c0_210, %c1_211, %c9_212, %c0_213] : memref<1x18x32x128xf32, #tpu.memory_space<vmem>>, vector<1x16x16x128xf32>
    %c0_214 = arith.constant 0 : index
    %c0_215 = arith.constant 0 : index
    %c0_216 = arith.constant 0 : index
    %c640_217 = arith.constant 640 : index
    %111 = vector.load %arg9[%c0_214, %c0_215, %c0_216, %c640_217] : memref<1x16x16x1152xf32, #tpu.memory_space<vmem>>, vector<1x16x16x128xf32>
    tpu.vector_store %arg9[%c0_214, %c0_215, %c0_216, %c640_217], %110 {strides = array<i32>} : memref<1x16x16x1152xf32, #tpu.memory_space<vmem>>, vector<1x16x16x128xf32>,
    %c0_218 = arith.constant 0 : index
    %c2_219 = arith.constant 2 : index
    %c7_220 = arith.constant 7 : index
    %c0_221 = arith.constant 0 : index
    %112 = vector.load %arg1[%c0_218, %c2_219, %c7_220, %c0_221] : memref<1x18x32x128xf32, #tpu.memory_space<vmem>>, vector<1x16x16x128xf32>
    %c0_222 = arith.constant 0 : index
    %c0_223 = arith.constant 0 : index
    %c0_224 = arith.constant 0 : index
    %c768_225 = arith.constant 768 : index
    %113 = vector.load %arg9[%c0_222, %c0_223, %c0_224, %c768_225] : memref<1x16x16x1152xf32, #tpu.memory_space<vmem>>, vector<1x16x16x128xf32>
    tpu.vector_store %arg9[%c0_222, %c0_223, %c0_224, %c768_225], %112 {strides = array<i32>} : memref<1x16x16x1152xf32, #tpu.memory_space<vmem>>, vector<1x16x16x128xf32>,
    %c0_226 = arith.constant 0 : index
    %c2_227 = arith.constant 2 : index
    %c8_228 = arith.constant 8 : index
    %c0_229 = arith.constant 0 : index
    %114 = vector.load %arg1[%c0_226, %c2_227, %c8_228, %c0_229] : memref<1x18x32x128xf32, #tpu.memory_space<vmem>>, vector<1x16x16x128xf32>
    %c0_230 = arith.constant 0 : index
    %c0_231 = arith.constant 0 : index
    %c0_232 = arith.constant 0 : index
    %c896_233 = arith.constant 896 : index
    %115 = vector.load %arg9[%c0_230, %c0_231, %c0_232, %c896_233] : memref<1x16x16x1152xf32, #tpu.memory_space<vmem>>, vector<1x16x16x128xf32>
    tpu.vector_store %arg9[%c0_230, %c0_231, %c0_232, %c896_233], %114 {strides = array<i32>} : memref<1x16x16x1152xf32, #tpu.memory_space<vmem>>, vector<1x16x16x128xf32>,
    %c0_234 = arith.constant 0 : index
    %c2_235 = arith.constant 2 : index
    %c9_236 = arith.constant 9 : index
    %c0_237 = arith.constant 0 : index
    %116 = vector.load %arg1[%c0_234, %c2_235, %c9_236, %c0_237] : memref<1x18x32x128xf32, #tpu.memory_space<vmem>>, vector<1x16x16x128xf32>
    %c0_238 = arith.constant 0 : index
    %c0_239 = arith.constant 0 : index
    %c0_240 = arith.constant 0 : index
    %c1024_241 = arith.constant 1024 : index
    %117 = vector.load %arg9[%c0_238, %c0_239, %c0_240, %c1024_241] : memref<1x16x16x1152xf32, #tpu.memory_space<vmem>>, vector<1x16x16x128xf32>
    tpu.vector_store %arg9[%c0_238, %c0_239, %c0_240, %c1024_241], %116 {strides = array<i32>} : memref<1x16x16x1152xf32, #tpu.memory_space<vmem>>, vector<1x16x16x128xf32>,
    %c0_242 = arith.constant 0 : index
    %c0_243 = arith.constant 0 : index
    %c0_244 = arith.constant 0 : index
    %c0_245 = arith.constant 0 : index
    %118 = vector.load %arg9[%c0_242, %c0_243, %c0_244, %c0_245] : memref<1x16x16x1152xf32, #tpu.memory_space<vmem>>, vector<1x16x16x1152xf32>
    %119 = vector.shape_cast %118 : vector<1x16x16x1152xf32> to vector<256x1152xf32>
    %c0_246 = arith.constant 0 : index
    %c0_247 = arith.constant 0 : index
    %120 = vector.load %arg6[%c0_246, %c0_247] : memref<1152x64xf32, #tpu.memory_space<vmem>>, vector<1152x64xf32>
    %cst_248 = arith.constant dense<0.000000e+00> : vector<256x64xf32>
    %121 = tpu.matmul %119, %120, %cst_248 {dimension_numbers = #tpu.dot_dimension_numbers<[1], [0], [0], [1], [0, 0, 1, 1], [], []>} : vector<256x1152xf32>, vector<1152x64xf32>, vector<256x64xf32> -> vector<256x64xf32>
    %c0_249 = arith.constant 0 : index
    %c0_250 = arith.constant 0 : index
    %122 = vector.load %arg7[%c0_249, %c0_250] : memref<1x64xf32, #tpu.memory_space<vmem>>, vector<1x64xf32>
    %123 = vector.broadcast %122 : vector<1x64xf32> to vector<256x64xf32>
    %124 = arith.addf %121, %123 : vector<256x64xf32>
    %125 = vector.extract_strided_slice %124 {offsets = [0, 0], sizes = [256, 32], strides = [1, 1]} : vector<256x64xf32> to vector<256x32xf32>
    %126 = math.tanh %125 : vector<256x32xf32>
    %127 = vector.extract_strided_slice %124 {offsets = [0, 32], sizes = [256, 32], strides = [1, 1]} : vector<256x64xf32> to vector<256x32xf32>
    %128 = math.tanh %127 : vector<256x32xf32>
    %129 = arith.mulf %126, %128 : vector<256x32xf32>
    %130 = tpu.concatenate %129, %47, %97 in 1 : vector<256x32xf32>, vector<256x32xf32>, vector<256x32xf32> -> vector<256x96xf32>
    %131 = vector.shape_cast %130 : vector<256x96xf32> to vector<1x256x96xf32>
    %c0_251 = arith.constant 0 : index
    %c0_252 = arith.constant 0 : index
    %c0_253 = arith.constant 0 : index
    %132 = vector.load %arg8[%c0_251, %c0_252, %c0_253] : memref<1x256x96xf32, #tpu.memory_space<vmem>>, vector<1x256x96xf32>
    tpu.vector_store %arg8[%c0_251, %c0_252, %c0_253], %131 {strides = array<i32>} : memref<1x256x96xf32, #tpu.memory_space<vmem>>, vector<1x256x96xf32>,
    return
  }
  func.func @transform_0(%arg0: i32) -> (i32, i32, i32, i32) {
    %c0_i32 = arith.constant 0 : i32
    %c0_i32_0 = arith.constant 0 : i32
    %c0_i32_1 = arith.constant 0 : i32
    %c0_i32_2 = arith.constant 0 : i32
    return %arg0, %c0_i32, %c0_i32_0, %c0_i32_1 : i32, i32, i32, i32
  }
  func.func @transform_1(%arg0: i32) -> (i32, i32) {
    %c0_i32 = arith.constant 0 : i32
    %c0_i32_0 = arith.constant 0 : i32
    %c0_i32_1 = arith.constant 0 : i32
    return %c0_i32, %c0_i32_0 : i32, i32
  }
  func.func @transform_2(%arg0: i32) -> (i32, i32) {
    %c0_i32 = arith.constant 0 : i32
    %c0_i32_0 = arith.constant 0 : i32
    %c0_i32_1 = arith.constant 0 : i32
    return %c0_i32, %c0_i32_0 : i32, i32
  }
  func.func @transform_3(%arg0: i32) -> (i32, i32) {
    %c0_i32 = arith.constant 0 : i32
    %c0_i32_0 = arith.constant 0 : i32
    %c0_i32_1 = arith.constant 0 : i32
    return %c0_i32, %c0_i32_0 : i32, i32
  }
  func.func @transform_4(%arg0: i32) -> (i32, i32) {
    %c0_i32 = arith.constant 0 : i32
    %c0_i32_0 = arith.constant 0 : i32
    %c0_i32_1 = arith.constant 0 : i32
    return %c0_i32, %c0_i32_0 : i32, i32
  }
  func.func @transform_5(%arg0: i32) -> (i32, i32) {
    %c0_i32 = arith.constant 0 : i32
    %c0_i32_0 = arith.constant 0 : i32
    %c0_i32_1 = arith.constant 0 : i32
    return %c0_i32, %c0_i32_0 : i32, i32
  }
  func.func @transform_6(%arg0: i32) -> (i32, i32) {
    %c0_i32 = arith.constant 0 : i32
    %c0_i32_0 = arith.constant 0 : i32
    %c0_i32_1 = arith.constant 0 : i32
    return %c0_i32, %c0_i32_0 : i32, i32
  }
  func.func @transform_7(%arg0: i32) -> (i32, i32, i32) {
    %c0_i32 = arith.constant 0 : i32
    %c0_i32_0 = arith.constant 0 : i32
    %c0_i32_1 = arith.constant 0 : i32
    return %arg0, %c0_i32, %c0_i32_0 : i32, i32, i32
  }
}

</mosaic_0001>

<llo_original>
// kernel: tpu_custom_call.1
$region0: #{tpu_custom_call.1}
  #allocation0 [shape = 'u32[]', space=smem, size = 0x4, offset = 0x4, fixed_abs, tag = 'smem constant byte address 0x4 - core index']
  #allocation1 [shape = 'u32[144,128]{1,0:T(1,128)}', space=vmem, size = 0x12000, scoped, tag = 'internal scratch']
  #allocation2 [shape = 'f32[1,16,16,1152]{3,2,1,0:T(8,128)}', space=vmem, size = 0x120000, scoped, tag = 'scratch operand']
  %s0 = inlined_call_operand.vmem [shape: f32[2,18,32,128], index: 0, kind: input, shape index: {}]
  %s1 = inlined_call_operand.vmem [shape: f32[1152,96], index: 1, kind: input, shape index: {}]
  %s2 = inlined_call_operand.vmem [shape: f32[1,96], index: 2, kind: input, shape index: {}]
  %s3 = inlined_call_operand.vmem [shape: f32[1152,128], index: 3, kind: input, shape index: {}]
  %s4 = inlined_call_operand.vmem [shape: f32[1,128], index: 4, kind: input, shape index: {}]
  %s5 = inlined_call_operand.vmem [shape: f32[1152,64], index: 5, kind: input, shape index: {}]
  %s6 = inlined_call_operand.vmem [shape: f32[1,64], index: 6, kind: input, shape index: {}]
  %s7 = inlined_call_operand.vmem [shape: f32[2,256,96], index: 7, kind: output, shape index: {}]
  %s8 = sld [smem:[#allocation0]]
  $region61: #{tpu_custom_call.1} parent=0
    _
  %s10 = ssub.s32 1, %s8
  %s11 = scalar_select 0, %s10, %s8
  loop: start=0, step=1, limit=4
  $region2: #{tpu_custom_call.1} parent=0 // loop_pre_header
    _
  $region3: #{tpu_custom_call.1} parent=0 // loop_header
    %s13 = sphi 0, %s17
    %p14 = scmp.ge.s32.totalorder %s13, 4
    %s23 = sphi 0, %s25
    %s26 = sphi 0, %s23
    %s27 = sphi 0, %s26
    %s43 = sphi 0, %s27
    %s47 = sphi 0, %s47
    %s49 = sphi 0, %s47
    %s50 = sphi 0, %s49
    %s64 = sphi 0, %s50
    %s68 = sphi 0, %s68
    %s70 = sphi 0, %s68
    %s71 = sphi 0, %s70
    %s85 = sphi 0, %s71
    %s89 = sphi 0, %s89
    %s91 = sphi 0, %s89
    %s92 = sphi 0, %s91
    %s106 = sphi 0, %s92
    %s110 = sphi 0, %s110
    %s112 = sphi 0, %s110
    %s113 = sphi 0, %s112
    %s127 = sphi 0, %s113
    %s131 = sphi 0, %s131
    %s133 = sphi 0, %s131
    %s134 = sphi 0, %s133
    %s148 = sphi 0, %s134
    %s152 = sphi 0, %s152
    %s154 = sphi 0, %s152
    %s155 = sphi 0, %s154
    %s169 = sphi 0, %s155
    %s175 = sphi 0, %s177
    %s178 = sphi 0, %s175
    %s179 = sphi 0, %s178
    %s195 = sphi 0, %s179
  $region4: #{tpu_custom_call.1} parent=0 // loop_header_branch
    %16 = sbr.rel (%p14) target = $region8
  $region5: #{tpu_custom_call.1} parent=0 // loop_body
    %s18 = ssub.s32 %s13, 1
    %s19 = ssub.s32 %s13, 2
    %s20 = sadd.s32 %s13, 1
    %s21 = ssub.s32 %s13, %s20
    %p22 = scmp.eq.s32.totalorder %s21, 0
    %s24 = sadd.s32 %s23, 1
    %s25 = scalar_select %p22, %s23, %s24
    %p28 = pneg %p22
    %p29 = scmp.eq.s32.totalorder %s13, 1
    %p30 = por %p28, %p29
    %p31 = scmp.ne.s32.totalorder %s23, %s26
    %p32 = scmp.eq.s32.totalorder %s13, 0
    %p33 = por %p31, %p32
    %p34 = scmp.ne.s32.totalorder %s23, %s26
    %p35 = scmp.eq.s32.totalorder %s18, 1
    %p36 = por %p34, %p35
    %p37 = scmp.ne.s32.totalorder %s26, %s27
    %p38 = scmp.eq.s32.totalorder %s18, 0
    %p39 = por %p37, %p38
    %p40 = scmp.ne.s32.totalorder %s26, %s27
    %p41 = scmp.eq.s32.totalorder %s19, 1
    %p42 = por %p40, %p41
    %p44 = scmp.ne.s32.totalorder %s27, %s43
    %p45 = scmp.eq.s32.totalorder %s19, 0
    %p46 = por %p44, %p45
    %s48 = sadd.s32 %s47, 1
    %p51 = scmp.eq.s32.totalorder %s13, 1
    %p52 = scmp.ne.s32.totalorder %s47, %s49
    %p53 = scmp.eq.s32.totalorder %s13, 0
    %p54 = por %p52, %p53
    %p55 = scmp.ne.s32.totalorder %s47, %s49
    %p56 = scmp.eq.s32.totalorder %s18, 1
    %p57 = por %p55, %p56
    %p58 = scmp.ne.s32.totalorder %s49, %s50
    %p59 = scmp.eq.s32.totalorder %s18, 0
    %p60 = por %p58, %p59
    %p61 = scmp.ne.s32.totalorder %s49, %s50
    %p62 = scmp.eq.s32.totalorder %s19, 1
    %p63 = por %p61, %p62
    %p65 = scmp.ne.s32.totalorder %s50, %s64
    %p66 = scmp.eq.s32.totalorder %s19, 0
    %p67 = por %p65, %p66
    %s69 = sadd.s32 %s68, 1
    %p72 = scmp.eq.s32.totalorder %s13, 1
    %p73 = scmp.ne.s32.totalorder %s68, %s70
    %p74 = scmp.eq.s32.totalorder %s13, 0
    %p75 = por %p73, %p74
    %p76 = scmp.ne.s32.totalorder %s68, %s70
    %p77 = scmp.eq.s32.totalorder %s18, 1
    %p78 = por %p76, %p77
    %p79 = scmp.ne.s32.totalorder %s70, %s71
    %p80 = scmp.eq.s32.totalorder %s18, 0
    %p81 = por %p79, %p80
    %p82 = scmp.ne.s32.totalorder %s70, %s71
    %p83 = scmp.eq.s32.totalorder %s19, 1
    %p84 = por %p82, %p83
    %p86 = scmp.ne.s32.totalorder %s71, %s85
    %p87 = scmp.eq.s32.totalorder %s19, 0
    %p88 = por %p86, %p87
    %s90 = sadd.s32 %s89, 1
    %p93 = scmp.eq.s32.totalorder %s13, 1
    %p94 = scmp.ne.s32.totalorder %s89, %s91
    %p95 = scmp.eq.s32.totalorder %s13, 0
    %p96 = por %p94, %p95
    %p97 = scmp.ne.s32.totalorder %s89, %s91
    %p98 = scmp.eq.s32.totalorder %s18, 1
    %p99 = por %p97, %p98
    %p100 = scmp.ne.s32.totalorder %s91, %s92
    %p101 = scmp.eq.s32.totalorder %s18, 0
    %p102 = por %p100, %p101
    %p103 = scmp.ne.s32.totalorder %s91, %s92
    %p104 = scmp.eq.s32.totalorder %s19, 1
    %p105 = por %p103, %p104
    %p107 = scmp.ne.s32.totalorder %s92, %s106
    %p108 = scmp.eq.s32.totalorder %s19, 0
    %p109 = por %p107, %p108
    %s111 = sadd.s32 %s110, 1
    %p114 = scmp.eq.s32.totalorder %s13, 1
    %p115 = scmp.ne.s32.totalorder %s110, %s112
    %p116 = scmp.eq.s32.totalorder %s13, 0
    %p117 = por %p115, %p116
    %p118 = scmp.ne.s32.totalorder %s110, %s112
    %p119 = scmp.eq.s32.totalorder %s18, 1
    %p120 = por %p118, %p119
    %p121 = scmp.ne.s32.totalorder %s112, %s113
    %p122 = scmp.eq.s32.totalorder %s18, 0
    %p123 = por %p121, %p122
    %p124 = scmp.ne.s32.totalorder %s112, %s113
    %p125 = scmp.eq.s32.totalorder %s19, 1
    %p126 = por %p124, %p125
    %p128 = scmp.ne.s32.totalorder %s113, %s127
    %p129 = scmp.eq.s32.totalorder %s19, 0
    %p130 = por %p128, %p129
    %s132 = sadd.s32 %s131, 1
    %p135 = scmp.eq.s32.totalorder %s13, 1
    %p136 = scmp.ne.s32.totalorder %s131, %s133
    %p137 = scmp.eq.s32.totalorder %s13, 0
    %p138 = por %p136, %p137
    %p139 = scmp.ne.s32.totalorder %s131, %s133
    %p140 = scmp.eq.s32.totalorder %s18, 1
    %p141 = por %p139, %p140
    %p142 = scmp.ne.s32.totalorder %s133, %s134
    %p143 = scmp.eq.s32.totalorder %s18, 0
    %p144 = por %p142, %p143
    %p145 = scmp.ne.s32.totalorder %s133, %s134
    %p146 = scmp.eq.s32.totalorder %s19, 1
    %p147 = por %p145, %p146
    %p149 = scmp.ne.s32.totalorder %s134, %s148
    %p150 = scmp.eq.s32.totalorder %s19, 0
    %p151 = por %p149, %p150
    %s153 = sadd.s32 %s152, 1
    %p156 = scmp.eq.s32.totalorder %s13, 1
    %p157 = scmp.ne.s32.totalorder %s152, %s154
    %p158 = scmp.eq.s32.totalorder %s13, 0
    %p159 = por %p157, %p158
    %p160 = scmp.ne.s32.totalorder %s152, %s154
    %p161 = scmp.eq.s32.totalorder %s18, 1
    %p162 = por %p160, %p161
    %p163 = scmp.ne.s32.totalorder %s154, %s155
    %p164 = scmp.eq.s32.totalorder %s18, 0
    %p165 = por %p163, %p164
    %p166 = scmp.ne.s32.totalorder %s154, %s155
    %p167 = scmp.eq.s32.totalorder %s19, 1
    %p168 = por %p166, %p167
    %p170 = scmp.ne.s32.totalorder %s155, %s169
    %p171 = scmp.eq.s32.totalorder %s19, 0
    %p172 = por %p170, %p171
    %s173 = ssub.s32 %s13, %s20
    %p174 = scmp.eq.s32.totalorder %s173, 0
    %s176 = sadd.s32 %s175, 1
    %s177 = scalar_select %p174, %s175, %s176
    %p180 = pneg %p174
    %p181 = scmp.eq.s32.totalorder %s13, 1
    %p182 = por %p180, %p181
    %p183 = scmp.ne.s32.totalorder %s175, %s178
    %p184 = scmp.eq.s32.totalorder %s13, 0
    %p185 = por %p183, %p184
    %p186 = scmp.ne.s32.totalorder %s175, %s178
    %p187 = scmp.eq.s32.totalorder %s18, 1
    %p188 = por %p186, %p187
    %p189 = scmp.ne.s32.totalorder %s178, %s179
    %p190 = scmp.eq.s32.totalorder %s18, 0
    %p191 = por %p189, %p190
    %p192 = scmp.ne.s32.totalorder %s178, %s179
    %p193 = scmp.eq.s32.totalorder %s19, 1
    %p194 = por %p192, %p193
    %p196 = scmp.ne.s32.totalorder %s179, %s195
    %p197 = scmp.eq.s32.totalorder %s19, 0
    %p198 = por %p196, %p197
    %p199 = scmp.le.s32.totalorder 1, %s13
    %p200 = scmp.lt.s32.totalorder %s13, 3
    %p201 = pnand %p199, %p200
    %p202 = pneg %p201
    // Predicated region
    $region9: #{tpu_custom_call.1} parent=5 // pred_check
      _
    $region10: #{tpu_custom_call.1} parent=5 // pred_check_branch
      %204 = sbr.rel (%p201) target = $region12
    $region11: #{tpu_custom_call.1} parent=5 // pred_region
      %s205 = ssub.s32 %s13, 1
      // Predicated region
      $region13: #{tpu_custom_call.1} parent=11 // pred_check
        %p206 = pneg %p60
      $region14: #{tpu_custom_call.1} parent=11 // pred_check_branch
        %208 = sbr.rel (%p206) target = $region16
      $region15: #{tpu_custom_call.1} parent=11 // pred_region
        _
      $region16: #{tpu_custom_call.1} parent=11 // pred_fallthru
        _
      // Predicated region
      $region17: #{tpu_custom_call.1} parent=11 // pred_check
        %p209 = pneg %p81
      $region18: #{tpu_custom_call.1} parent=11 // pred_check_branch
        %211 = sbr.rel (%p209) target = $region20
      $region19: #{tpu_custom_call.1} parent=11 // pred_region
        _
      $region20: #{tpu_custom_call.1} parent=11 // pred_fallthru
        _
      // Predicated region
      $region21: #{tpu_custom_call.1} parent=11 // pred_check
        %p212 = pneg %p102
      $region22: #{tpu_custom_call.1} parent=11 // pred_check_branch
        %214 = sbr.rel (%p212) target = $region24
      $region23: #{tpu_custom_call.1} parent=11 // pred_region
        _
      $region24: #{tpu_custom_call.1} parent=11 // pred_fallthru
        _
      // Predicated region
      $region25: #{tpu_custom_call.1} parent=11 // pred_check
        %p215 = pneg %p123
      $region26: #{tpu_custom_call.1} parent=11 // pred_check_branch
        %217 = sbr.rel (%p215) target = $region28
      $region27: #{tpu_custom_call.1} parent=11 // pred_region
        _
      $region28: #{tpu_custom_call.1} parent=11 // pred_fallthru
        _
      // Predicated region
      $region29: #{tpu_custom_call.1} parent=11 // pred_check
        %p218 = pneg %p144
      $region30: #{tpu_custom_call.1} parent=11 // pred_check_branch
        %220 = sbr.rel (%p218) target = $region32
      $region31: #{tpu_custom_call.1} parent=11 // pred_region
        _
      $region32: #{tpu_custom_call.1} parent=11 // pred_fallthru
        _
      // Predicated region
      $region33: #{tpu_custom_call.1} parent=11 // pred_check
        %p221 = pneg %p165
      $region34: #{tpu_custom_call.1} parent=11 // pred_check_branch
        %223 = sbr.rel (%p221) target = $region36
      $region35: #{tpu_custom_call.1} parent=11 // pred_region
        _
      $region36: #{tpu_custom_call.1} parent=11 // pred_fallthru
        _
    $region12: #{tpu_custom_call.1} parent=5 // pred_fallthru
      _
    %p224 = scmp.lt.s32.totalorder %s13, 2
    // Predicated region
    $region37: #{tpu_custom_call.1} parent=5 // pred_check
      %p225 = pneg %p224
    $region38: #{tpu_custom_call.1} parent=5 // pred_check_branch
      %227 = sbr.rel (%p225) target = $region40
    $region39: #{tpu_custom_call.1} parent=5 // pred_region
      // Predicated region
      $region41: #{tpu_custom_call.1} parent=39 // pred_check
        %p228 = pneg %p33
      $region42: #{tpu_custom_call.1} parent=39 // pred_check_branch
        %230 = sbr.rel (%p228) target = $region44
      $region43: #{tpu_custom_call.1} parent=39 // pred_region
        %p231 = scmp.lt.s32.totalorder %s13, 1
        %s232 = scalar_select %p231, %s13, 1
        %s233 = smul.addr %s232, 72
        %s234 = smul.addr %s233, 8
        %s235 = scalar_lea.vmem %s0, %s234
      $region44: #{tpu_custom_call.1} parent=39 // pred_fallthru
        _
    $region40: #{tpu_custom_call.1} parent=5 // pred_fallthru
      _
    %p236 = scmp.le.s32.totalorder 1, %s13
    %p237 = scmp.lt.s32.totalorder %s13, 3
    %p238 = pnand %p236, %p237
    %p239 = pneg %p238
    // Predicated region
    $region45: #{tpu_custom_call.1} parent=5 // pred_check
      _
    $region46: #{tpu_custom_call.1} parent=5 // pred_check_branch
      %241 = sbr.rel (%p238) target = $region48
    $region47: #{tpu_custom_call.1} parent=5 // pred_region
      %s242 = ssub.s32 %s13, 1
      %p243 = scmp.lt.s32.totalorder %s18, 1
      %s244 = scalar_select %p243, %s18, 1
      %s245 = smul.addr %s244, 72
      %s246 = smul.addr %s245, 8
      %s247 = scalar_lea.vmem %s0, %s246
      %p248 = pneg %p39
      %p249 = pneg %p36
      %p250 = pneg %p60
      %p251 = pneg %p57
      %p252 = pneg %p81
      %p253 = pneg %p78
      %p254 = pneg %p102
      %p255 = pneg %p99
      %p256 = pneg %p123
      %p257 = pneg %p120
      %p258 = pneg %p144
      %p259 = pneg %p141
      %p260 = pneg %p165
      %p261 = pneg %p162
      %p262 = pneg %p191
      %p263 = pneg %p188
      %p264 = scmp.lt.s32.totalorder %s18, 1
      %s265 = scalar_select %p264, %s18, 1
      %s266 = smul.addr %s265, 32
      %s267 = smul.addr %s266, 8
      %s268 = scalar_lea.vmem %s7, %s267
      %p269 = scmp.lt.s32.totalorder %s18, 1
      %s270 = scalar_select %p269, %s18, 1
      %s271 = smul.addr %s270, 72
      %s272 = smul.addr %s271, 8
      %s273 = scalar_lea.vmem %s0, %s272
      %p274 = scmp.lt.s32.totalorder %s18, 1
      %s275 = scalar_select %p274, %s18, 1
      %s276 = smul.addr %s275, 32
      %s277 = smul.addr %s276, 8
      %s278 = scalar_lea.vmem %s7, %s277
      %s279 = scalar_lea.vmem %s273, 32
      %v280 = vld [vmem:[%s279 + $0x8] sm:$0xff]
      %v281 = vld [vmem:[%s279 + $0x10] sm:$0xff]
      %v282 = vld [vmem:[%s279 + $0x28] sm:$0xff]
      %v283 = vld [vmem:[%s279 + $0x30] sm:$0xff]
      %v284 = vld [vmem:[%s279 + $0x48] sm:$0xff]
      %v285 = vld [vmem:[%s279 + $0x50] sm:$0xff]
      %v286 = vld [vmem:[%s279 + $0x68] sm:$0xff]
      %v287 = vld [vmem:[%s279 + $0x70] sm:$0xff]
      %v288 = vld [vmem:[%s279 + $0x88] sm:$0xff]
      %v289 = vld [vmem:[%s279 + $0x90] sm:$0xff]
      %v290 = vld [vmem:[%s279 + $0xa8] sm:$0xff]
      %v291 = vld [vmem:[%s279 + $0xb0] sm:$0xff]
      %v292 = vld [vmem:[%s279 + $0xc8] sm:$0xff]
      %v293 = vld [vmem:[%s279 + $0xd0] sm:$0xff]
      %v294 = vld [vmem:[%s279 + $0xe8] sm:$0xff]
      %v295 = vld [vmem:[%s279 + $0xf0] sm:$0xff]
      %v296 = vld [vmem:[%s279 + $0x108] sm:$0xff]
      %v297 = vld [vmem:[%s279 + $0x110] sm:$0xff]
      %v298 = vld [vmem:[%s279 + $0x128] sm:$0xff]
      %v299 = vld [vmem:[%s279 + $0x130] sm:$0xff]
      %v300 = vld [vmem:[%s279 + $0x148] sm:$0xff]
      %v301 = vld [vmem:[%s279 + $0x150] sm:$0xff]
      %v302 = vld [vmem:[%s279 + $0x168] sm:$0xff]
      %v303 = vld [vmem:[%s279 + $0x170] sm:$0xff]
      %v304 = vld [vmem:[%s279 + $0x188] sm:$0xff]
      %v305 = vld [vmem:[%s279 + $0x190] sm:$0xff]
      %v306 = vld [vmem:[%s279 + $0x1a8] sm:$0xff]
      %v307 = vld [vmem:[%s279 + $0x1b0] sm:$0xff]
      %v308 = vld [vmem:[%s279 + $0x1c8] sm:$0xff]
      %v309 = vld [vmem:[%s279 + $0x1d0] sm:$0xff]
      %v310 = vld [vmem:[%s279 + $0x1e8] sm:$0xff]
      %v311 = vld [vmem:[%s279 + $0x1f0] sm:$0xff]
      %v312 = vld [vmem:[%s273 + $0x7] sm:$0xff]
      %v313 = vld [vmem:[%s273 + $0xf] sm:$0xff]
      %v314 = vld [vmem:[%s273 + $0x27] sm:$0xff]
      %v315 = vld [vmem:[%s273 + $0x2f] sm:$0xff]
      %v316 = vld [vmem:[%s273 + $0x47] sm:$0xff]
      %v317 = vld [vmem:[%s273 + $0x4f] sm:$0xff]
      %v318 = vld [vmem:[%s273 + $0x67] sm:$0xff]
      %v319 = vld [vmem:[%s273 + $0x6f] sm:$0xff]
      %v320 = vld [vmem:[%s273 + $0x87] sm:$0xff]
      %v321 = vld [vmem:[%s273 + $0x8f] sm:$0xff]
      %v322 = vld [vmem:[%s273 + $0xa7] sm:$0xff]
      %v323 = vld [vmem:[%s273 + $0xaf] sm:$0xff]
      %v324 = vld [vmem:[%s273 + $0xc7] sm:$0xff]
      %v325 = vld [vmem:[%s273 + $0xcf] sm:$0xff]
      %v326 = vld [vmem:[%s273 + $0xe7] sm:$0xff]
      %v327 = vld [vmem:[%s273 + $0xef] sm:$0xff]
      %v328 = vld [vmem:[%s273 + $0x107] sm:$0xff]
      %v329 = vld [vmem:[%s273 + $0x10f] sm:$0xff]
      %v330 = vld [vmem:[%s273 + $0x127] sm:$0xff]
      %v331 = vld [vmem:[%s273 + $0x12f] sm:$0xff]
      %v332 = vld [vmem:[%s273 + $0x147] sm:$0xff]
      %v333 = vld [vmem:[%s273 + $0x14f] sm:$0xff]
      %v334 = vld [vmem:[%s273 + $0x167] sm:$0xff]
      %v335 = vld [vmem:[%s273 + $0x16f] sm:$0xff]
      %v336 = vld [vmem:[%s273 + $0x187] sm:$0xff]
      %v337 = vld [vmem:[%s273 + $0x18f] sm:$0xff]
      %v338 = vld [vmem:[%s273 + $0x1a7] sm:$0xff]
      %v339 = vld [vmem:[%s273 + $0x1af] sm:$0xff]
      %v340 = vld [vmem:[%s273 + $0x1c7] sm:$0xff]
      %v341 = vld [vmem:[%s273 + $0x1cf] sm:$0xff]
      %v342 = vld [vmem:[%s273 + $0x1e7] sm:$0xff]
      %v343 = vld [vmem:[%s273 + $0x1ef] sm:$0xff]
      %344 = vst [vmem:[#allocation2] sm:$0xff] %v312
      %345 = vst [vmem:[#allocation2 + $0x48] sm:$0xff] %v313
      %346 = vst [vmem:[#allocation2 + $0x90] sm:$0xff] %v314
      %347 = vst [vmem:[#allocation2 + $0xd8] sm:$0xff] %v315
      %348 = vst [vmem:[#allocation2 + $0x120] sm:$0xff] %v316
      %349 = vst [vmem:[#allocation2 + $0x168] sm:$0xff] %v317
      %350 = vst [vmem:[#allocation2 + $0x1b0] sm:$0xff] %v318
      %351 = vst [vmem:[#allocation2 + $0x1f8] sm:$0xff] %v319
      %352 = vst [vmem:[#allocation2 + $0x240] sm:$0xff] %v320
      %353 = vst [vmem:[#allocation2 + $0x288] sm:$0xff] %v321
      %354 = vst [vmem:[#allocation2 + $0x2d0] sm:$0xff] %v322
      %355 = vst [vmem:[#allocation2 + $0x318] sm:$0xff] %v323
      %356 = vst [vmem:[#allocation2 + $0x360] sm:$0xff] %v324
      %357 = vst [vmem:[#allocation2 + $0x3a8] sm:$0xff] %v325
      %358 = vst [vmem:[#allocation2 + $0x3f0] sm:$0xff] %v326
      %359 = vst [vmem:[#allocation2 + $0x438] sm:$0xff] %v327
      %360 = vst [vmem:[#allocation2 + $0x480] sm:$0xff] %v328
      %361 = vst [vmem:[#allocation2 + $0x4c8] sm:$0xff] %v329
      %362 = vst [vmem:[#allocation2 + $0x510] sm:$0xff] %v330
      %363 = vst [vmem:[#allocation2 + $0x558] sm:$0xff] %v331
      %364 = vst [vmem:[#allocation2 + $0x5a0] sm:$0xff] %v332
      %365 = vst [vmem:[#allocation2 + $0x5e8] sm:$0xff] %v333
      %366 = vst [vmem:[#allocation2 + $0x630] sm:$0xff] %v334
      %367 = vst [vmem:[#allocation2 + $0x678] sm:$0xff] %v335
      %368 = vst [vmem:[#allocation2 + $0x6c0] sm:$0xff] %v336
      %369 = vst [vmem:[#allocation2 + $0x708] sm:$0xff] %v337
      %370 = vst [vmem:[#allocation2 + $0x750] sm:$0xff] %v338
      %371 = vst [vmem:[#allocation2 + $0x798] sm:$0xff] %v339
      %372 = vst [vmem:[#allocation2 + $0x7e0] sm:$0xff] %v340
      %373 = vst [vmem:[#allocation2 + $0x828] sm:$0xff] %v341
      %374 = vst [vmem:[#allocation2 + $0x870] sm:$0xff] %v342
      %375 = vst [vmem:[#allocation2 + $0x8b8] sm:$0xff] %v343
      %v376 = vld [vmem:[%s273 + $0x8] sm:$0xff]
      %v377 = vld [vmem:[%s273 + $0x10] sm:$0xff]
      %v378 = vld [vmem:[%s273 + $0x28] sm:$0xff]
      %v379 = vld [vmem:[%s273 + $0x30] sm:$0xff]
      %v380 = vld [vmem:[%s273 + $0x48] sm:$0xff]
      %v381 = vld [vmem:[%s273 + $0x50] sm:$0xff]
      %v382 = vld [vmem:[%s273 + $0x68] sm:$0xff]
      %v383 = vld [vmem:[%s273 + $0x70] sm:$0xff]
      %v384 = vld [vmem:[%s273 + $0x88] sm:$0xff]
      %v385 = vld [vmem:[%s273 + $0x90] sm:$0xff]
      %v386 = vld [vmem:[%s273 + $0xa8] sm:$0xff]
      %v387 = vld [vmem:[%s273 + $0xb0] sm:$0xff]
      %v388 = vld [vmem:[%s273 + $0xc8] sm:$0xff]
      %v389 = vld [vmem:[%s273 + $0xd0] sm:$0xff]
      %v390 = vld [vmem:[%s273 + $0xe8] sm:$0xff]
      %v391 = vld [vmem:[%s273 + $0xf0] sm:$0xff]
      %v392 = vld [vmem:[%s273 + $0x108] sm:$0xff]
      %v393 = vld [vmem:[%s273 + $0x110] sm:$0xff]
      %v394 = vld [vmem:[%s273 + $0x128] sm:$0xff]
      %v395 = vld [vmem:[%s273 + $0x130] sm:$0xff]
      %v396 = vld [vmem:[%s273 + $0x148] sm:$0xff]
      %v397 = vld [vmem:[%s273 + $0x150] sm:$0xff]
      %v398 = vld [vmem:[%s273 + $0x168] sm:$0xff]
      %v399 = vld [vmem:[%s273 + $0x170] sm:$0xff]
      %v400 = vld [vmem:[%s273 + $0x188] sm:$0xff]
      %v401 = vld [vmem:[%s273 + $0x190] sm:$0xff]
      %v402 = vld [vmem:[%s273 + $0x1a8] sm:$0xff]
      %v403 = vld [vmem:[%s273 + $0x1b0] sm:$0xff]
      %v404 = vld [vmem:[%s273 + $0x1c8] sm:$0xff]
      %v405 = vld [vmem:[%s273 + $0x1d0] sm:$0xff]
      %v406 = vld [vmem:[%s273 + $0x1e8] sm:$0xff]
      %v407 = vld [vmem:[%s273 + $0x1f0] sm:$0xff]
      %408 = vst [vmem:[#allocation2 + $0x8] sm:$0xff] %v376
      %409 = vst [vmem:[#allocation2 + $0x50] sm:$0xff] %v377
      %410 = vst [vmem:[#allocation2 + $0x98] sm:$0xff] %v378
      %411 = vst [vmem:[#allocation2 + $0xe0] sm:$0xff] %v379
      %412 = vst [vmem:[#allocation2 + $0x128] sm:$0xff] %v380
      %413 = vst [vmem:[#allocation2 + $0x170] sm:$0xff] %v381
      %414 = vst [vmem:[#allocation2 + $0x1b8] sm:$0xff] %v382
      %415 = vst [vmem:[#allocation2 + $0x200] sm:$0xff] %v383
      %416 = vst [vmem:[#allocation2 + $0x248] sm:$0xff] %v384
      %417 = vst [vmem:[#allocation2 + $0x290] sm:$0xff] %v385
      %418 = vst [vmem:[#allocation2 + $0x2d8] sm:$0xff] %v386
      %419 = vst [vmem:[#allocation2 + $0x320] sm:$0xff] %v387
      %420 = vst [vmem:[#allocation2 + $0x368] sm:$0xff] %v388
      %421 = vst [vmem:[#allocation2 + $0x3b0] sm:$0xff] %v389
      %422 = vst [vmem:[#allocation2 + $0x3f8] sm:$0xff] %v390
      %423 = vst [vmem:[#allocation2 + $0x440] sm:$0xff] %v391
      %424 = vst [vmem:[#allocation2 + $0x488] sm:$0xff] %v392
      %425 = vst [vmem:[#allocation2 + $0x4d0] sm:$0xff] %v393
      %426 = vst [vmem:[#allocation2 + $0x518] sm:$0xff] %v394
      %427 = vst [vmem:[#allocation2 + $0x560] sm:$0xff] %v395
      %428 = vst [vmem:[#allocation2 + $0x5a8] sm:$0xff] %v396
      %429 = vst [vmem:[#allocation2 + $0x5f0] sm:$0xff] %v397
      %430 = vst [vmem:[#allocation2 + $0x638] sm:$0xff] %v398
      %431 = vst [vmem:[#allocation2 + $0x680] sm:$0xff] %v399
      %432 = vst [vmem:[#allocation2 + $0x6c8] sm:$0xff] %v400
      %433 = vst [vmem:[#allocation2 + $0x710] sm:$0xff] %v401
      %434 = vst [vmem:[#allocation2 + $0x758] sm:$0xff] %v402
      %435 = vst [vmem:[#allocation2 + $0x7a0] sm:$0xff] %v403
      %436 = vst [vmem:[#allocation2 + $0x7e8] sm:$0xff] %v404
      %437 = vst [vmem:[#allocation2 + $0x830] sm:$0xff] %v405
      %438 = vst [vmem:[#allocation2 + $0x878] sm:$0xff] %v406
      %439 = vst [vmem:[#allocation2 + $0x8c0] sm:$0xff] %v407
      %v440 = vld [vmem:[%s273 + $0x9] sm:$0xff]
      %v441 = vld [vmem:[%s273 + $0x11] sm:$0xff]
      %v442 = vld [vmem:[%s273 + $0x29] sm:$0xff]
      %v443 = vld [vmem:[%s273 + $0x31] sm:$0xff]
      %v444 = vld [vmem:[%s273 + $0x49] sm:$0xff]
      %v445 = vld [vmem:[%s273 + $0x51] sm:$0xff]
      %v446 = vld [vmem:[%s273 + $0x69] sm:$0xff]
      %v447 = vld [vmem:[%s273 + $0x71] sm:$0xff]
      %v448 = vld [vmem:[%s273 + $0x89] sm:$0xff]
      %v449 = vld [vmem:[%s273 + $0x91] sm:$0xff]
      %v450 = vld [vmem:[%s273 + $0xa9] sm:$0xff]
      %v451 = vld [vmem:[%s273 + $0xb1] sm:$0xff]
      %v452 = vld [vmem:[%s273 + $0xc9] sm:$0xff]
      %v453 = vld [vmem:[%s273 + $0xd1] sm:$0xff]
      %v454 = vld [vmem:[%s273 + $0xe9] sm:$0xff]
      %v455 = vld [vmem:[%s273 + $0xf1] sm:$0xff]
      %v456 = vld [vmem:[%s273 + $0x109] sm:$0xff]
      %v457 = vld [vmem:[%s273 + $0x111] sm:$0xff]
      %v458 = vld [vmem:[%s273 + $0x129] sm:$0xff]
      %v459 = vld [vmem:[%s273 + $0x131] sm:$0xff]
      %v460 = vld [vmem:[%s273 + $0x149] sm:$0xff]
      %v461 = vld [vmem:[%s273 + $0x151] sm:$0xff]
      %v462 = vld [vmem:[%s273 + $0x169] sm:$0xff]
      %v463 = vld [vmem:[%s273 + $0x171] sm:$0xff]
      %v464 = vld [vmem:[%s273 + $0x189] sm:$0xff]
      %v465 = vld [vmem:[%s273 + $0x191] sm:$0xff]
      %v466 = vld [vmem:[%s273 + $0x1a9] sm:$0xff]
      %v467 = vld [vmem:[%s273 + $0x1b1] sm:$0xff]
      %v468 = vld [vmem:[%s273 + $0x1c9] sm:$0xff]
      %v469 = vld [vmem:[%s273 + $0x1d1] sm:$0xff]
      %v470 = vld [vmem:[%s273 + $0x1e9] sm:$0xff]
      %v471 = vld [vmem:[%s273 + $0x1f1] sm:$0xff]
      %472 = vst [vmem:[#allocation2 + $0x10] sm:$0xff] %v440
      %473 = vst [vmem:[#allocation2 + $0x58] sm:$0xff] %v441
      %474 = vst [vmem:[#allocation2 + $0xa0] sm:$0xff] %v442
      %475 = vst [vmem:[#allocation2 + $0xe8] sm:$0xff] %v443
      %476 = vst [vmem:[#allocation2 + $0x130] sm:$0xff] %v444
      %477 = vst [vmem:[#allocation2 + $0x178] sm:$0xff] %v445
      %478 = vst [vmem:[#allocation2 + $0x1c0] sm:$0xff] %v446
      %479 = vst [vmem:[#allocation2 + $0x208] sm:$0xff] %v447
      %480 = vst [vmem:[#allocation2 + $0x250] sm:$0xff] %v448
      %481 = vst [vmem:[#allocation2 + $0x298] sm:$0xff] %v449
      %482 = vst [vmem:[#allocation2 + $0x2e0] sm:$0xff] %v450
      %483 = vst [vmem:[#allocation2 + $0x328] sm:$0xff] %v451
      %484 = vst [vmem:[#allocation2 + $0x370] sm:$0xff] %v452
      %485 = vst [vmem:[#allocation2 + $0x3b8] sm:$0xff] %v453
      %486 = vst [vmem:[#allocation2 + $0x400] sm:$0xff] %v454
      %487 = vst [vmem:[#allocation2 + $0x448] sm:$0xff] %v455
      %488 = vst [vmem:[#allocation2 + $0x490] sm:$0xff] %v456
      %489 = vst [vmem:[#allocation2 + $0x4d8] sm:$0xff] %v457
      %490 = vst [vmem:[#allocation2 + $0x520] sm:$0xff] %v458
      %491 = vst [vmem:[#allocation2 + $0x568] sm:$0xff] %v459
      %492 = vst [vmem:[#allocation2 + $0x5b0] sm:$0xff] %v460
      %493 = vst [vmem:[#allocation2 + $0x5f8] sm:$0xff] %v461
      %494 = vst [vmem:[#allocation2 + $0x640] sm:$0xff] %v462
      %495 = vst [vmem:[#allocation2 + $0x688] sm:$0xff] %v463
      %496 = vst [vmem:[#allocation2 + $0x6d0] sm:$0xff] %v464
      %497 = vst [vmem:[#allocation2 + $0x718] sm:$0xff] %v465
      %498 = vst [vmem:[#allocation2 + $0x760] sm:$0xff] %v466
      %499 = vst [vmem:[#allocation2 + $0x7a8] sm:$0xff] %v467
      %500 = vst [vmem:[#allocation2 + $0x7f0] sm:$0xff] %v468
      %501 = vst [vmem:[#allocation2 + $0x838] sm:$0xff] %v469
      %502 = vst [vmem:[#allocation2 + $0x880] sm:$0xff] %v470
      %503 = vst [vmem:[#allocation2 + $0x8c8] sm:$0xff] %v471
      %v504 = vld [vmem:[%s279 + $0x7] sm:$0xff]
      %v505 = vld [vmem:[%s279 + $0xf] sm:$0xff]
      %v506 = vld [vmem:[%s279 + $0x27] sm:$0xff]
      %v507 = vld [vmem:[%s279 + $0x2f] sm:$0xff]
      %v508 = vld [vmem:[%s279 + $0x47] sm:$0xff]
      %v509 = vld [vmem:[%s279 + $0x4f] sm:$0xff]
      %v510 = vld [vmem:[%s279 + $0x67] sm:$0xff]
      %v511 = vld [vmem:[%s279 + $0x6f] sm:$0xff]
      %v512 = vld [vmem:[%s279 + $0x87] sm:$0xff]
      %v513 = vld [vmem:[%s279 + $0x8f] sm:$0xff]
      %v514 = vld [vmem:[%s279 + $0xa7] sm:$0xff]
      %v515 = vld [vmem:[%s279 + $0xaf] sm:$0xff]
      %v516 = vld [vmem:[%s279 + $0xc7] sm:$0xff]
      %v517 = vld [vmem:[%s279 + $0xcf] sm:$0xff]
      %v518 = vld [vmem:[%s279 + $0xe7] sm:$0xff]
      %v519 = vld [vmem:[%s279 + $0xef] sm:$0xff]
      %v520 = vld [vmem:[%s279 + $0x107] sm:$0xff]
      %v521 = vld [vmem:[%s279 + $0x10f] sm:$0xff]
      %v522 = vld [vmem:[%s279 + $0x127] sm:$0xff]
      %v523 = vld [vmem:[%s279 + $0x12f] sm:$0xff]
      %v524 = vld [vmem:[%s279 + $0x147] sm:$0xff]
      %v525 = vld [vmem:[%s279 + $0x14f] sm:$0xff]
      %v526 = vld [vmem:[%s279 + $0x167] sm:$0xff]
      %v527 = vld [vmem:[%s279 + $0x16f] sm:$0xff]
      %v528 = vld [vmem:[%s279 + $0x187] sm:$0xff]
      %v529 = vld [vmem:[%s279 + $0x18f] sm:$0xff]
      %v530 = vld [vmem:[%s279 + $0x1a7] sm:$0xff]
      %v531 = vld [vmem:[%s279 + $0x1af] sm:$0xff]
      %v532 = vld [vmem:[%s279 + $0x1c7] sm:$0xff]
      %v533 = vld [vmem:[%s279 + $0x1cf] sm:$0xff]
      %v534 = vld [vmem:[%s279 + $0x1e7] sm:$0xff]
      %v535 = vld [vmem:[%s279 + $0x1ef] sm:$0xff]
      %536 = vst [vmem:[#allocation2 + $0x18] sm:$0xff] %v504
      %537 = vst [vmem:[#allocation2 + $0x60] sm:$0xff] %v505
      %538 = vst [vmem:[#allocation2 + $0xa8] sm:$0xff] %v506
      %539 = vst [vmem:[#allocation2 + $0xf0] sm:$0xff] %v507
      %540 = vst [vmem:[#allocation2 + $0x138] sm:$0xff] %v508
      %541 = vst [vmem:[#allocation2 + $0x180] sm:$0xff] %v509
      %542 = vst [vmem:[#allocation2 + $0x1c8] sm:$0xff] %v510
      %543 = vst [vmem:[#allocation2 + $0x210] sm:$0xff] %v511
      %544 = vst [vmem:[#allocation2 + $0x258] sm:$0xff] %v512
      %545 = vst [vmem:[#allocation2 + $0x2a0] sm:$0xff] %v513
      %546 = vst [vmem:[#allocation2 + $0x2e8] sm:$0xff] %v514
      %547 = vst [vmem:[#allocation2 + $0x330] sm:$0xff] %v515
      %548 = vst [vmem:[#allocation2 + $0x378] sm:$0xff] %v516
      %549 = vst [vmem:[#allocation2 + $0x3c0] sm:$0xff] %v517
      %550 = vst [vmem:[#allocation2 + $0x408] sm:$0xff] %v518
      %551 = vst [vmem:[#allocation2 + $0x450] sm:$0xff] %v519
      %552 = vst [vmem:[#allocation2 + $0x498] sm:$0xff] %v520
      %553 = vst [vmem:[#allocation2 + $0x4e0] sm:$0xff] %v521
      %554 = vst [vmem:[#allocation2 + $0x528] sm:$0xff] %v522
      %555 = vst [vmem:[#allocation2 + $0x570] sm:$0xff] %v523
      %556 = vst [vmem:[#allocation2 + $0x5b8] sm:$0xff] %v524
      %557 = vst [vmem:[#allocation2 + $0x600] sm:$0xff] %v525
      %558 = vst [vmem:[#allocation2 + $0x648] sm:$0xff] %v526
      %559 = vst [vmem:[#allocation2 + $0x690] sm:$0xff] %v527
      %560 = vst [vmem:[#allocation2 + $0x6d8] sm:$0xff] %v528
      %561 = vst [vmem:[#allocation2 + $0x720] sm:$0xff] %v529
      %562 = vst [vmem:[#allocation2 + $0x768] sm:$0xff] %v530
      %563 = vst [vmem:[#allocation2 + $0x7b0] sm:$0xff] %v531
      %564 = vst [vmem:[#allocation2 + $0x7f8] sm:$0xff] %v532
      %565 = vst [vmem:[#allocation2 + $0x840] sm:$0xff] %v533
      %566 = vst [vmem:[#allocation2 + $0x888] sm:$0xff] %v534
      %567 = vst [vmem:[#allocation2 + $0x8d0] sm:$0xff] %v535
      %v568 = vld [vmem:[%s279 + $0x8] sm:$0xff]
      %v569 = vld [vmem:[%s279 + $0x10] sm:$0xff]
      %v570 = vld [vmem:[%s279 + $0x28] sm:$0xff]
      %v571 = vld [vmem:[%s279 + $0x30] sm:$0xff]
      %v572 = vld [vmem:[%s279 + $0x48] sm:$0xff]
      %v573 = vld [vmem:[%s279 + $0x50] sm:$0xff]
      %v574 = vld [vmem:[%s279 + $0x68] sm:$0xff]
      %v575 = vld [vmem:[%s279 + $0x70] sm:$0xff]
      %v576 = vld [vmem:[%s279 + $0x88] sm:$0xff]
      %v577 = vld [vmem:[%s279 + $0x90] sm:$0xff]
      %v578 = vld [vmem:[%s279 + $0xa8] sm:$0xff]
      %v579 = vld [vmem:[%s279 + $0xb0] sm:$0xff]
      %v580 = vld [vmem:[%s279 + $0xc8] sm:$0xff]
      %v581 = vld [vmem:[%s279 + $0xd0] sm:$0xff]
      %v582 = vld [vmem:[%s279 + $0xe8] sm:$0xff]
      %v583 = vld [vmem:[%s279 + $0xf0] sm:$0xff]
      %v584 = vld [vmem:[%s279 + $0x108] sm:$0xff]
      %v585 = vld [vmem:[%s279 + $0x110] sm:$0xff]
      %v586 = vld [vmem:[%s279 + $0x128] sm:$0xff]
      %v587 = vld [vmem:[%s279 + $0x130] sm:$0xff]
      %v588 = vld [vmem:[%s279 + $0x148] sm:$0xff]
      %v589 = vld [vmem:[%s279 + $0x150] sm:$0xff]
      %v590 = vld [vmem:[%s279 + $0x168] sm:$0xff]
      %v591 = vld [vmem:[%s279 + $0x170] sm:$0xff]
      %v592 = vld [vmem:[%s279 + $0x188] sm:$0xff]
      %v593 = vld [vmem:[%s279 + $0x190] sm:$0xff]
      %v594 = vld [vmem:[%s279 + $0x1a8] sm:$0xff]
      %v595 = vld [vmem:[%s279 + $0x1b0] sm:$0xff]
      %v596 = vld [vmem:[%s279 + $0x1c8] sm:$0xff]
      %v597 = vld [vmem:[%s279 + $0x1d0] sm:$0xff]
      %v598 = vld [vmem:[%s279 + $0x1e8] sm:$0xff]
      %v599 = vld [vmem:[%s279 + $0x1f0] sm:$0xff]
      %600 = vst [vmem:[#allocation2 + $0x20] sm:$0xff] %v568
      %601 = vst [vmem:[#allocation2 + $0x68] sm:$0xff] %v569
      %602 = vst [vmem:[#allocation2 + $0xb0] sm:$0xff] %v570
      %603 = vst [vmem:[#allocation2 + $0xf8] sm:$0xff] %v571
      %604 = vst [vmem:[#allocation2 + $0x140] sm:$0xff] %v572
      %605 = vst [vmem:[#allocation2 + $0x188] sm:$0xff] %v573
      %606 = vst [vmem:[#allocation2 + $0x1d0] sm:$0xff] %v574
      %607 = vst [vmem:[#allocation2 + $0x218] sm:$0xff] %v575
      %608 = vst [vmem:[#allocation2 + $0x260] sm:$0xff] %v576
      %609 = vst [vmem:[#allocation2 + $0x2a8] sm:$0xff] %v577
      %610 = vst [vmem:[#allocation2 + $0x2f0] sm:$0xff] %v578
      %611 = vst [vmem:[#allocation2 + $0x338] sm:$0xff] %v579
      %612 = vst [vmem:[#allocation2 + $0x380] sm:$0xff] %v580
      %613 = vst [vmem:[#allocation2 + $0x3c8] sm:$0xff] %v581
      %614 = vst [vmem:[#allocation2 + $0x410] sm:$0xff] %v582
      %615 = vst [vmem:[#allocation2 + $0x458] sm:$0xff] %v583
      %616 = vst [vmem:[#allocation2 + $0x4a0] sm:$0xff] %v584
      %617 = vst [vmem:[#allocation2 + $0x4e8] sm:$0xff] %v585
      %618 = vst [vmem:[#allocation2 + $0x530] sm:$0xff] %v586
      %619 = vst [vmem:[#allocation2 + $0x578] sm:$0xff] %v587
      %620 = vst [vmem:[#allocation2 + $0x5c0] sm:$0xff] %v588
      %621 = vst [vmem:[#allocation2 + $0x608] sm:$0xff] %v589
      %622 = vst [vmem:[#allocation2 + $0x650] sm:$0xff] %v590
      %623 = vst [vmem:[#allocation2 + $0x698] sm:$0xff] %v591
      %624 = vst [vmem:[#allocation2 + $0x6e0] sm:$0xff] %v592
      %625 = vst [vmem:[#allocation2 + $0x728] sm:$0xff] %v593
      %626 = vst [vmem:[#allocation2 + $0x770] sm:$0xff] %v594
      %627 = vst [vmem:[#allocation2 + $0x7b8] sm:$0xff] %v595
      %628 = vst [vmem:[#allocation2 + $0x800] sm:$0xff] %v596
      %629 = vst [vmem:[#allocation2 + $0x848] sm:$0xff] %v597
      %630 = vst [vmem:[#allocation2 + $0x890] sm:$0xff] %v598
      %631 = vst [vmem:[#allocation2 + $0x8d8] sm:$0xff] %v599
      %v632 = vld [vmem:[%s279 + $0x9] sm:$0xff]
      %v633 = vld [vmem:[%s279 + $0x11] sm:$0xff]
      %v634 = vld [vmem:[%s279 + $0x29] sm:$0xff]
      %v635 = vld [vmem:[%s279 + $0x31] sm:$0xff]
      %v636 = vld [vmem:[%s279 + $0x49] sm:$0xff]
      %v637 = vld [vmem:[%s279 + $0x51] sm:$0xff]
      %v638 = vld [vmem:[%s279 + $0x69] sm:$0xff]
      %v639 = vld [vmem:[%s279 + $0x71] sm:$0xff]
      %v640 = vld [vmem:[%s279 + $0x89] sm:$0xff]
      %v641 = vld [vmem:[%s279 + $0x91] sm:$0xff]
      %v642 = vld [vmem:[%s279 + $0xa9] sm:$0xff]
      %v643 = vld [vmem:[%s279 + $0xb1] sm:$0xff]
      %v644 = vld [vmem:[%s279 + $0xc9] sm:$0xff]
      %v645 = vld [vmem:[%s279 + $0xd1] sm:$0xff]
      %v646 = vld [vmem:[%s279 + $0xe9] sm:$0xff]
      %v647 = vld [vmem:[%s279 + $0xf1] sm:$0xff]
      %v648 = vld [vmem:[%s279 + $0x109] sm:$0xff]
      %v649 = vld [vmem:[%s279 + $0x111] sm:$0xff]
      %v650 = vld [vmem:[%s279 + $0x129] sm:$0xff]
      %v651 = vld [vmem:[%s279 + $0x131] sm:$0xff]
      %v652 = vld [vmem:[%s279 + $0x149] sm:$0xff]
      %v653 = vld [vmem:[%s279 + $0x151] sm:$0xff]
      %v654 = vld [vmem:[%s279 + $0x169] sm:$0xff]
      %v655 = vld [vmem:[%s279 + $0x171] sm:$0xff]
      %v656 = vld [vmem:[%s279 + $0x189] sm:$0xff]
      %v657 = vld [vmem:[%s279 + $0x191] sm:$0xff]
      %v658 = vld [vmem:[%s279 + $0x1a9] sm:$0xff]
      %v659 = vld [vmem:[%s279 + $0x1b1] sm:$0xff]
      %v660 = vld [vmem:[%s279 + $0x1c9] sm:$0xff]
      %v661 = vld [vmem:[%s279 + $0x1d1] sm:$0xff]
      %v662 = vld [vmem:[%s279 + $0x1e9] sm:$0xff]
      %v663 = vld [vmem:[%s279 + $0x1f1] sm:$0xff]
      %664 = vst [vmem:[#allocation2 + $0x28] sm:$0xff] %v632
      %665 = vst [vmem:[#allocation2 + $0x70] sm:$0xff] %v633
      %666 = vst [vmem:[#allocation2 + $0xb8] sm:$0xff] %v634
      %667 = vst [vmem:[#allocation2 + $0x100] sm:$0xff] %v635
      %668 = vst [vmem:[#allocation2 + $0x148] sm:$0xff] %v636
      %669 = vst [vmem:[#allocation2 + $0x190] sm:$0xff] %v637
      %670 = vst [vmem:[#allocation2 + $0x1d8] sm:$0xff] %v638
      %671 = vst [vmem:[#allocation2 + $0x220] sm:$0xff] %v639
      %672 = vst [vmem:[#allocation2 + $0x268] sm:$0xff] %v640
      %673 = vst [vmem:[#allocation2 + $0x2b0] sm:$0xff] %v641
      %674 = vst [vmem:[#allocation2 + $0x2f8] sm:$0xff] %v642
      %675 = vst [vmem:[#allocation2 + $0x340] sm:$0xff] %v643
      %676 = vst [vmem:[#allocation2 + $0x388] sm:$0xff] %v644
      %677 = vst [vmem:[#allocation2 + $0x3d0] sm:$0xff] %v645
      %678 = vst [vmem:[#allocation2 + $0x418] sm:$0xff] %v646
      %679 = vst [vmem:[#allocation2 + $0x460] sm:$0xff] %v647
      %680 = vst [vmem:[#allocation2 + $0x4a8] sm:$0xff] %v648
      %681 = vst [vmem:[#allocation2 + $0x4f0] sm:$0xff] %v649
      %682 = vst [vmem:[#allocation2 + $0x538] sm:$0xff] %v650
      %683 = vst [vmem:[#allocation2 + $0x580] sm:$0xff] %v651
      %684 = vst [vmem:[#allocation2 + $0x5c8] sm:$0xff] %v652
      %685 = vst [vmem:[#allocation2 + $0x610] sm:$0xff] %v653
      %686 = vst [vmem:[#allocation2 + $0x658] sm:$0xff] %v654
      %687 = vst [vmem:[#allocation2 + $0x6a0] sm:$0xff] %v655
      %688 = vst [vmem:[#allocation2 + $0x6e8] sm:$0xff] %v656
      %689 = vst [vmem:[#allocation2 + $0x730] sm:$0xff] %v657
      %690 = vst [vmem:[#allocation2 + $0x778] sm:$0xff] %v658
      %691 = vst [vmem:[#allocation2 + $0x7c0] sm:$0xff] %v659
      %692 = vst [vmem:[#allocation2 + $0x808] sm:$0xff] %v660
      %693 = vst [vmem:[#allocation2 + $0x850] sm:$0xff] %v661
      %694 = vst [vmem:[#allocation2 + $0x898] sm:$0xff] %v662
      %695 = vst [vmem:[#allocation2 + $0x8e0] sm:$0xff] %v663
      %s696 = scalar_lea.vmem %s273, 64
      %v697 = vld [vmem:[%s696 + $0x7] sm:$0xff]
      %v698 = vld [vmem:[%s696 + $0xf] sm:$0xff]
      %v699 = vld [vmem:[%s696 + $0x27] sm:$0xff]
      %v700 = vld [vmem:[%s696 + $0x2f] sm:$0xff]
      %v701 = vld [vmem:[%s696 + $0x47] sm:$0xff]
      %v702 = vld [vmem:[%s696 + $0x4f] sm:$0xff]
      %v703 = vld [vmem:[%s696 + $0x67] sm:$0xff]
      %v704 = vld [vmem:[%s696 + $0x6f] sm:$0xff]
      %v705 = vld [vmem:[%s696 + $0x87] sm:$0xff]
      %v706 = vld [vmem:[%s696 + $0x8f] sm:$0xff]
      %v707 = vld [vmem:[%s696 + $0xa7] sm:$0xff]
      %v708 = vld [vmem:[%s696 + $0xaf] sm:$0xff]
      %v709 = vld [vmem:[%s696 + $0xc7] sm:$0xff]
      %v710 = vld [vmem:[%s696 + $0xcf] sm:$0xff]
      %v711 = vld [vmem:[%s696 + $0xe7] sm:$0xff]
      %v712 = vld [vmem:[%s696 + $0xef] sm:$0xff]
      %v713 = vld [vmem:[%s696 + $0x107] sm:$0xff]
      %v714 = vld [vmem:[%s696 + $0x10f] sm:$0xff]
      %v715 = vld [vmem:[%s696 + $0x127] sm:$0xff]
      %v716 = vld [vmem:[%s696 + $0x12f] sm:$0xff]
      %v717 = vld [vmem:[%s696 + $0x147] sm:$0xff]
      %v718 = vld [vmem:[%s696 + $0x14f] sm:$0xff]
      %v719 = vld [vmem:[%s696 + $0x167] sm:$0xff]
      %v720 = vld [vmem:[%s696 + $0x16f] sm:$0xff]
      %v721 = vld [vmem:[%s696 + $0x187] sm:$0xff]
      %v722 = vld [vmem:[%s696 + $0x18f] sm:$0xff]
      %v723 = vld [vmem:[%s696 + $0x1a7] sm:$0xff]
      %v724 = vld [vmem:[%s696 + $0x1af] sm:$0xff]
      %v725 = vld [vmem:[%s696 + $0x1c7] sm:$0xff]
      %v726 = vld [vmem:[%s696 + $0x1cf] sm:$0xff]
      %v727 = vld [vmem:[%s696 + $0x1e7] sm:$0xff]
      %v728 = vld [vmem:[%s696 + $0x1ef] sm:$0xff]
      %729 = vst [vmem:[#allocation2 + $0x30] sm:$0xff] %v697
      %730 = vst [vmem:[#allocation2 + $0x78] sm:$0xff] %v698
      %731 = vst [vmem:[#allocation2 + $0xc0] sm:$0xff] %v699
      %732 = vst [vmem:[#allocation2 + $0x108] sm:$0xff] %v700
      %733 = vst [vmem:[#allocation2 + $0x150] sm:$0xff] %v701
      %734 = vst [vmem:[#allocation2 + $0x198] sm:$0xff] %v702
      %735 = vst [vmem:[#allocation2 + $0x1e0] sm:$0xff] %v703
      %736 = vst [vmem:[#allocation2 + $0x228] sm:$0xff] %v704
      %737 = vst [vmem:[#allocation2 + $0x270] sm:$0xff] %v705
      %738 = vst [vmem:[#allocation2 + $0x2b8] sm:$0xff] %v706
      %739 = vst [vmem:[#allocation2 + $0x300] sm:$0xff] %v707
      %740 = vst [vmem:[#allocation2 + $0x348] sm:$0xff] %v708
      %741 = vst [vmem:[#allocation2 + $0x390] sm:$0xff] %v709
      %742 = vst [vmem:[#allocation2 + $0x3d8] sm:$0xff] %v710
      %743 = vst [vmem:[#allocation2 + $0x420] sm:$0xff] %v711
      %744 = vst [vmem:[#allocation2 + $0x468] sm:$0xff] %v712
      %745 = vst [vmem:[#allocation2 + $0x4b0] sm:$0xff] %v713
      %746 = vst [vmem:[#allocation2 + $0x4f8] sm:$0xff] %v714
      %747 = vst [vmem:[#allocation2 + $0x540] sm:$0xff] %v715
      %748 = vst [vmem:[#allocation2 + $0x588] sm:$0xff] %v716
      %749 = vst [vmem:[#allocation2 + $0x5d0] sm:$0xff] %v717
      %750 = vst [vmem:[#allocation2 + $0x618] sm:$0xff] %v718
      %751 = vst [vmem:[#allocation2 + $0x660] sm:$0xff] %v719
      %752 = vst [vmem:[#allocation2 + $0x6a8] sm:$0xff] %v720
      %753 = vst [vmem:[#allocation2 + $0x6f0] sm:$0xff] %v721
      %754 = vst [vmem:[#allocation2 + $0x738] sm:$0xff] %v722
      %755 = vst [vmem:[#allocation2 + $0x780] sm:$0xff] %v723
      %756 = vst [vmem:[#allocation2 + $0x7c8] sm:$0xff] %v724
      %757 = vst [vmem:[#allocation2 + $0x810] sm:$0xff] %v725
      %758 = vst [vmem:[#allocation2 + $0x858] sm:$0xff] %v726
      %759 = vst [vmem:[#allocation2 + $0x8a0] sm:$0xff] %v727
      %760 = vst [vmem:[#allocation2 + $0x8e8] sm:$0xff] %v728
      %v761 = vld [vmem:[%s696 + $0x8] sm:$0xff]
      %v762 = vld [vmem:[%s696 + $0x10] sm:$0xff]
      %v763 = vld [vmem:[%s696 + $0x28] sm:$0xff]
      %v764 = vld [vmem:[%s696 + $0x30] sm:$0xff]
      %v765 = vld [vmem:[%s696 + $0x48] sm:$0xff]
      %v766 = vld [vmem:[%s696 + $0x50] sm:$0xff]
      %v767 = vld [vmem:[%s696 + $0x68] sm:$0xff]
      %v768 = vld [vmem:[%s696 + $0x70] sm:$0xff]
      %v769 = vld [vmem:[%s696 + $0x88] sm:$0xff]
      %v770 = vld [vmem:[%s696 + $0x90] sm:$0xff]
      %v771 = vld [vmem:[%s696 + $0xa8] sm:$0xff]
      %v772 = vld [vmem:[%s696 + $0xb0] sm:$0xff]
      %v773 = vld [vmem:[%s696 + $0xc8] sm:$0xff]
      %v774 = vld [vmem:[%s696 + $0xd0] sm:$0xff]
      %v775 = vld [vmem:[%s696 + $0xe8] sm:$0xff]
      %v776 = vld [vmem:[%s696 + $0xf0] sm:$0xff]
      %v777 = vld [vmem:[%s696 + $0x108] sm:$0xff]
      %v778 = vld [vmem:[%s696 + $0x110] sm:$0xff]
      %v779 = vld [vmem:[%s696 + $0x128] sm:$0xff]
      %v780 = vld [vmem:[%s696 + $0x130] sm:$0xff]
      %v781 = vld [vmem:[%s696 + $0x148] sm:$0xff]
      %v782 = vld [vmem:[%s696 + $0x150] sm:$0xff]
      %v783 = vld [vmem:[%s696 + $0x168] sm:$0xff]
      %v784 = vld [vmem:[%s696 + $0x170] sm:$0xff]
      %v785 = vld [vmem:[%s696 + $0x188] sm:$0xff]
      %v786 = vld [vmem:[%s696 + $0x190] sm:$0xff]
      %v787 = vld [vmem:[%s696 + $0x1a8] sm:$0xff]
      %v788 = vld [vmem:[%s696 + $0x1b0] sm:$0xff]
      %v789 = vld [vmem:[%s696 + $0x1c8] sm:$0xff]
      %v790 = vld [vmem:[%s696 + $0x1d0] sm:$0xff]
      %v791 = vld [vmem:[%s696 + $0x1e8] sm:$0xff]
      %v792 = vld [vmem:[%s696 + $0x1f0] sm:$0xff]
      %793 = vst [vmem:[#allocation2 + $0x38] sm:$0xff] %v761
      %794 = vst [vmem:[#allocation2 + $0x80] sm:$0xff] %v762
      %795 = vst [vmem:[#allocation2 + $0xc8] sm:$0xff] %v763
      %796 = vst [vmem:[#allocation2 + $0x110] sm:$0xff] %v764
      %797 = vst [vmem:[#allocation2 + $0x158] sm:$0xff] %v765
      %798 = vst [vmem:[#allocation2 + $0x1a0] sm:$0xff] %v766
      %799 = vst [vmem:[#allocation2 + $0x1e8] sm:$0xff] %v767
      %800 = vst [vmem:[#allocation2 + $0x230] sm:$0xff] %v768
      %801 = vst [vmem:[#allocation2 + $0x278] sm:$0xff] %v769
      %802 = vst [vmem:[#allocation2 + $0x2c0] sm:$0xff] %v770
      %803 = vst [vmem:[#allocation2 + $0x308] sm:$0xff] %v771
      %804 = vst [vmem:[#allocation2 + $0x350] sm:$0xff] %v772
      %805 = vst [vmem:[#allocation2 + $0x398] sm:$0xff] %v773
      %806 = vst [vmem:[#allocation2 + $0x3e0] sm:$0xff] %v774
      %807 = vst [vmem:[#allocation2 + $0x428] sm:$0xff] %v775
      %808 = vst [vmem:[#allocation2 + $0x470] sm:$0xff] %v776
      %809 = vst [vmem:[#allocation2 + $0x4b8] sm:$0xff] %v777
      %810 = vst [vmem:[#allocation2 + $0x500] sm:$0xff] %v778
      %811 = vst [vmem:[#allocation2 + $0x548] sm:$0xff] %v779
      %812 = vst [vmem:[#allocation2 + $0x590] sm:$0xff] %v780
      %813 = vst [vmem:[#allocation2 + $0x5d8] sm:$0xff] %v781
      %814 = vst [vmem:[#allocation2 + $0x620] sm:$0xff] %v782
      %815 = vst [vmem:[#allocation2 + $0x668] sm:$0xff] %v783
      %816 = vst [vmem:[#allocation2 + $0x6b0] sm:$0xff] %v784
      %817 = vst [vmem:[#allocation2 + $0x6f8] sm:$0xff] %v785
      %818 = vst [vmem:[#allocation2 + $0x740] sm:$0xff] %v786
      %819 = vst [vmem:[#allocation2 + $0x788] sm:$0xff] %v787
      %820 = vst [vmem:[#allocation2 + $0x7d0] sm:$0xff] %v788
      %821 = vst [vmem:[#allocation2 + $0x818] sm:$0xff] %v789
      %822 = vst [vmem:[#allocation2 + $0x860] sm:$0xff] %v790
      %823 = vst [vmem:[#allocation2 + $0x8a8] sm:$0xff] %v791
      %824 = vst [vmem:[#allocation2 + $0x8f0] sm:$0xff] %v792
      %v825 = vld [vmem:[%s696 + $0x9] sm:$0xff]
      %v826 = vld [vmem:[%s696 + $0x11] sm:$0xff]
      %v827 = vld [vmem:[%s696 + $0x29] sm:$0xff]
      %v828 = vld [vmem:[%s696 + $0x31] sm:$0xff]
      %v829 = vld [vmem:[%s696 + $0x49] sm:$0xff]
      %v830 = vld [vmem:[%s696 + $0x51] sm:$0xff]
      %v831 = vld [vmem:[%s696 + $0x69] sm:$0xff]
      %v832 = vld [vmem:[%s696 + $0x71] sm:$0xff]
      %v833 = vld [vmem:[%s696 + $0x89] sm:$0xff]
      %v834 = vld [vmem:[%s696 + $0x91] sm:$0xff]
      %v835 = vld [vmem:[%s696 + $0xa9] sm:$0xff]
      %v836 = vld [vmem:[%s696 + $0xb1] sm:$0xff]
      %v837 = vld [vmem:[%s696 + $0xc9] sm:$0xff]
      %v838 = vld [vmem:[%s696 + $0xd1] sm:$0xff]
      %v839 = vld [vmem:[%s696 + $0xe9] sm:$0xff]
      %v840 = vld [vmem:[%s696 + $0xf1] sm:$0xff]
      %v841 = vld [vmem:[%s696 + $0x109] sm:$0xff]
      %v842 = vld [vmem:[%s696 + $0x111] sm:$0xff]
      %v843 = vld [vmem:[%s696 + $0x129] sm:$0xff]
      %v844 = vld [vmem:[%s696 + $0x131] sm:$0xff]
      %v845 = vld [vmem:[%s696 + $0x149] sm:$0xff]
      %v846 = vld [vmem:[%s696 + $0x151] sm:$0xff]
      %v847 = vld [vmem:[%s696 + $0x169] sm:$0xff]
      %v848 = vld [vmem:[%s696 + $0x171] sm:$0xff]
      %v849 = vld [vmem:[%s696 + $0x189] sm:$0xff]
      %v850 = vld [vmem:[%s696 + $0x191] sm:$0xff]
      %v851 = vld [vmem:[%s696 + $0x1a9] sm:$0xff]
      %v852 = vld [vmem:[%s696 + $0x1b1] sm:$0xff]
      %v853 = vld [vmem:[%s696 + $0x1c9] sm:$0xff]
      %v854 = vld [vmem:[%s696 + $0x1d1] sm:$0xff]
      %v855 = vld [vmem:[%s696 + $0x1e9] sm:$0xff]
      %v856 = vld [vmem:[%s696 + $0x1f1] sm:$0xff]
      %857 = vst [vmem:[#allocation2 + $0x40] sm:$0xff] %v825
      %858 = vst [vmem:[#allocation2 + $0x88] sm:$0xff] %v826
      %859 = vst [vmem:[#allocation2 + $0xd0] sm:$0xff] %v827
      %860 = vst [vmem:[#allocation2 + $0x118] sm:$0xff] %v828
      %861 = vst [vmem:[#allocation2 + $0x160] sm:$0xff] %v829
      %862 = vst [vmem:[#allocation2 + $0x1a8] sm:$0xff] %v830
      %863 = vst [vmem:[#allocation2 + $0x1f0] sm:$0xff] %v831
      %864 = vst [vmem:[#allocation2 + $0x238] sm:$0xff] %v832
      %865 = vst [vmem:[#allocation2 + $0x280] sm:$0xff] %v833
      %866 = vst [vmem:[#allocation2 + $0x2c8] sm:$0xff] %v834
      %867 = vst [vmem:[#allocation2 + $0x310] sm:$0xff] %v835
      %868 = vst [vmem:[#allocation2 + $0x358] sm:$0xff] %v836
      %869 = vst [vmem:[#allocation2 + $0x3a0] sm:$0xff] %v837
      %870 = vst [vmem:[#allocation2 + $0x3e8] sm:$0xff] %v838
      %871 = vst [vmem:[#allocation2 + $0x430] sm:$0xff] %v839
      %872 = vst [vmem:[#allocation2 + $0x478] sm:$0xff] %v840
      %873 = vst [vmem:[#allocation2 + $0x4c0] sm:$0xff] %v841
      %874 = vst [vmem:[#allocation2 + $0x508] sm:$0xff] %v842
      %875 = vst [vmem:[#allocation2 + $0x550] sm:$0xff] %v843
      %876 = vst [vmem:[#allocation2 + $0x598] sm:$0xff] %v844
      %877 = vst [vmem:[#allocation2 + $0x5e0] sm:$0xff] %v845
      %878 = vst [vmem:[#allocation2 + $0x628] sm:$0xff] %v846
      %879 = vst [vmem:[#allocation2 + $0x670] sm:$0xff] %v847
      %880 = vst [vmem:[#allocation2 + $0x6b8] sm:$0xff] %v848
      %881 = vst [vmem:[#allocation2 + $0x700] sm:$0xff] %v849
      %882 = vst [vmem:[#allocation2 + $0x748] sm:$0xff] %v850
      %883 = vst [vmem:[#allocation2 + $0x790] sm:$0xff] %v851
      %884 = vst [vmem:[#allocation2 + $0x7d8] sm:$0xff] %v852
      %885 = vst [vmem:[#allocation2 + $0x820] sm:$0xff] %v853
      %886 = vst [vmem:[#allocation2 + $0x868] sm:$0xff] %v854
      %887 = vst [vmem:[#allocation2 + $0x8b0] sm:$0xff] %v855
      %888 = vst [vmem:[#allocation2 + $0x8f8] sm:$0xff] %v856
      %v889 = vld [vmem:[#allocation2] sm:$0xff]
      %v890 = vld [vmem:[#allocation2 + $0x8] sm:$0xff]
      %v891 = vld [vmem:[#allocation2 + $0x10] sm:$0xff]
      %v892 = vld [vmem:[#allocation2 + $0x18] sm:$0xff]
      %v893 = vld [vmem:[#allocation2 + $0x20] sm:$0xff]
      %v894 = vld [vmem:[#allocation2 + $0x28] sm:$0xff]
      %v895 = vld [vmem:[#allocation2 + $0x30] sm:$0xff]
      %v896 = vld [vmem:[#allocation2 + $0x38] sm:$0xff]
      %v897 = vld [vmem:[#allocation2 + $0x40] sm:$0xff]
      %v898 = vld [vmem:[#allocation2 + $0x48] sm:$0xff]
      %v899 = vld [vmem:[#allocation2 + $0x50] sm:$0xff]
      %v900 = vld [vmem:[#allocation2 + $0x58] sm:$0xff]
      %v901 = vld [vmem:[#allocation2 + $0x60] sm:$0xff]
      %v902 = vld [vmem:[#allocation2 + $0x68] sm:$0xff]
      %v903 = vld [vmem:[#allocation2 + $0x70] sm:$0xff]
      %v904 = vld [vmem:[#allocation2 + $0x78] sm:$0xff]
      %v905 = vld [vmem:[#allocation2 + $0x80] sm:$0xff]
      %v906 = vld [vmem:[#allocation2 + $0x88] sm:$0xff]
      %v907 = vld [vmem:[#allocation2 + $0x90] sm:$0xff]
      %v908 = vld [vmem:[#allocation2 + $0x98] sm:$0xff]
      %v909 = vld [vmem:[#allocation2 + $0xa0] sm:$0xff]
      %v910 = vld [vmem:[#allocation2 + $0xa8] sm:$0xff]
      %v911 = vld [vmem:[#allocation2 + $0xb0] sm:$0xff]
      %v912 = vld [vmem:[#allocation2 + $0xb8] sm:$0xff]
      %v913 = vld [vmem:[#allocation2 + $0xc0] sm:$0xff]
      %v914 = vld [vmem:[#allocation2 + $0xc8] sm:$0xff]
      %v915 = vld [vmem:[#allocation2 + $0xd0] sm:$0xff]
      %v916 = vld [vmem:[#allocation2 + $0xd8] sm:$0xff]
      %v917 = vld [vmem:[#allocation2 + $0xe0] sm:$0xff]
      %v918 = vld [vmem:[#allocation2 + $0xe8] sm:$0xff]
      %v919 = vld [vmem:[#allocation2 + $0xf0] sm:$0xff]
      %v920 = vld [vmem:[#allocation2 + $0xf8] sm:$0xff]
      %v921 = vld [vmem:[#allocation2 + $0x100] sm:$0xff]
      %v922 = vld [vmem:[#allocation2 + $0x108] sm:$0xff]
      %v923 = vld [vmem:[#allocation2 + $0x110] sm:$0xff]
      %v924 = vld [vmem:[#allocation2 + $0x118] sm:$0xff]
      %v925 = vld [vmem:[#allocation2 + $0x120] sm:$0xff]
      %v926 = vld [vmem:[#allocation2 + $0x128] sm:$0xff]
      %v927 = vld [vmem:[#allocation2 + $0x130] sm:$0xff]
      %v928 = vld [vmem:[#allocation2 + $0x138] sm:$0xff]
      %v929 = vld [vmem:[#allocation2 + $0x140] sm:$0xff]
      %v930 = vld [vmem:[#allocation2 + $0x148] sm:$0xff]
      %v931 = vld [vmem:[#allocation2 + $0x150] sm:$0xff]
      %v932 = vld [vmem:[#allocation2 + $0x158] sm:$0xff]
      %v933 = vld [vmem:[#allocation2 + $0x160] sm:$0xff]
      %v934 = vld [vmem:[#allocation2 + $0x168] sm:$0xff]
      %v935 = vld [vmem:[#allocation2 + $0x170] sm:$0xff]
      %v936 = vld [vmem:[#allocation2 + $0x178] sm:$0xff]
      %v937 = vld [vmem:[#allocation2 + $0x180] sm:$0xff]
      %v938 = vld [vmem:[#allocation2 + $0x188] sm:$0xff]
      %v939 = vld [vmem:[#allocation2 + $0x190] sm:$0xff]
      %v940 = vld [vmem:[#allocation2 + $0x198] sm:$0xff]
      %v941 = vld [vmem:[#allocation2 + $0x1a0] sm:$0xff]
      %v942 = vld [vmem:[#allocation2 + $0x1a8] sm:$0xff]
      %v943 = vld [vmem:[#allocation2 + $0x1b0] sm:$0xff]
      %v944 = vld [vmem:[#allocation2 + $0x1b8] sm:$0xff]
      %v945 = vld [vmem:[#allocation2 + $0x1c0] sm:$0xff]
      %v946 = vld [vmem:[#allocation2 + $0x1c8] sm:$0xff]
      %v947 = vld [vmem:[#allocation2 + $0x1d0] sm:$0xff]
      %v948 = vld [vmem:[#allocation2 + $0x1d8] sm:$0xff]
      %v949 = vld [vmem:[#allocation2 + $0x1e0] sm:$0xff]
      %v950 = vld [vmem:[#allocation2 + $0x1e8] sm:$0xff]
      %v951 = vld [vmem:[#allocation2 + $0x1f0] sm:$0xff]
      %v952 = vld [vmem:[#allocation2 + $0x1f8] sm:$0xff]
      %v953 = vld [vmem:[#allocation2 + $0x200] sm:$0xff]
      %v954 = vld [vmem:[#allocation2 + $0x208] sm:$0xff]
      %v955 = vld [vmem:[#allocation2 + $0x210] sm:$0xff]
      %v956 = vld [vmem:[#allocation2 + $0x218] sm:$0xff]
      %v957 = vld [vmem:[#allocation2 + $0x220] sm:$0xff]
      %v958 = vld [vmem:[#allocation2 + $0x228] sm:$0xff]
      %v959 = vld [vmem:[#allocation2 + $0x230] sm:$0xff]
      %v960 = vld [vmem:[#allocation2 + $0x238] sm:$0xff]
      %v961 = vld [vmem:[#allocation2 + $0x240] sm:$0xff]
      %v962 = vld [vmem:[#allocation2 + $0x248] sm:$0xff]
      %v963 = vld [vmem:[#allocation2 + $0x250] sm:$0xff]
      %v964 = vld [vmem:[#allocation2 + $0x258] sm:$0xff]
      %v965 = vld [vmem:[#allocation2 + $0x260] sm:$0xff]
      %v966 = vld [vmem:[#allocation2 + $0x268] sm:$0xff]
      %v967 = vld [vmem:[#allocation2 + $0x270] sm:$0xff]
      %v968 = vld [vmem:[#allocation2 + $0x278] sm:$0xff]
      %v969 = vld [vmem:[#allocation2 + $0x280] sm:$0xff]
      %v970 = vld [vmem:[#allocation2 + $0x288] sm:$0xff]
      %v971 = vld [vmem:[#allocation2 + $0x290] sm:$0xff]
      %v972 = vld [vmem:[#allocation2 + $0x298] sm:$0xff]
      %v973 = vld [vmem:[#allocation2 + $0x2a0] sm:$0xff]
      %v974 = vld [vmem:[#allocation2 + $0x2a8] sm:$0xff]
      %v975 = vld [vmem:[#allocation2 + $0x2b0] sm:$0xff]
      %v976 = vld [vmem:[#allocation2 + $0x2b8] sm:$0xff]
      %v977 = vld [vmem:[#allocation2 + $0x2c0] sm:$0xff]
      %v978 = vld [vmem:[#allocation2 + $0x2c8] sm:$0xff]
      %v979 = vld [vmem:[#allocation2 + $0x2d0] sm:$0xff]
      %v980 = vld [vmem:[#allocation2 + $0x2d8] sm:$0xff]
      %v981 = vld [vmem:[#allocation2 + $0x2e0] sm:$0xff]
      %v982 = vld [vmem:[#allocation2 + $0x2e8] sm:$0xff]
      %v983 = vld [vmem:[#allocation2 + $0x2f0] sm:$0xff]
      %v984 = vld [vmem:[#allocation2 + $0x2f8] sm:$0xff]
      %v985 = vld [vmem:[#allocation2 + $0x300] sm:$0xff]
      %v986 = vld [vmem:[#allocation2 + $0x308] sm:$0xff]
      %v987 = vld [vmem:[#allocation2 + $0x310] sm:$0xff]
      %v988 = vld [vmem:[#allocation2 + $0x318] sm:$0xff]
      %v989 = vld [vmem:[#allocation2 + $0x320] sm:$0xff]
      %v990 = vld [vmem:[#allocation2 + $0x328] sm:$0xff]
      %v991 = vld [vmem:[#allocation2 + $0x330] sm:$0xff]
      %v992 = vld [vmem:[#allocation2 + $0x338] sm:$0xff]
      %v993 = vld [vmem:[#allocation2 + $0x340] sm:$0xff]
      %v994 = vld [vmem:[#allocation2 + $0x348] sm:$0xff]
      %v995 = vld [vmem:[#allocation2 + $0x350] sm:$0xff]
      %v996 = vld [vmem:[#allocation2 + $0x358] sm:$0xff]
      %v997 = vld [vmem:[#allocation2 + $0x360] sm:$0xff]
      %v998 = vld [vmem:[#allocation2 + $0x368] sm:$0xff]
      %v999 = vld [vmem:[#allocation2 + $0x370] sm:$0xff]
      %v1000 = vld [vmem:[#allocation2 + $0x378] sm:$0xff]
      %v1001 = vld [vmem:[#allocation2 + $0x380] sm:$0xff]
      %v1002 = vld [vmem:[#allocation2 + $0x388] sm:$0xff]
      %v1003 = vld [vmem:[#allocation2 + $0x390] sm:$0xff]
      %v1004 = vld [vmem:[#allocation2 + $0x398] sm:$0xff]
      %v1005 = vld [vmem:[#allocation2 + $0x3a0] sm:$0xff]
      %v1006 = vld [vmem:[#allocation2 + $0x3a8] sm:$0xff]
      %v1007 = vld [vmem:[#allocation2 + $0x3b0] sm:$0xff]
      %v1008 = vld [vmem:[#allocation2 + $0x3b8] sm:$0xff]
      %v1009 = vld [vmem:[#allocation2 + $0x3c0] sm:$0xff]
      %v1010 = vld [vmem:[#allocation2 + $0x3c8] sm:$0xff]
      %v1011 = vld [vmem:[#allocation2 + $0x3d0] sm:$0xff]
      %v1012 = vld [vmem:[#allocation2 + $0x3d8] sm:$0xff]
      %v1013 = vld [vmem:[#allocation2 + $0x3e0] sm:$0xff]
      %v1014 = vld [vmem:[#allocation2 + $0x3e8] sm:$0xff]
      %v1015 = vld [vmem:[#allocation2 + $0x3f0] sm:$0xff]
      %v1016 = vld [vmem:[#allocation2 + $0x3f8] sm:$0xff]
      %v1017 = vld [vmem:[#allocation2 + $0x400] sm:$0xff]
      %v1018 = vld [vmem:[#allocation2 + $0x408] sm:$0xff]
      %v1019 = vld [vmem:[#allocation2 + $0x410] sm:$0xff]
      %v1020 = vld [vmem:[#allocation2 + $0x418] sm:$0xff]
      %v1021 = vld [vmem:[#allocation2 + $0x420] sm:$0xff]
      %v1022 = vld [vmem:[#allocation2 + $0x428] sm:$0xff]
      %v1023 = vld [vmem:[#allocation2 + $0x430] sm:$0xff]
      %v1024 = vld [vmem:[#allocation2 + $0x438] sm:$0xff]
      %v1025 = vld [vmem:[#allocation2 + $0x440] sm:$0xff]
      %v1026 = vld [vmem:[#allocation2 + $0x448] sm:$0xff]
      %v1027 = vld [vmem:[#allocation2 + $0x450] sm:$0xff]
      %v1028 = vld [vmem:[#allocation2 + $0x458] sm:$0xff]
      %v1029 = vld [vmem:[#allocation2 + $0x460] sm:$0xff]
      %v1030 = vld [vmem:[#allocation2 + $0x468] sm:$0xff]
      %v1031 = vld [vmem:[#allocation2 + $0x470] sm:$0xff]
      %v1032 = vld [vmem:[#allocation2 + $0x478] sm:$0xff]
      %v1033 = vld [vmem:[#allocation2 + $0x480] sm:$0xff]
      %v1034 = vld [vmem:[#allocation2 + $0x488] sm:$0xff]
      %v1035 = vld [vmem:[#allocation2 + $0x490] sm:$0xff]
      %v1036 = vld [vmem:[#allocation2 + $0x498] sm:$0xff]
      %v1037 = vld [vmem:[#allocation2 + $0x4a0] sm:$0xff]
      %v1038 = vld [vmem:[#allocation2 + $0x4a8] sm:$0xff]
      %v1039 = vld [vmem:[#allocation2 + $0x4b0] sm:$0xff]
      %v1040 = vld [vmem:[#allocation2 + $0x4b8] sm:$0xff]
      %v1041 = vld [vmem:[#allocation2 + $0x4c0] sm:$0xff]
      %v1042 = vld [vmem:[#allocation2 + $0x4c8] sm:$0xff]
      %v1043 = vld [vmem:[#allocation2 + $0x4d0] sm:$0xff]
      %v1044 = vld [vmem:[#allocation2 + $0x4d8] sm:$0xff]
      %v1045 = vld [vmem:[#allocation2 + $0x4e0] sm:$0xff]
      %v1046 = vld [vmem:[#allocation2 + $0x4e8] sm:$0xff]
      %v1047 = vld [vmem:[#allocation2 + $0x4f0] sm:$0xff]
      %v1048 = vld [vmem:[#allocation2 + $0x4f8] sm:$0xff]
      %v1049 = vld [vmem:[#allocation2 + $0x500] sm:$0xff]
      %v1050 = vld [vmem:[#allocation2 + $0x508] sm:$0xff]
      %v1051 = vld [vmem:[#allocation2 + $0x510] sm:$0xff]
      %v1052 = vld [vmem:[#allocation2 + $0x518] sm:$0xff]
      %v1053 = vld [vmem:[#allocation2 + $0x520] sm:$0xff]
      %v1054 = vld [vmem:[#allocation2 + $0x528] sm:$0xff]
      %v1055 = vld [vmem:[#allocation2 + $0x530] sm:$0xff]
      %v1056 = vld [vmem:[#allocation2 + $0x538] sm:$0xff]
      %v1057 = vld [vmem:[#allocation2 + $0x540] sm:$0xff]
      %v1058 = vld [vmem:[#allocation2 + $0x548] sm:$0xff]
      %v1059 = vld [vmem:[#allocation2 + $0x550] sm:$0xff]
      %v1060 = vld [vmem:[#allocation2 + $0x558] sm:$0xff]
      %v1061 = vld [vmem:[#allocation2 + $0x560] sm:$0xff]
      %v1062 = vld [vmem:[#allocation2 + $0x568] sm:$0xff]
      %v1063 = vld [vmem:[#allocation2 + $0x570] sm:$0xff]
      %v1064 = vld [vmem:[#allocation2 + $0x578] sm:$0xff]
      %v1065 = vld [vmem:[#allocation2 + $0x580] sm:$0xff]
      %v1066 = vld [vmem:[#allocation2 + $0x588] sm:$0xff]
      %v1067 = vld [vmem:[#allocation2 + $0x590] sm:$0xff]
      %v1068 = vld [vmem:[#allocation2 + $0x598] sm:$0xff]
      %v1069 = vld [vmem:[#allocation2 + $0x5a0] sm:$0xff]
      %v1070 = vld [vmem:[#allocation2 + $0x5a8] sm:$0xff]
      %v1071 = vld [vmem:[#allocation2 + $0x5b0] sm:$0xff]
      %v1072 = vld [vmem:[#allocation2 + $0x5b8] sm:$0xff]
      %v1073 = vld [vmem:[#allocation2 + $0x5c0] sm:$0xff]
      %v1074 = vld [vmem:[#allocation2 + $0x5c8] sm:$0xff]
      %v1075 = vld [vmem:[#allocation2 + $0x5d0] sm:$0xff]
      %v1076 = vld [vmem:[#allocation2 + $0x5d8] sm:$0xff]
      %v1077 = vld [vmem:[#allocation2 + $0x5e0] sm:$0xff]
      %v1078 = vld [vmem:[#allocation2 + $0x5e8] sm:$0xff]
      %v1079 = vld [vmem:[#allocation2 + $0x5f0] sm:$0xff]
      %v1080 = vld [vmem:[#allocation2 + $0x5f8] sm:$0xff]
      %v1081 = vld [vmem:[#allocation2 + $0x600] sm:$0xff]
      %v1082 = vld [vmem:[#allocation2 + $0x608] sm:$0xff]
      %v1083 = vld [vmem:[#allocation2 + $0x610] sm:$0xff]
      %v1084 = vld [vmem:[#allocation2 + $0x618] sm:$0xff]
      %v1085 = vld [vmem:[#allocation2 + $0x620] sm:$0xff]
      %v1086 = vld [vmem:[#allocation2 + $0x628] sm:$0xff]
      %v1087 = vld [vmem:[#allocation2 + $0x630] sm:$0xff]
      %v1088 = vld [vmem:[#allocation2 + $0x638] sm:$0xff]
      %v1089 = vld [vmem:[#allocation2 + $0x640] sm:$0xff]
      %v1090 = vld [vmem:[#allocation2 + $0x648] sm:$0xff]
      %v1091 = vld [vmem:[#allocation2 + $0x650] sm:$0xff]
      %v1092 = vld [vmem:[#allocation2 + $0x658] sm:$0xff]
      %v1093 = vld [vmem:[#allocation2 + $0x660] sm:$0xff]
      %v1094 = vld [vmem:[#allocation2 + $0x668] sm:$0xff]
      %v1095 = vld [vmem:[#allocation2 + $0x670] sm:$0xff]
      %v1096 = vld [vmem:[#allocation2 + $0x678] sm:$0xff]
      %v1097 = vld [vmem:[#allocation2 + $0x680] sm:$0xff]
      %v1098 = vld [vmem:[#allocation2 + $0x688] sm:$0xff]
      %v1099 = vld [vmem:[#allocation2 + $0x690] sm:$0xff]
      %v1100 = vld [vmem:[#allocation2 + $0x698] sm:$0xff]
      %v1101 = vld [vmem:[#allocation2 + $0x6a0] sm:$0xff]
      %v1102 = vld [vmem:[#allocation2 + $0x6a8] sm:$0xff]
      %v1103 = vld [vmem:[#allocation2 + $0x6b0] sm:$0xff]
      %v1104 = vld [vmem:[#allocation2 + $0x6b8] sm:$0xff]
      %v1105 = vld [vmem:[#allocation2 + $0x6c0] sm:$0xff]
      %v1106 = vld [vmem:[#allocation2 + $0x6c8] sm:$0xff]
      %v1107 = vld [vmem:[#allocation2 + $0x6d0] sm:$0xff]
      %v1108 = vld [vmem:[#allocation2 + $0x6d8] sm:$0xff]
      %v1109 = vld [vmem:[#allocation2 + $0x6e0] sm:$0xff]
      %v1110 = vld [vmem:[#allocation2 + $0x6e8] sm:$0xff]
      %v1111 = vld [vmem:[#allocation2 + $0x6f0] sm:$0xff]
      %v1112 = vld [vmem:[#allocation2 + $0x6f8] sm:$0xff]
      %v1113 = vld [vmem:[#allocation2 + $0x700] sm:$0xff]
      %v1114 = vld [vmem:[#allocation2 + $0x708] sm:$0xff]
      %v1115 = vld [vmem:[#allocation2 + $0x710] sm:$0xff]
      %v1116 = vld [vmem:[#allocation2 + $0x718] sm:$0xff]
      %v1117 = vld [vmem:[#allocation2 + $0x720] sm:$0xff]
      %v1118 = vld [vmem:[#allocation2 + $0x728] sm:$0xff]
      %v1119 = vld [vmem:[#allocation2 + $0x730] sm:$0xff]
      %v1120 = vld [vmem:[#allocation2 + $0x738] sm:$0xff]
      %v1121 = vld [vmem:[#allocation2 + $0x740] sm:$0xff]
      %v1122 = vld [vmem:[#allocation2 + $0x748] sm:$0xff]
      %v1123 = vld [vmem:[#allocation2 + $0x750] sm:$0xff]
      %v1124 = vld [vmem:[#allocation2 + $0x758] sm:$0xff]
      %v1125 = vld [vmem:[#allocation2 + $0x760] sm:$0xff]
      %v1126 = vld [vmem:[#allocation2 + $0x768] sm:$0xff]
      %v1127 = vld [vmem:[#allocation2 + $0x770] sm:$0xff]
      %v1128 = vld [vmem:[#allocation2 + $0x778] sm:$0xff]
      %v1129 = vld [vmem:[#allocation2 + $0x780] sm:$0xff]
      %v1130 = vld [vmem:[#allocation2 + $0x788] sm:$0xff]
      %v1131 = vld [vmem:[#allocation2 + $0x790] sm:$0xff]
      %v1132 = vld [vmem:[#allocation2 + $0x798] sm:$0xff]
      %v1133 = vld [vmem:[#allocation2 + $0x7a0] sm:$0xff]
      %v1134 = vld [vmem:[#allocation2 + $0x7a8] sm:$0xff]
      %v1135 = vld [vmem:[#allocation2 + $0x7b0] sm:$0xff]
      %v1136 = vld [vmem:[#allocation2 + $0x7b8] sm:$0xff]
      %v1137 = vld [vmem:[#allocation2 + $0x7c0] sm:$0xff]
      %v1138 = vld [vmem:[#allocation2 + $0x7c8] sm:$0xff]
      %v1139 = vld [vmem:[#allocation2 + $0x7d0] sm:$0xff]
      %v1140 = vld [vmem:[#allocation2 + $0x7d8] sm:$0xff]
      %v1141 = vld [vmem:[#allocation2 + $0x7e0] sm:$0xff]
      %v1142 = vld [vmem:[#allocation2 + $0x7e8] sm:$0xff]
      %v1143 = vld [vmem:[#allocation2 + $0x7f0] sm:$0xff]
      %v1144 = vld [vmem:[#allocation2 + $0x7f8] sm:$0xff]
      %v1145 = vld [vmem:[#allocation2 + $0x800] sm:$0xff]
      %v1146 = vld [vmem:[#allocation2 + $0x808] sm:$0xff]
      %v1147 = vld [vmem:[#allocation2 + $0x810] sm:$0xff]
      %v1148 = vld [vmem:[#allocation2 + $0x818] sm:$0xff]
      %v1149 = vld [vmem:[#allocation2 + $0x820] sm:$0xff]
      %v1150 = vld [vmem:[#allocation2 + $0x828] sm:$0xff]
      %v1151 = vld [vmem:[#allocation2 + $0x830] sm:$0xff]
      %v1152 = vld [vmem:[#allocation2 + $0x838] sm:$0xff]
      %v1153 = vld [vmem:[#allocation2 + $0x840] sm:$0xff]
      %v1154 = vld [vmem:[#allocation2 + $0x848] sm:$0xff]
      %v1155 = vld [vmem:[#allocation2 + $0x850] sm:$0xff]
      %v1156 = vld [vmem:[#allocation2 + $0x858] sm:$0xff]
      %v1157 = vld [vmem:[#allocation2 + $0x860] sm:$0xff]
      %v1158 = vld [vmem:[#allocation2 + $0x868] sm:$0xff]
      %v1159 = vld [vmem:[#allocation2 + $0x870] sm:$0xff]
      %v1160 = vld [vmem:[#allocation2 + $0x878] sm:$0xff]
      %v1161 = vld [vmem:[#allocation2 + $0x880] sm:$0xff]
      %v1162 = vld [vmem:[#allocation2 + $0x888] sm:$0xff]
      %v1163 = vld [vmem:[#allocation2 + $0x890] sm:$0xff]
      %v1164 = vld [vmem:[#allocation2 + $0x898] sm:$0xff]
      %v1165 = vld [vmem:[#allocation2 + $0x8a0] sm:$0xff]
      %v1166 = vld [vmem:[#allocation2 + $0x8a8] sm:$0xff]
      %v1167 = vld [vmem:[#allocation2 + $0x8b0] sm:$0xff]
      %v1168 = vld [vmem:[#allocation2 + $0x8b8] sm:$0xff]
      %v1169 = vld [vmem:[#allocation2 + $0x8c0] sm:$0xff]
      %v1170 = vld [vmem:[#allocation2 + $0x8c8] sm:$0xff]
      %v1171 = vld [vmem:[#allocation2 + $0x8d0] sm:$0xff]
      %v1172 = vld [vmem:[#allocation2 + $0x8d8] sm:$0xff]
      %v1173 = vld [vmem:[#allocation2 + $0x8e0] sm:$0xff]
      %v1174 = vld [vmem:[#allocation2 + $0x8e8] sm:$0xff]
      %v1175 = vld [vmem:[#allocation2 + $0x8f0] sm:$0xff]
      %v1176 = vld [vmem:[#allocation2 + $0x8f8] sm:$0xff]
      %v1177 = vld [vmem:[%s1] sm:$0xff]
      %v1178 = vld [vmem:[%s1 + $0x8] sm:$0xff]
      %v1179 = vld [vmem:[%s1 + $0x10] sm:$0xff]
      %v1180 = vld [vmem:[%s1 + $0x18] sm:$0xff]
      %v1181 = vld [vmem:[%s1 + $0x20] sm:$0xff]
      %v1182 = vld [vmem:[%s1 + $0x28] sm:$0xff]
      %v1183 = vld [vmem:[%s1 + $0x30] sm:$0xff]
      %v1184 = vld [vmem:[%s1 + $0x38] sm:$0xff]
      %v1185 = vld [vmem:[%s1 + $0x40] sm:$0xff]
      %v1186 = vld [vmem:[%s1 + $0x48] sm:$0xff]
      %v1187 = vld [vmem:[%s1 + $0x50] sm:$0xff]
      %v1188 = vld [vmem:[%s1 + $0x58] sm:$0xff]
      %v1189 = vld [vmem:[%s1 + $0x60] sm:$0xff]
      %v1190 = vld [vmem:[%s1 + $0x68] sm:$0xff]
      %v1191 = vld [vmem:[%s1 + $0x70] sm:$0xff]
      %v1192 = vld [vmem:[%s1 + $0x78] sm:$0xff]
      %v1193 = vld [vmem:[%s1 + $0x80] sm:$0xff]
      %v1194 = vld [vmem:[%s1 + $0x88] sm:$0xff]
      %v1195 = vld [vmem:[%s1 + $0x90] sm:$0xff]
      %v1196 = vld [vmem:[%s1 + $0x98] sm:$0xff]
      %v1197 = vld [vmem:[%s1 + $0xa0] sm:$0xff]
      %v1198 = vld [vmem:[%s1 + $0xa8] sm:$0xff]
      %v1199 = vld [vmem:[%s1 + $0xb0] sm:$0xff]
      %v1200 = vld [vmem:[%s1 + $0xb8] sm:$0xff]
      %v1201 = vld [vmem:[%s1 + $0xc0] sm:$0xff]
      %v1202 = vld [vmem:[%s1 + $0xc8] sm:$0xff]
      %v1203 = vld [vmem:[%s1 + $0xd0] sm:$0xff]
      %v1204 = vld [vmem:[%s1 + $0xd8] sm:$0xff]
      %v1205 = vld [vmem:[%s1 + $0xe0] sm:$0xff]
      %v1206 = vld [vmem:[%s1 + $0xe8] sm:$0xff]
      %v1207 = vld [vmem:[%s1 + $0xf0] sm:$0xff]
      %v1208 = vld [vmem:[%s1 + $0xf8] sm:$0xff]
      %v1209 = vld [vmem:[%s1 + $0x100] sm:$0xff]
      %v1210 = vld [vmem:[%s1 + $0x108] sm:$0xff]
      %v1211 = vld [vmem:[%s1 + $0x110] sm:$0xff]
      %v1212 = vld [vmem:[%s1 + $0x118] sm:$0xff]
      %v1213 = vld [vmem:[%s1 + $0x120] sm:$0xff]
      %v1214 = vld [vmem:[%s1 + $0x128] sm:$0xff]
      %v1215 = vld [vmem:[%s1 + $0x130] sm:$0xff]
      %v1216 = vld [vmem:[%s1 + $0x138] sm:$0xff]
      %v1217 = vld [vmem:[%s1 + $0x140] sm:$0xff]
      %v1218 = vld [vmem:[%s1 + $0x148] sm:$0xff]
      %v1219 = vld [vmem:[%s1 + $0x150] sm:$0xff]
      %v1220 = vld [vmem:[%s1 + $0x158] sm:$0xff]
      %v1221 = vld [vmem:[%s1 + $0x160] sm:$0xff]
      %v1222 = vld [vmem:[%s1 + $0x168] sm:$0xff]
      %v1223 = vld [vmem:[%s1 + $0x170] sm:$0xff]
      %v1224 = vld [vmem:[%s1 + $0x178] sm:$0xff]
      %v1225 = vld [vmem:[%s1 + $0x180] sm:$0xff]
      %v1226 = vld [vmem:[%s1 + $0x188] sm:$0xff]
      %v1227 = vld [vmem:[%s1 + $0x190] sm:$0xff]
      %v1228 = vld [vmem:[%s1 + $0x198] sm:$0xff]
      %v1229 = vld [vmem:[%s1 + $0x1a0] sm:$0xff]
      %v1230 = vld [vmem:[%s1 + $0x1a8] sm:$0xff]
      %v1231 = vld [vmem:[%s1 + $0x1b0] sm:$0xff]
      %v1232 = vld [vmem:[%s1 + $0x1b8] sm:$0xff]
      %v1233 = vld [vmem:[%s1 + $0x1c0] sm:$0xff]
      %v1234 = vld [vmem:[%s1 + $0x1c8] sm:$0xff]
      %v1235 = vld [vmem:[%s1 + $0x1d0] sm:$0xff]
      %v1236 = vld [vmem:[%s1 + $0x1d8] sm:$0xff]
      %v1237 = vld [vmem:[%s1 + $0x1e0] sm:$0xff]
      %v1238 = vld [vmem:[%s1 + $0x1e8] sm:$0xff]
      %v1239 = vld [vmem:[%s1 + $0x1f0] sm:$0xff]
      %v1240 = vld [vmem:[%s1 + $0x1f8] sm:$0xff]
      %v1241 = vld [vmem:[%s1 + $0x200] sm:$0xff]
      %v1242 = vld [vmem:[%s1 + $0x208] sm:$0xff]
      %v1243 = vld [vmem:[%s1 + $0x210] sm:$0xff]
      %v1244 = vld [vmem:[%s1 + $0x218] sm:$0xff]
      %v1245 = vld [vmem:[%s1 + $0x220] sm:$0xff]
      %v1246 = vld [vmem:[%s1 + $0x228] sm:$0xff]
      %v1247 = vld [vmem:[%s1 + $0x230] sm:$0xff]
      %v1248 = vld [vmem:[%s1 + $0x238] sm:$0xff]
      %v1249 = vld [vmem:[%s1 + $0x240] sm:$0xff]
      %v1250 = vld [vmem:[%s1 + $0x248] sm:$0xff]
      %v1251 = vld [vmem:[%s1 + $0x250] sm:$0xff]
      %v1252 = vld [vmem:[%s1 + $0x258] sm:$0xff]
      %v1253 = vld [vmem:[%s1 + $0x260] sm:$0xff]
      %v1254 = vld [vmem:[%s1 + $0x268] sm:$0xff]
      %v1255 = vld [vmem:[%s1 + $0x270] sm:$0xff]
      %v1256 = vld [vmem:[%s1 + $0x278] sm:$0xff]
      %v1257 = vld [vmem:[%s1 + $0x280] sm:$0xff]
      %v1258 = vld [vmem:[%s1 + $0x288] sm:$0xff]
      %v1259 = vld [vmem:[%s1 + $0x290] sm:$0xff]
      %v1260 = vld [vmem:[%s1 + $0x298] sm:$0xff]
      %v1261 = vld [vmem:[%s1 + $0x2a0] sm:$0xff]
      %v1262 = vld [vmem:[%s1 + $0x2a8] sm:$0xff]
      %v1263 = vld [vmem:[%s1 + $0x2b0] sm:$0xff]
      %v1264 = vld [vmem:[%s1 + $0x2b8] sm:$0xff]
      %v1265 = vld [vmem:[%s1 + $0x2c0] sm:$0xff]
      %v1266 = vld [vmem:[%s1 + $0x2c8] sm:$0xff]
      %v1267 = vld [vmem:[%s1 + $0x2d0] sm:$0xff]
      %v1268 = vld [vmem:[%s1 + $0x2d8] sm:$0xff]
      %v1269 = vld [vmem:[%s1 + $0x2e0] sm:$0xff]
      %v1270 = vld [vmem:[%s1 + $0x2e8] sm:$0xff]
      %v1271 = vld [vmem:[%s1 + $0x2f0] sm:$0xff]
      %v1272 = vld [vmem:[%s1 + $0x2f8] sm:$0xff]
      %v1273 = vld [vmem:[%s1 + $0x300] sm:$0xff]
      %v1274 = vld [vmem:[%s1 + $0x308] sm:$0xff]
      %v1275 = vld [vmem:[%s1 + $0x310] sm:$0xff]
      %v1276 = vld [vmem:[%s1 + $0x318] sm:$0xff]
      %v1277 = vld [vmem:[%s1 + $0x320] sm:$0xff]
      %v1278 = vld [vmem:[%s1 + $0x328] sm:$0xff]
      %v1279 = vld [vmem:[%s1 + $0x330] sm:$0xff]
      %v1280 = vld [vmem:[%s1 + $0x338] sm:$0xff]
      %v1281 = vld [vmem:[%s1 + $0x340] sm:$0xff]
      %v1282 = vld [vmem:[%s1 + $0x348] sm:$0xff]
      %v1283 = vld [vmem:[%s1 + $0x350] sm:$0xff]
      %v1284 = vld [vmem:[%s1 + $0x358] sm:$0xff]
      %v1285 = vld [vmem:[%s1 + $0x360] sm:$0xff]
      %v1286 = vld [vmem:[%s1 + $0x368] sm:$0xff]
      %v1287 = vld [vmem:[%s1 + $0x370] sm:$0xff]
      %v1288 = vld [vmem:[%s1 + $0x378] sm:$0xff]
      %v1289 = vld [vmem:[%s1 + $0x380] sm:$0xff]
      %v1290 = vld [vmem:[%s1 + $0x388] sm:$0xff]
      %v1291 = vld [vmem:[%s1 + $0x390] sm:$0xff]
      %v1292 = vld [vmem:[%s1 + $0x398] sm:$0xff]
      %v1293 = vld [vmem:[%s1 + $0x3a0] sm:$0xff]
      %v1294 = vld [vmem:[%s1 + $0x3a8] sm:$0xff]
      %v1295 = vld [vmem:[%s1 + $0x3b0] sm:$0xff]
      %v1296 = vld [vmem:[%s1 + $0x3b8] sm:$0xff]
      %v1297 = vld [vmem:[%s1 + $0x3c0] sm:$0xff]
      %v1298 = vld [vmem:[%s1 + $0x3c8] sm:$0xff]
      %v1299 = vld [vmem:[%s1 + $0x3d0] sm:$0xff]
      %v1300 = vld [vmem:[%s1 + $0x3d8] sm:$0xff]
      %v1301 = vld [vmem:[%s1 + $0x3e0] sm:$0xff]
      %v1302 = vld [vmem:[%s1 + $0x3e8] sm:$0xff]
      %v1303 = vld [vmem:[%s1 + $0x3f0] sm:$0xff]
      %v1304 = vld [vmem:[%s1 + $0x3f8] sm:$0xff]
      %v1305 = vld [vmem:[%s1 + $0x400] sm:$0xff]
      %v1306 = vld [vmem:[%s1 + $0x408] sm:$0xff]
      %v1307 = vld [vmem:[%s1 + $0x410] sm:$0xff]
      %v1308 = vld [vmem:[%s1 + $0x418] sm:$0xff]
      %v1309 = vld [vmem:[%s1 + $0x420] sm:$0xff]
      %v1310 = vld [vmem:[%s1 + $0x428] sm:$0xff]
      %v1311 = vld [vmem:[%s1 + $0x430] sm:$0xff]
      %v1312 = vld [vmem:[%s1 + $0x438] sm:$0xff]
      %v1313 = vld [vmem:[%s1 + $0x440] sm:$0xff]
      %v1314 = vld [vmem:[%s1 + $0x448] sm:$0xff]
      %v1315 = vld [vmem:[%s1 + $0x450] sm:$0xff]
      %v1316 = vld [vmem:[%s1 + $0x458] sm:$0xff]
      %v1317 = vld [vmem:[%s1 + $0x460] sm:$0xff]
      %v1318 = vld [vmem:[%s1 + $0x468] sm:$0xff]
      %v1319 = vld [vmem:[%s1 + $0x470] sm:$0xff]
      %v1320 = vld [vmem:[%s1 + $0x478] sm:$0xff]
      %v1321 = vld [vmem:[%s2] sm:$0x1]
      %v1323 = vlaneseq
      %v1324 = vshrl.u32 %v1323, 7
      %v1325 = vsub.s32 0, %v1324
      %v1326 = vrot.slane %v1321, %v1325
      %1328 = vmatprep.subr.mxu0 0.0
      %1329 = vmatpush1.msra.mxu0 %v1192
      %1330 = vmatprep.subr.mxu0 0.0
      %1331 = vmatpush1.msra.mxu0 %v1191
      %1332 = vmatprep.subr.mxu0 0.0
      %1333 = vmatpush1.msra.mxu0 %v1190
      %1334 = vmatprep.subr.mxu0 0.0
      %1335 = vmatpush1.msra.mxu0 %v1189
      %1336 = vmatprep.subr.mxu0 0.0
      %1337 = vmatpush1.msra.mxu0 %v1188
      %1338 = vmatprep.subr.mxu0 0.0
      %1339 = vmatpush1.msra.mxu0 %v1187
      %1340 = vmatprep.subr.mxu0 0.0
      %1341 = vmatpush1.msra.mxu0 %v1186
      %1342 = vmatprep.subr.mxu0 0.0
      %1343 = vmatpush1.msra.mxu0 %v1185
      %1344 = vmatprep.subr.mxu0 0.0
      %1345 = vmatpush1.msra.mxu0 %v1184
      %1346 = vmatprep.subr.mxu0 0.0
      %1347 = vmatpush1.msra.mxu0 %v1183
      %1348 = vmatprep.subr.mxu0 0.0
      %1349 = vmatpush1.msra.mxu0 %v1182
      %1350 = vmatprep.subr.mxu0 0.0
      %1351 = vmatpush1.msra.mxu0 %v1181
      %1352 = vmatprep.subr.mxu0 0.0
      %1353 = vmatpush1.msra.mxu0 %v1180
      %1354 = vmatprep.subr.mxu0 0.0
      %1355 = vmatpush1.msra.mxu0 %v1179
      %1356 = vmatprep.subr.mxu0 0.0
      %1357 = vmatpush1.msra.mxu0 %v1178
      %1358 = vmatprep.subr.mxu0 0.0
      %1359 = vmatpush1.msra.mxu0 %v1177
      %1360 = vmatprep.subr.mxu0 0.0
      %1361 = vmatpush2.msra.mxu0 %v1208
      %1362 = vmatprep.subr.mxu0 0.0
      %1363 = vmatpush2.msra.mxu0 %v1207
      %1364 = vmatprep.subr.mxu0 0.0
      %1365 = vmatpush2.msra.mxu0 %v1206
      %1366 = vmatprep.subr.mxu0 0.0
      %1367 = vmatpush2.msra.mxu0 %v1205
      %1368 = vmatprep.subr.mxu0 0.0
      %1369 = vmatpush2.msra.mxu0 %v1204
      %1370 = vmatprep.subr.mxu0 0.0
      %1371 = vmatpush2.msra.mxu0 %v1203
      %1372 = vmatprep.subr.mxu0 0.0
      %1373 = vmatpush2.msra.mxu0 %v1202
      %1374 = vmatprep.subr.mxu0 0.0
      %1375 = vmatpush2.msra.mxu0 %v1201
      %1376 = vmatprep.subr.mxu0 0.0
      %1377 = vmatpush2.msra.mxu0 %v1200
      %1378 = vmatprep.subr.mxu0 0.0
      %1379 = vmatpush2.msra.mxu0 %v1199
      %1380 = vmatprep.subr.mxu0 0.0
      %1381 = vmatpush2.msra.mxu0 %v1198
      %1382 = vmatprep.subr.mxu0 0.0
      %1383 = vmatpush2.msra.mxu0 %v1197
      %1384 = vmatprep.subr.mxu0 0.0
      %1385 = vmatpush2.msra.mxu0 %v1196
      %1386 = vmatprep.subr.mxu0 0.0
      %1387 = vmatpush2.msra.mxu0 %v1195
      %1388 = vmatprep.subr.mxu0 0.0
      %1389 = vmatpush2.msra.mxu0 %v1194
      %1390 = vmatprep.subr.mxu0 0.0
      %1391 = vmatpush2.msra.mxu0 %v1193
      %1392 = vmatprep.mubr.f32.mxu0 %v890
      %1393 = vmatmul.mubr.f32.gmra.mxu0 %v889
      %v1394 = vpop.f32.mrf.mxu0
      %v1395 = vadd.f32 %v1326, %v1394
      %v1396 = vpop.f32.mrf.mxu0
      %1397 = vmatprep.mubr.f32.mxu0 %v899
      %1398 = vmatmul.mubr.f32.gmra.mxu0 %v898
      %v1399 = vpop.f32.mrf.mxu0
      %v1400 = vadd.f32 %v1326, %v1399
      %v1401 = vpop.f32.mrf.mxu0
      %1402 = vmatprep.mubr.f32.mxu0 %v908
      %1403 = vmatmul.mubr.f32.gmra.mxu0 %v907
      %v1404 = vpop.f32.mrf.mxu0
      %v1405 = vadd.f32 %v1326, %v1404
      %v1406 = vpop.f32.mrf.mxu0
      %1407 = vmatprep.mubr.f32.mxu0 %v917
      %1408 = vmatmul.mubr.f32.gmra.mxu0 %v916
      %v1409 = vpop.f32.mrf.mxu0
      %v1410 = vadd.f32 %v1326, %v1409
      %v1411 = vpop.f32.mrf.mxu0
      %1412 = vmatprep.mubr.f32.mxu0 %v926
      %1413 = vmatmul.mubr.f32.gmra.mxu0 %v925
      %v1414 = vpop.f32.mrf.mxu0
      %v1415 = vadd.f32 %v1326, %v1414
      %v1416 = vpop.f32.mrf.mxu0
      %1417 = vmatprep.mubr.f32.mxu0 %v935
      %1418 = vmatmul.mubr.f32.gmra.mxu0 %v934
      %v1419 = vpop.f32.mrf.mxu0
      %v1420 = vadd.f32 %v1326, %v1419
      %v1421 = vpop.f32.mrf.mxu0
      %1422 = vmatprep.mubr.f32.mxu0 %v944
      %1423 = vmatmul.mubr.f32.gmra.mxu0 %v943
      %v1424 = vpop.f32.mrf.mxu0
      %v1425 = vadd.f32 %v1326, %v1424
      %v1426 = vpop.f32.mrf.mxu0
      %1427 = vmatprep.mubr.f32.mxu0 %v953
      %1428 = vmatmul.mubr.f32.gmra.mxu0 %v952
      %v1429 = vpop.f32.mrf.mxu0
      %v1430 = vadd.f32 %v1326, %v1429
      %v1431 = vpop.f32.mrf.mxu0
      %1432 = vmatprep.mubr.f32.mxu0 %v962
      %1433 = vmatmul.mubr.f32.gmra.mxu0 %v961
      %v1434 = vpop.f32.mrf.mxu0
      %v1435 = vadd.f32 %v1326, %v1434
      %v1436 = vpop.f32.mrf.mxu0
      %1437 = vmatprep.mubr.f32.mxu0 %v971
      %1438 = vmatmul.mubr.f32.gmra.mxu0 %v970
      %v1439 = vpop.f32.mrf.mxu0
      %v1440 = vadd.f32 %v1326, %v1439
      %v1441 = vpop.f32.mrf.mxu0
      %1442 = vmatprep.mubr.f32.mxu0 %v980
      %1443 = vmatmul.mubr.f32.gmra.mxu0 %v979
      %v1444 = vpop.f32.mrf.mxu0
      %v1445 = vadd.f32 %v1326, %v1444
      %v1446 = vpop.f32.mrf.mxu0
      %1447 = vmatprep.mubr.f32.mxu0 %v989
      %1448 = vmatmul.mubr.f32.gmra.mxu0 %v988
      %v1449 = vpop.f32.mrf.mxu0
      %v1450 = vadd.f32 %v1326, %v1449
      %v1451 = vpop.f32.mrf.mxu0
      %1452 = vmatprep.mubr.f32.mxu0 %v998
      %1453 = vmatmul.mubr.f32.gmra.mxu0 %v997
      %v1454 = vpop.f32.mrf.mxu0
      %v1455 = vadd.f32 %v1326, %v1454
      %v1456 = vpop.f32.mrf.mxu0
      %1457 = vmatprep.mubr.f32.mxu0 %v1007
      %1458 = vmatmul.mubr.f32.gmra.mxu0 %v1006
      %v1459 = vpop.f32.mrf.mxu0
      %v1460 = vadd.f32 %v1326, %v1459
      %v1461 = vpop.f32.mrf.mxu0
      %1462 = vmatprep.mubr.f32.mxu0 %v1016
      %1463 = vmatmul.mubr.f32.gmra.mxu0 %v1015
      %v1464 = vpop.f32.mrf.mxu0
      %v1465 = vadd.f32 %v1326, %v1464
      %v1466 = vpop.f32.mrf.mxu0
      %1467 = vmatprep.mubr.f32.mxu0 %v1025
      %1468 = vmatmul.mubr.f32.gmra.mxu0 %v1024
      %v1469 = vpop.f32.mrf.mxu0
      %v1470 = vadd.f32 %v1326, %v1469
      %v1471 = vpop.f32.mrf.mxu0
      %1472 = vmatprep.mubr.f32.mxu0 %v1034
      %1473 = vmatmul.mubr.f32.gmra.mxu0 %v1033
      %v1474 = vpop.f32.mrf.mxu0
      %v1475 = vadd.f32 %v1326, %v1474
      %v1476 = vpop.f32.mrf.mxu0
      %1477 = vmatprep.mubr.f32.mxu0 %v1043
      %1478 = vmatmul.mubr.f32.gmra.mxu0 %v1042
      %v1479 = vpop.f32.mrf.mxu0
      %v1480 = vadd.f32 %v1326, %v1479
      %v1481 = vpop.f32.mrf.mxu0
      %1482 = vmatprep.mubr.f32.mxu0 %v1052
      %1483 = vmatmul.mubr.f32.gmra.mxu0 %v1051
      %v1484 = vpop.f32.mrf.mxu0
      %v1485 = vadd.f32 %v1326, %v1484
      %v1486 = vpop.f32.mrf.mxu0
      %1487 = vmatprep.mubr.f32.mxu0 %v1061
      %1488 = vmatmul.mubr.f32.gmra.mxu0 %v1060
      %v1489 = vpop.f32.mrf.mxu0
      %v1490 = vadd.f32 %v1326, %v1489
      %v1491 = vpop.f32.mrf.mxu0
      %1492 = vmatprep.mubr.f32.mxu0 %v1070
      %1493 = vmatmul.mubr.f32.gmra.mxu0 %v1069
      %v1494 = vpop.f32.mrf.mxu0
      %v1495 = vadd.f32 %v1326, %v1494
      %v1496 = vpop.f32.mrf.mxu0
      %1497 = vmatprep.mubr.f32.mxu0 %v1079
      %1498 = vmatmul.mubr.f32.gmra.mxu0 %v1078
      %v1499 = vpop.f32.mrf.mxu0
      %v1500 = vadd.f32 %v1326, %v1499
      %v1501 = vpop.f32.mrf.mxu0
      %1502 = vmatprep.mubr.f32.mxu0 %v1088
      %1503 = vmatmul.mubr.f32.gmra.mxu0 %v1087
      %v1504 = vpop.f32.mrf.mxu0
      %v1505 = vadd.f32 %v1326, %v1504
      %v1506 = vpop.f32.mrf.mxu0
      %1507 = vmatprep.mubr.f32.mxu0 %v1097
      %1508 = vmatmul.mubr.f32.gmra.mxu0 %v1096
      %v1509 = vpop.f32.mrf.mxu0
      %v1510 = vadd.f32 %v1326, %v1509
      %v1511 = vpop.f32.mrf.mxu0
      %1512 = vmatprep.mubr.f32.mxu0 %v1106
      %1513 = vmatmul.mubr.f32.gmra.mxu0 %v1105
      %v1514 = vpop.f32.mrf.mxu0
      %v1515 = vadd.f32 %v1326, %v1514
      %v1516 = vpop.f32.mrf.mxu0
      %1517 = vmatprep.mubr.f32.mxu0 %v1115
      %1518 = vmatmul.mubr.f32.gmra.mxu0 %v1114
      %v1519 = vpop.f32.mrf.mxu0
      %v1520 = vadd.f32 %v1326, %v1519
      %v1521 = vpop.f32.mrf.mxu0
      %1522 = vmatprep.mubr.f32.mxu0 %v1124
      %1523 = vmatmul.mubr.f32.gmra.mxu0 %v1123
      %v1524 = vpop.f32.mrf.mxu0
      %v1525 = vadd.f32 %v1326, %v1524
      %v1526 = vpop.f32.mrf.mxu0
      %1527 = vmatprep.mubr.f32.mxu0 %v1133
      %1528 = vmatmul.mubr.f32.gmra.mxu0 %v1132
      %v1529 = vpop.f32.mrf.mxu0
      %v1530 = vadd.f32 %v1326, %v1529
      %v1531 = vpop.f32.mrf.mxu0
      %1532 = vmatprep.mubr.f32.mxu0 %v1142
      %1533 = vmatmul.mubr.f32.gmra.mxu0 %v1141
      %v1534 = vpop.f32.mrf.mxu0
      %v1535 = vadd.f32 %v1326, %v1534
      %v1536 = vpop.f32.mrf.mxu0
      %1537 = vmatprep.mubr.f32.mxu0 %v1151
      %1538 = vmatmul.mubr.f32.gmra.mxu0 %v1150
      %v1539 = vpop.f32.mrf.mxu0
      %v1540 = vadd.f32 %v1326, %v1539
      %v1541 = vpop.f32.mrf.mxu0
      %1542 = vmatprep.mubr.f32.mxu0 %v1160
      %1543 = vmatmul.mubr.f32.gmra.mxu0 %v1159
      %v1544 = vpop.f32.mrf.mxu0
      %v1545 = vadd.f32 %v1326, %v1544
      %v1546 = vpop.f32.mrf.mxu0
      %1547 = vmatprep.mubr.f32.mxu0 %v1169
      %1548 = vmatmul.mubr.f32.gmra.mxu0 %v1168
      %v1549 = vpop.f32.mrf.mxu0
      %v1550 = vadd.f32 %v1326, %v1549
      %v1551 = vpop.f32.mrf.mxu0
      %1552 = vdwg.mxu0
      %1553 = vmatprep.subr.mxu0 0.0
      %1554 = vmatpush1.msra.mxu0 %v1224
      %1555 = vmatprep.subr.mxu0 0.0
      %1556 = vmatpush1.msra.mxu0 %v1223
      %1557 = vmatprep.subr.mxu0 0.0
      %1558 = vmatpush1.msra.mxu0 %v1222
      %1559 = vmatprep.subr.mxu0 0.0
      %1560 = vmatpush1.msra.mxu0 %v1221
      %1561 = vmatprep.subr.mxu0 0.0
      %1562 = vmatpush1.msra.mxu0 %v1220
      %1563 = vmatprep.subr.mxu0 0.0
      %1564 = vmatpush1.msra.mxu0 %v1219
      %1565 = vmatprep.subr.mxu0 0.0
      %1566 = vmatpush1.msra.mxu0 %v1218
      %1567 = vmatprep.subr.mxu0 0.0
      %1568 = vmatpush1.msra.mxu0 %v1217
      %1569 = vmatprep.subr.mxu0 0.0
      %1570 = vmatpush1.msra.mxu0 %v1216
      %1571 = vmatprep.subr.mxu0 0.0
      %1572 = vmatpush1.msra.mxu0 %v1215
      %1573 = vmatprep.subr.mxu0 0.0
      %1574 = vmatpush1.msra.mxu0 %v1214
      %1575 = vmatprep.subr.mxu0 0.0
      %1576 = vmatpush1.msra.mxu0 %v1213
      %1577 = vmatprep.subr.mxu0 0.0
      %1578 = vmatpush1.msra.mxu0 %v1212
      %1579 = vmatprep.subr.mxu0 0.0
      %1580 = vmatpush1.msra.mxu0 %v1211
      %1581 = vmatprep.subr.mxu0 0.0
      %1582 = vmatpush1.msra.mxu0 %v1210
      %1583 = vmatprep.subr.mxu0 0.0
      %1584 = vmatpush1.msra.mxu0 %v1209
      %1585 = vmatprep.subr.mxu0 0.0
      %1586 = vmatpush2.msra.mxu0 %v1240
      %1587 = vmatprep.subr.mxu0 0.0
      %1588 = vmatpush2.msra.mxu0 %v1239
      %1589 = vmatprep.subr.mxu0 0.0
      %1590 = vmatpush2.msra.mxu0 %v1238
      %1591 = vmatprep.subr.mxu0 0.0
      %1592 = vmatpush2.msra.mxu0 %v1237
      %1593 = vmatprep.subr.mxu0 0.0
      %1594 = vmatpush2.msra.mxu0 %v1236
      %1595 = vmatprep.subr.mxu0 0.0
      %1596 = vmatpush2.msra.mxu0 %v1235
      %1597 = vmatprep.subr.mxu0 0.0
      %1598 = vmatpush2.msra.mxu0 %v1234
      %1599 = vmatprep.subr.mxu0 0.0
      %1600 = vmatpush2.msra.mxu0 %v1233
      %1601 = vmatprep.subr.mxu0 0.0
      %1602 = vmatpush2.msra.mxu0 %v1232
      %1603 = vmatprep.subr.mxu0 0.0
      %1604 = vmatpush2.msra.mxu0 %v1231
      %1605 = vmatprep.subr.mxu0 0.0
      %1606 = vmatpush2.msra.mxu0 %v1230
      %1607 = vmatprep.subr.mxu0 0.0
      %1608 = vmatpush2.msra.mxu0 %v1229
      %1609 = vmatprep.subr.mxu0 0.0
      %1610 = vmatpush2.msra.mxu0 %v1228
      %1611 = vmatprep.subr.mxu0 0.0
      %1612 = vmatpush2.msra.mxu0 %v1227
      %1613 = vmatprep.subr.mxu0 0.0
      %1614 = vmatpush2.msra.mxu0 %v1226
      %1615 = vmatprep.subr.mxu0 0.0
      %1616 = vmatpush2.msra.mxu0 %v1225
      %1617 = vmatprep.mubr.f32.mxu0 %v892
      %1618 = vmatmul.mubr.f32.gmra.mxu0 %v891
      %v1619 = vpop.f32.mrf.mxu0
      %v1620 = vadd.f32 %v1395, %v1619
      %v1621 = vpop.f32.mrf.mxu0
      %1622 = vmatprep.mubr.f32.mxu0 %v901
      %1623 = vmatmul.mubr.f32.gmra.mxu0 %v900
      %v1624 = vpop.f32.mrf.mxu0
      %v1625 = vadd.f32 %v1400, %v1624
      %v1626 = vpop.f32.mrf.mxu0
      %1627 = vmatprep.mubr.f32.mxu0 %v910
      %1628 = vmatmul.mubr.f32.gmra.mxu0 %v909
      %v1629 = vpop.f32.mrf.mxu0
      %v1630 = vadd.f32 %v1405, %v1629
      %v1631 = vpop.f32.mrf.mxu0
      %1632 = vmatprep.mubr.f32.mxu0 %v919
      %1633 = vmatmul.mubr.f32.gmra.mxu0 %v918
      %v1634 = vpop.f32.mrf.mxu0
      %v1635 = vadd.f32 %v1410, %v1634
      %v1636 = vpop.f32.mrf.mxu0
      %1637 = vmatprep.mubr.f32.mxu0 %v928
      %1638 = vmatmul.mubr.f32.gmra.mxu0 %v927
      %v1639 = vpop.f32.mrf.mxu0
      %v1640 = vadd.f32 %v1415, %v1639
      %v1641 = vpop.f32.mrf.mxu0
      %1642 = vmatprep.mubr.f32.mxu0 %v937
      %1643 = vmatmul.mubr.f32.gmra.mxu0 %v936
      %v1644 = vpop.f32.mrf.mxu0
      %v1645 = vadd.f32 %v1420, %v1644
      %v1646 = vpop.f32.mrf.mxu0
      %1647 = vmatprep.mubr.f32.mxu0 %v946
      %1648 = vmatmul.mubr.f32.gmra.mxu0 %v945
      %v1649 = vpop.f32.mrf.mxu0
      %v1650 = vadd.f32 %v1425, %v1649
      %v1651 = vpop.f32.mrf.mxu0
      %1652 = vmatprep.mubr.f32.mxu0 %v955
      %1653 = vmatmul.mubr.f32.gmra.mxu0 %v954
      %v1654 = vpop.f32.mrf.mxu0
      %v1655 = vadd.f32 %v1430, %v1654
      %v1656 = vpop.f32.mrf.mxu0
      %1657 = vmatprep.mubr.f32.mxu0 %v964
      %1658 = vmatmul.mubr.f32.gmra.mxu0 %v963
      %v1659 = vpop.f32.mrf.mxu0
      %v1660 = vadd.f32 %v1435, %v1659
      %v1661 = vpop.f32.mrf.mxu0
      %1662 = vmatprep.mubr.f32.mxu0 %v973
      %1663 = vmatmul.mubr.f32.gmra.mxu0 %v972
      %v1664 = vpop.f32.mrf.mxu0
      %v1665 = vadd.f32 %v1440, %v1664
      %v1666 = vpop.f32.mrf.mxu0
      %1667 = vmatprep.mubr.f32.mxu0 %v982
      %1668 = vmatmul.mubr.f32.gmra.mxu0 %v981
      %v1669 = vpop.f32.mrf.mxu0
      %v1670 = vadd.f32 %v1445, %v1669
      %v1671 = vpop.f32.mrf.mxu0
      %1672 = vmatprep.mubr.f32.mxu0 %v991
      %1673 = vmatmul.mubr.f32.gmra.mxu0 %v990
      %v1674 = vpop.f32.mrf.mxu0
      %v1675 = vadd.f32 %v1450, %v1674
      %v1676 = vpop.f32.mrf.mxu0
      %1677 = vmatprep.mubr.f32.mxu0 %v1000
      %1678 = vmatmul.mubr.f32.gmra.mxu0 %v999
      %v1679 = vpop.f32.mrf.mxu0
      %v1680 = vadd.f32 %v1455, %v1679
      %v1681 = vpop.f32.mrf.mxu0
      %1682 = vmatprep.mubr.f32.mxu0 %v1009
      %1683 = vmatmul.mubr.f32.gmra.mxu0 %v1008
      %v1684 = vpop.f32.mrf.mxu0
      %v1685 = vadd.f32 %v1460, %v1684
      %v1686 = vpop.f32.mrf.mxu0
      %1687 = vmatprep.mubr.f32.mxu0 %v1018
      %1688 = vmatmul.mubr.f32.gmra.mxu0 %v1017
      %v1689 = vpop.f32.mrf.mxu0
      %v1690 = vadd.f32 %v1465, %v1689
      %v1691 = vpop.f32.mrf.mxu0
      %1692 = vmatprep.mubr.f32.mxu0 %v1027
      %1693 = vmatmul.mubr.f32.gmra.mxu0 %v1026
      %v1694 = vpop.f32.mrf.mxu0
      %v1695 = vadd.f32 %v1470, %v1694
      %v1696 = vpop.f32.mrf.mxu0
      %1697 = vmatprep.mubr.f32.mxu0 %v1036
      %1698 = vmatmul.mubr.f32.gmra.mxu0 %v1035
      %v1699 = vpop.f32.mrf.mxu0
      %v1700 = vadd.f32 %v1475, %v1699
      %v1701 = vpop.f32.mrf.mxu0
      %1702 = vmatprep.mubr.f32.mxu0 %v1045
      %1703 = vmatmul.mubr.f32.gmra.mxu0 %v1044
      %v1704 = vpop.f32.mrf.mxu0
      %v1705 = vadd.f32 %v1480, %v1704
      %v1706 = vpop.f32.mrf.mxu0
      %1707 = vmatprep.mubr.f32.mxu0 %v1054
      %1708 = vmatmul.mubr.f32.gmra.mxu0 %v1053
      %v1709 = vpop.f32.mrf.mxu0
      %v1710 = vadd.f32 %v1485, %v1709
      %v1711 = vpop.f32.mrf.mxu0
      %1712 = vmatprep.mubr.f32.mxu0 %v1063
      %1713 = vmatmul.mubr.f32.gmra.mxu0 %v1062
      %v1714 = vpop.f32.mrf.mxu0
      %v1715 = vadd.f32 %v1490, %v1714
      %v1716 = vpop.f32.mrf.mxu0
      %1717 = vmatprep.mubr.f32.mxu0 %v1072
      %1718 = vmatmul.mubr.f32.gmra.mxu0 %v1071
      %v1719 = vpop.f32.mrf.mxu0
      %v1720 = vadd.f32 %v1495, %v1719
      %v1721 = vpop.f32.mrf.mxu0
      %1722 = vmatprep.mubr.f32.mxu0 %v1081
      %1723 = vmatmul.mubr.f32.gmra.mxu0 %v1080
      %v1724 = vpop.f32.mrf.mxu0
      %v1725 = vadd.f32 %v1500, %v1724
      %v1726 = vpop.f32.mrf.mxu0
      %1727 = vmatprep.mubr.f32.mxu0 %v1090
      %1728 = vmatmul.mubr.f32.gmra.mxu0 %v1089
      %v1729 = vpop.f32.mrf.mxu0
      %v1730 = vadd.f32 %v1505, %v1729
      %v1731 = vpop.f32.mrf.mxu0
      %1732 = vmatprep.mubr.f32.mxu0 %v1099
      %1733 = vmatmul.mubr.f32.gmra.mxu0 %v1098
      %v1734 = vpop.f32.mrf.mxu0
      %v1735 = vadd.f32 %v1510, %v1734
      %v1736 = vpop.f32.mrf.mxu0
      %1737 = vmatprep.mubr.f32.mxu0 %v1108
      %1738 = vmatmul.mubr.f32.gmra.mxu0 %v1107
      %v1739 = vpop.f32.mrf.mxu0
      %v1740 = vadd.f32 %v1515, %v1739
      %v1741 = vpop.f32.mrf.mxu0
      %1742 = vmatprep.mubr.f32.mxu0 %v1117
      %1743 = vmatmul.mubr.f32.gmra.mxu0 %v1116
      %v1744 = vpop.f32.mrf.mxu0
      %v1745 = vadd.f32 %v1520, %v1744
      %v1746 = vpop.f32.mrf.mxu0
      %1747 = vmatprep.mubr.f32.mxu0 %v1126
      %1748 = vmatmul.mubr.f32.gmra.mxu0 %v1125
      %v1749 = vpop.f32.mrf.mxu0
      %v1750 = vadd.f32 %v1525, %v1749
      %v1751 = vpop.f32.mrf.mxu0
      %1752 = vmatprep.mubr.f32.mxu0 %v1135
      %1753 = vmatmul.mubr.f32.gmra.mxu0 %v1134
      %v1754 = vpop.f32.mrf.mxu0
      %v1755 = vadd.f32 %v1530, %v1754
      %v1756 = vpop.f32.mrf.mxu0
      %1757 = vmatprep.mubr.f32.mxu0 %v1144
      %1758 = vmatmul.mubr.f32.gmra.mxu0 %v1143
      %v1759 = vpop.f32.mrf.mxu0
      %v1760 = vadd.f32 %v1535, %v1759
      %v1761 = vpop.f32.mrf.mxu0
      %1762 = vmatprep.mubr.f32.mxu0 %v1153
      %1763 = vmatmul.mubr.f32.gmra.mxu0 %v1152
      %v1764 = vpop.f32.mrf.mxu0
      %v1765 = vadd.f32 %v1540, %v1764
      %v1766 = vpop.f32.mrf.mxu0
      %1767 = vmatprep.mubr.f32.mxu0 %v1162
      %1768 = vmatmul.mubr.f32.gmra.mxu0 %v1161
      %v1769 = vpop.f32.mrf.mxu0
      %v1770 = vadd.f32 %v1545, %v1769
      %v1771 = vpop.f32.mrf.mxu0
      %1772 = vmatprep.mubr.f32.mxu0 %v1171
      %1773 = vmatmul.mubr.f32.gmra.mxu0 %v1170
      %v1774 = vpop.f32.mrf.mxu0
      %v1775 = vadd.f32 %v1550, %v1774
      %v1776 = vpop.f32.mrf.mxu0
      %1777 = vdwg.mxu0
      %1778 = vmatprep.subr.mxu0 0.0
      %1779 = vmatpush1.msra.mxu0 %v1256
      %1780 = vmatprep.subr.mxu0 0.0
      %1781 = vmatpush1.msra.mxu0 %v1255
      %1782 = vmatprep.subr.mxu0 0.0
      %1783 = vmatpush1.msra.mxu0 %v1254
      %1784 = vmatprep.subr.mxu0 0.0
      %1785 = vmatpush1.msra.mxu0 %v1253
      %1786 = vmatprep.subr.mxu0 0.0
      %1787 = vmatpush1.msra.mxu0 %v1252
      %1788 = vmatprep.subr.mxu0 0.0
      %1789 = vmatpush1.msra.mxu0 %v1251
      %1790 = vmatprep.subr.mxu0 0.0
      %1791 = vmatpush1.msra.mxu0 %v1250
      %1792 = vmatprep.subr.mxu0 0.0
      %1793 = vmatpush1.msra.mxu0 %v1249
      %1794 = vmatprep.subr.mxu0 0.0
      %1795 = vmatpush1.msra.mxu0 %v1248
      %1796 = vmatprep.subr.mxu0 0.0
      %1797 = vmatpush1.msra.mxu0 %v1247
      %1798 = vmatprep.subr.mxu0 0.0
      %1799 = vmatpush1.msra.mxu0 %v1246
      %1800 = vmatprep.subr.mxu0 0.0
      %1801 = vmatpush1.msra.mxu0 %v1245
      %1802 = vmatprep.subr.mxu0 0.0
      %1803 = vmatpush1.msra.mxu0 %v1244
      %1804 = vmatprep.subr.mxu0 0.0
      %1805 = vmatpush1.msra.mxu0 %v1243
      %1806 = vmatprep.subr.mxu0 0.0
      %1807 = vmatpush1.msra.mxu0 %v1242
      %1808 = vmatprep.subr.mxu0 0.0
      %1809 = vmatpush1.msra.mxu0 %v1241
      %1810 = vmatprep.subr.mxu0 0.0
      %1811 = vmatpush2.msra.mxu0 %v1272
      %1812 = vmatprep.subr.mxu0 0.0
      %1813 = vmatpush2.msra.mxu0 %v1271
      %1814 = vmatprep.subr.mxu0 0.0
      %1815 = vmatpush2.msra.mxu0 %v1270
      %1816 = vmatprep.subr.mxu0 0.0
      %1817 = vmatpush2.msra.mxu0 %v1269
      %1818 = vmatprep.subr.mxu0 0.0
      %1819 = vmatpush2.msra.mxu0 %v1268
      %1820 = vmatprep.subr.mxu0 0.0
      %1821 = vmatpush2.msra.mxu0 %v1267
      %1822 = vmatprep.subr.mxu0 0.0
      %1823 = vmatpush2.msra.mxu0 %v1266
      %1824 = vmatprep.subr.mxu0 0.0
      %1825 = vmatpush2.msra.mxu0 %v1265
      %1826 = vmatprep.subr.mxu0 0.0
      %1827 = vmatpush2.msra.mxu0 %v1264
      %1828 = vmatprep.subr.mxu0 0.0
      %1829 = vmatpush2.msra.mxu0 %v1263
      %1830 = vmatprep.subr.mxu0 0.0
      %1831 = vmatpush2.msra.mxu0 %v1262
      %1832 = vmatprep.subr.mxu0 0.0
      %1833 = vmatpush2.msra.mxu0 %v1261
      %1834 = vmatprep.subr.mxu0 0.0
      %1835 = vmatpush2.msra.mxu0 %v1260
      %1836 = vmatprep.subr.mxu0 0.0
      %1837 = vmatpush2.msra.mxu0 %v1259
      %1838 = vmatprep.subr.mxu0 0.0
      %1839 = vmatpush2.msra.mxu0 %v1258
      %1840 = vmatprep.subr.mxu0 0.0
      %1841 = vmatpush2.msra.mxu0 %v1257
      %1842 = vmatprep.mubr.f32.mxu0 %v894
      %1843 = vmatmul.mubr.f32.gmra.mxu0 %v893
      %v1844 = vpop.f32.mrf.mxu0
      %v1845 = vadd.f32 %v1620, %v1844
      %v1846 = vpop.f32.mrf.mxu0
      %1847 = vmatprep.mubr.f32.mxu0 %v903
      %1848 = vmatmul.mubr.f32.gmra.mxu0 %v902
      %v1849 = vpop.f32.mrf.mxu0
      %v1850 = vadd.f32 %v1625, %v1849
      %v1851 = vpop.f32.mrf.mxu0
      %1852 = vmatprep.mubr.f32.mxu0 %v912
      %1853 = vmatmul.mubr.f32.gmra.mxu0 %v911
      %v1854 = vpop.f32.mrf.mxu0
      %v1855 = vadd.f32 %v1630, %v1854
      %v1856 = vpop.f32.mrf.mxu0
      %1857 = vmatprep.mubr.f32.mxu0 %v921
      %1858 = vmatmul.mubr.f32.gmra.mxu0 %v920
      %v1859 = vpop.f32.mrf.mxu0
      %v1860 = vadd.f32 %v1635, %v1859
      %v1861 = vpop.f32.mrf.mxu0
      %1862 = vmatprep.mubr.f32.mxu0 %v930
      %1863 = vmatmul.mubr.f32.gmra.mxu0 %v929
      %v1864 = vpop.f32.mrf.mxu0
      %v1865 = vadd.f32 %v1640, %v1864
      %v1866 = vpop.f32.mrf.mxu0
      %1867 = vmatprep.mubr.f32.mxu0 %v939
      %1868 = vmatmul.mubr.f32.gmra.mxu0 %v938
      %v1869 = vpop.f32.mrf.mxu0
      %v1870 = vadd.f32 %v1645, %v1869
      %v1871 = vpop.f32.mrf.mxu0
      %1872 = vmatprep.mubr.f32.mxu0 %v948
      %1873 = vmatmul.mubr.f32.gmra.mxu0 %v947
      %v1874 = vpop.f32.mrf.mxu0
      %v1875 = vadd.f32 %v1650, %v1874
      %v1876 = vpop.f32.mrf.mxu0
      %1877 = vmatprep.mubr.f32.mxu0 %v957
      %1878 = vmatmul.mubr.f32.gmra.mxu0 %v956
      %v1879 = vpop.f32.mrf.mxu0
      %v1880 = vadd.f32 %v1655, %v1879
      %v1881 = vpop.f32.mrf.mxu0
      %1882 = vmatprep.mubr.f32.mxu0 %v966
      %1883 = vmatmul.mubr.f32.gmra.mxu0 %v965
      %v1884 = vpop.f32.mrf.mxu0
      %v1885 = vadd.f32 %v1660, %v1884
      %v1886 = vpop.f32.mrf.mxu0
      %1887 = vmatprep.mubr.f32.mxu0 %v975
      %1888 = vmatmul.mubr.f32.gmra.mxu0 %v974
      %v1889 = vpop.f32.mrf.mxu0
      %v1890 = vadd.f32 %v1665, %v1889
      %v1891 = vpop.f32.mrf.mxu0
      %1892 = vmatprep.mubr.f32.mxu0 %v984
      %1893 = vmatmul.mubr.f32.gmra.mxu0 %v983
      %v1894 = vpop.f32.mrf.mxu0
      %v1895 = vadd.f32 %v1670, %v1894
      %v1896 = vpop.f32.mrf.mxu0
      %1897 = vmatprep.mubr.f32.mxu0 %v993
      %1898 = vmatmul.mubr.f32.gmra.mxu0 %v992
      %v1899 = vpop.f32.mrf.mxu0
      %v1900 = vadd.f32 %v1675, %v1899
      %v1901 = vpop.f32.mrf.mxu0
      %1902 = vmatprep.mubr.f32.mxu0 %v1002
      %1903 = vmatmul.mubr.f32.gmra.mxu0 %v1001
      %v1904 = vpop.f32.mrf.mxu0
      %v1905 = vadd.f32 %v1680, %v1904
      %v1906 = vpop.f32.mrf.mxu0
      %1907 = vmatprep.mubr.f32.mxu0 %v1011
      %1908 = vmatmul.mubr.f32.gmra.mxu0 %v1010
      %v1909 = vpop.f32.mrf.mxu0
      %v1910 = vadd.f32 %v1685, %v1909
      %v1911 = vpop.f32.mrf.mxu0
      %1912 = vmatprep.mubr.f32.mxu0 %v1020
      %1913 = vmatmul.mubr.f32.gmra.mxu0 %v1019
      %v1914 = vpop.f32.mrf.mxu0
      %v1915 = vadd.f32 %v1690, %v1914
      %v1916 = vpop.f32.mrf.mxu0
      %1917 = vmatprep.mubr.f32.mxu0 %v1029
      %1918 = vmatmul.mubr.f32.gmra.mxu0 %v1028
      %v1919 = vpop.f32.mrf.mxu0
      %v1920 = vadd.f32 %v1695, %v1919
      %v1921 = vpop.f32.mrf.mxu0
      %1922 = vmatprep.mubr.f32.mxu0 %v1038
      %1923 = vmatmul.mubr.f32.gmra.mxu0 %v1037
      %v1924 = vpop.f32.mrf.mxu0
      %v1925 = vadd.f32 %v1700, %v1924
      %v1926 = vpop.f32.mrf.mxu0
      %1927 = vmatprep.mubr.f32.mxu0 %v1047
      %1928 = vmatmul.mubr.f32.gmra.mxu0 %v1046
      %v1929 = vpop.f32.mrf.mxu0
      %v1930 = vadd.f32 %v1705, %v1929
      %v1931 = vpop.f32.mrf.mxu0
      %1932 = vmatprep.mubr.f32.mxu0 %v1056
      %1933 = vmatmul.mubr.f32.gmra.mxu0 %v1055
      %v1934 = vpop.f32.mrf.mxu0
      %v1935 = vadd.f32 %v1710, %v1934
      %v1936 = vpop.f32.mrf.mxu0
      %1937 = vmatprep.mubr.f32.mxu0 %v1065
      %1938 = vmatmul.mubr.f32.gmra.mxu0 %v1064
      %v1939 = vpop.f32.mrf.mxu0
      %v1940 = vadd.f32 %v1715, %v1939
      %v1941 = vpop.f32.mrf.mxu0
      %1942 = vmatprep.mubr.f32.mxu0 %v1074
      %1943 = vmatmul.mubr.f32.gmra.mxu0 %v1073
      %v1944 = vpop.f32.mrf.mxu0
      %v1945 = vadd.f32 %v1720, %v1944
      %v1946 = vpop.f32.mrf.mxu0
      %1947 = vmatprep.mubr.f32.mxu0 %v1083
      %1948 = vmatmul.mubr.f32.gmra.mxu0 %v1082
      %v1949 = vpop.f32.mrf.mxu0
      %v1950 = vadd.f32 %v1725, %v1949
      %v1951 = vpop.f32.mrf.mxu0
      %1952 = vmatprep.mubr.f32.mxu0 %v1092
      %1953 = vmatmul.mubr.f32.gmra.mxu0 %v1091
      %v1954 = vpop.f32.mrf.mxu0
      %v1955 = vadd.f32 %v1730, %v1954
      %v1956 = vpop.f32.mrf.mxu0
      %1957 = vmatprep.mubr.f32.mxu0 %v1101
      %1958 = vmatmul.mubr.f32.gmra.mxu0 %v1100
      %v1959 = vpop.f32.mrf.mxu0
      %v1960 = vadd.f32 %v1735, %v1959
      %v1961 = vpop.f32.mrf.mxu0
      %1962 = vmatprep.mubr.f32.mxu0 %v1110
      %1963 = vmatmul.mubr.f32.gmra.mxu0 %v1109
      %v1964 = vpop.f32.mrf.mxu0
      %v1965 = vadd.f32 %v1740, %v1964
      %v1966 = vpop.f32.mrf.mxu0
      %1967 = vmatprep.mubr.f32.mxu0 %v1119
      %1968 = vmatmul.mubr.f32.gmra.mxu0 %v1118
      %v1969 = vpop.f32.mrf.mxu0
      %v1970 = vadd.f32 %v1745, %v1969
      %v1971 = vpop.f32.mrf.mxu0
      %1972 = vmatprep.mubr.f32.mxu0 %v1128
      %1973 = vmatmul.mubr.f32.gmra.mxu0 %v1127
      %v1974 = vpop.f32.mrf.mxu0
      %v1975 = vadd.f32 %v1750, %v1974
      %v1976 = vpop.f32.mrf.mxu0
      %1977 = vmatprep.mubr.f32.mxu0 %v1137
      %1978 = vmatmul.mubr.f32.gmra.mxu0 %v1136
      %v1979 = vpop.f32.mrf.mxu0
      %v1980 = vadd.f32 %v1755, %v1979
      %v1981 = vpop.f32.mrf.mxu0
      %1982 = vmatprep.mubr.f32.mxu0 %v1146
      %1983 = vmatmul.mubr.f32.gmra.mxu0 %v1145
      %v1984 = vpop.f32.mrf.mxu0
      %v1985 = vadd.f32 %v1760, %v1984
      %v1986 = vpop.f32.mrf.mxu0
      %1987 = vmatprep.mubr.f32.mxu0 %v1155
      %1988 = vmatmul.mubr.f32.gmra.mxu0 %v1154
      %v1989 = vpop.f32.mrf.mxu0
      %v1990 = vadd.f32 %v1765, %v1989
      %v1991 = vpop.f32.mrf.mxu0
      %1992 = vmatprep.mubr.f32.mxu0 %v1164
      %1993 = vmatmul.mubr.f32.gmra.mxu0 %v1163
      %v1994 = vpop.f32.mrf.mxu0
      %v1995 = vadd.f32 %v1770, %v1994
      %v1996 = vpop.f32.mrf.mxu0
      %1997 = vmatprep.mubr.f32.mxu0 %v1173
      %1998 = vmatmul.mubr.f32.gmra.mxu0 %v1172
      %v1999 = vpop.f32.mrf.mxu0
      %v2000 = vadd.f32 %v1775, %v1999
      %v2001 = vpop.f32.mrf.mxu0
      %2002 = vdwg.mxu0
      %2003 = vmatprep.subr.mxu0 0.0
      %2004 = vmatpush1.msra.mxu0 %v1288
      %2005 = vmatprep.subr.mxu0 0.0
      %2006 = vmatpush1.msra.mxu0 %v1287
      %2007 = vmatprep.subr.mxu0 0.0
      %2008 = vmatpush1.msra.mxu0 %v1286
      %2009 = vmatprep.subr.mxu0 0.0
      %2010 = vmatpush1.msra.mxu0 %v1285
      %2011 = vmatprep.subr.mxu0 0.0
      %2012 = vmatpush1.msra.mxu0 %v1284
      %2013 = vmatprep.subr.mxu0 0.0
      %2014 = vmatpush1.msra.mxu0 %v1283
      %2015 = vmatprep.subr.mxu0 0.0
      %2016 = vmatpush1.msra.mxu0 %v1282
      %2017 = vmatprep.subr.mxu0 0.0
      %2018 = vmatpush1.msra.mxu0 %v1281
      %2019 = vmatprep.subr.mxu0 0.0
      %2020 = vmatpush1.msra.mxu0 %v1280
      %2021 = vmatprep.subr.mxu0 0.0
      %2022 = vmatpush1.msra.mxu0 %v1279
      %2023 = vmatprep.subr.mxu0 0.0
      %2024 = vmatpush1.msra.mxu0 %v1278
      %2025 = vmatprep.subr.mxu0 0.0
      %2026 = vmatpush1.msra.mxu0 %v1277
      %2027 = vmatprep.subr.mxu0 0.0
      %2028 = vmatpush1.msra.mxu0 %v1276
      %2029 = vmatprep.subr.mxu0 0.0
      %2030 = vmatpush1.msra.mxu0 %v1275
      %2031 = vmatprep.subr.mxu0 0.0
      %2032 = vmatpush1.msra.mxu0 %v1274
      %2033 = vmatprep.subr.mxu0 0.0
      %2034 = vmatpush1.msra.mxu0 %v1273
      %2035 = vmatprep.subr.mxu0 0.0
      %2036 = vmatpush2.msra.mxu0 %v1304
      %2037 = vmatprep.subr.mxu0 0.0
      %2038 = vmatpush2.msra.mxu0 %v1303
      %2039 = vmatprep.subr.mxu0 0.0
      %2040 = vmatpush2.msra.mxu0 %v1302
      %2041 = vmatprep.subr.mxu0 0.0
      %2042 = vmatpush2.msra.mxu0 %v1301
      %2043 = vmatprep.subr.mxu0 0.0
      %2044 = vmatpush2.msra.mxu0 %v1300
      %2045 = vmatprep.subr.mxu0 0.0
      %2046 = vmatpush2.msra.mxu0 %v1299
      %2047 = vmatprep.subr.mxu0 0.0
      %2048 = vmatpush2.msra.mxu0 %v1298
      %2049 = vmatprep.subr.mxu0 0.0
      %2050 = vmatpush2.msra.mxu0 %v1297
      %2051 = vmatprep.subr.mxu0 0.0
      %2052 = vmatpush2.msra.mxu0 %v1296
      %2053 = vmatprep.subr.mxu0 0.0
      %2054 = vmatpush2.msra.mxu0 %v1295
      %2055 = vmatprep.subr.mxu0 0.0
      %2056 = vmatpush2.msra.mxu0 %v1294
      %2057 = vmatprep.subr.mxu0 0.0
      %2058 = vmatpush2.msra.mxu0 %v1293
      %2059 = vmatprep.subr.mxu0 0.0
      %2060 = vmatpush2.msra.mxu0 %v1292
      %2061 = vmatprep.subr.mxu0 0.0
      %2062 = vmatpush2.msra.mxu0 %v1291
      %2063 = vmatprep.subr.mxu0 0.0
      %2064 = vmatpush2.msra.mxu0 %v1290
      %2065 = vmatprep.subr.mxu0 0.0
      %2066 = vmatpush2.msra.mxu0 %v1289
      %2067 = vmatprep.mubr.f32.mxu0 %v896
      %2068 = vmatmul.mubr.f32.gmra.mxu0 %v895
      %v2069 = vpop.f32.mrf.mxu0
      %v2070 = vadd.f32 %v1845, %v2069
      %v2071 = vpop.f32.mrf.mxu0
      %2072 = vmatprep.mubr.f32.mxu0 %v905
      %2073 = vmatmul.mubr.f32.gmra.mxu0 %v904
      %v2074 = vpop.f32.mrf.mxu0
      %v2075 = vadd.f32 %v1850, %v2074
      %v2076 = vpop.f32.mrf.mxu0
      %2077 = vmatprep.mubr.f32.mxu0 %v914
      %2078 = vmatmul.mubr.f32.gmra.mxu0 %v913
      %v2079 = vpop.f32.mrf.mxu0
      %v2080 = vadd.f32 %v1855, %v2079
      %v2081 = vpop.f32.mrf.mxu0
      %2082 = vmatprep.mubr.f32.mxu0 %v923
      %2083 = vmatmul.mubr.f32.gmra.mxu0 %v922
      %v2084 = vpop.f32.mrf.mxu0
      %v2085 = vadd.f32 %v1860, %v2084
      %v2086 = vpop.f32.mrf.mxu0
      %2087 = vmatprep.mubr.f32.mxu0 %v932
      %2088 = vmatmul.mubr.f32.gmra.mxu0 %v931
      %v2089 = vpop.f32.mrf.mxu0
      %v2090 = vadd.f32 %v1865, %v2089
      %v2091 = vpop.f32.mrf.mxu0
      %2092 = vmatprep.mubr.f32.mxu0 %v941
      %2093 = vmatmul.mubr.f32.gmra.mxu0 %v940
      %v2094 = vpop.f32.mrf.mxu0
      %v2095 = vadd.f32 %v1870, %v2094
      %v2096 = vpop.f32.mrf.mxu0
      %2097 = vmatprep.mubr.f32.mxu0 %v950
      %2098 = vmatmul.mubr.f32.gmra.mxu0 %v949
      %v2099 = vpop.f32.mrf.mxu0
      %v2100 = vadd.f32 %v1875, %v2099
      %v2101 = vpop.f32.mrf.mxu0
      %2102 = vmatprep.mubr.f32.mxu0 %v959
      %2103 = vmatmul.mubr.f32.gmra.mxu0 %v958
      %v2104 = vpop.f32.mrf.mxu0
      %v2105 = vadd.f32 %v1880, %v2104
      %v2106 = vpop.f32.mrf.mxu0
      %2107 = vmatprep.mubr.f32.mxu0 %v968
      %2108 = vmatmul.mubr.f32.gmra.mxu0 %v967
      %v2109 = vpop.f32.mrf.mxu0
      %v2110 = vadd.f32 %v1885, %v2109
      %v2111 = vpop.f32.mrf.mxu0
      %2112 = vmatprep.mubr.f32.mxu0 %v977
      %2113 = vmatmul.mubr.f32.gmra.mxu0 %v976
      %v2114 = vpop.f32.mrf.mxu0
      %v2115 = vadd.f32 %v1890, %v2114
      %v2116 = vpop.f32.mrf.mxu0
      %2117 = vmatprep.mubr.f32.mxu0 %v986
      %2118 = vmatmul.mubr.f32.gmra.mxu0 %v985
      %v2119 = vpop.f32.mrf.mxu0
      %v2120 = vadd.f32 %v1895, %v2119
      %v2121 = vpop.f32.mrf.mxu0
      %2122 = vmatprep.mubr.f32.mxu0 %v995
      %2123 = vmatmul.mubr.f32.gmra.mxu0 %v994
      %v2124 = vpop.f32.mrf.mxu0
      %v2125 = vadd.f32 %v1900, %v2124
      %v2126 = vpop.f32.mrf.mxu0
      %2127 = vmatprep.mubr.f32.mxu0 %v1004
      %2128 = vmatmul.mubr.f32.gmra.mxu0 %v1003
      %v2129 = vpop.f32.mrf.mxu0
      %v2130 = vadd.f32 %v1905, %v2129
      %v2131 = vpop.f32.mrf.mxu0
      %2132 = vmatprep.mubr.f32.mxu0 %v1013
      %2133 = vmatmul.mubr.f32.gmra.mxu0 %v1012
      %v2134 = vpop.f32.mrf.mxu0
      %v2135 = vadd.f32 %v1910, %v2134
      %v2136 = vpop.f32.mrf.mxu0
      %2137 = vmatprep.mubr.f32.mxu0 %v1022
      %2138 = vmatmul.mubr.f32.gmra.mxu0 %v1021
      %v2139 = vpop.f32.mrf.mxu0
      %v2140 = vadd.f32 %v1915, %v2139
      %v2141 = vpop.f32.mrf.mxu0
      %2142 = vmatprep.mubr.f32.mxu0 %v1031
      %2143 = vmatmul.mubr.f32.gmra.mxu0 %v1030
      %v2144 = vpop.f32.mrf.mxu0
      %v2145 = vadd.f32 %v1920, %v2144
      %v2146 = vpop.f32.mrf.mxu0
      %2147 = vmatprep.mubr.f32.mxu0 %v1040
      %2148 = vmatmul.mubr.f32.gmra.mxu0 %v1039
      %v2149 = vpop.f32.mrf.mxu0
      %v2150 = vadd.f32 %v1925, %v2149
      %v2151 = vpop.f32.mrf.mxu0
      %2152 = vmatprep.mubr.f32.mxu0 %v1049
      %2153 = vmatmul.mubr.f32.gmra.mxu0 %v1048
      %v2154 = vpop.f32.mrf.mxu0
      %v2155 = vadd.f32 %v1930, %v2154
      %v2156 = vpop.f32.mrf.mxu0
      %2157 = vmatprep.mubr.f32.mxu0 %v1058
      %2158 = vmatmul.mubr.f32.gmra.mxu0 %v1057
      %v2159 = vpop.f32.mrf.mxu0
      %v2160 = vadd.f32 %v1935, %v2159
      %v2161 = vpop.f32.mrf.mxu0
      %2162 = vmatprep.mubr.f32.mxu0 %v1067
      %2163 = vmatmul.mubr.f32.gmra.mxu0 %v1066
      %v2164 = vpop.f32.mrf.mxu0
      %v2165 = vadd.f32 %v1940, %v2164
      %v2166 = vpop.f32.mrf.mxu0
      %2167 = vmatprep.mubr.f32.mxu0 %v1076
      %2168 = vmatmul.mubr.f32.gmra.mxu0 %v1075
      %v2169 = vpop.f32.mrf.mxu0
      %v2170 = vadd.f32 %v1945, %v2169
      %v2171 = vpop.f32.mrf.mxu0
      %2172 = vmatprep.mubr.f32.mxu0 %v1085
      %2173 = vmatmul.mubr.f32.gmra.mxu0 %v1084
      %v2174 = vpop.f32.mrf.mxu0
      %v2175 = vadd.f32 %v1950, %v2174
      %v2176 = vpop.f32.mrf.mxu0
      %2177 = vmatprep.mubr.f32.mxu0 %v1094
      %2178 = vmatmul.mubr.f32.gmra.mxu0 %v1093
      %v2179 = vpop.f32.mrf.mxu0
      %v2180 = vadd.f32 %v1955, %v2179
      %v2181 = vpop.f32.mrf.mxu0
      %2182 = vmatprep.mubr.f32.mxu0 %v1103
      %2183 = vmatmul.mubr.f32.gmra.mxu0 %v1102
      %v2184 = vpop.f32.mrf.mxu0
      %v2185 = vadd.f32 %v1960, %v2184
      %v2186 = vpop.f32.mrf.mxu0
      %2187 = vmatprep.mubr.f32.mxu0 %v1112
      %2188 = vmatmul.mubr.f32.gmra.mxu0 %v1111
      %v2189 = vpop.f32.mrf.mxu0
      %v2190 = vadd.f32 %v1965, %v2189
      %v2191 = vpop.f32.mrf.mxu0
      %2192 = vmatprep.mubr.f32.mxu0 %v1121
      %2193 = vmatmul.mubr.f32.gmra.mxu0 %v1120
      %v2194 = vpop.f32.mrf.mxu0
      %v2195 = vadd.f32 %v1970, %v2194
      %v2196 = vpop.f32.mrf.mxu0
      %2197 = vmatprep.mubr.f32.mxu0 %v1130
      %2198 = vmatmul.mubr.f32.gmra.mxu0 %v1129
      %v2199 = vpop.f32.mrf.mxu0
      %v2200 = vadd.f32 %v1975, %v2199
      %v2201 = vpop.f32.mrf.mxu0
      %2202 = vmatprep.mubr.f32.mxu0 %v1139
      %2203 = vmatmul.mubr.f32.gmra.mxu0 %v1138
      %v2204 = vpop.f32.mrf.mxu0
      %v2205 = vadd.f32 %v1980, %v2204
      %v2206 = vpop.f32.mrf.mxu0
      %2207 = vmatprep.mubr.f32.mxu0 %v1148
      %2208 = vmatmul.mubr.f32.gmra.mxu0 %v1147
      %v2209 = vpop.f32.mrf.mxu0
      %v2210 = vadd.f32 %v1985, %v2209
      %v2211 = vpop.f32.mrf.mxu0
      %2212 = vmatprep.mubr.f32.mxu0 %v1157
      %2213 = vmatmul.mubr.f32.gmra.mxu0 %v1156
      %v2214 = vpop.f32.mrf.mxu0
      %v2215 = vadd.f32 %v1990, %v2214
      %v2216 = vpop.f32.mrf.mxu0
      %2217 = vmatprep.mubr.f32.mxu0 %v1166
      %2218 = vmatmul.mubr.f32.gmra.mxu0 %v1165
      %v2219 = vpop.f32.mrf.mxu0
      %v2220 = vadd.f32 %v1995, %v2219
      %v2221 = vpop.f32.mrf.mxu0
      %2222 = vmatprep.mubr.f32.mxu0 %v1175
      %2223 = vmatmul.mubr.f32.gmra.mxu0 %v1174
      %v2224 = vpop.f32.mrf.mxu0
      %v2225 = vadd.f32 %v2000, %v2224
      %v2226 = vpop.f32.mrf.mxu0
      %2227 = vdwg.mxu0
      %2228 = vmatprep.subr.mxu0 0.0
      %2229 = vmatpush1.msra.mxu0 %v1320
      %2230 = vmatprep.subr.mxu0 0.0
      %2231 = vmatpush1.msra.mxu0 %v1319
      %2232 = vmatprep.subr.mxu0 0.0
      %2233 = vmatpush1.msra.mxu0 %v1318
      %2234 = vmatprep.subr.mxu0 0.0
      %2235 = vmatpush1.msra.mxu0 %v1317
      %2236 = vmatprep.subr.mxu0 0.0
      %2237 = vmatpush1.msra.mxu0 %v1316
      %2238 = vmatprep.subr.mxu0 0.0
      %2239 = vmatpush1.msra.mxu0 %v1315
      %2240 = vmatprep.subr.mxu0 0.0
      %2241 = vmatpush1.msra.mxu0 %v1314
      %2242 = vmatprep.subr.mxu0 0.0
      %2243 = vmatpush1.msra.mxu0 %v1313
      %2244 = vmatprep.subr.mxu0 0.0
      %2245 = vmatpush1.msra.mxu0 %v1312
      %2246 = vmatprep.subr.mxu0 0.0
      %2247 = vmatpush1.msra.mxu0 %v1311
      %2248 = vmatprep.subr.mxu0 0.0
      %2249 = vmatpush1.msra.mxu0 %v1310
      %2250 = vmatprep.subr.mxu0 0.0
      %2251 = vmatpush1.msra.mxu0 %v1309
      %2252 = vmatprep.subr.mxu0 0.0
      %2253 = vmatpush1.msra.mxu0 %v1308
      %2254 = vmatprep.subr.mxu0 0.0
      %2255 = vmatpush1.msra.mxu0 %v1307
      %2256 = vmatprep.subr.mxu0 0.0
      %2257 = vmatpush1.msra.mxu0 %v1306
      %2258 = vmatprep.subr.mxu0 0.0
      %2259 = vmatpush1.msra.mxu0 %v1305
      %2260 = vmatprep.subr.mxu0 0.0
      %2261 = vmatpush2.msra.mxu0 0.0
      %2262 = vmatprep.subr.mxu0 0.0
      %2263 = vmatpush2.msra.mxu0 0.0
      %2264 = vmatprep.subr.mxu0 0.0
      %2265 = vmatpush2.msra.mxu0 0.0
      %2266 = vmatprep.subr.mxu0 0.0
      %2267 = vmatpush2.msra.mxu0 0.0
      %2268 = vmatprep.subr.mxu0 0.0
      %2269 = vmatpush2.msra.mxu0 0.0
      %2270 = vmatprep.subr.mxu0 0.0
      %2271 = vmatpush2.msra.mxu0 0.0
      %2272 = vmatprep.subr.mxu0 0.0
      %2273 = vmatpush2.msra.mxu0 0.0
      %2274 = vmatprep.subr.mxu0 0.0
      %2275 = vmatpush2.msra.mxu0 0.0
      %2276 = vmatprep.subr.mxu0 0.0
      %2277 = vmatpush2.msra.mxu0 0.0
      %2278 = vmatprep.subr.mxu0 0.0
      %2279 = vmatpush2.msra.mxu0 0.0
      %2280 = vmatprep.subr.mxu0 0.0
      %2281 = vmatpush2.msra.mxu0 0.0
      %2282 = vmatprep.subr.mxu0 0.0
      %2283 = vmatpush2.msra.mxu0 0.0
      %2284 = vmatprep.subr.mxu0 0.0
      %2285 = vmatpush2.msra.mxu0 0.0
      %2286 = vmatprep.subr.mxu0 0.0
      %2287 = vmatpush2.msra.mxu0 0.0
      %2288 = vmatprep.subr.mxu0 0.0
      %2289 = vmatpush2.msra.mxu0 0.0
      %2290 = vmatprep.subr.mxu0 0.0
      %2291 = vmatpush2.msra.mxu0 0.0
      %2292 = vmatprep.mubr.f32.mxu0 0.0
      %2293 = vmatmul.mubr.f32.gmra.mxu0 %v897
      %v2294 = vpop.f32.mrf.mxu0
      %v2295 = vadd.f32 %v2070, %v2294
      %v2296 = vpop.f32.mrf.mxu0
      %2297 = vmatprep.mubr.f32.mxu0 0.0
      %2298 = vmatmul.mubr.f32.gmra.mxu0 %v906
      %v2299 = vpop.f32.mrf.mxu0
      %v2300 = vadd.f32 %v2075, %v2299
      %v2301 = vpop.f32.mrf.mxu0
      %2302 = vmatprep.mubr.f32.mxu0 0.0
      %2303 = vmatmul.mubr.f32.gmra.mxu0 %v915
      %v2304 = vpop.f32.mrf.mxu0
      %v2305 = vadd.f32 %v2080, %v2304
      %v2306 = vpop.f32.mrf.mxu0
      %2307 = vmatprep.mubr.f32.mxu0 0.0
      %2308 = vmatmul.mubr.f32.gmra.mxu0 %v924
      %v2309 = vpop.f32.mrf.mxu0
      %v2310 = vadd.f32 %v2085, %v2309
      %v2311 = vpop.f32.mrf.mxu0
      %2312 = vmatprep.mubr.f32.mxu0 0.0
      %2313 = vmatmul.mubr.f32.gmra.mxu0 %v933
      %v2314 = vpop.f32.mrf.mxu0
      %v2315 = vadd.f32 %v2090, %v2314
      %v2316 = vpop.f32.mrf.mxu0
      %2317 = vmatprep.mubr.f32.mxu0 0.0
      %2318 = vmatmul.mubr.f32.gmra.mxu0 %v942
      %v2319 = vpop.f32.mrf.mxu0
      %v2320 = vadd.f32 %v2095, %v2319
      %v2321 = vpop.f32.mrf.mxu0
      %2322 = vmatprep.mubr.f32.mxu0 0.0
      %2323 = vmatmul.mubr.f32.gmra.mxu0 %v951
      %v2324 = vpop.f32.mrf.mxu0
      %v2325 = vadd.f32 %v2100, %v2324
      %v2326 = vpop.f32.mrf.mxu0
      %2327 = vmatprep.mubr.f32.mxu0 0.0
      %2328 = vmatmul.mubr.f32.gmra.mxu0 %v960
      %v2329 = vpop.f32.mrf.mxu0
      %v2330 = vadd.f32 %v2105, %v2329
      %v2331 = vpop.f32.mrf.mxu0
      %2332 = vmatprep.mubr.f32.mxu0 0.0
      %2333 = vmatmul.mubr.f32.gmra.mxu0 %v969
      %v2334 = vpop.f32.mrf.mxu0
      %v2335 = vadd.f32 %v2110, %v2334
      %v2336 = vpop.f32.mrf.mxu0
      %2337 = vmatprep.mubr.f32.mxu0 0.0
      %2338 = vmatmul.mubr.f32.gmra.mxu0 %v978
      %v2339 = vpop.f32.mrf.mxu0
      %v2340 = vadd.f32 %v2115, %v2339
      %v2341 = vpop.f32.mrf.mxu0
      %2342 = vmatprep.mubr.f32.mxu0 0.0
      %2343 = vmatmul.mubr.f32.gmra.mxu0 %v987
      %v2344 = vpop.f32.mrf.mxu0
      %v2345 = vadd.f32 %v2120, %v2344
      %v2346 = vpop.f32.mrf.mxu0
      %2347 = vmatprep.mubr.f32.mxu0 0.0
      %2348 = vmatmul.mubr.f32.gmra.mxu0 %v996
      %v2349 = vpop.f32.mrf.mxu0
      %v2350 = vadd.f32 %v2125, %v2349
      %v2351 = vpop.f32.mrf.mxu0
      %2352 = vmatprep.mubr.f32.mxu0 0.0
      %2353 = vmatmul.mubr.f32.gmra.mxu0 %v1005
      %v2354 = vpop.f32.mrf.mxu0
      %v2355 = vadd.f32 %v2130, %v2354
      %v2356 = vpop.f32.mrf.mxu0
      %2357 = vmatprep.mubr.f32.mxu0 0.0
      %2358 = vmatmul.mubr.f32.gmra.mxu0 %v1014
      %v2359 = vpop.f32.mrf.mxu0
      %v2360 = vadd.f32 %v2135, %v2359
      %v2361 = vpop.f32.mrf.mxu0
      %2362 = vmatprep.mubr.f32.mxu0 0.0
      %2363 = vmatmul.mubr.f32.gmra.mxu0 %v1023
      %v2364 = vpop.f32.mrf.mxu0
      %v2365 = vadd.f32 %v2140, %v2364
      %v2366 = vpop.f32.mrf.mxu0
      %2367 = vmatprep.mubr.f32.mxu0 0.0
      %2368 = vmatmul.mubr.f32.gmra.mxu0 %v1032
      %v2369 = vpop.f32.mrf.mxu0
      %v2370 = vadd.f32 %v2145, %v2369
      %v2371 = vpop.f32.mrf.mxu0
      %2372 = vmatprep.mubr.f32.mxu0 0.0
      %2373 = vmatmul.mubr.f32.gmra.mxu0 %v1041
      %v2374 = vpop.f32.mrf.mxu0
      %v2375 = vadd.f32 %v2150, %v2374
      %v2376 = vpop.f32.mrf.mxu0
      %2377 = vmatprep.mubr.f32.mxu0 0.0
      %2378 = vmatmul.mubr.f32.gmra.mxu0 %v1050
      %v2379 = vpop.f32.mrf.mxu0
      %v2380 = vadd.f32 %v2155, %v2379
      %v2381 = vpop.f32.mrf.mxu0
      %2382 = vmatprep.mubr.f32.mxu0 0.0
      %2383 = vmatmul.mubr.f32.gmra.mxu0 %v1059
      %v2384 = vpop.f32.mrf.mxu0
      %v2385 = vadd.f32 %v2160, %v2384
      %v2386 = vpop.f32.mrf.mxu0
      %2387 = vmatprep.mubr.f32.mxu0 0.0
      %2388 = vmatmul.mubr.f32.gmra.mxu0 %v1068
      %v2389 = vpop.f32.mrf.mxu0
      %v2390 = vadd.f32 %v2165, %v2389
      %v2391 = vpop.f32.mrf.mxu0
      %2392 = vmatprep.mubr.f32.mxu0 0.0
      %2393 = vmatmul.mubr.f32.gmra.mxu0 %v1077
      %v2394 = vpop.f32.mrf.mxu0
      %v2395 = vadd.f32 %v2170, %v2394
      %v2396 = vpop.f32.mrf.mxu0
      %2397 = vmatprep.mubr.f32.mxu0 0.0
      %2398 = vmatmul.mubr.f32.gmra.mxu0 %v1086
      %v2399 = vpop.f32.mrf.mxu0
      %v2400 = vadd.f32 %v2175, %v2399
      %v2401 = vpop.f32.mrf.mxu0
      %2402 = vmatprep.mubr.f32.mxu0 0.0
      %2403 = vmatmul.mubr.f32.gmra.mxu0 %v1095
      %v2404 = vpop.f32.mrf.mxu0
      %v2405 = vadd.f32 %v2180, %v2404
      %v2406 = vpop.f32.mrf.mxu0
      %2407 = vmatprep.mubr.f32.mxu0 0.0
      %2408 = vmatmul.mubr.f32.gmra.mxu0 %v1104
      %v2409 = vpop.f32.mrf.mxu0
      %v2410 = vadd.f32 %v2185, %v2409
      %v2411 = vpop.f32.mrf.mxu0
      %2412 = vmatprep.mubr.f32.mxu0 0.0
      %2413 = vmatmul.mubr.f32.gmra.mxu0 %v1113
      %v2414 = vpop.f32.mrf.mxu0
      %v2415 = vadd.f32 %v2190, %v2414
      %v2416 = vpop.f32.mrf.mxu0
      %2417 = vmatprep.mubr.f32.mxu0 0.0
      %2418 = vmatmul.mubr.f32.gmra.mxu0 %v1122
      %v2419 = vpop.f32.mrf.mxu0
      %v2420 = vadd.f32 %v2195, %v2419
      %v2421 = vpop.f32.mrf.mxu0
      %2422 = vmatprep.mubr.f32.mxu0 0.0
      %2423 = vmatmul.mubr.f32.gmra.mxu0 %v1131
      %v2424 = vpop.f32.mrf.mxu0
      %v2425 = vadd.f32 %v2200, %v2424
      %v2426 = vpop.f32.mrf.mxu0
      %2427 = vmatprep.mubr.f32.mxu0 0.0
      %2428 = vmatmul.mubr.f32.gmra.mxu0 %v1140
      %v2429 = vpop.f32.mrf.mxu0
      %v2430 = vadd.f32 %v2205, %v2429
      %v2431 = vpop.f32.mrf.mxu0
      %2432 = vmatprep.mubr.f32.mxu0 0.0
      %2433 = vmatmul.mubr.f32.gmra.mxu0 %v1149
      %v2434 = vpop.f32.mrf.mxu0
      %v2435 = vadd.f32 %v2210, %v2434
      %v2436 = vpop.f32.mrf.mxu0
      %2437 = vmatprep.mubr.f32.mxu0 0.0
      %2438 = vmatmul.mubr.f32.gmra.mxu0 %v1158
      %v2439 = vpop.f32.mrf.mxu0
      %v2440 = vadd.f32 %v2215, %v2439
      %v2441 = vpop.f32.mrf.mxu0
      %2442 = vmatprep.mubr.f32.mxu0 0.0
      %2443 = vmatmul.mubr.f32.gmra.mxu0 %v1167
      %v2444 = vpop.f32.mrf.mxu0
      %v2445 = vadd.f32 %v2220, %v2444
      %v2446 = vpop.f32.mrf.mxu0
      %2447 = vmatprep.mubr.f32.mxu0 0.0
      %2448 = vmatmul.mubr.f32.gmra.mxu0 %v1176
      %v2449 = vpop.f32.mrf.mxu0
      %v2450 = vadd.f32 %v2225, %v2449
      %v2451 = vpop.f32.mrf.mxu0
      %2452 = vdwg.mxu0
      %v2453 = vmul.f32 %v2295, 0.5
      %v2454 = vmul.f32 %v2300, 0.5
      %v2455 = vmul.f32 %v2305, 0.5
      %v2456 = vmul.f32 %v2310, 0.5
      %v2457 = vmul.f32 %v2315, 0.5
      %v2458 = vmul.f32 %v2320, 0.5
      %v2459 = vmul.f32 %v2325, 0.5
      %v2460 = vmul.f32 %v2330, 0.5
      %v2461 = vmul.f32 %v2335, 0.5
      %v2462 = vmul.f32 %v2340, 0.5
      %v2463 = vmul.f32 %v2345, 0.5
      %v2464 = vmul.f32 %v2350, 0.5
      %v2465 = vmul.f32 %v2355, 0.5
      %v2466 = vmul.f32 %v2360, 0.5
      %v2467 = vmul.f32 %v2365, 0.5
      %v2468 = vmul.f32 %v2370, 0.5
      %v2469 = vmul.f32 %v2375, 0.5
      %v2470 = vmul.f32 %v2380, 0.5
      %v2471 = vmul.f32 %v2385, 0.5
      %v2472 = vmul.f32 %v2390, 0.5
      %v2473 = vmul.f32 %v2395, 0.5
      %v2474 = vmul.f32 %v2400, 0.5
      %v2475 = vmul.f32 %v2405, 0.5
      %v2476 = vmul.f32 %v2410, 0.5
      %v2477 = vmul.f32 %v2415, 0.5
      %v2478 = vmul.f32 %v2420, 0.5
      %v2479 = vmul.f32 %v2425, 0.5
      %v2480 = vmul.f32 %v2430, 0.5
      %v2481 = vmul.f32 %v2435, 0.5
      %v2482 = vmul.f32 %v2440, 0.5
      %v2483 = vmul.f32 %v2445, 0.5
      %v2484 = vmul.f32 %v2450, 0.5
      %v2485 = vtanh.pop %v2453
      %v2486 = vtanh.pop %v2454
      %v2487 = vtanh.pop %v2455
      %v2488 = vtanh.pop %v2456
      %v2489 = vtanh.pop %v2457
      %v2490 = vtanh.pop %v2458
      %v2491 = vtanh.pop %v2459
      %v2492 = vtanh.pop %v2460
      %v2493 = vtanh.pop %v2461
      %v2494 = vtanh.pop %v2462
      %v2495 = vtanh.pop %v2463
      %v2496 = vtanh.pop %v2464
      %v2497 = vtanh.pop %v2465
      %v2498 = vtanh.pop %v2466
      %v2499 = vtanh.pop %v2467
      %v2500 = vtanh.pop %v2468
      %v2501 = vtanh.pop %v2469
      %v2502 = vtanh.pop %v2470
      %v2503 = vtanh.pop %v2471
      %v2504 = vtanh.pop %v2472
      %v2505 = vtanh.pop %v2473
      %v2506 = vtanh.pop %v2474
      %v2507 = vtanh.pop %v2475
      %v2508 = vtanh.pop %v2476
      %v2509 = vtanh.pop %v2477
      %v2510 = vtanh.pop %v2478
      %v2511 = vtanh.pop %v2479
      %v2512 = vtanh.pop %v2480
      %v2513 = vtanh.pop %v2481
      %v2514 = vtanh.pop %v2482
      %v2515 = vtanh.pop %v2483
      %v2516 = vtanh.pop %v2484
      %v2517 = vmul.f32 %v2485, 0.5
      %v2518 = vmul.f32 %v2486, 0.5
      %v2519 = vmul.f32 %v2487, 0.5
      %v2520 = vmul.f32 %v2488, 0.5
      %v2521 = vmul.f32 %v2489, 0.5
      %v2522 = vmul.f32 %v2490, 0.5
      %v2523 = vmul.f32 %v2491, 0.5
      %v2524 = vmul.f32 %v2492, 0.5
      %v2525 = vmul.f32 %v2493, 0.5
      %v2526 = vmul.f32 %v2494, 0.5
      %v2527 = vmul.f32 %v2495, 0.5
      %v2528 = vmul.f32 %v2496, 0.5
      %v2529 = vmul.f32 %v2497, 0.5
      %v2530 = vmul.f32 %v2498, 0.5
      %v2531 = vmul.f32 %v2499, 0.5
      %v2532 = vmul.f32 %v2500, 0.5
      %v2533 = vmul.f32 %v2501, 0.5
      %v2534 = vmul.f32 %v2502, 0.5
      %v2535 = vmul.f32 %v2503, 0.5
      %v2536 = vmul.f32 %v2504, 0.5
      %v2537 = vmul.f32 %v2505, 0.5
      %v2538 = vmul.f32 %v2506, 0.5
      %v2539 = vmul.f32 %v2507, 0.5
      %v2540 = vmul.f32 %v2508, 0.5
      %v2541 = vmul.f32 %v2509, 0.5
      %v2542 = vmul.f32 %v2510, 0.5
      %v2543 = vmul.f32 %v2511, 0.5
      %v2544 = vmul.f32 %v2512, 0.5
      %v2545 = vmul.f32 %v2513, 0.5
      %v2546 = vmul.f32 %v2514, 0.5
      %v2547 = vmul.f32 %v2515, 0.5
      %v2548 = vmul.f32 %v2516, 0.5
      %v2549 = vadd.f32 %v2517, 0.5
      %v2550 = vadd.f32 %v2518, 0.5
      %v2551 = vadd.f32 %v2519, 0.5
      %v2552 = vadd.f32 %v2520, 0.5
      %v2553 = vadd.f32 %v2521, 0.5
      %v2554 = vadd.f32 %v2522, 0.5
      %v2555 = vadd.f32 %v2523, 0.5
      %v2556 = vadd.f32 %v2524, 0.5
      %v2557 = vadd.f32 %v2525, 0.5
      %v2558 = vadd.f32 %v2526, 0.5
      %v2559 = vadd.f32 %v2527, 0.5
      %v2560 = vadd.f32 %v2528, 0.5
      %v2561 = vadd.f32 %v2529, 0.5
      %v2562 = vadd.f32 %v2530, 0.5
      %v2563 = vadd.f32 %v2531, 0.5
      %v2564 = vadd.f32 %v2532, 0.5
      %v2565 = vadd.f32 %v2533, 0.5
      %v2566 = vadd.f32 %v2534, 0.5
      %v2567 = vadd.f32 %v2535, 0.5
      %v2568 = vadd.f32 %v2536, 0.5
      %v2569 = vadd.f32 %v2537, 0.5
      %v2570 = vadd.f32 %v2538, 0.5
      %v2571 = vadd.f32 %v2539, 0.5
      %v2572 = vadd.f32 %v2540, 0.5
      %v2573 = vadd.f32 %v2541, 0.5
      %v2574 = vadd.f32 %v2542, 0.5
      %v2575 = vadd.f32 %v2543, 0.5
      %v2576 = vadd.f32 %v2544, 0.5
      %v2577 = vadd.f32 %v2545, 0.5
      %v2578 = vadd.f32 %v2546, 0.5
      %v2579 = vadd.f32 %v2547, 0.5
      %v2580 = vadd.f32 %v2548, 0.5
      %v2581 = vtanh.pop %v2295
      %v2582 = vtanh.pop %v2300
      %v2583 = vtanh.pop %v2305
      %v2584 = vtanh.pop %v2310
      %v2585 = vtanh.pop %v2315
      %v2586 = vtanh.pop %v2320
      %v2587 = vtanh.pop %v2325
      %v2588 = vtanh.pop %v2330
      %v2589 = vtanh.pop %v2335
      %v2590 = vtanh.pop %v2340
      %v2591 = vtanh.pop %v2345
      %v2592 = vtanh.pop %v2350
      %v2593 = vtanh.pop %v2355
      %v2594 = vtanh.pop %v2360
      %v2595 = vtanh.pop %v2365
      %v2596 = vtanh.pop %v2370
      %v2597 = vtanh.pop %v2375
      %v2598 = vtanh.pop %v2380
      %v2599 = vtanh.pop %v2385
      %v2600 = vtanh.pop %v2390
      %v2601 = vtanh.pop %v2395
      %v2602 = vtanh.pop %v2400
      %v2603 = vtanh.pop %v2405
      %v2604 = vtanh.pop %v2410
      %v2605 = vtanh.pop %v2415
      %v2606 = vtanh.pop %v2420
      %v2607 = vtanh.pop %v2425
      %v2608 = vtanh.pop %v2430
      %v2609 = vtanh.pop %v2435
      %v2610 = vtanh.pop %v2440
      %v2611 = vtanh.pop %v2445
      %v2612 = vtanh.pop %v2450
      %2645 = vrot.lane.b32.xlu0 %v280, 32
      %v2646 = vpop.permute.xlu0 %2645
      %2647 = vrot.lane.b32.xlu0 %v281, 32
      %v2648 = vpop.permute.xlu0 %2647
      %2649 = vrot.lane.b32.xlu0 %v282, 32
      %v2650 = vpop.permute.xlu0 %2649
      %2651 = vrot.lane.b32.xlu0 %v283, 32
      %v2652 = vpop.permute.xlu0 %2651
      %2653 = vrot.lane.b32.xlu0 %v284, 32
      %v2654 = vpop.permute.xlu0 %2653
      %2655 = vrot.lane.b32.xlu0 %v285, 32
      %v2656 = vpop.permute.xlu0 %2655
      %2657 = vrot.lane.b32.xlu0 %v286, 32
      %v2658 = vpop.permute.xlu0 %2657
      %2659 = vrot.lane.b32.xlu0 %v287, 32
      %v2660 = vpop.permute.xlu0 %2659
      %2661 = vrot.lane.b32.xlu0 %v288, 32
      %v2662 = vpop.permute.xlu0 %2661
      %2663 = vrot.lane.b32.xlu0 %v289, 32
      %v2664 = vpop.permute.xlu0 %2663
      %2665 = vrot.lane.b32.xlu0 %v290, 32
      %v2666 = vpop.permute.xlu0 %2665
      %2667 = vrot.lane.b32.xlu0 %v291, 32
      %v2668 = vpop.permute.xlu0 %2667
      %2669 = vrot.lane.b32.xlu0 %v292, 32
      %v2670 = vpop.permute.xlu0 %2669
      %2671 = vrot.lane.b32.xlu0 %v293, 32
      %v2672 = vpop.permute.xlu0 %2671
      %2673 = vrot.lane.b32.xlu0 %v294, 32
      %v2674 = vpop.permute.xlu0 %2673
      %2675 = vrot.lane.b32.xlu0 %v295, 32
      %v2676 = vpop.permute.xlu0 %2675
      %2677 = vrot.lane.b32.xlu0 %v296, 32
      %v2678 = vpop.permute.xlu0 %2677
      %2679 = vrot.lane.b32.xlu0 %v297, 32
      %v2680 = vpop.permute.xlu0 %2679
      %2681 = vrot.lane.b32.xlu0 %v298, 32
      %v2682 = vpop.permute.xlu0 %2681
      %2683 = vrot.lane.b32.xlu0 %v299, 32
      %v2684 = vpop.permute.xlu0 %2683
      %2685 = vrot.lane.b32.xlu0 %v300, 32
      %v2686 = vpop.permute.xlu0 %2685
      %2687 = vrot.lane.b32.xlu0 %v301, 32
      %v2688 = vpop.permute.xlu0 %2687
      %2689 = vrot.lane.b32.xlu0 %v302, 32
      %v2690 = vpop.permute.xlu0 %2689
      %2691 = vrot.lane.b32.xlu0 %v303, 32
      %v2692 = vpop.permute.xlu0 %2691
      %2693 = vrot.lane.b32.xlu0 %v304, 32
      %v2694 = vpop.permute.xlu0 %2693
      %2695 = vrot.lane.b32.xlu0 %v305, 32
      %v2696 = vpop.permute.xlu0 %2695
      %2697 = vrot.lane.b32.xlu0 %v306, 32
      %v2698 = vpop.permute.xlu0 %2697
      %2699 = vrot.lane.b32.xlu0 %v307, 32
      %v2700 = vpop.permute.xlu0 %2699
      %2701 = vrot.lane.b32.xlu0 %v308, 32
      %v2702 = vpop.permute.xlu0 %2701
      %2703 = vrot.lane.b32.xlu0 %v309, 32
      %v2704 = vpop.permute.xlu0 %2703
      %2705 = vrot.lane.b32.xlu0 %v310, 32
      %v2706 = vpop.permute.xlu0 %2705
      %2707 = vrot.lane.b32.xlu0 %v311, 32
      %v2708 = vpop.permute.xlu0 %2707
      %v2741 = vmul.f32 %v2549, %v2646
      %v2742 = vmul.f32 %v2550, %v2648
      %v2743 = vmul.f32 %v2551, %v2650
      %v2744 = vmul.f32 %v2552, %v2652
      %v2745 = vmul.f32 %v2553, %v2654
      %v2746 = vmul.f32 %v2554, %v2656
      %v2747 = vmul.f32 %v2555, %v2658
      %v2748 = vmul.f32 %v2556, %v2660
      %v2749 = vmul.f32 %v2557, %v2662
      %v2750 = vmul.f32 %v2558, %v2664
      %v2751 = vmul.f32 %v2559, %v2666
      %v2752 = vmul.f32 %v2560, %v2668
      %v2753 = vmul.f32 %v2561, %v2670
      %v2754 = vmul.f32 %v2562, %v2672
      %v2755 = vmul.f32 %v2563, %v2674
      %v2756 = vmul.f32 %v2564, %v2676
      %v2757 = vmul.f32 %v2565, %v2678
      %v2758 = vmul.f32 %v2566, %v2680
      %v2759 = vmul.f32 %v2567, %v2682
      %v2760 = vmul.f32 %v2568, %v2684
      %v2761 = vmul.f32 %v2569, %v2686
      %v2762 = vmul.f32 %v2570, %v2688
      %v2763 = vmul.f32 %v2571, %v2690
      %v2764 = vmul.f32 %v2572, %v2692
      %v2765 = vmul.f32 %v2573, %v2694
      %v2766 = vmul.f32 %v2574, %v2696
      %v2767 = vmul.f32 %v2575, %v2698
      %v2768 = vmul.f32 %v2576, %v2700
      %v2769 = vmul.f32 %v2577, %v2702
      %v2770 = vmul.f32 %v2578, %v2704
      %v2771 = vmul.f32 %v2579, %v2706
      %v2772 = vmul.f32 %v2580, %v2708
      %2805 = vrot.lane.b32.xlu0 %v2581, 64
      %v2806 = vpop.permute.xlu0 %2805
      %2807 = vrot.lane.b32.xlu0 %v2582, 64
      %v2808 = vpop.permute.xlu0 %2807
      %2809 = vrot.lane.b32.xlu0 %v2583, 64
      %v2810 = vpop.permute.xlu0 %2809
      %2811 = vrot.lane.b32.xlu0 %v2584, 64
      %v2812 = vpop.permute.xlu0 %2811
      %2813 = vrot.lane.b32.xlu0 %v2585, 64
      %v2814 = vpop.permute.xlu0 %2813
      %2815 = vrot.lane.b32.xlu0 %v2586, 64
      %v2816 = vpop.permute.xlu0 %2815
      %2817 = vrot.lane.b32.xlu0 %v2587, 64
      %v2818 = vpop.permute.xlu0 %2817
      %2819 = vrot.lane.b32.xlu0 %v2588, 64
      %v2820 = vpop.permute.xlu0 %2819
      %2821 = vrot.lane.b32.xlu0 %v2589, 64
      %v2822 = vpop.permute.xlu0 %2821
      %2823 = vrot.lane.b32.xlu0 %v2590, 64
      %v2824 = vpop.permute.xlu0 %2823
      %2825 = vrot.lane.b32.xlu0 %v2591, 64
      %v2826 = vpop.permute.xlu0 %2825
      %2827 = vrot.lane.b32.xlu0 %v2592, 64
      %v2828 = vpop.permute.xlu0 %2827
      %2829 = vrot.lane.b32.xlu0 %v2593, 64
      %v2830 = vpop.permute.xlu0 %2829
      %2831 = vrot.lane.b32.xlu0 %v2594, 64
      %v2832 = vpop.permute.xlu0 %2831
      %2833 = vrot.lane.b32.xlu0 %v2595, 64
      %v2834 = vpop.permute.xlu0 %2833
      %2835 = vrot.lane.b32.xlu0 %v2596, 64
      %v2836 = vpop.permute.xlu0 %2835
      %2837 = vrot.lane.b32.xlu0 %v2597, 64
      %v2838 = vpop.permute.xlu0 %2837
      %2839 = vrot.lane.b32.xlu0 %v2598, 64
      %v2840 = vpop.permute.xlu0 %2839
      %2841 = vrot.lane.b32.xlu0 %v2599, 64
      %v2842 = vpop.permute.xlu0 %2841
      %2843 = vrot.lane.b32.xlu0 %v2600, 64
      %v2844 = vpop.permute.xlu0 %2843
      %2845 = vrot.lane.b32.xlu0 %v2601, 64
      %v2846 = vpop.permute.xlu0 %2845
      %2847 = vrot.lane.b32.xlu0 %v2602, 64
      %v2848 = vpop.permute.xlu0 %2847
      %2849 = vrot.lane.b32.xlu0 %v2603, 64
      %v2850 = vpop.permute.xlu0 %2849
      %2851 = vrot.lane.b32.xlu0 %v2604, 64
      %v2852 = vpop.permute.xlu0 %2851
      %2853 = vrot.lane.b32.xlu0 %v2605, 64
      %v2854 = vpop.permute.xlu0 %2853
      %2855 = vrot.lane.b32.xlu0 %v2606, 64
      %v2856 = vpop.permute.xlu0 %2855
      %2857 = vrot.lane.b32.xlu0 %v2607, 64
      %v2858 = vpop.permute.xlu0 %2857
      %2859 = vrot.lane.b32.xlu0 %v2608, 64
      %v2860 = vpop.permute.xlu0 %2859
      %2861 = vrot.lane.b32.xlu0 %v2609, 64
      %v2862 = vpop.permute.xlu0 %2861
      %2863 = vrot.lane.b32.xlu0 %v2610, 64
      %v2864 = vpop.permute.xlu0 %2863
      %2865 = vrot.lane.b32.xlu0 %v2611, 64
      %v2866 = vpop.permute.xlu0 %2865
      %2867 = vrot.lane.b32.xlu0 %v2612, 64
      %v2868 = vpop.permute.xlu0 %2867
      %v2901 = vmul.f32 %v2549, %v2806
      %v2902 = vmul.f32 %v2550, %v2808
      %v2903 = vmul.f32 %v2551, %v2810
      %v2904 = vmul.f32 %v2552, %v2812
      %v2905 = vmul.f32 %v2553, %v2814
      %v2906 = vmul.f32 %v2554, %v2816
      %v2907 = vmul.f32 %v2555, %v2818
      %v2908 = vmul.f32 %v2556, %v2820
      %v2909 = vmul.f32 %v2557, %v2822
      %v2910 = vmul.f32 %v2558, %v2824
      %v2911 = vmul.f32 %v2559, %v2826
      %v2912 = vmul.f32 %v2560, %v2828
      %v2913 = vmul.f32 %v2561, %v2830
      %v2914 = vmul.f32 %v2562, %v2832
      %v2915 = vmul.f32 %v2563, %v2834
      %v2916 = vmul.f32 %v2564, %v2836
      %v2917 = vmul.f32 %v2565, %v2838
      %v2918 = vmul.f32 %v2566, %v2840
      %v2919 = vmul.f32 %v2567, %v2842
      %v2920 = vmul.f32 %v2568, %v2844
      %v2921 = vmul.f32 %v2569, %v2846
      %v2922 = vmul.f32 %v2570, %v2848
      %v2923 = vmul.f32 %v2571, %v2850
      %v2924 = vmul.f32 %v2572, %v2852
      %v2925 = vmul.f32 %v2573, %v2854
      %v2926 = vmul.f32 %v2574, %v2856
      %v2927 = vmul.f32 %v2575, %v2858
      %v2928 = vmul.f32 %v2576, %v2860
      %v2929 = vmul.f32 %v2577, %v2862
      %v2930 = vmul.f32 %v2578, %v2864
      %v2931 = vmul.f32 %v2579, %v2866
      %v2932 = vmul.f32 %v2580, %v2868
      %2965 = vrot.lane.b32.xlu0 %v2901, 32
      %v2966 = vpop.permute.xlu0 %2965
      %2967 = vrot.lane.b32.xlu0 %v2902, 32
      %v2968 = vpop.permute.xlu0 %2967
      %2969 = vrot.lane.b32.xlu0 %v2903, 32
      %v2970 = vpop.permute.xlu0 %2969
      %2971 = vrot.lane.b32.xlu0 %v2904, 32
      %v2972 = vpop.permute.xlu0 %2971
      %2973 = vrot.lane.b32.xlu0 %v2905, 32
      %v2974 = vpop.permute.xlu0 %2973
      %2975 = vrot.lane.b32.xlu0 %v2906, 32
      %v2976 = vpop.permute.xlu0 %2975
      %2977 = vrot.lane.b32.xlu0 %v2907, 32
      %v2978 = vpop.permute.xlu0 %2977
      %2979 = vrot.lane.b32.xlu0 %v2908, 32
      %v2980 = vpop.permute.xlu0 %2979
      %2981 = vrot.lane.b32.xlu0 %v2909, 32
      %v2982 = vpop.permute.xlu0 %2981
      %2983 = vrot.lane.b32.xlu0 %v2910, 32
      %v2984 = vpop.permute.xlu0 %2983
      %2985 = vrot.lane.b32.xlu0 %v2911, 32
      %v2986 = vpop.permute.xlu0 %2985
      %2987 = vrot.lane.b32.xlu0 %v2912, 32
      %v2988 = vpop.permute.xlu0 %2987
      %2989 = vrot.lane.b32.xlu0 %v2913, 32
      %v2990 = vpop.permute.xlu0 %2989
      %2991 = vrot.lane.b32.xlu0 %v2914, 32
      %v2992 = vpop.permute.xlu0 %2991
      %2993 = vrot.lane.b32.xlu0 %v2915, 32
      %v2994 = vpop.permute.xlu0 %2993
      %2995 = vrot.lane.b32.xlu0 %v2916, 32
      %v2996 = vpop.permute.xlu0 %2995
      %2997 = vrot.lane.b32.xlu0 %v2917, 32
      %v2998 = vpop.permute.xlu0 %2997
      %2999 = vrot.lane.b32.xlu0 %v2918, 32
      %v3000 = vpop.permute.xlu0 %2999
      %3001 = vrot.lane.b32.xlu0 %v2919, 32
      %v3002 = vpop.permute.xlu0 %3001
      %3003 = vrot.lane.b32.xlu0 %v2920, 32
      %v3004 = vpop.permute.xlu0 %3003
      %3005 = vrot.lane.b32.xlu0 %v2921, 32
      %v3006 = vpop.permute.xlu0 %3005
      %3007 = vrot.lane.b32.xlu0 %v2922, 32
      %v3008 = vpop.permute.xlu0 %3007
      %3009 = vrot.lane.b32.xlu0 %v2923, 32
      %v3010 = vpop.permute.xlu0 %3009
      %3011 = vrot.lane.b32.xlu0 %v2924, 32
      %v3012 = vpop.permute.xlu0 %3011
      %3013 = vrot.lane.b32.xlu0 %v2925, 32
      %v3014 = vpop.permute.xlu0 %3013
      %3015 = vrot.lane.b32.xlu0 %v2926, 32
      %v3016 = vpop.permute.xlu0 %3015
      %3017 = vrot.lane.b32.xlu0 %v2927, 32
      %v3018 = vpop.permute.xlu0 %3017
      %3019 = vrot.lane.b32.xlu0 %v2928, 32
      %v3020 = vpop.permute.xlu0 %3019
      %3021 = vrot.lane.b32.xlu0 %v2929, 32
      %v3022 = vpop.permute.xlu0 %3021
      %3023 = vrot.lane.b32.xlu0 %v2930, 32
      %v3024 = vpop.permute.xlu0 %3023
      %3025 = vrot.lane.b32.xlu0 %v2931, 32
      %v3026 = vpop.permute.xlu0 %3025
      %3027 = vrot.lane.b32.xlu0 %v2932, 32
      %v3028 = vpop.permute.xlu0 %3027
      %v3061 = vadd.f32 %v2741, %v2966
      %v3062 = vadd.f32 %v2742, %v2968
      %v3063 = vadd.f32 %v2743, %v2970
      %v3064 = vadd.f32 %v2744, %v2972
      %v3065 = vadd.f32 %v2745, %v2974
      %v3066 = vadd.f32 %v2746, %v2976
      %v3067 = vadd.f32 %v2747, %v2978
      %v3068 = vadd.f32 %v2748, %v2980
      %v3069 = vadd.f32 %v2749, %v2982
      %v3070 = vadd.f32 %v2750, %v2984
      %v3071 = vadd.f32 %v2751, %v2986
      %v3072 = vadd.f32 %v2752, %v2988
      %v3073 = vadd.f32 %v2753, %v2990
      %v3074 = vadd.f32 %v2754, %v2992
      %v3075 = vadd.f32 %v2755, %v2994
      %v3076 = vadd.f32 %v2756, %v2996
      %v3077 = vadd.f32 %v2757, %v2998
      %v3078 = vadd.f32 %v2758, %v3000
      %v3079 = vadd.f32 %v2759, %v3002
      %v3080 = vadd.f32 %v2760, %v3004
      %v3081 = vadd.f32 %v2761, %v3006
      %v3082 = vadd.f32 %v2762, %v3008
      %v3083 = vadd.f32 %v2763, %v3010
      %v3084 = vadd.f32 %v2764, %v3012
      %v3085 = vadd.f32 %v2765, %v3014
      %v3086 = vadd.f32 %v2766, %v3016
      %v3087 = vadd.f32 %v2767, %v3018
      %v3088 = vadd.f32 %v2768, %v3020
      %v3089 = vadd.f32 %v2769, %v3022
      %v3090 = vadd.f32 %v2770, %v3024
      %v3091 = vadd.f32 %v2771, %v3026
      %v3092 = vadd.f32 %v2772, %v3028
      %3125 = vrot.lane.b32.xlu0 %v3061, 96
      %v3126 = vpop.permute.xlu0 %3125
      %3127 = vrot.lane.b32.xlu0 %v3062, 96
      %v3128 = vpop.permute.xlu0 %3127
      %3129 = vrot.lane.b32.xlu0 %v3063, 96
      %v3130 = vpop.permute.xlu0 %3129
      %3131 = vrot.lane.b32.xlu0 %v3064, 96
      %v3132 = vpop.permute.xlu0 %3131
      %3133 = vrot.lane.b32.xlu0 %v3065, 96
      %v3134 = vpop.permute.xlu0 %3133
      %3135 = vrot.lane.b32.xlu0 %v3066, 96
      %v3136 = vpop.permute.xlu0 %3135
      %3137 = vrot.lane.b32.xlu0 %v3067, 96
      %v3138 = vpop.permute.xlu0 %3137
      %3139 = vrot.lane.b32.xlu0 %v3068, 96
      %v3140 = vpop.permute.xlu0 %3139
      %3141 = vrot.lane.b32.xlu0 %v3069, 96
      %v3142 = vpop.permute.xlu0 %3141
      %3143 = vrot.lane.b32.xlu0 %v3070, 96
      %v3144 = vpop.permute.xlu0 %3143
      %3145 = vrot.lane.b32.xlu0 %v3071, 96
      %v3146 = vpop.permute.xlu0 %3145
      %3147 = vrot.lane.b32.xlu0 %v3072, 96
      %v3148 = vpop.permute.xlu0 %3147
      %3149 = vrot.lane.b32.xlu0 %v3073, 96
      %v3150 = vpop.permute.xlu0 %3149
      %3151 = vrot.lane.b32.xlu0 %v3074, 96
      %v3152 = vpop.permute.xlu0 %3151
      %3153 = vrot.lane.b32.xlu0 %v3075, 96
      %v3154 = vpop.permute.xlu0 %3153
      %3155 = vrot.lane.b32.xlu0 %v3076, 96
      %v3156 = vpop.permute.xlu0 %3155
      %3157 = vrot.lane.b32.xlu0 %v3077, 96
      %v3158 = vpop.permute.xlu0 %3157
      %3159 = vrot.lane.b32.xlu0 %v3078, 96
      %v3160 = vpop.permute.xlu0 %3159
      %3161 = vrot.lane.b32.xlu0 %v3079, 96
      %v3162 = vpop.permute.xlu0 %3161
      %3163 = vrot.lane.b32.xlu0 %v3080, 96
      %v3164 = vpop.permute.xlu0 %3163
      %3165 = vrot.lane.b32.xlu0 %v3081, 96
      %v3166 = vpop.permute.xlu0 %3165
      %3167 = vrot.lane.b32.xlu0 %v3082, 96
      %v3168 = vpop.permute.xlu0 %3167
      %3169 = vrot.lane.b32.xlu0 %v3083, 96
      %v3170 = vpop.permute.xlu0 %3169
      %3171 = vrot.lane.b32.xlu0 %v3084, 96
      %v3172 = vpop.permute.xlu0 %3171
      %3173 = vrot.lane.b32.xlu0 %v3085, 96
      %v3174 = vpop.permute.xlu0 %3173
      %3175 = vrot.lane.b32.xlu0 %v3086, 96
      %v3176 = vpop.permute.xlu0 %3175
      %3177 = vrot.lane.b32.xlu0 %v3087, 96
      %v3178 = vpop.permute.xlu0 %3177
      %3179 = vrot.lane.b32.xlu0 %v3088, 96
      %v3180 = vpop.permute.xlu0 %3179
      %3181 = vrot.lane.b32.xlu0 %v3089, 96
      %v3182 = vpop.permute.xlu0 %3181
      %3183 = vrot.lane.b32.xlu0 %v3090, 96
      %v3184 = vpop.permute.xlu0 %3183
      %3185 = vrot.lane.b32.xlu0 %v3091, 96
      %v3186 = vpop.permute.xlu0 %3185
      %3187 = vrot.lane.b32.xlu0 %v3092, 96
      %v3188 = vpop.permute.xlu0 %3187
      %vm3221 = vcmask 261120
      %3222 = vst.msk [vmem:[%s279 + $0x8] sm:$0xff] %vm3221, %v3126
      %3223 = vst.msk [vmem:[%s279 + $0x10] sm:$0xff] %vm3221, %v3128
      %3224 = vst.msk [vmem:[%s279 + $0x28] sm:$0xff] %vm3221, %v3130
      %3225 = vst.msk [vmem:[%s279 + $0x30] sm:$0xff] %vm3221, %v3132
      %3226 = vst.msk [vmem:[%s279 + $0x48] sm:$0xff] %vm3221, %v3134
      %3227 = vst.msk [vmem:[%s279 + $0x50] sm:$0xff] %vm3221, %v3136
      %3228 = vst.msk [vmem:[%s279 + $0x68] sm:$0xff] %vm3221, %v3138
      %3229 = vst.msk [vmem:[%s279 + $0x70] sm:$0xff] %vm3221, %v3140
      %3230 = vst.msk [vmem:[%s279 + $0x88] sm:$0xff] %vm3221, %v3142
      %3231 = vst.msk [vmem:[%s279 + $0x90] sm:$0xff] %vm3221, %v3144
      %3232 = vst.msk [vmem:[%s279 + $0xa8] sm:$0xff] %vm3221, %v3146
      %3233 = vst.msk [vmem:[%s279 + $0xb0] sm:$0xff] %vm3221, %v3148
      %3234 = vst.msk [vmem:[%s279 + $0xc8] sm:$0xff] %vm3221, %v3150
      %3235 = vst.msk [vmem:[%s279 + $0xd0] sm:$0xff] %vm3221, %v3152
      %3236 = vst.msk [vmem:[%s279 + $0xe8] sm:$0xff] %vm3221, %v3154
      %3237 = vst.msk [vmem:[%s279 + $0xf0] sm:$0xff] %vm3221, %v3156
      %3238 = vst.msk [vmem:[%s279 + $0x108] sm:$0xff] %vm3221, %v3158
      %3239 = vst.msk [vmem:[%s279 + $0x110] sm:$0xff] %vm3221, %v3160
      %3240 = vst.msk [vmem:[%s279 + $0x128] sm:$0xff] %vm3221, %v3162
      %3241 = vst.msk [vmem:[%s279 + $0x130] sm:$0xff] %vm3221, %v3164
      %3242 = vst.msk [vmem:[%s279 + $0x148] sm:$0xff] %vm3221, %v3166
      %3243 = vst.msk [vmem:[%s279 + $0x150] sm:$0xff] %vm3221, %v3168
      %3244 = vst.msk [vmem:[%s279 + $0x168] sm:$0xff] %vm3221, %v3170
      %3245 = vst.msk [vmem:[%s279 + $0x170] sm:$0xff] %vm3221, %v3172
      %3246 = vst.msk [vmem:[%s279 + $0x188] sm:$0xff] %vm3221, %v3174
      %3247 = vst.msk [vmem:[%s279 + $0x190] sm:$0xff] %vm3221, %v3176
      %3248 = vst.msk [vmem:[%s279 + $0x1a8] sm:$0xff] %vm3221, %v3178
      %3249 = vst.msk [vmem:[%s279 + $0x1b0] sm:$0xff] %vm3221, %v3180
      %3250 = vst.msk [vmem:[%s279 + $0x1c8] sm:$0xff] %vm3221, %v3182
      %3251 = vst.msk [vmem:[%s279 + $0x1d0] sm:$0xff] %vm3221, %v3184
      %3252 = vst.msk [vmem:[%s279 + $0x1e8] sm:$0xff] %vm3221, %v3186
      %3253 = vst.msk [vmem:[%s279 + $0x1f0] sm:$0xff] %vm3221, %v3188
      %v3254 = vld [vmem:[%s273 + $0x7] sm:$0xff]
      %v3255 = vld [vmem:[%s273 + $0xf] sm:$0xff]
      %v3256 = vld [vmem:[%s273 + $0x27] sm:$0xff]
      %v3257 = vld [vmem:[%s273 + $0x2f] sm:$0xff]
      %v3258 = vld [vmem:[%s273 + $0x47] sm:$0xff]
      %v3259 = vld [vmem:[%s273 + $0x4f] sm:$0xff]
      %v3260 = vld [vmem:[%s273 + $0x67] sm:$0xff]
      %v3261 = vld [vmem:[%s273 + $0x6f] sm:$0xff]
      %v3262 = vld [vmem:[%s273 + $0x87] sm:$0xff]
      %v3263 = vld [vmem:[%s273 + $0x8f] sm:$0xff]
      %v3264 = vld [vmem:[%s273 + $0xa7] sm:$0xff]
      %v3265 = vld [vmem:[%s273 + $0xaf] sm:$0xff]
      %v3266 = vld [vmem:[%s273 + $0xc7] sm:$0xff]
      %v3267 = vld [vmem:[%s273 + $0xcf] sm:$0xff]
      %v3268 = vld [vmem:[%s273 + $0xe7] sm:$0xff]
      %v3269 = vld [vmem:[%s273 + $0xef] sm:$0xff]
      %v3270 = vld [vmem:[%s273 + $0x107] sm:$0xff]
      %v3271 = vld [vmem:[%s273 + $0x10f] sm:$0xff]
      %v3272 = vld [vmem:[%s273 + $0x127] sm:$0xff]
      %v3273 = vld [vmem:[%s273 + $0x12f] sm:$0xff]
      %v3274 = vld [vmem:[%s273 + $0x147] sm:$0xff]
      %v3275 = vld [vmem:[%s273 + $0x14f] sm:$0xff]
      %v3276 = vld [vmem:[%s273 + $0x167] sm:$0xff]
      %v3277 = vld [vmem:[%s273 + $0x16f] sm:$0xff]
      %v3278 = vld [vmem:[%s273 + $0x187] sm:$0xff]
      %v3279 = vld [vmem:[%s273 + $0x18f] sm:$0xff]
      %v3280 = vld [vmem:[%s273 + $0x1a7] sm:$0xff]
      %v3281 = vld [vmem:[%s273 + $0x1af] sm:$0xff]
      %v3282 = vld [vmem:[%s273 + $0x1c7] sm:$0xff]
      %v3283 = vld [vmem:[%s273 + $0x1cf] sm:$0xff]
      %v3284 = vld [vmem:[%s273 + $0x1e7] sm:$0xff]
      %v3285 = vld [vmem:[%s273 + $0x1ef] sm:$0xff]
      %3286 = vst [vmem:[#allocation2] sm:$0xff] %v3254
      %3287 = vst [vmem:[#allocation2 + $0x48] sm:$0xff] %v3255
      %3288 = vst [vmem:[#allocation2 + $0x90] sm:$0xff] %v3256
      %3289 = vst [vmem:[#allocation2 + $0xd8] sm:$0xff] %v3257
      %3290 = vst [vmem:[#allocation2 + $0x120] sm:$0xff] %v3258
      %3291 = vst [vmem:[#allocation2 + $0x168] sm:$0xff] %v3259
      %3292 = vst [vmem:[#allocation2 + $0x1b0] sm:$0xff] %v3260
      %3293 = vst [vmem:[#allocation2 + $0x1f8] sm:$0xff] %v3261
      %3294 = vst [vmem:[#allocation2 + $0x240] sm:$0xff] %v3262
      %3295 = vst [vmem:[#allocation2 + $0x288] sm:$0xff] %v3263
      %3296 = vst [vmem:[#allocation2 + $0x2d0] sm:$0xff] %v3264
      %3297 = vst [vmem:[#allocation2 + $0x318] sm:$0xff] %v3265
      %3298 = vst [vmem:[#allocation2 + $0x360] sm:$0xff] %v3266
      %3299 = vst [vmem:[#allocation2 + $0x3a8] sm:$0xff] %v3267
      %3300 = vst [vmem:[#allocation2 + $0x3f0] sm:$0xff] %v3268
      %3301 = vst [vmem:[#allocation2 + $0x438] sm:$0xff] %v3269
      %3302 = vst [vmem:[#allocation2 + $0x480] sm:$0xff] %v3270
      %3303 = vst [vmem:[#allocation2 + $0x4c8] sm:$0xff] %v3271
      %3304 = vst [vmem:[#allocation2 + $0x510] sm:$0xff] %v3272
      %3305 = vst [vmem:[#allocation2 + $0x558] sm:$0xff] %v3273
      %3306 = vst [vmem:[#allocation2 + $0x5a0] sm:$0xff] %v3274
      %3307 = vst [vmem:[#allocation2 + $0x5e8] sm:$0xff] %v3275
      %3308 = vst [vmem:[#allocation2 + $0x630] sm:$0xff] %v3276
      %3309 = vst [vmem:[#allocation2 + $0x678] sm:$0xff] %v3277
      %3310 = vst [vmem:[#allocation2 + $0x6c0] sm:$0xff] %v3278
      %3311 = vst [vmem:[#allocation2 + $0x708] sm:$0xff] %v3279
      %3312 = vst [vmem:[#allocation2 + $0x750] sm:$0xff] %v3280
      %3313 = vst [vmem:[#allocation2 + $0x798] sm:$0xff] %v3281
      %3314 = vst [vmem:[#allocation2 + $0x7e0] sm:$0xff] %v3282
      %3315 = vst [vmem:[#allocation2 + $0x828] sm:$0xff] %v3283
      %3316 = vst [vmem:[#allocation2 + $0x870] sm:$0xff] %v3284
      %3317 = vst [vmem:[#allocation2 + $0x8b8] sm:$0xff] %v3285
      %v3318 = vld [vmem:[%s273 + $0x8] sm:$0xff]
      %v3319 = vld [vmem:[%s273 + $0x10] sm:$0xff]
      %v3320 = vld [vmem:[%s273 + $0x28] sm:$0xff]
      %v3321 = vld [vmem:[%s273 + $0x30] sm:$0xff]
      %v3322 = vld [vmem:[%s273 + $0x48] sm:$0xff]
      %v3323 = vld [vmem:[%s273 + $0x50] sm:$0xff]
      %v3324 = vld [vmem:[%s273 + $0x68] sm:$0xff]
      %v3325 = vld [vmem:[%s273 + $0x70] sm:$0xff]
      %v3326 = vld [vmem:[%s273 + $0x88] sm:$0xff]
      %v3327 = vld [vmem:[%s273 + $0x90] sm:$0xff]
      %v3328 = vld [vmem:[%s273 + $0xa8] sm:$0xff]
      %v3329 = vld [vmem:[%s273 + $0xb0] sm:$0xff]
      %v3330 = vld [vmem:[%s273 + $0xc8] sm:$0xff]
      %v3331 = vld [vmem:[%s273 + $0xd0] sm:$0xff]
      %v3332 = vld [vmem:[%s273 + $0xe8] sm:$0xff]
      %v3333 = vld [vmem:[%s273 + $0xf0] sm:$0xff]
      %v3334 = vld [vmem:[%s273 + $0x108] sm:$0xff]
      %v3335 = vld [vmem:[%s273 + $0x110] sm:$0xff]
      %v3336 = vld [vmem:[%s273 + $0x128] sm:$0xff]
      %v3337 = vld [vmem:[%s273 + $0x130] sm:$0xff]
      %v3338 = vld [vmem:[%s273 + $0x148] sm:$0xff]
      %v3339 = vld [vmem:[%s273 + $0x150] sm:$0xff]
      %v3340 = vld [vmem:[%s273 + $0x168] sm:$0xff]
      %v3341 = vld [vmem:[%s273 + $0x170] sm:$0xff]
      %v3342 = vld [vmem:[%s273 + $0x188] sm:$0xff]
      %v3343 = vld [vmem:[%s273 + $0x190] sm:$0xff]
      %v3344 = vld [vmem:[%s273 + $0x1a8] sm:$0xff]
      %v3345 = vld [vmem:[%s273 + $0x1b0] sm:$0xff]
      %v3346 = vld [vmem:[%s273 + $0x1c8] sm:$0xff]
      %v3347 = vld [vmem:[%s273 + $0x1d0] sm:$0xff]
      %v3348 = vld [vmem:[%s273 + $0x1e8] sm:$0xff]
      %v3349 = vld [vmem:[%s273 + $0x1f0] sm:$0xff]
      %3350 = vst [vmem:[#allocation2 + $0x8] sm:$0xff] %v3318
      %3351 = vst [vmem:[#allocation2 + $0x50] sm:$0xff] %v3319
      %3352 = vst [vmem:[#allocation2 + $0x98] sm:$0xff] %v3320
      %3353 = vst [vmem:[#allocation2 + $0xe0] sm:$0xff] %v3321
      %3354 = vst [vmem:[#allocation2 + $0x128] sm:$0xff] %v3322
      %3355 = vst [vmem:[#allocation2 + $0x170] sm:$0xff] %v3323
      %3356 = vst [vmem:[#allocation2 + $0x1b8] sm:$0xff] %v3324
      %3357 = vst [vmem:[#allocation2 + $0x200] sm:$0xff] %v3325
      %3358 = vst [vmem:[#allocation2 + $0x248] sm:$0xff] %v3326
      %3359 = vst [vmem:[#allocation2 + $0x290] sm:$0xff] %v3327
      %3360 = vst [vmem:[#allocation2 + $0x2d8] sm:$0xff] %v3328
      %3361 = vst [vmem:[#allocation2 + $0x320] sm:$0xff] %v3329
      %3362 = vst [vmem:[#allocation2 + $0x368] sm:$0xff] %v3330
      %3363 = vst [vmem:[#allocation2 + $0x3b0] sm:$0xff] %v3331
      %3364 = vst [vmem:[#allocation2 + $0x3f8] sm:$0xff] %v3332
      %3365 = vst [vmem:[#allocation2 + $0x440] sm:$0xff] %v3333
      %3366 = vst [vmem:[#allocation2 + $0x488] sm:$0xff] %v3334
      %3367 = vst [vmem:[#allocation2 + $0x4d0] sm:$0xff] %v3335
      %3368 = vst [vmem:[#allocation2 + $0x518] sm:$0xff] %v3336
      %3369 = vst [vmem:[#allocation2 + $0x560] sm:$0xff] %v3337
      %3370 = vst [vmem:[#allocation2 + $0x5a8] sm:$0xff] %v3338
      %3371 = vst [vmem:[#allocation2 + $0x5f0] sm:$0xff] %v3339
      %3372 = vst [vmem:[#allocation2 + $0x638] sm:$0xff] %v3340
      %3373 = vst [vmem:[#allocation2 + $0x680] sm:$0xff] %v3341
      %3374 = vst [vmem:[#allocation2 + $0x6c8] sm:$0xff] %v3342
      %3375 = vst [vmem:[#allocation2 + $0x710] sm:$0xff] %v3343
      %3376 = vst [vmem:[#allocation2 + $0x758] sm:$0xff] %v3344
      %3377 = vst [vmem:[#allocation2 + $0x7a0] sm:$0xff] %v3345
      %3378 = vst [vmem:[#allocation2 + $0x7e8] sm:$0xff] %v3346
      %3379 = vst [vmem:[#allocation2 + $0x830] sm:$0xff] %v3347
      %3380 = vst [vmem:[#allocation2 + $0x878] sm:$0xff] %v3348
      %3381 = vst [vmem:[#allocation2 + $0x8c0] sm:$0xff] %v3349
      %v3382 = vld [vmem:[%s273 + $0x9] sm:$0xff]
      %v3383 = vld [vmem:[%s273 + $0x11] sm:$0xff]
      %v3384 = vld [vmem:[%s273 + $0x29] sm:$0xff]
      %v3385 = vld [vmem:[%s273 + $0x31] sm:$0xff]
      %v3386 = vld [vmem:[%s273 + $0x49] sm:$0xff]
      %v3387 = vld [vmem:[%s273 + $0x51] sm:$0xff]
      %v3388 = vld [vmem:[%s273 + $0x69] sm:$0xff]
      %v3389 = vld [vmem:[%s273 + $0x71] sm:$0xff]
      %v3390 = vld [vmem:[%s273 + $0x89] sm:$0xff]
      %v3391 = vld [vmem:[%s273 + $0x91] sm:$0xff]
      %v3392 = vld [vmem:[%s273 + $0xa9] sm:$0xff]
      %v3393 = vld [vmem:[%s273 + $0xb1] sm:$0xff]
      %v3394 = vld [vmem:[%s273 + $0xc9] sm:$0xff]
      %v3395 = vld [vmem:[%s273 + $0xd1] sm:$0xff]
      %v3396 = vld [vmem:[%s273 + $0xe9] sm:$0xff]
      %v3397 = vld [vmem:[%s273 + $0xf1] sm:$0xff]
      %v3398 = vld [vmem:[%s273 + $0x109] sm:$0xff]
      %v3399 = vld [vmem:[%s273 + $0x111] sm:$0xff]
      %v3400 = vld [vmem:[%s273 + $0x129] sm:$0xff]
      %v3401 = vld [vmem:[%s273 + $0x131] sm:$0xff]
      %v3402 = vld [vmem:[%s273 + $0x149] sm:$0xff]
      %v3403 = vld [vmem:[%s273 + $0x151] sm:$0xff]
      %v3404 = vld [vmem:[%s273 + $0x169] sm:$0xff]
      %v3405 = vld [vmem:[%s273 + $0x171] sm:$0xff]
      %v3406 = vld [vmem:[%s273 + $0x189] sm:$0xff]
      %v3407 = vld [vmem:[%s273 + $0x191] sm:$0xff]
      %v3408 = vld [vmem:[%s273 + $0x1a9] sm:$0xff]
      %v3409 = vld [vmem:[%s273 + $0x1b1] sm:$0xff]
      %v3410 = vld [vmem:[%s273 + $0x1c9] sm:$0xff]
      %v3411 = vld [vmem:[%s273 + $0x1d1] sm:$0xff]
      %v3412 = vld [vmem:[%s273 + $0x1e9] sm:$0xff]
      %v3413 = vld [vmem:[%s273 + $0x1f1] sm:$0xff]
      %3414 = vst [vmem:[#allocation2 + $0x10] sm:$0xff] %v3382
      %3415 = vst [vmem:[#allocation2 + $0x58] sm:$0xff] %v3383
      %3416 = vst [vmem:[#allocation2 + $0xa0] sm:$0xff] %v3384
      %3417 = vst [vmem:[#allocation2 + $0xe8] sm:$0xff] %v3385
      %3418 = vst [vmem:[#allocation2 + $0x130] sm:$0xff] %v3386
      %3419 = vst [vmem:[#allocation2 + $0x178] sm:$0xff] %v3387
      %3420 = vst [vmem:[#allocation2 + $0x1c0] sm:$0xff] %v3388
      %3421 = vst [vmem:[#allocation2 + $0x208] sm:$0xff] %v3389
      %3422 = vst [vmem:[#allocation2 + $0x250] sm:$0xff] %v3390
      %3423 = vst [vmem:[#allocation2 + $0x298] sm:$0xff] %v3391
      %3424 = vst [vmem:[#allocation2 + $0x2e0] sm:$0xff] %v3392
      %3425 = vst [vmem:[#allocation2 + $0x328] sm:$0xff] %v3393
      %3426 = vst [vmem:[#allocation2 + $0x370] sm:$0xff] %v3394
      %3427 = vst [vmem:[#allocation2 + $0x3b8] sm:$0xff] %v3395
      %3428 = vst [vmem:[#allocation2 + $0x400] sm:$0xff] %v3396
      %3429 = vst [vmem:[#allocation2 + $0x448] sm:$0xff] %v3397
      %3430 = vst [vmem:[#allocation2 + $0x490] sm:$0xff] %v3398
      %3431 = vst [vmem:[#allocation2 + $0x4d8] sm:$0xff] %v3399
      %3432 = vst [vmem:[#allocation2 + $0x520] sm:$0xff] %v3400
      %3433 = vst [vmem:[#allocation2 + $0x568] sm:$0xff] %v3401
      %3434 = vst [vmem:[#allocation2 + $0x5b0] sm:$0xff] %v3402
      %3435 = vst [vmem:[#allocation2 + $0x5f8] sm:$0xff] %v3403
      %3436 = vst [vmem:[#allocation2 + $0x640] sm:$0xff] %v3404
      %3437 = vst [vmem:[#allocation2 + $0x688] sm:$0xff] %v3405
      %3438 = vst [vmem:[#allocation2 + $0x6d0] sm:$0xff] %v3406
      %3439 = vst [vmem:[#allocation2 + $0x718] sm:$0xff] %v3407
      %3440 = vst [vmem:[#allocation2 + $0x760] sm:$0xff] %v3408
      %3441 = vst [vmem:[#allocation2 + $0x7a8] sm:$0xff] %v3409
      %3442 = vst [vmem:[#allocation2 + $0x7f0] sm:$0xff] %v3410
      %3443 = vst [vmem:[#allocation2 + $0x838] sm:$0xff] %v3411
      %3444 = vst [vmem:[#allocation2 + $0x880] sm:$0xff] %v3412
      %3445 = vst [vmem:[#allocation2 + $0x8c8] sm:$0xff] %v3413
      %v3446 = vld [vmem:[%s279 + $0x7] sm:$0xff]
      %v3447 = vld [vmem:[%s279 + $0xf] sm:$0xff]
      %v3448 = vld [vmem:[%s279 + $0x27] sm:$0xff]
      %v3449 = vld [vmem:[%s279 + $0x2f] sm:$0xff]
      %v3450 = vld [vmem:[%s279 + $0x47] sm:$0xff]
      %v3451 = vld [vmem:[%s279 + $0x4f] sm:$0xff]
      %v3452 = vld [vmem:[%s279 + $0x67] sm:$0xff]
      %v3453 = vld [vmem:[%s279 + $0x6f] sm:$0xff]
      %v3454 = vld [vmem:[%s279 + $0x87] sm:$0xff]
      %v3455 = vld [vmem:[%s279 + $0x8f] sm:$0xff]
      %v3456 = vld [vmem:[%s279 + $0xa7] sm:$0xff]
      %v3457 = vld [vmem:[%s279 + $0xaf] sm:$0xff]
      %v3458 = vld [vmem:[%s279 + $0xc7] sm:$0xff]
      %v3459 = vld [vmem:[%s279 + $0xcf] sm:$0xff]
      %v3460 = vld [vmem:[%s279 + $0xe7] sm:$0xff]
      %v3461 = vld [vmem:[%s279 + $0xef] sm:$0xff]
      %v3462 = vld [vmem:[%s279 + $0x107] sm:$0xff]
      %v3463 = vld [vmem:[%s279 + $0x10f] sm:$0xff]
      %v3464 = vld [vmem:[%s279 + $0x127] sm:$0xff]
      %v3465 = vld [vmem:[%s279 + $0x12f] sm:$0xff]
      %v3466 = vld [vmem:[%s279 + $0x147] sm:$0xff]
      %v3467 = vld [vmem:[%s279 + $0x14f] sm:$0xff]
      %v3468 = vld [vmem:[%s279 + $0x167] sm:$0xff]
      %v3469 = vld [vmem:[%s279 + $0x16f] sm:$0xff]
      %v3470 = vld [vmem:[%s279 + $0x187] sm:$0xff]
      %v3471 = vld [vmem:[%s279 + $0x18f] sm:$0xff]
      %v3472 = vld [vmem:[%s279 + $0x1a7] sm:$0xff]
      %v3473 = vld [vmem:[%s279 + $0x1af] sm:$0xff]
      %v3474 = vld [vmem:[%s279 + $0x1c7] sm:$0xff]
      %v3475 = vld [vmem:[%s279 + $0x1cf] sm:$0xff]
      %v3476 = vld [vmem:[%s279 + $0x1e7] sm:$0xff]
      %v3477 = vld [vmem:[%s279 + $0x1ef] sm:$0xff]
      %3478 = vst [vmem:[#allocation2 + $0x18] sm:$0xff] %v3446
      %3479 = vst [vmem:[#allocation2 + $0x60] sm:$0xff] %v3447
      %3480 = vst [vmem:[#allocation2 + $0xa8] sm:$0xff] %v3448
      %3481 = vst [vmem:[#allocation2 + $0xf0] sm:$0xff] %v3449
      %3482 = vst [vmem:[#allocation2 + $0x138] sm:$0xff] %v3450
      %3483 = vst [vmem:[#allocation2 + $0x180] sm:$0xff] %v3451
      %3484 = vst [vmem:[#allocation2 + $0x1c8] sm:$0xff] %v3452
      %3485 = vst [vmem:[#allocation2 + $0x210] sm:$0xff] %v3453
      %3486 = vst [vmem:[#allocation2 + $0x258] sm:$0xff] %v3454
      %3487 = vst [vmem:[#allocation2 + $0x2a0] sm:$0xff] %v3455
      %3488 = vst [vmem:[#allocation2 + $0x2e8] sm:$0xff] %v3456
      %3489 = vst [vmem:[#allocation2 + $0x330] sm:$0xff] %v3457
      %3490 = vst [vmem:[#allocation2 + $0x378] sm:$0xff] %v3458
      %3491 = vst [vmem:[#allocation2 + $0x3c0] sm:$0xff] %v3459
      %3492 = vst [vmem:[#allocation2 + $0x408] sm:$0xff] %v3460
      %3493 = vst [vmem:[#allocation2 + $0x450] sm:$0xff] %v3461
      %3494 = vst [vmem:[#allocation2 + $0x498] sm:$0xff] %v3462
      %3495 = vst [vmem:[#allocation2 + $0x4e0] sm:$0xff] %v3463
      %3496 = vst [vmem:[#allocation2 + $0x528] sm:$0xff] %v3464
      %3497 = vst [vmem:[#allocation2 + $0x570] sm:$0xff] %v3465
      %3498 = vst [vmem:[#allocation2 + $0x5b8] sm:$0xff] %v3466
      %3499 = vst [vmem:[#allocation2 + $0x600] sm:$0xff] %v3467
      %3500 = vst [vmem:[#allocation2 + $0x648] sm:$0xff] %v3468
      %3501 = vst [vmem:[#allocation2 + $0x690] sm:$0xff] %v3469
      %3502 = vst [vmem:[#allocation2 + $0x6d8] sm:$0xff] %v3470
      %3503 = vst [vmem:[#allocation2 + $0x720] sm:$0xff] %v3471
      %3504 = vst [vmem:[#allocation2 + $0x768] sm:$0xff] %v3472
      %3505 = vst [vmem:[#allocation2 + $0x7b0] sm:$0xff] %v3473
      %3506 = vst [vmem:[#allocation2 + $0x7f8] sm:$0xff] %v3474
      %3507 = vst [vmem:[#allocation2 + $0x840] sm:$0xff] %v3475
      %3508 = vst [vmem:[#allocation2 + $0x888] sm:$0xff] %v3476
      %3509 = vst [vmem:[#allocation2 + $0x8d0] sm:$0xff] %v3477
      %v3510 = vld [vmem:[%s279 + $0x8] sm:$0xff]
      %v3511 = vld [vmem:[%s279 + $0x10] sm:$0xff]
      %v3512 = vld [vmem:[%s279 + $0x28] sm:$0xff]
      %v3513 = vld [vmem:[%s279 + $0x30] sm:$0xff]
      %v3514 = vld [vmem:[%s279 + $0x48] sm:$0xff]
      %v3515 = vld [vmem:[%s279 + $0x50] sm:$0xff]
      %v3516 = vld [vmem:[%s279 + $0x68] sm:$0xff]
      %v3517 = vld [vmem:[%s279 + $0x70] sm:$0xff]
      %v3518 = vld [vmem:[%s279 + $0x88] sm:$0xff]
      %v3519 = vld [vmem:[%s279 + $0x90] sm:$0xff]
      %v3520 = vld [vmem:[%s279 + $0xa8] sm:$0xff]
      %v3521 = vld [vmem:[%s279 + $0xb0] sm:$0xff]
      %v3522 = vld [vmem:[%s279 + $0xc8] sm:$0xff]
      %v3523 = vld [vmem:[%s279 + $0xd0] sm:$0xff]
      %v3524 = vld [vmem:[%s279 + $0xe8] sm:$0xff]
      %v3525 = vld [vmem:[%s279 + $0xf0] sm:$0xff]
      %v3526 = vld [vmem:[%s279 + $0x108] sm:$0xff]
      %v3527 = vld [vmem:[%s279 + $0x110] sm:$0xff]
      %v3528 = vld [vmem:[%s279 + $0x128] sm:$0xff]
      %v3529 = vld [vmem:[%s279 + $0x130] sm:$0xff]
      %v3530 = vld [vmem:[%s279 + $0x148] sm:$0xff]
      %v3531 = vld [vmem:[%s279 + $0x150] sm:$0xff]
      %v3532 = vld [vmem:[%s279 + $0x168] sm:$0xff]
      %v3533 = vld [vmem:[%s279 + $0x170] sm:$0xff]
      %v3534 = vld [vmem:[%s279 + $0x188] sm:$0xff]
      %v3535 = vld [vmem:[%s279 + $0x190] sm:$0xff]
      %v3536 = vld [vmem:[%s279 + $0x1a8] sm:$0xff]
      %v3537 = vld [vmem:[%s279 + $0x1b0] sm:$0xff]
      %v3538 = vld [vmem:[%s279 + $0x1c8] sm:$0xff]
      %v3539 = vld [vmem:[%s279 + $0x1d0] sm:$0xff]
      %v3540 = vld [vmem:[%s279 + $0x1e8] sm:$0xff]
      %v3541 = vld [vmem:[%s279 + $0x1f0] sm:$0xff]
      %3542 = vst [vmem:[#allocation2 + $0x20] sm:$0xff] %v3510
      %3543 = vst [vmem:[#allocation2 + $0x68] sm:$0xff] %v3511
      %3544 = vst [vmem:[#allocation2 + $0xb0] sm:$0xff] %v3512
      %3545 = vst [vmem:[#allocation2 + $0xf8] sm:$0xff] %v3513
      %3546 = vst [vmem:[#allocation2 + $0x140] sm:$0xff] %v3514
      %3547 = vst [vmem:[#allocation2 + $0x188] sm:$0xff] %v3515
      %3548 = vst [vmem:[#allocation2 + $0x1d0] sm:$0xff] %v3516
      %3549 = vst [vmem:[#allocation2 + $0x218] sm:$0xff] %v3517
      %3550 = vst [vmem:[#allocation2 + $0x260] sm:$0xff] %v3518
      %3551 = vst [vmem:[#allocation2 + $0x2a8] sm:$0xff] %v3519
      %3552 = vst [vmem:[#allocation2 + $0x2f0] sm:$0xff] %v3520
      %3553 = vst [vmem:[#allocation2 + $0x338] sm:$0xff] %v3521
      %3554 = vst [vmem:[#allocation2 + $0x380] sm:$0xff] %v3522
      %3555 = vst [vmem:[#allocation2 + $0x3c8] sm:$0xff] %v3523
      %3556 = vst [vmem:[#allocation2 + $0x410] sm:$0xff] %v3524
      %3557 = vst [vmem:[#allocation2 + $0x458] sm:$0xff] %v3525
      %3558 = vst [vmem:[#allocation2 + $0x4a0] sm:$0xff] %v3526
      %3559 = vst [vmem:[#allocation2 + $0x4e8] sm:$0xff] %v3527
      %3560 = vst [vmem:[#allocation2 + $0x530] sm:$0xff] %v3528
      %3561 = vst [vmem:[#allocation2 + $0x578] sm:$0xff] %v3529
      %3562 = vst [vmem:[#allocation2 + $0x5c0] sm:$0xff] %v3530
      %3563 = vst [vmem:[#allocation2 + $0x608] sm:$0xff] %v3531
      %3564 = vst [vmem:[#allocation2 + $0x650] sm:$0xff] %v3532
      %3565 = vst [vmem:[#allocation2 + $0x698] sm:$0xff] %v3533
      %3566 = vst [vmem:[#allocation2 + $0x6e0] sm:$0xff] %v3534
      %3567 = vst [vmem:[#allocation2 + $0x728] sm:$0xff] %v3535
      %3568 = vst [vmem:[#allocation2 + $0x770] sm:$0xff] %v3536
      %3569 = vst [vmem:[#allocation2 + $0x7b8] sm:$0xff] %v3537
      %3570 = vst [vmem:[#allocation2 + $0x800] sm:$0xff] %v3538
      %3571 = vst [vmem:[#allocation2 + $0x848] sm:$0xff] %v3539
      %3572 = vst [vmem:[#allocation2 + $0x890] sm:$0xff] %v3540
      %3573 = vst [vmem:[#allocation2 + $0x8d8] sm:$0xff] %v3541
      %v3574 = vld [vmem:[%s279 + $0x9] sm:$0xff]
      %v3575 = vld [vmem:[%s279 + $0x11] sm:$0xff]
      %v3576 = vld [vmem:[%s279 + $0x29] sm:$0xff]
      %v3577 = vld [vmem:[%s279 + $0x31] sm:$0xff]
      %v3578 = vld [vmem:[%s279 + $0x49] sm:$0xff]
      %v3579 = vld [vmem:[%s279 + $0x51] sm:$0xff]
      %v3580 = vld [vmem:[%s279 + $0x69] sm:$0xff]
      %v3581 = vld [vmem:[%s279 + $0x71] sm:$0xff]
      %v3582 = vld [vmem:[%s279 + $0x89] sm:$0xff]
      %v3583 = vld [vmem:[%s279 + $0x91] sm:$0xff]
      %v3584 = vld [vmem:[%s279 + $0xa9] sm:$0xff]
      %v3585 = vld [vmem:[%s279 + $0xb1] sm:$0xff]
      %v3586 = vld [vmem:[%s279 + $0xc9] sm:$0xff]
      %v3587 = vld [vmem:[%s279 + $0xd1] sm:$0xff]
      %v3588 = vld [vmem:[%s279 + $0xe9] sm:$0xff]
      %v3589 = vld [vmem:[%s279 + $0xf1] sm:$0xff]
      %v3590 = vld [vmem:[%s279 + $0x109] sm:$0xff]
      %v3591 = vld [vmem:[%s279 + $0x111] sm:$0xff]
      %v3592 = vld [vmem:[%s279 + $0x129] sm:$0xff]
      %v3593 = vld [vmem:[%s279 + $0x131] sm:$0xff]
      %v3594 = vld [vmem:[%s279 + $0x149] sm:$0xff]
      %v3595 = vld [vmem:[%s279 + $0x151] sm:$0xff]
      %v3596 = vld [vmem:[%s279 + $0x169] sm:$0xff]
      %v3597 = vld [vmem:[%s279 + $0x171] sm:$0xff]
      %v3598 = vld [vmem:[%s279 + $0x189] sm:$0xff]
      %v3599 = vld [vmem:[%s279 + $0x191] sm:$0xff]
      %v3600 = vld [vmem:[%s279 + $0x1a9] sm:$0xff]
      %v3601 = vld [vmem:[%s279 + $0x1b1] sm:$0xff]
      %v3602 = vld [vmem:[%s279 + $0x1c9] sm:$0xff]
      %v3603 = vld [vmem:[%s279 + $0x1d1] sm:$0xff]
      %v3604 = vld [vmem:[%s279 + $0x1e9] sm:$0xff]
      %v3605 = vld [vmem:[%s279 + $0x1f1] sm:$0xff]
      %3606 = vst [vmem:[#allocation2 + $0x28] sm:$0xff] %v3574
      %3607 = vst [vmem:[#allocation2 + $0x70] sm:$0xff] %v3575
      %3608 = vst [vmem:[#allocation2 + $0xb8] sm:$0xff] %v3576
      %3609 = vst [vmem:[#allocation2 + $0x100] sm:$0xff] %v3577
      %3610 = vst [vmem:[#allocation2 + $0x148] sm:$0xff] %v3578
      %3611 = vst [vmem:[#allocation2 + $0x190] sm:$0xff] %v3579
      %3612 = vst [vmem:[#allocation2 + $0x1d8] sm:$0xff] %v3580
      %3613 = vst [vmem:[#allocation2 + $0x220] sm:$0xff] %v3581
      %3614 = vst [vmem:[#allocation2 + $0x268] sm:$0xff] %v3582
      %3615 = vst [vmem:[#allocation2 + $0x2b0] sm:$0xff] %v3583
      %3616 = vst [vmem:[#allocation2 + $0x2f8] sm:$0xff] %v3584
      %3617 = vst [vmem:[#allocation2 + $0x340] sm:$0xff] %v3585
      %3618 = vst [vmem:[#allocation2 + $0x388] sm:$0xff] %v3586
      %3619 = vst [vmem:[#allocation2 + $0x3d0] sm:$0xff] %v3587
      %3620 = vst [vmem:[#allocation2 + $0x418] sm:$0xff] %v3588
      %3621 = vst [vmem:[#allocation2 + $0x460] sm:$0xff] %v3589
      %3622 = vst [vmem:[#allocation2 + $0x4a8] sm:$0xff] %v3590
      %3623 = vst [vmem:[#allocation2 + $0x4f0] sm:$0xff] %v3591
      %3624 = vst [vmem:[#allocation2 + $0x538] sm:$0xff] %v3592
      %3625 = vst [vmem:[#allocation2 + $0x580] sm:$0xff] %v3593
      %3626 = vst [vmem:[#allocation2 + $0x5c8] sm:$0xff] %v3594
      %3627 = vst [vmem:[#allocation2 + $0x610] sm:$0xff] %v3595
      %3628 = vst [vmem:[#allocation2 + $0x658] sm:$0xff] %v3596
      %3629 = vst [vmem:[#allocation2 + $0x6a0] sm:$0xff] %v3597
      %3630 = vst [vmem:[#allocation2 + $0x6e8] sm:$0xff] %v3598
      %3631 = vst [vmem:[#allocation2 + $0x730] sm:$0xff] %v3599
      %3632 = vst [vmem:[#allocation2 + $0x778] sm:$0xff] %v3600
      %3633 = vst [vmem:[#allocation2 + $0x7c0] sm:$0xff] %v3601
      %3634 = vst [vmem:[#allocation2 + $0x808] sm:$0xff] %v3602
      %3635 = vst [vmem:[#allocation2 + $0x850] sm:$0xff] %v3603
      %3636 = vst [vmem:[#allocation2 + $0x898] sm:$0xff] %v3604
      %3637 = vst [vmem:[#allocation2 + $0x8e0] sm:$0xff] %v3605
      %v3638 = vld [vmem:[%s696 + $0x7] sm:$0xff]
      %v3639 = vld [vmem:[%s696 + $0xf] sm:$0xff]
      %v3640 = vld [vmem:[%s696 + $0x27] sm:$0xff]
      %v3641 = vld [vmem:[%s696 + $0x2f] sm:$0xff]
      %v3642 = vld [vmem:[%s696 + $0x47] sm:$0xff]
      %v3643 = vld [vmem:[%s696 + $0x4f] sm:$0xff]
      %v3644 = vld [vmem:[%s696 + $0x67] sm:$0xff]
      %v3645 = vld [vmem:[%s696 + $0x6f] sm:$0xff]
      %v3646 = vld [vmem:[%s696 + $0x87] sm:$0xff]
      %v3647 = vld [vmem:[%s696 + $0x8f] sm:$0xff]
      %v3648 = vld [vmem:[%s696 + $0xa7] sm:$0xff]
      %v3649 = vld [vmem:[%s696 + $0xaf] sm:$0xff]
      %v3650 = vld [vmem:[%s696 + $0xc7] sm:$0xff]
      %v3651 = vld [vmem:[%s696 + $0xcf] sm:$0xff]
      %v3652 = vld [vmem:[%s696 + $0xe7] sm:$0xff]
      %v3653 = vld [vmem:[%s696 + $0xef] sm:$0xff]
      %v3654 = vld [vmem:[%s696 + $0x107] sm:$0xff]
      %v3655 = vld [vmem:[%s696 + $0x10f] sm:$0xff]
      %v3656 = vld [vmem:[%s696 + $0x127] sm:$0xff]
      %v3657 = vld [vmem:[%s696 + $0x12f] sm:$0xff]
      %v3658 = vld [vmem:[%s696 + $0x147] sm:$0xff]
      %v3659 = vld [vmem:[%s696 + $0x14f] sm:$0xff]
      %v3660 = vld [vmem:[%s696 + $0x167] sm:$0xff]
      %v3661 = vld [vmem:[%s696 + $0x16f] sm:$0xff]
      %v3662 = vld [vmem:[%s696 + $0x187] sm:$0xff]
      %v3663 = vld [vmem:[%s696 + $0x18f] sm:$0xff]
      %v3664 = vld [vmem:[%s696 + $0x1a7] sm:$0xff]
      %v3665 = vld [vmem:[%s696 + $0x1af] sm:$0xff]
      %v3666 = vld [vmem:[%s696 + $0x1c7] sm:$0xff]
      %v3667 = vld [vmem:[%s696 + $0x1cf] sm:$0xff]
      %v3668 = vld [vmem:[%s696 + $0x1e7] sm:$0xff]
      %v3669 = vld [vmem:[%s696 + $0x1ef] sm:$0xff]
      %3670 = vst [vmem:[#allocation2 + $0x30] sm:$0xff] %v3638
      %3671 = vst [vmem:[#allocation2 + $0x78] sm:$0xff] %v3639
      %3672 = vst [vmem:[#allocation2 + $0xc0] sm:$0xff] %v3640
      %3673 = vst [vmem:[#allocation2 + $0x108] sm:$0xff] %v3641
      %3674 = vst [vmem:[#allocation2 + $0x150] sm:$0xff] %v3642
      %3675 = vst [vmem:[#allocation2 + $0x198] sm:$0xff] %v3643
      %3676 = vst [vmem:[#allocation2 + $0x1e0] sm:$0xff] %v3644
      %3677 = vst [vmem:[#allocation2 + $0x228] sm:$0xff] %v3645
      %3678 = vst [vmem:[#allocation2 + $0x270] sm:$0xff] %v3646
      %3679 = vst [vmem:[#allocation2 + $0x2b8] sm:$0xff] %v3647
      %3680 = vst [vmem:[#allocation2 + $0x300] sm:$0xff] %v3648
      %3681 = vst [vmem:[#allocation2 + $0x348] sm:$0xff] %v3649
      %3682 = vst [vmem:[#allocation2 + $0x390] sm:$0xff] %v3650
      %3683 = vst [vmem:[#allocation2 + $0x3d8] sm:$0xff] %v3651
      %3684 = vst [vmem:[#allocation2 + $0x420] sm:$0xff] %v3652
      %3685 = vst [vmem:[#allocation2 + $0x468] sm:$0xff] %v3653
      %3686 = vst [vmem:[#allocation2 + $0x4b0] sm:$0xff] %v3654
      %3687 = vst [vmem:[#allocation2 + $0x4f8] sm:$0xff] %v3655
      %3688 = vst [vmem:[#allocation2 + $0x540] sm:$0xff] %v3656
      %3689 = vst [vmem:[#allocation2 + $0x588] sm:$0xff] %v3657
      %3690 = vst [vmem:[#allocation2 + $0x5d0] sm:$0xff] %v3658
      %3691 = vst [vmem:[#allocation2 + $0x618] sm:$0xff] %v3659
      %3692 = vst [vmem:[#allocation2 + $0x660] sm:$0xff] %v3660
      %3693 = vst [vmem:[#allocation2 + $0x6a8] sm:$0xff] %v3661
      %3694 = vst [vmem:[#allocation2 + $0x6f0] sm:$0xff] %v3662
      %3695 = vst [vmem:[#allocation2 + $0x738] sm:$0xff] %v3663
      %3696 = vst [vmem:[#allocation2 + $0x780] sm:$0xff] %v3664
      %3697 = vst [vmem:[#allocation2 + $0x7c8] sm:$0xff] %v3665
      %3698 = vst [vmem:[#allocation2 + $0x810] sm:$0xff] %v3666
      %3699 = vst [vmem:[#allocation2 + $0x858] sm:$0xff] %v3667
      %3700 = vst [vmem:[#allocation2 + $0x8a0] sm:$0xff] %v3668
      %3701 = vst [vmem:[#allocation2 + $0x8e8] sm:$0xff] %v3669
      %v3702 = vld [vmem:[%s696 + $0x8] sm:$0xff]
      %v3703 = vld [vmem:[%s696 + $0x10] sm:$0xff]
      %v3704 = vld [vmem:[%s696 + $0x28] sm:$0xff]
      %v3705 = vld [vmem:[%s696 + $0x30] sm:$0xff]
      %v3706 = vld [vmem:[%s696 + $0x48] sm:$0xff]
      %v3707 = vld [vmem:[%s696 + $0x50] sm:$0xff]
      %v3708 = vld [vmem:[%s696 + $0x68] sm:$0xff]
      %v3709 = vld [vmem:[%s696 + $0x70] sm:$0xff]
      %v3710 = vld [vmem:[%s696 + $0x88] sm:$0xff]
      %v3711 = vld [vmem:[%s696 + $0x90] sm:$0xff]
      %v3712 = vld [vmem:[%s696 + $0xa8] sm:$0xff]
      %v3713 = vld [vmem:[%s696 + $0xb0] sm:$0xff]
      %v3714 = vld [vmem:[%s696 + $0xc8] sm:$0xff]
      %v3715 = vld [vmem:[%s696 + $0xd0] sm:$0xff]
      %v3716 = vld [vmem:[%s696 + $0xe8] sm:$0xff]
      %v3717 = vld [vmem:[%s696 + $0xf0] sm:$0xff]
      %v3718 = vld [vmem:[%s696 + $0x108] sm:$0xff]
      %v3719 = vld [vmem:[%s696 + $0x110] sm:$0xff]
      %v3720 = vld [vmem:[%s696 + $0x128] sm:$0xff]
      %v3721 = vld [vmem:[%s696 + $0x130] sm:$0xff]
      %v3722 = vld [vmem:[%s696 + $0x148] sm:$0xff]
      %v3723 = vld [vmem:[%s696 + $0x150] sm:$0xff]
      %v3724 = vld [vmem:[%s696 + $0x168] sm:$0xff]
      %v3725 = vld [vmem:[%s696 + $0x170] sm:$0xff]
      %v3726 = vld [vmem:[%s696 + $0x188] sm:$0xff]
      %v3727 = vld [vmem:[%s696 + $0x190] sm:$0xff]
      %v3728 = vld [vmem:[%s696 + $0x1a8] sm:$0xff]
      %v3729 = vld [vmem:[%s696 + $0x1b0] sm:$0xff]
      %v3730 = vld [vmem:[%s696 + $0x1c8] sm:$0xff]
      %v3731 = vld [vmem:[%s696 + $0x1d0] sm:$0xff]
      %v3732 = vld [vmem:[%s696 + $0x1e8] sm:$0xff]
      %v3733 = vld [vmem:[%s696 + $0x1f0] sm:$0xff]
      %3734 = vst [vmem:[#allocation2 + $0x38] sm:$0xff] %v3702
      %3735 = vst [vmem:[#allocation2 + $0x80] sm:$0xff] %v3703
      %3736 = vst [vmem:[#allocation2 + $0xc8] sm:$0xff] %v3704
      %3737 = vst [vmem:[#allocation2 + $0x110] sm:$0xff] %v3705
      %3738 = vst [vmem:[#allocation2 + $0x158] sm:$0xff] %v3706
      %3739 = vst [vmem:[#allocation2 + $0x1a0] sm:$0xff] %v3707
      %3740 = vst [vmem:[#allocation2 + $0x1e8] sm:$0xff] %v3708
      %3741 = vst [vmem:[#allocation2 + $0x230] sm:$0xff] %v3709
      %3742 = vst [vmem:[#allocation2 + $0x278] sm:$0xff] %v3710
      %3743 = vst [vmem:[#allocation2 + $0x2c0] sm:$0xff] %v3711
      %3744 = vst [vmem:[#allocation2 + $0x308] sm:$0xff] %v3712
      %3745 = vst [vmem:[#allocation2 + $0x350] sm:$0xff] %v3713
      %3746 = vst [vmem:[#allocation2 + $0x398] sm:$0xff] %v3714
      %3747 = vst [vmem:[#allocation2 + $0x3e0] sm:$0xff] %v3715
      %3748 = vst [vmem:[#allocation2 + $0x428] sm:$0xff] %v3716
      %3749 = vst [vmem:[#allocation2 + $0x470] sm:$0xff] %v3717
      %3750 = vst [vmem:[#allocation2 + $0x4b8] sm:$0xff] %v3718
      %3751 = vst [vmem:[#allocation2 + $0x500] sm:$0xff] %v3719
      %3752 = vst [vmem:[#allocation2 + $0x548] sm:$0xff] %v3720
      %3753 = vst [vmem:[#allocation2 + $0x590] sm:$0xff] %v3721
      %3754 = vst [vmem:[#allocation2 + $0x5d8] sm:$0xff] %v3722
      %3755 = vst [vmem:[#allocation2 + $0x620] sm:$0xff] %v3723
      %3756 = vst [vmem:[#allocation2 + $0x668] sm:$0xff] %v3724
      %3757 = vst [vmem:[#allocation2 + $0x6b0] sm:$0xff] %v3725
      %3758 = vst [vmem:[#allocation2 + $0x6f8] sm:$0xff] %v3726
      %3759 = vst [vmem:[#allocation2 + $0x740] sm:$0xff] %v3727
      %3760 = vst [vmem:[#allocation2 + $0x788] sm:$0xff] %v3728
      %3761 = vst [vmem:[#allocation2 + $0x7d0] sm:$0xff] %v3729
      %3762 = vst [vmem:[#allocation2 + $0x818] sm:$0xff] %v3730
      %3763 = vst [vmem:[#allocation2 + $0x860] sm:$0xff] %v3731
      %3764 = vst [vmem:[#allocation2 + $0x8a8] sm:$0xff] %v3732
      %3765 = vst [vmem:[#allocation2 + $0x8f0] sm:$0xff] %v3733
      %v3766 = vld [vmem:[%s696 + $0x9] sm:$0xff]
      %v3767 = vld [vmem:[%s696 + $0x11] sm:$0xff]
      %v3768 = vld [vmem:[%s696 + $0x29] sm:$0xff]
      %v3769 = vld [vmem:[%s696 + $0x31] sm:$0xff]
      %v3770 = vld [vmem:[%s696 + $0x49] sm:$0xff]
      %v3771 = vld [vmem:[%s696 + $0x51] sm:$0xff]
      %v3772 = vld [vmem:[%s696 + $0x69] sm:$0xff]
      %v3773 = vld [vmem:[%s696 + $0x71] sm:$0xff]
      %v3774 = vld [vmem:[%s696 + $0x89] sm:$0xff]
      %v3775 = vld [vmem:[%s696 + $0x91] sm:$0xff]
      %v3776 = vld [vmem:[%s696 + $0xa9] sm:$0xff]
      %v3777 = vld [vmem:[%s696 + $0xb1] sm:$0xff]
      %v3778 = vld [vmem:[%s696 + $0xc9] sm:$0xff]
      %v3779 = vld [vmem:[%s696 + $0xd1] sm:$0xff]
      %v3780 = vld [vmem:[%s696 + $0xe9] sm:$0xff]
      %v3781 = vld [vmem:[%s696 + $0xf1] sm:$0xff]
      %v3782 = vld [vmem:[%s696 + $0x109] sm:$0xff]
      %v3783 = vld [vmem:[%s696 + $0x111] sm:$0xff]
      %v3784 = vld [vmem:[%s696 + $0x129] sm:$0xff]
      %v3785 = vld [vmem:[%s696 + $0x131] sm:$0xff]
      %v3786 = vld [vmem:[%s696 + $0x149] sm:$0xff]
      %v3787 = vld [vmem:[%s696 + $0x151] sm:$0xff]
      %v3788 = vld [vmem:[%s696 + $0x169] sm:$0xff]
      %v3789 = vld [vmem:[%s696 + $0x171] sm:$0xff]
      %v3790 = vld [vmem:[%s696 + $0x189] sm:$0xff]
      %v3791 = vld [vmem:[%s696 + $0x191] sm:$0xff]
      %v3792 = vld [vmem:[%s696 + $0x1a9] sm:$0xff]
      %v3793 = vld [vmem:[%s696 + $0x1b1] sm:$0xff]
      %v3794 = vld [vmem:[%s696 + $0x1c9] sm:$0xff]
      %v3795 = vld [vmem:[%s696 + $0x1d1] sm:$0xff]
      %v3796 = vld [vmem:[%s696 + $0x1e9] sm:$0xff]
      %v3797 = vld [vmem:[%s696 + $0x1f1] sm:$0xff]
      %3798 = vst [vmem:[#allocation2 + $0x40] sm:$0xff] %v3766
      %3799 = vst [vmem:[#allocation2 + $0x88] sm:$0xff] %v3767
      %3800 = vst [vmem:[#allocation2 + $0xd0] sm:$0xff] %v3768
      %3801 = vst [vmem:[#allocation2 + $0x118] sm:$0xff] %v3769
      %3802 = vst [vmem:[#allocation2 + $0x160] sm:$0xff] %v3770
      %3803 = vst [vmem:[#allocation2 + $0x1a8] sm:$0xff] %v3771
      %3804 = vst [vmem:[#allocation2 + $0x1f0] sm:$0xff] %v3772
      %3805 = vst [vmem:[#allocation2 + $0x238] sm:$0xff] %v3773
      %3806 = vst [vmem:[#allocation2 + $0x280] sm:$0xff] %v3774
      %3807 = vst [vmem:[#allocation2 + $0x2c8] sm:$0xff] %v3775
      %3808 = vst [vmem:[#allocation2 + $0x310] sm:$0xff] %v3776
      %3809 = vst [vmem:[#allocation2 + $0x358] sm:$0xff] %v3777
      %3810 = vst [vmem:[#allocation2 + $0x3a0] sm:$0xff] %v3778
      %3811 = vst [vmem:[#allocation2 + $0x3e8] sm:$0xff] %v3779
      %3812 = vst [vmem:[#allocation2 + $0x430] sm:$0xff] %v3780
      %3813 = vst [vmem:[#allocation2 + $0x478] sm:$0xff] %v3781
      %3814 = vst [vmem:[#allocation2 + $0x4c0] sm:$0xff] %v3782
      %3815 = vst [vmem:[#allocation2 + $0x508] sm:$0xff] %v3783
      %3816 = vst [vmem:[#allocation2 + $0x550] sm:$0xff] %v3784
      %3817 = vst [vmem:[#allocation2 + $0x598] sm:$0xff] %v3785
      %3818 = vst [vmem:[#allocation2 + $0x5e0] sm:$0xff] %v3786
      %3819 = vst [vmem:[#allocation2 + $0x628] sm:$0xff] %v3787
      %3820 = vst [vmem:[#allocation2 + $0x670] sm:$0xff] %v3788
      %3821 = vst [vmem:[#allocation2 + $0x6b8] sm:$0xff] %v3789
      %3822 = vst [vmem:[#allocation2 + $0x700] sm:$0xff] %v3790
      %3823 = vst [vmem:[#allocation2 + $0x748] sm:$0xff] %v3791
      %3824 = vst [vmem:[#allocation2 + $0x790] sm:$0xff] %v3792
      %3825 = vst [vmem:[#allocation2 + $0x7d8] sm:$0xff] %v3793
      %3826 = vst [vmem:[#allocation2 + $0x820] sm:$0xff] %v3794
      %3827 = vst [vmem:[#allocation2 + $0x868] sm:$0xff] %v3795
      %3828 = vst [vmem:[#allocation2 + $0x8b0] sm:$0xff] %v3796
      %3829 = vst [vmem:[#allocation2 + $0x8f8] sm:$0xff] %v3797
      %v3830 = vld [vmem:[#allocation2] sm:$0xff]
      %v3831 = vld [vmem:[#allocation2 + $0x8] sm:$0xff]
      %v3832 = vld [vmem:[#allocation2 + $0x10] sm:$0xff]
      %v3833 = vld [vmem:[#allocation2 + $0x18] sm:$0xff]
      %v3834 = vld [vmem:[#allocation2 + $0x20] sm:$0xff]
      %v3835 = vld [vmem:[#allocation2 + $0x28] sm:$0xff]
      %v3836 = vld [vmem:[#allocation2 + $0x30] sm:$0xff]
      %v3837 = vld [vmem:[#allocation2 + $0x38] sm:$0xff]
      %v3838 = vld [vmem:[#allocation2 + $0x40] sm:$0xff]
      %v3839 = vld [vmem:[#allocation2 + $0x48] sm:$0xff]
      %v3840 = vld [vmem:[#allocation2 + $0x50] sm:$0xff]
      %v3841 = vld [vmem:[#allocation2 + $0x58] sm:$0xff]
      %v3842 = vld [vmem:[#allocation2 + $0x60] sm:$0xff]
      %v3843 = vld [vmem:[#allocation2 + $0x68] sm:$0xff]
      %v3844 = vld [vmem:[#allocation2 + $0x70] sm:$0xff]
      %v3845 = vld [vmem:[#allocation2 + $0x78] sm:$0xff]
      %v3846 = vld [vmem:[#allocation2 + $0x80] sm:$0xff]
      %v3847 = vld [vmem:[#allocation2 + $0x88] sm:$0xff]
      %v3848 = vld [vmem:[#allocation2 + $0x90] sm:$0xff]
      %v3849 = vld [vmem:[#allocation2 + $0x98] sm:$0xff]
      %v3850 = vld [vmem:[#allocation2 + $0xa0] sm:$0xff]
      %v3851 = vld [vmem:[#allocation2 + $0xa8] sm:$0xff]
      %v3852 = vld [vmem:[#allocation2 + $0xb0] sm:$0xff]
      %v3853 = vld [vmem:[#allocation2 + $0xb8] sm:$0xff]
      %v3854 = vld [vmem:[#allocation2 + $0xc0] sm:$0xff]
      %v3855 = vld [vmem:[#allocation2 + $0xc8] sm:$0xff]
      %v3856 = vld [vmem:[#allocation2 + $0xd0] sm:$0xff]
      %v3857 = vld [vmem:[#allocation2 + $0xd8] sm:$0xff]
      %v3858 = vld [vmem:[#allocation2 + $0xe0] sm:$0xff]
      %v3859 = vld [vmem:[#allocation2 + $0xe8] sm:$0xff]
      %v3860 = vld [vmem:[#allocation2 + $0xf0] sm:$0xff]
      %v3861 = vld [vmem:[#allocation2 + $0xf8] sm:$0xff]
      %v3862 = vld [vmem:[#allocation2 + $0x100] sm:$0xff]
      %v3863 = vld [vmem:[#allocation2 + $0x108] sm:$0xff]
      %v3864 = vld [vmem:[#allocation2 + $0x110] sm:$0xff]
      %v3865 = vld [vmem:[#allocation2 + $0x118] sm:$0xff]
      %v3866 = vld [vmem:[#allocation2 + $0x120] sm:$0xff]
      %v3867 = vld [vmem:[#allocation2 + $0x128] sm:$0xff]
      %v3868 = vld [vmem:[#allocation2 + $0x130] sm:$0xff]
      %v3869 = vld [vmem:[#allocation2 + $0x138] sm:$0xff]
      %v3870 = vld [vmem:[#allocation2 + $0x140] sm:$0xff]
      %v3871 = vld [vmem:[#allocation2 + $0x148] sm:$0xff]
      %v3872 = vld [vmem:[#allocation2 + $0x150] sm:$0xff]
      %v3873 = vld [vmem:[#allocation2 + $0x158] sm:$0xff]
      %v3874 = vld [vmem:[#allocation2 + $0x160] sm:$0xff]
      %v3875 = vld [vmem:[#allocation2 + $0x168] sm:$0xff]
      %v3876 = vld [vmem:[#allocation2 + $0x170] sm:$0xff]
      %v3877 = vld [vmem:[#allocation2 + $0x178] sm:$0xff]
      %v3878 = vld [vmem:[#allocation2 + $0x180] sm:$0xff]
      %v3879 = vld [vmem:[#allocation2 + $0x188] sm:$0xff]
      %v3880 = vld [vmem:[#allocation2 + $0x190] sm:$0xff]
      %v3881 = vld [vmem:[#allocation2 + $0x198] sm:$0xff]
      %v3882 = vld [vmem:[#allocation2 + $0x1a0] sm:$0xff]
      %v3883 = vld [vmem:[#allocation2 + $0x1a8] sm:$0xff]
      %v3884 = vld [vmem:[#allocation2 + $0x1b0] sm:$0xff]
      %v3885 = vld [vmem:[#allocation2 + $0x1b8] sm:$0xff]
      %v3886 = vld [vmem:[#allocation2 + $0x1c0] sm:$0xff]
      %v3887 = vld [vmem:[#allocation2 + $0x1c8] sm:$0xff]
      %v3888 = vld [vmem:[#allocation2 + $0x1d0] sm:$0xff]
      %v3889 = vld [vmem:[#allocation2 + $0x1d8] sm:$0xff]
      %v3890 = vld [vmem:[#allocation2 + $0x1e0] sm:$0xff]
      %v3891 = vld [vmem:[#allocation2 + $0x1e8] sm:$0xff]
      %v3892 = vld [vmem:[#allocation2 + $0x1f0] sm:$0xff]
      %v3893 = vld [vmem:[#allocation2 + $0x1f8] sm:$0xff]
      %v3894 = vld [vmem:[#allocation2 + $0x200] sm:$0xff]
      %v3895 = vld [vmem:[#allocation2 + $0x208] sm:$0xff]
      %v3896 = vld [vmem:[#allocation2 + $0x210] sm:$0xff]
      %v3897 = vld [vmem:[#allocation2 + $0x218] sm:$0xff]
      %v3898 = vld [vmem:[#allocation2 + $0x220] sm:$0xff]
      %v3899 = vld [vmem:[#allocation2 + $0x228] sm:$0xff]
      %v3900 = vld [vmem:[#allocation2 + $0x230] sm:$0xff]
      %v3901 = vld [vmem:[#allocation2 + $0x238] sm:$0xff]
      %v3902 = vld [vmem:[#allocation2 + $0x240] sm:$0xff]
      %v3903 = vld [vmem:[#allocation2 + $0x248] sm:$0xff]
      %v3904 = vld [vmem:[#allocation2 + $0x250] sm:$0xff]
      %v3905 = vld [vmem:[#allocation2 + $0x258] sm:$0xff]
      %v3906 = vld [vmem:[#allocation2 + $0x260] sm:$0xff]
      %v3907 = vld [vmem:[#allocation2 + $0x268] sm:$0xff]
      %v3908 = vld [vmem:[#allocation2 + $0x270] sm:$0xff]
      %v3909 = vld [vmem:[#allocation2 + $0x278] sm:$0xff]
      %v3910 = vld [vmem:[#allocation2 + $0x280] sm:$0xff]
      %v3911 = vld [vmem:[#allocation2 + $0x288] sm:$0xff]
      %v3912 = vld [vmem:[#allocation2 + $0x290] sm:$0xff]
      %v3913 = vld [vmem:[#allocation2 + $0x298] sm:$0xff]
      %v3914 = vld [vmem:[#allocation2 + $0x2a0] sm:$0xff]
      %v3915 = vld [vmem:[#allocation2 + $0x2a8] sm:$0xff]
      %v3916 = vld [vmem:[#allocation2 + $0x2b0] sm:$0xff]
      %v3917 = vld [vmem:[#allocation2 + $0x2b8] sm:$0xff]
      %v3918 = vld [vmem:[#allocation2 + $0x2c0] sm:$0xff]
      %v3919 = vld [vmem:[#allocation2 + $0x2c8] sm:$0xff]
      %v3920 = vld [vmem:[#allocation2 + $0x2d0] sm:$0xff]
      %v3921 = vld [vmem:[#allocation2 + $0x2d8] sm:$0xff]
      %v3922 = vld [vmem:[#allocation2 + $0x2e0] sm:$0xff]
      %v3923 = vld [vmem:[#allocation2 + $0x2e8] sm:$0xff]
      %v3924 = vld [vmem:[#allocation2 + $0x2f0] sm:$0xff]
      %v3925 = vld [vmem:[#allocation2 + $0x2f8] sm:$0xff]
      %v3926 = vld [vmem:[#allocation2 + $0x300] sm:$0xff]
      %v3927 = vld [vmem:[#allocation2 + $0x308] sm:$0xff]
      %v3928 = vld [vmem:[#allocation2 + $0x310] sm:$0xff]
      %v3929 = vld [vmem:[#allocation2 + $0x318] sm:$0xff]
      %v3930 = vld [vmem:[#allocation2 + $0x320] sm:$0xff]
      %v3931 = vld [vmem:[#allocation2 + $0x328] sm:$0xff]
      %v3932 = vld [vmem:[#allocation2 + $0x330] sm:$0xff]
      %v3933 = vld [vmem:[#allocation2 + $0x338] sm:$0xff]
      %v3934 = vld [vmem:[#allocation2 + $0x340] sm:$0xff]
      %v3935 = vld [vmem:[#allocation2 + $0x348] sm:$0xff]
      %v3936 = vld [vmem:[#allocation2 + $0x350] sm:$0xff]
      %v3937 = vld [vmem:[#allocation2 + $0x358] sm:$0xff]
      %v3938 = vld [vmem:[#allocation2 + $0x360] sm:$0xff]
      %v3939 = vld [vmem:[#allocation2 + $0x368] sm:$0xff]
      %v3940 = vld [vmem:[#allocation2 + $0x370] sm:$0xff]
      %v3941 = vld [vmem:[#allocation2 + $0x378] sm:$0xff]
      %v3942 = vld [vmem:[#allocation2 + $0x380] sm:$0xff]
      %v3943 = vld [vmem:[#allocation2 + $0x388] sm:$0xff]
      %v3944 = vld [vmem:[#allocation2 + $0x390] sm:$0xff]
      %v3945 = vld [vmem:[#allocation2 + $0x398] sm:$0xff]
      %v3946 = vld [vmem:[#allocation2 + $0x3a0] sm:$0xff]
      %v3947 = vld [vmem:[#allocation2 + $0x3a8] sm:$0xff]
      %v3948 = vld [vmem:[#allocation2 + $0x3b0] sm:$0xff]
      %v3949 = vld [vmem:[#allocation2 + $0x3b8] sm:$0xff]
      %v3950 = vld [vmem:[#allocation2 + $0x3c0] sm:$0xff]
      %v3951 = vld [vmem:[#allocation2 + $0x3c8] sm:$0xff]
      %v3952 = vld [vmem:[#allocation2 + $0x3d0] sm:$0xff]
      %v3953 = vld [vmem:[#allocation2 + $0x3d8] sm:$0xff]
      %v3954 = vld [vmem:[#allocation2 + $0x3e0] sm:$0xff]
      %v3955 = vld [vmem:[#allocation2 + $0x3e8] sm:$0xff]
      %v3956 = vld [vmem:[#allocation2 + $0x3f0] sm:$0xff]
      %v3957 = vld [vmem:[#allocation2 + $0x3f8] sm:$0xff]
      %v3958 = vld [vmem:[#allocation2 + $0x400] sm:$0xff]
      %v3959 = vld [vmem:[#allocation2 + $0x408] sm:$0xff]
      %v3960 = vld [vmem:[#allocation2 + $0x410] sm:$0xff]
      %v3961 = vld [vmem:[#allocation2 + $0x418] sm:$0xff]
      %v3962 = vld [vmem:[#allocation2 + $0x420] sm:$0xff]
      %v3963 = vld [vmem:[#allocation2 + $0x428] sm:$0xff]
      %v3964 = vld [vmem:[#allocation2 + $0x430] sm:$0xff]
      %v3965 = vld [vmem:[#allocation2 + $0x438] sm:$0xff]
      %v3966 = vld [vmem:[#allocation2 + $0x440] sm:$0xff]
      %v3967 = vld [vmem:[#allocation2 + $0x448] sm:$0xff]
      %v3968 = vld [vmem:[#allocation2 + $0x450] sm:$0xff]
      %v3969 = vld [vmem:[#allocation2 + $0x458] sm:$0xff]
      %v3970 = vld [vmem:[#allocation2 + $0x460] sm:$0xff]
      %v3971 = vld [vmem:[#allocation2 + $0x468] sm:$0xff]
      %v3972 = vld [vmem:[#allocation2 + $0x470] sm:$0xff]
      %v3973 = vld [vmem:[#allocation2 + $0x478] sm:$0xff]
      %v3974 = vld [vmem:[#allocation2 + $0x480] sm:$0xff]
      %v3975 = vld [vmem:[#allocation2 + $0x488] sm:$0xff]
      %v3976 = vld [vmem:[#allocation2 + $0x490] sm:$0xff]
      %v3977 = vld [vmem:[#allocation2 + $0x498] sm:$0xff]
      %v3978 = vld [vmem:[#allocation2 + $0x4a0] sm:$0xff]
      %v3979 = vld [vmem:[#allocation2 + $0x4a8] sm:$0xff]
      %v3980 = vld [vmem:[#allocation2 + $0x4b0] sm:$0xff]
      %v3981 = vld [vmem:[#allocation2 + $0x4b8] sm:$0xff]
      %v3982 = vld [vmem:[#allocation2 + $0x4c0] sm:$0xff]
      %v3983 = vld [vmem:[#allocation2 + $0x4c8] sm:$0xff]
      %v3984 = vld [vmem:[#allocation2 + $0x4d0] sm:$0xff]
      %v3985 = vld [vmem:[#allocation2 + $0x4d8] sm:$0xff]
      %v3986 = vld [vmem:[#allocation2 + $0x4e0] sm:$0xff]
      %v3987 = vld [vmem:[#allocation2 + $0x4e8] sm:$0xff]
      %v3988 = vld [vmem:[#allocation2 + $0x4f0] sm:$0xff]
      %v3989 = vld [vmem:[#allocation2 + $0x4f8] sm:$0xff]
      %v3990 = vld [vmem:[#allocation2 + $0x500] sm:$0xff]
      %v3991 = vld [vmem:[#allocation2 + $0x508] sm:$0xff]
      %v3992 = vld [vmem:[#allocation2 + $0x510] sm:$0xff]
      %v3993 = vld [vmem:[#allocation2 + $0x518] sm:$0xff]
      %v3994 = vld [vmem:[#allocation2 + $0x520] sm:$0xff]
      %v3995 = vld [vmem:[#allocation2 + $0x528] sm:$0xff]
      %v3996 = vld [vmem:[#allocation2 + $0x530] sm:$0xff]
      %v3997 = vld [vmem:[#allocation2 + $0x538] sm:$0xff]
      %v3998 = vld [vmem:[#allocation2 + $0x540] sm:$0xff]
      %v3999 = vld [vmem:[#allocation2 + $0x548] sm:$0xff]
      %v4000 = vld [vmem:[#allocation2 + $0x550] sm:$0xff]
      %v4001 = vld [vmem:[#allocation2 + $0x558] sm:$0xff]
      %v4002 = vld [vmem:[#allocation2 + $0x560] sm:$0xff]
      %v4003 = vld [vmem:[#allocation2 + $0x568] sm:$0xff]
      %v4004 = vld [vmem:[#allocation2 + $0x570] sm:$0xff]
      %v4005 = vld [vmem:[#allocation2 + $0x578] sm:$0xff]
      %v4006 = vld [vmem:[#allocation2 + $0x580] sm:$0xff]
      %v4007 = vld [vmem:[#allocation2 + $0x588] sm:$0xff]
      %v4008 = vld [vmem:[#allocation2 + $0x590] sm:$0xff]
      %v4009 = vld [vmem:[#allocation2 + $0x598] sm:$0xff]
      %v4010 = vld [vmem:[#allocation2 + $0x5a0] sm:$0xff]
      %v4011 = vld [vmem:[#allocation2 + $0x5a8] sm:$0xff]
      %v4012 = vld [vmem:[#allocation2 + $0x5b0] sm:$0xff]
      %v4013 = vld [vmem:[#allocation2 + $0x5b8] sm:$0xff]
      %v4014 = vld [vmem:[#allocation2 + $0x5c0] sm:$0xff]
      %v4015 = vld [vmem:[#allocation2 + $0x5c8] sm:$0xff]
      %v4016 = vld [vmem:[#allocation2 + $0x5d0] sm:$0xff]
      %v4017 = vld [vmem:[#allocation2 + $0x5d8] sm:$0xff]
      %v4018 = vld [vmem:[#allocation2 + $0x5e0] sm:$0xff]
      %v4019 = vld [vmem:[#allocation2 + $0x5e8] sm:$0xff]
      %v4020 = vld [vmem:[#allocation2 + $0x5f0] sm:$0xff]
      %v4021 = vld [vmem:[#allocation2 + $0x5f8] sm:$0xff]
      %v4022 = vld [vmem:[#allocation2 + $0x600] sm:$0xff]
      %v4023 = vld [vmem:[#allocation2 + $0x608] sm:$0xff]
      %v4024 = vld [vmem:[#allocation2 + $0x610] sm:$0xff]
      %v4025 = vld [vmem:[#allocation2 + $0x618] sm:$0xff]
      %v4026 = vld [vmem:[#allocation2 + $0x620] sm:$0xff]
      %v4027 = vld [vmem:[#allocation2 + $0x628] sm:$0xff]
      %v4028 = vld [vmem:[#allocation2 + $0x630] sm:$0xff]
      %v4029 = vld [vmem:[#allocation2 + $0x638] sm:$0xff]
      %v4030 = vld [vmem:[#allocation2 + $0x640] sm:$0xff]
      %v4031 = vld [vmem:[#allocation2 + $0x648] sm:$0xff]
      %v4032 = vld [vmem:[#allocation2 + $0x650] sm:$0xff]
      %v4033 = vld [vmem:[#allocation2 + $0x658] sm:$0xff]
      %v4034 = vld [vmem:[#allocation2 + $0x660] sm:$0xff]
      %v4035 = vld [vmem:[#allocation2 + $0x668] sm:$0xff]
      %v4036 = vld [vmem:[#allocation2 + $0x670] sm:$0xff]
      %v4037 = vld [vmem:[#allocation2 + $0x678] sm:$0xff]
      %v4038 = vld [vmem:[#allocation2 + $0x680] sm:$0xff]
      %v4039 = vld [vmem:[#allocation2 + $0x688] sm:$0xff]
      %v4040 = vld [vmem:[#allocation2 + $0x690] sm:$0xff]
      %v4041 = vld [vmem:[#allocation2 + $0x698] sm:$0xff]
      %v4042 = vld [vmem:[#allocation2 + $0x6a0] sm:$0xff]
      %v4043 = vld [vmem:[#allocation2 + $0x6a8] sm:$0xff]
      %v4044 = vld [vmem:[#allocation2 + $0x6b0] sm:$0xff]
      %v4045 = vld [vmem:[#allocation2 + $0x6b8] sm:$0xff]
      %v4046 = vld [vmem:[#allocation2 + $0x6c0] sm:$0xff]
      %v4047 = vld [vmem:[#allocation2 + $0x6c8] sm:$0xff]
      %v4048 = vld [vmem:[#allocation2 + $0x6d0] sm:$0xff]
      %v4049 = vld [vmem:[#allocation2 + $0x6d8] sm:$0xff]
      %v4050 = vld [vmem:[#allocation2 + $0x6e0] sm:$0xff]
      %v4051 = vld [vmem:[#allocation2 + $0x6e8] sm:$0xff]
      %v4052 = vld [vmem:[#allocation2 + $0x6f0] sm:$0xff]
      %v4053 = vld [vmem:[#allocation2 + $0x6f8] sm:$0xff]
      %v4054 = vld [vmem:[#allocation2 + $0x700] sm:$0xff]
      %v4055 = vld [vmem:[#allocation2 + $0x708] sm:$0xff]
      %v4056 = vld [vmem:[#allocation2 + $0x710] sm:$0xff]
      %v4057 = vld [vmem:[#allocation2 + $0x718] sm:$0xff]
      %v4058 = vld [vmem:[#allocation2 + $0x720] sm:$0xff]
      %v4059 = vld [vmem:[#allocation2 + $0x728] sm:$0xff]
      %v4060 = vld [vmem:[#allocation2 + $0x730] sm:$0xff]
      %v4061 = vld [vmem:[#allocation2 + $0x738] sm:$0xff]
      %v4062 = vld [vmem:[#allocation2 + $0x740] sm:$0xff]
      %v4063 = vld [vmem:[#allocation2 + $0x748] sm:$0xff]
      %v4064 = vld [vmem:[#allocation2 + $0x750] sm:$0xff]
      %v4065 = vld [vmem:[#allocation2 + $0x758] sm:$0xff]
      %v4066 = vld [vmem:[#allocation2 + $0x760] sm:$0xff]
      %v4067 = vld [vmem:[#allocation2 + $0x768] sm:$0xff]
      %v4068 = vld [vmem:[#allocation2 + $0x770] sm:$0xff]
      %v4069 = vld [vmem:[#allocation2 + $0x778] sm:$0xff]
      %v4070 = vld [vmem:[#allocation2 + $0x780] sm:$0xff]
      %v4071 = vld [vmem:[#allocation2 + $0x788] sm:$0xff]
      %v4072 = vld [vmem:[#allocation2 + $0x790] sm:$0xff]
      %v4073 = vld [vmem:[#allocation2 + $0x798] sm:$0xff]
      %v4074 = vld [vmem:[#allocation2 + $0x7a0] sm:$0xff]
      %v4075 = vld [vmem:[#allocation2 + $0x7a8] sm:$0xff]
      %v4076 = vld [vmem:[#allocation2 + $0x7b0] sm:$0xff]
      %v4077 = vld [vmem:[#allocation2 + $0x7b8] sm:$0xff]
      %v4078 = vld [vmem:[#allocation2 + $0x7c0] sm:$0xff]
      %v4079 = vld [vmem:[#allocation2 + $0x7c8] sm:$0xff]
      %v4080 = vld [vmem:[#allocation2 + $0x7d0] sm:$0xff]
      %v4081 = vld [vmem:[#allocation2 + $0x7d8] sm:$0xff]
      %v4082 = vld [vmem:[#allocation2 + $0x7e0] sm:$0xff]
      %v4083 = vld [vmem:[#allocation2 + $0x7e8] sm:$0xff]
      %v4084 = vld [vmem:[#allocation2 + $0x7f0] sm:$0xff]
      %v4085 = vld [vmem:[#allocation2 + $0x7f8] sm:$0xff]
      %v4086 = vld [vmem:[#allocation2 + $0x800] sm:$0xff]
      %v4087 = vld [vmem:[#allocation2 + $0x808] sm:$0xff]
      %v4088 = vld [vmem:[#allocation2 + $0x810] sm:$0xff]
      %v4089 = vld [vmem:[#allocation2 + $0x818] sm:$0xff]
      %v4090 = vld [vmem:[#allocation2 + $0x820] sm:$0xff]
      %v4091 = vld [vmem:[#allocation2 + $0x828] sm:$0xff]
      %v4092 = vld [vmem:[#allocation2 + $0x830] sm:$0xff]
      %v4093 = vld [vmem:[#allocation2 + $0x838] sm:$0xff]
      %v4094 = vld [vmem:[#allocation2 + $0x840] sm:$0xff]
      %v4095 = vld [vmem:[#allocation2 + $0x848] sm:$0xff]
      %v4096 = vld [vmem:[#allocation2 + $0x850] sm:$0xff]
      %v4097 = vld [vmem:[#allocation2 + $0x858] sm:$0xff]
      %v4098 = vld [vmem:[#allocation2 + $0x860] sm:$0xff]
      %v4099 = vld [vmem:[#allocation2 + $0x868] sm:$0xff]
      %v4100 = vld [vmem:[#allocation2 + $0x870] sm:$0xff]
      %v4101 = vld [vmem:[#allocation2 + $0x878] sm:$0xff]
      %v4102 = vld [vmem:[#allocation2 + $0x880] sm:$0xff]
      %v4103 = vld [vmem:[#allocation2 + $0x888] sm:$0xff]
      %v4104 = vld [vmem:[#allocation2 + $0x890] sm:$0xff]
      %v4105 = vld [vmem:[#allocation2 + $0x898] sm:$0xff]
      %v4106 = vld [vmem:[#allocation2 + $0x8a0] sm:$0xff]
      %v4107 = vld [vmem:[#allocation2 + $0x8a8] sm:$0xff]
      %v4108 = vld [vmem:[#allocation2 + $0x8b0] sm:$0xff]
      %v4109 = vld [vmem:[#allocation2 + $0x8b8] sm:$0xff]
      %v4110 = vld [vmem:[#allocation2 + $0x8c0] sm:$0xff]
      %v4111 = vld [vmem:[#allocation2 + $0x8c8] sm:$0xff]
      %v4112 = vld [vmem:[#allocation2 + $0x8d0] sm:$0xff]
      %v4113 = vld [vmem:[#allocation2 + $0x8d8] sm:$0xff]
      %v4114 = vld [vmem:[#allocation2 + $0x8e0] sm:$0xff]
      %v4115 = vld [vmem:[#allocation2 + $0x8e8] sm:$0xff]
      %v4116 = vld [vmem:[#allocation2 + $0x8f0] sm:$0xff]
      %v4117 = vld [vmem:[#allocation2 + $0x8f8] sm:$0xff]
      %v4118 = vld [vmem:[%s3] sm:$0xff]
      %v4119 = vld [vmem:[%s3 + $0x8] sm:$0xff]
      %v4120 = vld [vmem:[%s3 + $0x10] sm:$0xff]
      %v4121 = vld [vmem:[%s3 + $0x18] sm:$0xff]
      %v4122 = vld [vmem:[%s3 + $0x20] sm:$0xff]
      %v4123 = vld [vmem:[%s3 + $0x28] sm:$0xff]
      %v4124 = vld [vmem:[%s3 + $0x30] sm:$0xff]
      %v4125 = vld [vmem:[%s3 + $0x38] sm:$0xff]
      %v4126 = vld [vmem:[%s3 + $0x40] sm:$0xff]
      %v4127 = vld [vmem:[%s3 + $0x48] sm:$0xff]
      %v4128 = vld [vmem:[%s3 + $0x50] sm:$0xff]
      %v4129 = vld [vmem:[%s3 + $0x58] sm:$0xff]
      %v4130 = vld [vmem:[%s3 + $0x60] sm:$0xff]
      %v4131 = vld [vmem:[%s3 + $0x68] sm:$0xff]
      %v4132 = vld [vmem:[%s3 + $0x70] sm:$0xff]
      %v4133 = vld [vmem:[%s3 + $0x78] sm:$0xff]
      %v4134 = vld [vmem:[%s3 + $0x80] sm:$0xff]
      %v4135 = vld [vmem:[%s3 + $0x88] sm:$0xff]
      %v4136 = vld [vmem:[%s3 + $0x90] sm:$0xff]
      %v4137 = vld [vmem:[%s3 + $0x98] sm:$0xff]
      %v4138 = vld [vmem:[%s3 + $0xa0] sm:$0xff]
      %v4139 = vld [vmem:[%s3 + $0xa8] sm:$0xff]
      %v4140 = vld [vmem:[%s3 + $0xb0] sm:$0xff]
      %v4141 = vld [vmem:[%s3 + $0xb8] sm:$0xff]
      %v4142 = vld [vmem:[%s3 + $0xc0] sm:$0xff]
      %v4143 = vld [vmem:[%s3 + $0xc8] sm:$0xff]
      %v4144 = vld [vmem:[%s3 + $0xd0] sm:$0xff]
      %v4145 = vld [vmem:[%s3 + $0xd8] sm:$0xff]
      %v4146 = vld [vmem:[%s3 + $0xe0] sm:$0xff]
      %v4147 = vld [vmem:[%s3 + $0xe8] sm:$0xff]
      %v4148 = vld [vmem:[%s3 + $0xf0] sm:$0xff]
      %v4149 = vld [vmem:[%s3 + $0xf8] sm:$0xff]
      %v4150 = vld [vmem:[%s3 + $0x100] sm:$0xff]
      %v4151 = vld [vmem:[%s3 + $0x108] sm:$0xff]
      %v4152 = vld [vmem:[%s3 + $0x110] sm:$0xff]
      %v4153 = vld [vmem:[%s3 + $0x118] sm:$0xff]
      %v4154 = vld [vmem:[%s3 + $0x120] sm:$0xff]
      %v4155 = vld [vmem:[%s3 + $0x128] sm:$0xff]
      %v4156 = vld [vmem:[%s3 + $0x130] sm:$0xff]
      %v4157 = vld [vmem:[%s3 + $0x138] sm:$0xff]
      %v4158 = vld [vmem:[%s3 + $0x140] sm:$0xff]
      %v4159 = vld [vmem:[%s3 + $0x148] sm:$0xff]
      %v4160 = vld [vmem:[%s3 + $0x150] sm:$0xff]
      %v4161 = vld [vmem:[%s3 + $0x158] sm:$0xff]
      %v4162 = vld [vmem:[%s3 + $0x160] sm:$0xff]
      %v4163 = vld [vmem:[%s3 + $0x168] sm:$0xff]
      %v4164 = vld [vmem:[%s3 + $0x170] sm:$0xff]
      %v4165 = vld [vmem:[%s3 + $0x178] sm:$0xff]
      %v4166 = vld [vmem:[%s3 + $0x180] sm:$0xff]
      %v4167 = vld [vmem:[%s3 + $0x188] sm:$0xff]
      %v4168 = vld [vmem:[%s3 + $0x190] sm:$0xff]
      %v4169 = vld [vmem:[%s3 + $0x198] sm:$0xff]
      %v4170 = vld [vmem:[%s3 + $0x1a0] sm:$0xff]
      %v4171 = vld [vmem:[%s3 + $0x1a8] sm:$0xff]
      %v4172 = vld [vmem:[%s3 + $0x1b0] sm:$0xff]
      %v4173 = vld [vmem:[%s3 + $0x1b8] sm:$0xff]
      %v4174 = vld [vmem:[%s3 + $0x1c0] sm:$0xff]
      %v4175 = vld [vmem:[%s3 + $0x1c8] sm:$0xff]
      %v4176 = vld [vmem:[%s3 + $0x1d0] sm:$0xff]
      %v4177 = vld [vmem:[%s3 + $0x1d8] sm:$0xff]
      %v4178 = vld [vmem:[%s3 + $0x1e0] sm:$0xff]
      %v4179 = vld [vmem:[%s3 + $0x1e8] sm:$0xff]
      %v4180 = vld [vmem:[%s3 + $0x1f0] sm:$0xff]
      %v4181 = vld [vmem:[%s3 + $0x1f8] sm:$0xff]
      %v4182 = vld [vmem:[%s3 + $0x200] sm:$0xff]
      %v4183 = vld [vmem:[%s3 + $0x208] sm:$0xff]
      %v4184 = vld [vmem:[%s3 + $0x210] sm:$0xff]
      %v4185 = vld [vmem:[%s3 + $0x218] sm:$0xff]
      %v4186 = vld [vmem:[%s3 + $0x220] sm:$0xff]
      %v4187 = vld [vmem:[%s3 + $0x228] sm:$0xff]
      %v4188 = vld [vmem:[%s3 + $0x230] sm:$0xff]
      %v4189 = vld [vmem:[%s3 + $0x238] sm:$0xff]
      %v4190 = vld [vmem:[%s3 + $0x240] sm:$0xff]
      %v4191 = vld [vmem:[%s3 + $0x248] sm:$0xff]
      %v4192 = vld [vmem:[%s3 + $0x250] sm:$0xff]
      %v4193 = vld [vmem:[%s3 + $0x258] sm:$0xff]
      %v4194 = vld [vmem:[%s3 + $0x260] sm:$0xff]
      %v4195 = vld [vmem:[%s3 + $0x268] sm:$0xff]
      %v4196 = vld [vmem:[%s3 + $0x270] sm:$0xff]
      %v4197 = vld [vmem:[%s3 + $0x278] sm:$0xff]
      %v4198 = vld [vmem:[%s3 + $0x280] sm:$0xff]
      %v4199 = vld [vmem:[%s3 + $0x288] sm:$0xff]
      %v4200 = vld [vmem:[%s3 + $0x290] sm:$0xff]
      %v4201 = vld [vmem:[%s3 + $0x298] sm:$0xff]
      %v4202 = vld [vmem:[%s3 + $0x2a0] sm:$0xff]
      %v4203 = vld [vmem:[%s3 + $0x2a8] sm:$0xff]
      %v4204 = vld [vmem:[%s3 + $0x2b0] sm:$0xff]
      %v4205 = vld [vmem:[%s3 + $0x2b8] sm:$0xff]
      %v4206 = vld [vmem:[%s3 + $0x2c0] sm:$0xff]
      %v4207 = vld [vmem:[%s3 + $0x2c8] sm:$0xff]
      %v4208 = vld [vmem:[%s3 + $0x2d0] sm:$0xff]
      %v4209 = vld [vmem:[%s3 + $0x2d8] sm:$0xff]
      %v4210 = vld [vmem:[%s3 + $0x2e0] sm:$0xff]
      %v4211 = vld [vmem:[%s3 + $0x2e8] sm:$0xff]
      %v4212 = vld [vmem:[%s3 + $0x2f0] sm:$0xff]
      %v4213 = vld [vmem:[%s3 + $0x2f8] sm:$0xff]
      %v4214 = vld [vmem:[%s3 + $0x300] sm:$0xff]
      %v4215 = vld [vmem:[%s3 + $0x308] sm:$0xff]
      %v4216 = vld [vmem:[%s3 + $0x310] sm:$0xff]
      %v4217 = vld [vmem:[%s3 + $0x318] sm:$0xff]
      %v4218 = vld [vmem:[%s3 + $0x320] sm:$0xff]
      %v4219 = vld [vmem:[%s3 + $0x328] sm:$0xff]
      %v4220 = vld [vmem:[%s3 + $0x330] sm:$0xff]
      %v4221 = vld [vmem:[%s3 + $0x338] sm:$0xff]
      %v4222 = vld [vmem:[%s3 + $0x340] sm:$0xff]
      %v4223 = vld [vmem:[%s3 + $0x348] sm:$0xff]
      %v4224 = vld [vmem:[%s3 + $0x350] sm:$0xff]
      %v4225 = vld [vmem:[%s3 + $0x358] sm:$0xff]
      %v4226 = vld [vmem:[%s3 + $0x360] sm:$0xff]
      %v4227 = vld [vmem:[%s3 + $0x368] sm:$0xff]
      %v4228 = vld [vmem:[%s3 + $0x370] sm:$0xff]
      %v4229 = vld [vmem:[%s3 + $0x378] sm:$0xff]
      %v4230 = vld [vmem:[%s3 + $0x380] sm:$0xff]
      %v4231 = vld [vmem:[%s3 + $0x388] sm:$0xff]
      %v4232 = vld [vmem:[%s3 + $0x390] sm:$0xff]
      %v4233 = vld [vmem:[%s3 + $0x398] sm:$0xff]
      %v4234 = vld [vmem:[%s3 + $0x3a0] sm:$0xff]
      %v4235 = vld [vmem:[%s3 + $0x3a8] sm:$0xff]
      %v4236 = vld [vmem:[%s3 + $0x3b0] sm:$0xff]
      %v4237 = vld [vmem:[%s3 + $0x3b8] sm:$0xff]
      %v4238 = vld [vmem:[%s3 + $0x3c0] sm:$0xff]
      %v4239 = vld [vmem:[%s3 + $0x3c8] sm:$0xff]
      %v4240 = vld [vmem:[%s3 + $0x3d0] sm:$0xff]
      %v4241 = vld [vmem:[%s3 + $0x3d8] sm:$0xff]
      %v4242 = vld [vmem:[%s3 + $0x3e0] sm:$0xff]
      %v4243 = vld [vmem:[%s3 + $0x3e8] sm:$0xff]
      %v4244 = vld [vmem:[%s3 + $0x3f0] sm:$0xff]
      %v4245 = vld [vmem:[%s3 + $0x3f8] sm:$0xff]
      %v4246 = vld [vmem:[%s3 + $0x400] sm:$0xff]
      %v4247 = vld [vmem:[%s3 + $0x408] sm:$0xff]
      %v4248 = vld [vmem:[%s3 + $0x410] sm:$0xff]
      %v4249 = vld [vmem:[%s3 + $0x418] sm:$0xff]
      %v4250 = vld [vmem:[%s3 + $0x420] sm:$0xff]
      %v4251 = vld [vmem:[%s3 + $0x428] sm:$0xff]
      %v4252 = vld [vmem:[%s3 + $0x430] sm:$0xff]
      %v4253 = vld [vmem:[%s3 + $0x438] sm:$0xff]
      %v4254 = vld [vmem:[%s3 + $0x440] sm:$0xff]
      %v4255 = vld [vmem:[%s3 + $0x448] sm:$0xff]
      %v4256 = vld [vmem:[%s3 + $0x450] sm:$0xff]
      %v4257 = vld [vmem:[%s3 + $0x458] sm:$0xff]
      %v4258 = vld [vmem:[%s3 + $0x460] sm:$0xff]
      %v4259 = vld [vmem:[%s3 + $0x468] sm:$0xff]
      %v4260 = vld [vmem:[%s3 + $0x470] sm:$0xff]
      %v4261 = vld [vmem:[%s3 + $0x478] sm:$0xff]
      %v4262 = vld [vmem:[%s4] sm:$0x1]
      %v4264 = vlaneseq
      %v4265 = vshrl.u32 %v4264, 7
      %v4266 = vsub.s32 0, %v4265
      %v4267 = vrot.slane %v4262, %v4266
      %4269 = vmatprep.subr.mxu0 0.0
      %4270 = vmatpush1.msra.mxu0 %v4133
      %4271 = vmatprep.subr.mxu0 0.0
      %4272 = vmatpush1.msra.mxu0 %v4132
      %4273 = vmatprep.subr.mxu0 0.0
      %4274 = vmatpush1.msra.mxu0 %v4131
      %4275 = vmatprep.subr.mxu0 0.0
      %4276 = vmatpush1.msra.mxu0 %v4130
      %4277 = vmatprep.subr.mxu0 0.0
      %4278 = vmatpush1.msra.mxu0 %v4129
      %4279 = vmatprep.subr.mxu0 0.0
      %4280 = vmatpush1.msra.mxu0 %v4128
      %4281 = vmatprep.subr.mxu0 0.0
      %4282 = vmatpush1.msra.mxu0 %v4127
      %4283 = vmatprep.subr.mxu0 0.0
      %4284 = vmatpush1.msra.mxu0 %v4126
      %4285 = vmatprep.subr.mxu0 0.0
      %4286 = vmatpush1.msra.mxu0 %v4125
      %4287 = vmatprep.subr.mxu0 0.0
      %4288 = vmatpush1.msra.mxu0 %v4124
      %4289 = vmatprep.subr.mxu0 0.0
      %4290 = vmatpush1.msra.mxu0 %v4123
      %4291 = vmatprep.subr.mxu0 0.0
      %4292 = vmatpush1.msra.mxu0 %v4122
      %4293 = vmatprep.subr.mxu0 0.0
      %4294 = vmatpush1.msra.mxu0 %v4121
      %4295 = vmatprep.subr.mxu0 0.0
      %4296 = vmatpush1.msra.mxu0 %v4120
      %4297 = vmatprep.subr.mxu0 0.0
      %4298 = vmatpush1.msra.mxu0 %v4119
      %4299 = vmatprep.subr.mxu0 0.0
      %4300 = vmatpush1.msra.mxu0 %v4118
      %4301 = vmatprep.subr.mxu0 0.0
      %4302 = vmatpush2.msra.mxu0 %v4149
      %4303 = vmatprep.subr.mxu0 0.0
      %4304 = vmatpush2.msra.mxu0 %v4148
      %4305 = vmatprep.subr.mxu0 0.0
      %4306 = vmatpush2.msra.mxu0 %v4147
      %4307 = vmatprep.subr.mxu0 0.0
      %4308 = vmatpush2.msra.mxu0 %v4146
      %4309 = vmatprep.subr.mxu0 0.0
      %4310 = vmatpush2.msra.mxu0 %v4145
      %4311 = vmatprep.subr.mxu0 0.0
      %4312 = vmatpush2.msra.mxu0 %v4144
      %4313 = vmatprep.subr.mxu0 0.0
      %4314 = vmatpush2.msra.mxu0 %v4143
      %4315 = vmatprep.subr.mxu0 0.0
      %4316 = vmatpush2.msra.mxu0 %v4142
      %4317 = vmatprep.subr.mxu0 0.0
      %4318 = vmatpush2.msra.mxu0 %v4141
      %4319 = vmatprep.subr.mxu0 0.0
      %4320 = vmatpush2.msra.mxu0 %v4140
      %4321 = vmatprep.subr.mxu0 0.0
      %4322 = vmatpush2.msra.mxu0 %v4139
      %4323 = vmatprep.subr.mxu0 0.0
      %4324 = vmatpush2.msra.mxu0 %v4138
      %4325 = vmatprep.subr.mxu0 0.0
      %4326 = vmatpush2.msra.mxu0 %v4137
      %4327 = vmatprep.subr.mxu0 0.0
      %4328 = vmatpush2.msra.mxu0 %v4136
      %4329 = vmatprep.subr.mxu0 0.0
      %4330 = vmatpush2.msra.mxu0 %v4135
      %4331 = vmatprep.subr.mxu0 0.0
      %4332 = vmatpush2.msra.mxu0 %v4134
      %4333 = vmatprep.mubr.f32.mxu0 %v3831
      %4334 = vmatmul.mubr.f32.gmra.mxu0 %v3830
      %v4335 = vpop.f32.mrf.mxu0
      %v4336 = vadd.f32 %v4267, %v4335
      %v4337 = vpop.f32.mrf.mxu0
      %4338 = vmatprep.mubr.f32.mxu0 %v3840
      %4339 = vmatmul.mubr.f32.gmra.mxu0 %v3839
      %v4340 = vpop.f32.mrf.mxu0
      %v4341 = vadd.f32 %v4267, %v4340
      %v4342 = vpop.f32.mrf.mxu0
      %4343 = vmatprep.mubr.f32.mxu0 %v3849
      %4344 = vmatmul.mubr.f32.gmra.mxu0 %v3848
      %v4345 = vpop.f32.mrf.mxu0
      %v4346 = vadd.f32 %v4267, %v4345
      %v4347 = vpop.f32.mrf.mxu0
      %4348 = vmatprep.mubr.f32.mxu0 %v3858
      %4349 = vmatmul.mubr.f32.gmra.mxu0 %v3857
      %v4350 = vpop.f32.mrf.mxu0
      %v4351 = vadd.f32 %v4267, %v4350
      %v4352 = vpop.f32.mrf.mxu0
      %4353 = vmatprep.mubr.f32.mxu0 %v3867
      %4354 = vmatmul.mubr.f32.gmra.mxu0 %v3866
      %v4355 = vpop.f32.mrf.mxu0
      %v4356 = vadd.f32 %v4267, %v4355
      %v4357 = vpop.f32.mrf.mxu0
      %4358 = vmatprep.mubr.f32.mxu0 %v3876
      %4359 = vmatmul.mubr.f32.gmra.mxu0 %v3875
      %v4360 = vpop.f32.mrf.mxu0
      %v4361 = vadd.f32 %v4267, %v4360
      %v4362 = vpop.f32.mrf.mxu0
      %4363 = vmatprep.mubr.f32.mxu0 %v3885
      %4364 = vmatmul.mubr.f32.gmra.mxu0 %v3884
      %v4365 = vpop.f32.mrf.mxu0
      %v4366 = vadd.f32 %v4267, %v4365
      %v4367 = vpop.f32.mrf.mxu0
      %4368 = vmatprep.mubr.f32.mxu0 %v3894
      %4369 = vmatmul.mubr.f32.gmra.mxu0 %v3893
      %v4370 = vpop.f32.mrf.mxu0
      %v4371 = vadd.f32 %v4267, %v4370
      %v4372 = vpop.f32.mrf.mxu0
      %4373 = vmatprep.mubr.f32.mxu0 %v3903
      %4374 = vmatmul.mubr.f32.gmra.mxu0 %v3902
      %v4375 = vpop.f32.mrf.mxu0
      %v4376 = vadd.f32 %v4267, %v4375
      %v4377 = vpop.f32.mrf.mxu0
      %4378 = vmatprep.mubr.f32.mxu0 %v3912
      %4379 = vmatmul.mubr.f32.gmra.mxu0 %v3911
      %v4380 = vpop.f32.mrf.mxu0
      %v4381 = vadd.f32 %v4267, %v4380
      %v4382 = vpop.f32.mrf.mxu0
      %4383 = vmatprep.mubr.f32.mxu0 %v3921
      %4384 = vmatmul.mubr.f32.gmra.mxu0 %v3920
      %v4385 = vpop.f32.mrf.mxu0
      %v4386 = vadd.f32 %v4267, %v4385
      %v4387 = vpop.f32.mrf.mxu0
      %4388 = vmatprep.mubr.f32.mxu0 %v3930
      %4389 = vmatmul.mubr.f32.gmra.mxu0 %v3929
      %v4390 = vpop.f32.mrf.mxu0
      %v4391 = vadd.f32 %v4267, %v4390
      %v4392 = vpop.f32.mrf.mxu0
      %4393 = vmatprep.mubr.f32.mxu0 %v3939
      %4394 = vmatmul.mubr.f32.gmra.mxu0 %v3938
      %v4395 = vpop.f32.mrf.mxu0
      %v4396 = vadd.f32 %v4267, %v4395
      %v4397 = vpop.f32.mrf.mxu0
      %4398 = vmatprep.mubr.f32.mxu0 %v3948
      %4399 = vmatmul.mubr.f32.gmra.mxu0 %v3947
      %v4400 = vpop.f32.mrf.mxu0
      %v4401 = vadd.f32 %v4267, %v4400
      %v4402 = vpop.f32.mrf.mxu0
      %4403 = vmatprep.mubr.f32.mxu0 %v3957
      %4404 = vmatmul.mubr.f32.gmra.mxu0 %v3956
      %v4405 = vpop.f32.mrf.mxu0
      %v4406 = vadd.f32 %v4267, %v4405
      %v4407 = vpop.f32.mrf.mxu0
      %4408 = vmatprep.mubr.f32.mxu0 %v3966
      %4409 = vmatmul.mubr.f32.gmra.mxu0 %v3965
      %v4410 = vpop.f32.mrf.mxu0
      %v4411 = vadd.f32 %v4267, %v4410
      %v4412 = vpop.f32.mrf.mxu0
      %4413 = vmatprep.mubr.f32.mxu0 %v3975
      %4414 = vmatmul.mubr.f32.gmra.mxu0 %v3974
      %v4415 = vpop.f32.mrf.mxu0
      %v4416 = vadd.f32 %v4267, %v4415
      %v4417 = vpop.f32.mrf.mxu0
      %4418 = vmatprep.mubr.f32.mxu0 %v3984
      %4419 = vmatmul.mubr.f32.gmra.mxu0 %v3983
      %v4420 = vpop.f32.mrf.mxu0
      %v4421 = vadd.f32 %v4267, %v4420
      %v4422 = vpop.f32.mrf.mxu0
      %4423 = vmatprep.mubr.f32.mxu0 %v3993
      %4424 = vmatmul.mubr.f32.gmra.mxu0 %v3992
      %v4425 = vpop.f32.mrf.mxu0
      %v4426 = vadd.f32 %v4267, %v4425
      %v4427 = vpop.f32.mrf.mxu0
      %4428 = vmatprep.mubr.f32.mxu0 %v4002
      %4429 = vmatmul.mubr.f32.gmra.mxu0 %v4001
      %v4430 = vpop.f32.mrf.mxu0
      %v4431 = vadd.f32 %v4267, %v4430
      %v4432 = vpop.f32.mrf.mxu0
      %4433 = vmatprep.mubr.f32.mxu0 %v4011
      %4434 = vmatmul.mubr.f32.gmra.mxu0 %v4010
      %v4435 = vpop.f32.mrf.mxu0
      %v4436 = vadd.f32 %v4267, %v4435
      %v4437 = vpop.f32.mrf.mxu0
      %4438 = vmatprep.mubr.f32.mxu0 %v4020
      %4439 = vmatmul.mubr.f32.gmra.mxu0 %v4019
      %v4440 = vpop.f32.mrf.mxu0
      %v4441 = vadd.f32 %v4267, %v4440
      %v4442 = vpop.f32.mrf.mxu0
      %4443 = vmatprep.mubr.f32.mxu0 %v4029
      %4444 = vmatmul.mubr.f32.gmra.mxu0 %v4028
      %v4445 = vpop.f32.mrf.mxu0
      %v4446 = vadd.f32 %v4267, %v4445
      %v4447 = vpop.f32.mrf.mxu0
      %4448 = vmatprep.mubr.f32.mxu0 %v4038
      %4449 = vmatmul.mubr.f32.gmra.mxu0 %v4037
      %v4450 = vpop.f32.mrf.mxu0
      %v4451 = vadd.f32 %v4267, %v4450
      %v4452 = vpop.f32.mrf.mxu0
      %4453 = vmatprep.mubr.f32.mxu0 %v4047
      %4454 = vmatmul.mubr.f32.gmra.mxu0 %v4046
      %v4455 = vpop.f32.mrf.mxu0
      %v4456 = vadd.f32 %v4267, %v4455
      %v4457 = vpop.f32.mrf.mxu0
      %4458 = vmatprep.mubr.f32.mxu0 %v4056
      %4459 = vmatmul.mubr.f32.gmra.mxu0 %v4055
      %v4460 = vpop.f32.mrf.mxu0
      %v4461 = vadd.f32 %v4267, %v4460
      %v4462 = vpop.f32.mrf.mxu0
      %4463 = vmatprep.mubr.f32.mxu0 %v4065
      %4464 = vmatmul.mubr.f32.gmra.mxu0 %v4064
      %v4465 = vpop.f32.mrf.mxu0
      %v4466 = vadd.f32 %v4267, %v4465
      %v4467 = vpop.f32.mrf.mxu0
      %4468 = vmatprep.mubr.f32.mxu0 %v4074
      %4469 = vmatmul.mubr.f32.gmra.mxu0 %v4073
      %v4470 = vpop.f32.mrf.mxu0
      %v4471 = vadd.f32 %v4267, %v4470
      %v4472 = vpop.f32.mrf.mxu0
      %4473 = vmatprep.mubr.f32.mxu0 %v4083
      %4474 = vmatmul.mubr.f32.gmra.mxu0 %v4082
      %v4475 = vpop.f32.mrf.mxu0
      %v4476 = vadd.f32 %v4267, %v4475
      %v4477 = vpop.f32.mrf.mxu0
      %4478 = vmatprep.mubr.f32.mxu0 %v4092
      %4479 = vmatmul.mubr.f32.gmra.mxu0 %v4091
      %v4480 = vpop.f32.mrf.mxu0
      %v4481 = vadd.f32 %v4267, %v4480
      %v4482 = vpop.f32.mrf.mxu0
      %4483 = vmatprep.mubr.f32.mxu0 %v4101
      %4484 = vmatmul.mubr.f32.gmra.mxu0 %v4100
      %v4485 = vpop.f32.mrf.mxu0
      %v4486 = vadd.f32 %v4267, %v4485
      %v4487 = vpop.f32.mrf.mxu0
      %4488 = vmatprep.mubr.f32.mxu0 %v4110
      %4489 = vmatmul.mubr.f32.gmra.mxu0 %v4109
      %v4490 = vpop.f32.mrf.mxu0
      %v4491 = vadd.f32 %v4267, %v4490
      %v4492 = vpop.f32.mrf.mxu0
      %4493 = vdwg.mxu0
      %4494 = vmatprep.subr.mxu0 0.0
      %4495 = vmatpush1.msra.mxu0 %v4165
      %4496 = vmatprep.subr.mxu0 0.0
      %4497 = vmatpush1.msra.mxu0 %v4164
      %4498 = vmatprep.subr.mxu0 0.0
      %4499 = vmatpush1.msra.mxu0 %v4163
      %4500 = vmatprep.subr.mxu0 0.0
      %4501 = vmatpush1.msra.mxu0 %v4162
      %4502 = vmatprep.subr.mxu0 0.0
      %4503 = vmatpush1.msra.mxu0 %v4161
      %4504 = vmatprep.subr.mxu0 0.0
      %4505 = vmatpush1.msra.mxu0 %v4160
      %4506 = vmatprep.subr.mxu0 0.0
      %4507 = vmatpush1.msra.mxu0 %v4159
      %4508 = vmatprep.subr.mxu0 0.0
      %4509 = vmatpush1.msra.mxu0 %v4158
      %4510 = vmatprep.subr.mxu0 0.0
      %4511 = vmatpush1.msra.mxu0 %v4157
      %4512 = vmatprep.subr.mxu0 0.0
      %4513 = vmatpush1.msra.mxu0 %v4156
      %4514 = vmatprep.subr.mxu0 0.0
      %4515 = vmatpush1.msra.mxu0 %v4155
      %4516 = vmatprep.subr.mxu0 0.0
      %4517 = vmatpush1.msra.mxu0 %v4154
      %4518 = vmatprep.subr.mxu0 0.0
      %4519 = vmatpush1.msra.mxu0 %v4153
      %4520 = vmatprep.subr.mxu0 0.0
      %4521 = vmatpush1.msra.mxu0 %v4152
      %4522 = vmatprep.subr.mxu0 0.0
      %4523 = vmatpush1.msra.mxu0 %v4151
      %4524 = vmatprep.subr.mxu0 0.0
      %4525 = vmatpush1.msra.mxu0 %v4150
      %4526 = vmatprep.subr.mxu0 0.0
      %4527 = vmatpush2.msra.mxu0 %v4181
      %4528 = vmatprep.subr.mxu0 0.0
      %4529 = vmatpush2.msra.mxu0 %v4180
      %4530 = vmatprep.subr.mxu0 0.0
      %4531 = vmatpush2.msra.mxu0 %v4179
      %4532 = vmatprep.subr.mxu0 0.0
      %4533 = vmatpush2.msra.mxu0 %v4178
      %4534 = vmatprep.subr.mxu0 0.0
      %4535 = vmatpush2.msra.mxu0 %v4177
      %4536 = vmatprep.subr.mxu0 0.0
      %4537 = vmatpush2.msra.mxu0 %v4176
      %4538 = vmatprep.subr.mxu0 0.0
      %4539 = vmatpush2.msra.mxu0 %v4175
      %4540 = vmatprep.subr.mxu0 0.0
      %4541 = vmatpush2.msra.mxu0 %v4174
      %4542 = vmatprep.subr.mxu0 0.0
      %4543 = vmatpush2.msra.mxu0 %v4173
      %4544 = vmatprep.subr.mxu0 0.0
      %4545 = vmatpush2.msra.mxu0 %v4172
      %4546 = vmatprep.subr.mxu0 0.0
      %4547 = vmatpush2.msra.mxu0 %v4171
      %4548 = vmatprep.subr.mxu0 0.0
      %4549 = vmatpush2.msra.mxu0 %v4170
      %4550 = vmatprep.subr.mxu0 0.0
      %4551 = vmatpush2.msra.mxu0 %v4169
      %4552 = vmatprep.subr.mxu0 0.0
      %4553 = vmatpush2.msra.mxu0 %v4168
      %4554 = vmatprep.subr.mxu0 0.0
      %4555 = vmatpush2.msra.mxu0 %v4167
      %4556 = vmatprep.subr.mxu0 0.0
      %4557 = vmatpush2.msra.mxu0 %v4166
      %4558 = vmatprep.mubr.f32.mxu0 %v3833
      %4559 = vmatmul.mubr.f32.gmra.mxu0 %v3832
      %v4560 = vpop.f32.mrf.mxu0
      %v4561 = vadd.f32 %v4336, %v4560
      %v4562 = vpop.f32.mrf.mxu0
      %4563 = vmatprep.mubr.f32.mxu0 %v3842
      %4564 = vmatmul.mubr.f32.gmra.mxu0 %v3841
      %v4565 = vpop.f32.mrf.mxu0
      %v4566 = vadd.f32 %v4341, %v4565
      %v4567 = vpop.f32.mrf.mxu0
      %4568 = vmatprep.mubr.f32.mxu0 %v3851
      %4569 = vmatmul.mubr.f32.gmra.mxu0 %v3850
      %v4570 = vpop.f32.mrf.mxu0
      %v4571 = vadd.f32 %v4346, %v4570
      %v4572 = vpop.f32.mrf.mxu0
      %4573 = vmatprep.mubr.f32.mxu0 %v3860
      %4574 = vmatmul.mubr.f32.gmra.mxu0 %v3859
      %v4575 = vpop.f32.mrf.mxu0
      %v4576 = vadd.f32 %v4351, %v4575
      %v4577 = vpop.f32.mrf.mxu0
      %4578 = vmatprep.mubr.f32.mxu0 %v3869
      %4579 = vmatmul.mubr.f32.gmra.mxu0 %v3868
      %v4580 = vpop.f32.mrf.mxu0
      %v4581 = vadd.f32 %v4356, %v4580
      %v4582 = vpop.f32.mrf.mxu0
      %4583 = vmatprep.mubr.f32.mxu0 %v3878
      %4584 = vmatmul.mubr.f32.gmra.mxu0 %v3877
      %v4585 = vpop.f32.mrf.mxu0
      %v4586 = vadd.f32 %v4361, %v4585
      %v4587 = vpop.f32.mrf.mxu0
      %4588 = vmatprep.mubr.f32.mxu0 %v3887
      %4589 = vmatmul.mubr.f32.gmra.mxu0 %v3886
      %v4590 = vpop.f32.mrf.mxu0
      %v4591 = vadd.f32 %v4366, %v4590
      %v4592 = vpop.f32.mrf.mxu0
      %4593 = vmatprep.mubr.f32.mxu0 %v3896
      %4594 = vmatmul.mubr.f32.gmra.mxu0 %v3895
      %v4595 = vpop.f32.mrf.mxu0
      %v4596 = vadd.f32 %v4371, %v4595
      %v4597 = vpop.f32.mrf.mxu0
      %4598 = vmatprep.mubr.f32.mxu0 %v3905
      %4599 = vmatmul.mubr.f32.gmra.mxu0 %v3904
      %v4600 = vpop.f32.mrf.mxu0
      %v4601 = vadd.f32 %v4376, %v4600
      %v4602 = vpop.f32.mrf.mxu0
      %4603 = vmatprep.mubr.f32.mxu0 %v3914
      %4604 = vmatmul.mubr.f32.gmra.mxu0 %v3913
      %v4605 = vpop.f32.mrf.mxu0
      %v4606 = vadd.f32 %v4381, %v4605
      %v4607 = vpop.f32.mrf.mxu0
      %4608 = vmatprep.mubr.f32.mxu0 %v3923
      %4609 = vmatmul.mubr.f32.gmra.mxu0 %v3922
      %v4610 = vpop.f32.mrf.mxu0
      %v4611 = vadd.f32 %v4386, %v4610
      %v4612 = vpop.f32.mrf.mxu0
      %4613 = vmatprep.mubr.f32.mxu0 %v3932
      %4614 = vmatmul.mubr.f32.gmra.mxu0 %v3931
      %v4615 = vpop.f32.mrf.mxu0
      %v4616 = vadd.f32 %v4391, %v4615
      %v4617 = vpop.f32.mrf.mxu0
      %4618 = vmatprep.mubr.f32.mxu0 %v3941
      %4619 = vmatmul.mubr.f32.gmra.mxu0 %v3940
      %v4620 = vpop.f32.mrf.mxu0
      %v4621 = vadd.f32 %v4396, %v4620
      %v4622 = vpop.f32.mrf.mxu0
      %4623 = vmatprep.mubr.f32.mxu0 %v3950
      %4624 = vmatmul.mubr.f32.gmra.mxu0 %v3949
      %v4625 = vpop.f32.mrf.mxu0
      %v4626 = vadd.f32 %v4401, %v4625
      %v4627 = vpop.f32.mrf.mxu0
      %4628 = vmatprep.mubr.f32.mxu0 %v3959
      %4629 = vmatmul.mubr.f32.gmra.mxu0 %v3958
      %v4630 = vpop.f32.mrf.mxu0
      %v4631 = vadd.f32 %v4406, %v4630
      %v4632 = vpop.f32.mrf.mxu0
      %4633 = vmatprep.mubr.f32.mxu0 %v3968
      %4634 = vmatmul.mubr.f32.gmra.mxu0 %v3967
      %v4635 = vpop.f32.mrf.mxu0
      %v4636 = vadd.f32 %v4411, %v4635
      %v4637 = vpop.f32.mrf.mxu0
      %4638 = vmatprep.mubr.f32.mxu0 %v3977
      %4639 = vmatmul.mubr.f32.gmra.mxu0 %v3976
      %v4640 = vpop.f32.mrf.mxu0
      %v4641 = vadd.f32 %v4416, %v4640
      %v4642 = vpop.f32.mrf.mxu0
      %4643 = vmatprep.mubr.f32.mxu0 %v3986
      %4644 = vmatmul.mubr.f32.gmra.mxu0 %v3985
      %v4645 = vpop.f32.mrf.mxu0
      %v4646 = vadd.f32 %v4421, %v4645
      %v4647 = vpop.f32.mrf.mxu0
      %4648 = vmatprep.mubr.f32.mxu0 %v3995
      %4649 = vmatmul.mubr.f32.gmra.mxu0 %v3994
      %v4650 = vpop.f32.mrf.mxu0
      %v4651 = vadd.f32 %v4426, %v4650
      %v4652 = vpop.f32.mrf.mxu0
      %4653 = vmatprep.mubr.f32.mxu0 %v4004
      %4654 = vmatmul.mubr.f32.gmra.mxu0 %v4003
      %v4655 = vpop.f32.mrf.mxu0
      %v4656 = vadd.f32 %v4431, %v4655
      %v4657 = vpop.f32.mrf.mxu0
      %4658 = vmatprep.mubr.f32.mxu0 %v4013
      %4659 = vmatmul.mubr.f32.gmra.mxu0 %v4012
      %v4660 = vpop.f32.mrf.mxu0
      %v4661 = vadd.f32 %v4436, %v4660
      %v4662 = vpop.f32.mrf.mxu0
      %4663 = vmatprep.mubr.f32.mxu0 %v4022
      %4664 = vmatmul.mubr.f32.gmra.mxu0 %v4021
      %v4665 = vpop.f32.mrf.mxu0
      %v4666 = vadd.f32 %v4441, %v4665
      %v4667 = vpop.f32.mrf.mxu0
      %4668 = vmatprep.mubr.f32.mxu0 %v4031
      %4669 = vmatmul.mubr.f32.gmra.mxu0 %v4030
      %v4670 = vpop.f32.mrf.mxu0
      %v4671 = vadd.f32 %v4446, %v4670
      %v4672 = vpop.f32.mrf.mxu0
      %4673 = vmatprep.mubr.f32.mxu0 %v4040
      %4674 = vmatmul.mubr.f32.gmra.mxu0 %v4039
      %v4675 = vpop.f32.mrf.mxu0
      %v4676 = vadd.f32 %v4451, %v4675
      %v4677 = vpop.f32.mrf.mxu0
      %4678 = vmatprep.mubr.f32.mxu0 %v4049
      %4679 = vmatmul.mubr.f32.gmra.mxu0 %v4048
      %v4680 = vpop.f32.mrf.mxu0
      %v4681 = vadd.f32 %v4456, %v4680
      %v4682 = vpop.f32.mrf.mxu0
      %4683 = vmatprep.mubr.f32.mxu0 %v4058
      %4684 = vmatmul.mubr.f32.gmra.mxu0 %v4057
      %v4685 = vpop.f32.mrf.mxu0
      %v4686 = vadd.f32 %v4461, %v4685
      %v4687 = vpop.f32.mrf.mxu0
      %4688 = vmatprep.mubr.f32.mxu0 %v4067
      %4689 = vmatmul.mubr.f32.gmra.mxu0 %v4066
      %v4690 = vpop.f32.mrf.mxu0
      %v4691 = vadd.f32 %v4466, %v4690
      %v4692 = vpop.f32.mrf.mxu0
      %4693 = vmatprep.mubr.f32.mxu0 %v4076
      %4694 = vmatmul.mubr.f32.gmra.mxu0 %v4075
      %v4695 = vpop.f32.mrf.mxu0
      %v4696 = vadd.f32 %v4471, %v4695
      %v4697 = vpop.f32.mrf.mxu0
      %4698 = vmatprep.mubr.f32.mxu0 %v4085
      %4699 = vmatmul.mubr.f32.gmra.mxu0 %v4084
      %v4700 = vpop.f32.mrf.mxu0
      %v4701 = vadd.f32 %v4476, %v4700
      %v4702 = vpop.f32.mrf.mxu0
      %4703 = vmatprep.mubr.f32.mxu0 %v4094
      %4704 = vmatmul.mubr.f32.gmra.mxu0 %v4093
      %v4705 = vpop.f32.mrf.mxu0
      %v4706 = vadd.f32 %v4481, %v4705
      %v4707 = vpop.f32.mrf.mxu0
      %4708 = vmatprep.mubr.f32.mxu0 %v4103
      %4709 = vmatmul.mubr.f32.gmra.mxu0 %v4102
      %v4710 = vpop.f32.mrf.mxu0
      %v4711 = vadd.f32 %v4486, %v4710
      %v4712 = vpop.f32.mrf.mxu0
      %4713 = vmatprep.mubr.f32.mxu0 %v4112
      %4714 = vmatmul.mubr.f32.gmra.mxu0 %v4111
      %v4715 = vpop.f32.mrf.mxu0
      %v4716 = vadd.f32 %v4491, %v4715
      %v4717 = vpop.f32.mrf.mxu0
      %4718 = vdwg.mxu0
      %4719 = vmatprep.subr.mxu0 0.0
      %4720 = vmatpush1.msra.mxu0 %v4197
      %4721 = vmatprep.subr.mxu0 0.0
      %4722 = vmatpush1.msra.mxu0 %v4196
      %4723 = vmatprep.subr.mxu0 0.0
      %4724 = vmatpush1.msra.mxu0 %v4195
      %4725 = vmatprep.subr.mxu0 0.0
      %4726 = vmatpush1.msra.mxu0 %v4194
      %4727 = vmatprep.subr.mxu0 0.0
      %4728 = vmatpush1.msra.mxu0 %v4193
      %4729 = vmatprep.subr.mxu0 0.0
      %4730 = vmatpush1.msra.mxu0 %v4192
      %4731 = vmatprep.subr.mxu0 0.0
      %4732 = vmatpush1.msra.mxu0 %v4191
      %4733 = vmatprep.subr.mxu0 0.0
      %4734 = vmatpush1.msra.mxu0 %v4190
      %4735 = vmatprep.subr.mxu0 0.0
      %4736 = vmatpush1.msra.mxu0 %v4189
      %4737 = vmatprep.subr.mxu0 0.0
      %4738 = vmatpush1.msra.mxu0 %v4188
      %4739 = vmatprep.subr.mxu0 0.0
      %4740 = vmatpush1.msra.mxu0 %v4187
      %4741 = vmatprep.subr.mxu0 0.0
      %4742 = vmatpush1.msra.mxu0 %v4186
      %4743 = vmatprep.subr.mxu0 0.0
      %4744 = vmatpush1.msra.mxu0 %v4185
      %4745 = vmatprep.subr.mxu0 0.0
      %4746 = vmatpush1.msra.mxu0 %v4184
      %4747 = vmatprep.subr.mxu0 0.0
      %4748 = vmatpush1.msra.mxu0 %v4183
      %4749 = vmatprep.subr.mxu0 0.0
      %4750 = vmatpush1.msra.mxu0 %v4182
      %4751 = vmatprep.subr.mxu0 0.0
      %4752 = vmatpush2.msra.mxu0 %v4213
      %4753 = vmatprep.subr.mxu0 0.0
      %4754 = vmatpush2.msra.mxu0 %v4212
      %4755 = vmatprep.subr.mxu0 0.0
      %4756 = vmatpush2.msra.mxu0 %v4211
      %4757 = vmatprep.subr.mxu0 0.0
      %4758 = vmatpush2.msra.mxu0 %v4210
      %4759 = vmatprep.subr.mxu0 0.0
      %4760 = vmatpush2.msra.mxu0 %v4209
      %4761 = vmatprep.subr.mxu0 0.0
      %4762 = vmatpush2.msra.mxu0 %v4208
      %4763 = vmatprep.subr.mxu0 0.0
      %4764 = vmatpush2.msra.mxu0 %v4207
      %4765 = vmatprep.subr.mxu0 0.0
      %4766 = vmatpush2.msra.mxu0 %v4206
      %4767 = vmatprep.subr.mxu0 0.0
      %4768 = vmatpush2.msra.mxu0 %v4205
      %4769 = vmatprep.subr.mxu0 0.0
      %4770 = vmatpush2.msra.mxu0 %v4204
      %4771 = vmatprep.subr.mxu0 0.0
      %4772 = vmatpush2.msra.mxu0 %v4203
      %4773 = vmatprep.subr.mxu0 0.0
      %4774 = vmatpush2.msra.mxu0 %v4202
      %4775 = vmatprep.subr.mxu0 0.0
      %4776 = vmatpush2.msra.mxu0 %v4201
      %4777 = vmatprep.subr.mxu0 0.0
      %4778 = vmatpush2.msra.mxu0 %v4200
      %4779 = vmatprep.subr.mxu0 0.0
      %4780 = vmatpush2.msra.mxu0 %v4199
      %4781 = vmatprep.subr.mxu0 0.0
      %4782 = vmatpush2.msra.mxu0 %v4198
      %4783 = vmatprep.mubr.f32.mxu0 %v3835
      %4784 = vmatmul.mubr.f32.gmra.mxu0 %v3834
      %v4785 = vpop.f32.mrf.mxu0
      %v4786 = vadd.f32 %v4561, %v4785
      %v4787 = vpop.f32.mrf.mxu0
      %4788 = vmatprep.mubr.f32.mxu0 %v3844
      %4789 = vmatmul.mubr.f32.gmra.mxu0 %v3843
      %v4790 = vpop.f32.mrf.mxu0
      %v4791 = vadd.f32 %v4566, %v4790
      %v4792 = vpop.f32.mrf.mxu0
      %4793 = vmatprep.mubr.f32.mxu0 %v3853
      %4794 = vmatmul.mubr.f32.gmra.mxu0 %v3852
      %v4795 = vpop.f32.mrf.mxu0
      %v4796 = vadd.f32 %v4571, %v4795
      %v4797 = vpop.f32.mrf.mxu0
      %4798 = vmatprep.mubr.f32.mxu0 %v3862
      %4799 = vmatmul.mubr.f32.gmra.mxu0 %v3861
      %v4800 = vpop.f32.mrf.mxu0
      %v4801 = vadd.f32 %v4576, %v4800
      %v4802 = vpop.f32.mrf.mxu0
      %4803 = vmatprep.mubr.f32.mxu0 %v3871
      %4804 = vmatmul.mubr.f32.gmra.mxu0 %v3870
      %v4805 = vpop.f32.mrf.mxu0
      %v4806 = vadd.f32 %v4581, %v4805
      %v4807 = vpop.f32.mrf.mxu0
      %4808 = vmatprep.mubr.f32.mxu0 %v3880
      %4809 = vmatmul.mubr.f32.gmra.mxu0 %v3879
      %v4810 = vpop.f32.mrf.mxu0
      %v4811 = vadd.f32 %v4586, %v4810
      %v4812 = vpop.f32.mrf.mxu0
      %4813 = vmatprep.mubr.f32.mxu0 %v3889
      %4814 = vmatmul.mubr.f32.gmra.mxu0 %v3888
      %v4815 = vpop.f32.mrf.mxu0
      %v4816 = vadd.f32 %v4591, %v4815
      %v4817 = vpop.f32.mrf.mxu0
      %4818 = vmatprep.mubr.f32.mxu0 %v3898
      %4819 = vmatmul.mubr.f32.gmra.mxu0 %v3897
      %v4820 = vpop.f32.mrf.mxu0
      %v4821 = vadd.f32 %v4596, %v4820
      %v4822 = vpop.f32.mrf.mxu0
      %4823 = vmatprep.mubr.f32.mxu0 %v3907
      %4824 = vmatmul.mubr.f32.gmra.mxu0 %v3906
      %v4825 = vpop.f32.mrf.mxu0
      %v4826 = vadd.f32 %v4601, %v4825
      %v4827 = vpop.f32.mrf.mxu0
      %4828 = vmatprep.mubr.f32.mxu0 %v3916
      %4829 = vmatmul.mubr.f32.gmra.mxu0 %v3915
      %v4830 = vpop.f32.mrf.mxu0
      %v4831 = vadd.f32 %v4606, %v4830
      %v4832 = vpop.f32.mrf.mxu0
      %4833 = vmatprep.mubr.f32.mxu0 %v3925
      %4834 = vmatmul.mubr.f32.gmra.mxu0 %v3924
      %v4835 = vpop.f32.mrf.mxu0
      %v4836 = vadd.f32 %v4611, %v4835
      %v4837 = vpop.f32.mrf.mxu0
      %4838 = vmatprep.mubr.f32.mxu0 %v3934
      %4839 = vmatmul.mubr.f32.gmra.mxu0 %v3933
      %v4840 = vpop.f32.mrf.mxu0
      %v4841 = vadd.f32 %v4616, %v4840
      %v4842 = vpop.f32.mrf.mxu0
      %4843 = vmatprep.mubr.f32.mxu0 %v3943
      %4844 = vmatmul.mubr.f32.gmra.mxu0 %v3942
      %v4845 = vpop.f32.mrf.mxu0
      %v4846 = vadd.f32 %v4621, %v4845
      %v4847 = vpop.f32.mrf.mxu0
      %4848 = vmatprep.mubr.f32.mxu0 %v3952
      %4849 = vmatmul.mubr.f32.gmra.mxu0 %v3951
      %v4850 = vpop.f32.mrf.mxu0
      %v4851 = vadd.f32 %v4626, %v4850
      %v4852 = vpop.f32.mrf.mxu0
      %4853 = vmatprep.mubr.f32.mxu0 %v3961
      %4854 = vmatmul.mubr.f32.gmra.mxu0 %v3960
      %v4855 = vpop.f32.mrf.mxu0
      %v4856 = vadd.f32 %v4631, %v4855
      %v4857 = vpop.f32.mrf.mxu0
      %4858 = vmatprep.mubr.f32.mxu0 %v3970
      %4859 = vmatmul.mubr.f32.gmra.mxu0 %v3969
      %v4860 = vpop.f32.mrf.mxu0
      %v4861 = vadd.f32 %v4636, %v4860
      %v4862 = vpop.f32.mrf.mxu0
      %4863 = vmatprep.mubr.f32.mxu0 %v3979
      %4864 = vmatmul.mubr.f32.gmra.mxu0 %v3978
      %v4865 = vpop.f32.mrf.mxu0
      %v4866 = vadd.f32 %v4641, %v4865
      %v4867 = vpop.f32.mrf.mxu0
      %4868 = vmatprep.mubr.f32.mxu0 %v3988
      %4869 = vmatmul.mubr.f32.gmra.mxu0 %v3987
      %v4870 = vpop.f32.mrf.mxu0
      %v4871 = vadd.f32 %v4646, %v4870
      %v4872 = vpop.f32.mrf.mxu0
      %4873 = vmatprep.mubr.f32.mxu0 %v3997
      %4874 = vmatmul.mubr.f32.gmra.mxu0 %v3996
      %v4875 = vpop.f32.mrf.mxu0
      %v4876 = vadd.f32 %v4651, %v4875
      %v4877 = vpop.f32.mrf.mxu0
      %4878 = vmatprep.mubr.f32.mxu0 %v4006
      %4879 = vmatmul.mubr.f32.gmra.mxu0 %v4005
      %v4880 = vpop.f32.mrf.mxu0
      %v4881 = vadd.f32 %v4656, %v4880
      %v4882 = vpop.f32.mrf.mxu0
      %4883 = vmatprep.mubr.f32.mxu0 %v4015
      %4884 = vmatmul.mubr.f32.gmra.mxu0 %v4014
      %v4885 = vpop.f32.mrf.mxu0
      %v4886 = vadd.f32 %v4661, %v4885
      %v4887 = vpop.f32.mrf.mxu0
      %4888 = vmatprep.mubr.f32.mxu0 %v4024
      %4889 = vmatmul.mubr.f32.gmra.mxu0 %v4023
      %v4890 = vpop.f32.mrf.mxu0
      %v4891 = vadd.f32 %v4666, %v4890
      %v4892 = vpop.f32.mrf.mxu0
      %4893 = vmatprep.mubr.f32.mxu0 %v4033
      %4894 = vmatmul.mubr.f32.gmra.mxu0 %v4032
      %v4895 = vpop.f32.mrf.mxu0
      %v4896 = vadd.f32 %v4671, %v4895
      %v4897 = vpop.f32.mrf.mxu0
      %4898 = vmatprep.mubr.f32.mxu0 %v4042
      %4899 = vmatmul.mubr.f32.gmra.mxu0 %v4041
      %v4900 = vpop.f32.mrf.mxu0
      %v4901 = vadd.f32 %v4676, %v4900
      %v4902 = vpop.f32.mrf.mxu0
      %4903 = vmatprep.mubr.f32.mxu0 %v4051
      %4904 = vmatmul.mubr.f32.gmra.mxu0 %v4050
      %v4905 = vpop.f32.mrf.mxu0
      %v4906 = vadd.f32 %v4681, %v4905
      %v4907 = vpop.f32.mrf.mxu0
      %4908 = vmatprep.mubr.f32.mxu0 %v4060
      %4909 = vmatmul.mubr.f32.gmra.mxu0 %v4059
      %v4910 = vpop.f32.mrf.mxu0
      %v4911 = vadd.f32 %v4686, %v4910
      %v4912 = vpop.f32.mrf.mxu0
      %4913 = vmatprep.mubr.f32.mxu0 %v4069
      %4914 = vmatmul.mubr.f32.gmra.mxu0 %v4068
      %v4915 = vpop.f32.mrf.mxu0
      %v4916 = vadd.f32 %v4691, %v4915
      %v4917 = vpop.f32.mrf.mxu0
      %4918 = vmatprep.mubr.f32.mxu0 %v4078
      %4919 = vmatmul.mubr.f32.gmra.mxu0 %v4077
      %v4920 = vpop.f32.mrf.mxu0
      %v4921 = vadd.f32 %v4696, %v4920
      %v4922 = vpop.f32.mrf.mxu0
      %4923 = vmatprep.mubr.f32.mxu0 %v4087
      %4924 = vmatmul.mubr.f32.gmra.mxu0 %v4086
      %v4925 = vpop.f32.mrf.mxu0
      %v4926 = vadd.f32 %v4701, %v4925
      %v4927 = vpop.f32.mrf.mxu0
      %4928 = vmatprep.mubr.f32.mxu0 %v4096
      %4929 = vmatmul.mubr.f32.gmra.mxu0 %v4095
      %v4930 = vpop.f32.mrf.mxu0
      %v4931 = vadd.f32 %v4706, %v4930
      %v4932 = vpop.f32.mrf.mxu0
      %4933 = vmatprep.mubr.f32.mxu0 %v4105
      %4934 = vmatmul.mubr.f32.gmra.mxu0 %v4104
      %v4935 = vpop.f32.mrf.mxu0
      %v4936 = vadd.f32 %v4711, %v4935
      %v4937 = vpop.f32.mrf.mxu0
      %4938 = vmatprep.mubr.f32.mxu0 %v4114
      %4939 = vmatmul.mubr.f32.gmra.mxu0 %v4113
      %v4940 = vpop.f32.mrf.mxu0
      %v4941 = vadd.f32 %v4716, %v4940
      %v4942 = vpop.f32.mrf.mxu0
      %4943 = vdwg.mxu0
      %4944 = vmatprep.subr.mxu0 0.0
      %4945 = vmatpush1.msra.mxu0 %v4229
      %4946 = vmatprep.subr.mxu0 0.0
      %4947 = vmatpush1.msra.mxu0 %v4228
      %4948 = vmatprep.subr.mxu0 0.0
      %4949 = vmatpush1.msra.mxu0 %v4227
      %4950 = vmatprep.subr.mxu0 0.0
      %4951 = vmatpush1.msra.mxu0 %v4226
      %4952 = vmatprep.subr.mxu0 0.0
      %4953 = vmatpush1.msra.mxu0 %v4225
      %4954 = vmatprep.subr.mxu0 0.0
      %4955 = vmatpush1.msra.mxu0 %v4224
      %4956 = vmatprep.subr.mxu0 0.0
      %4957 = vmatpush1.msra.mxu0 %v4223
      %4958 = vmatprep.subr.mxu0 0.0
      %4959 = vmatpush1.msra.mxu0 %v4222
      %4960 = vmatprep.subr.mxu0 0.0
      %4961 = vmatpush1.msra.mxu0 %v4221
      %4962 = vmatprep.subr.mxu0 0.0
      %4963 = vmatpush1.msra.mxu0 %v4220
      %4964 = vmatprep.subr.mxu0 0.0
      %4965 = vmatpush1.msra.mxu0 %v4219
      %4966 = vmatprep.subr.mxu0 0.0
      %4967 = vmatpush1.msra.mxu0 %v4218
      %4968 = vmatprep.subr.mxu0 0.0
      %4969 = vmatpush1.msra.mxu0 %v4217
      %4970 = vmatprep.subr.mxu0 0.0
      %4971 = vmatpush1.msra.mxu0 %v4216
      %4972 = vmatprep.subr.mxu0 0.0
      %4973 = vmatpush1.msra.mxu0 %v4215
      %4974 = vmatprep.subr.mxu0 0.0
      %4975 = vmatpush1.msra.mxu0 %v4214
      %4976 = vmatprep.subr.mxu0 0.0
      %4977 = vmatpush2.msra.mxu0 %v4245
      %4978 = vmatprep.subr.mxu0 0.0
      %4979 = vmatpush2.msra.mxu0 %v4244
      %4980 = vmatprep.subr.mxu0 0.0
      %4981 = vmatpush2.msra.mxu0 %v4243
      %4982 = vmatprep.subr.mxu0 0.0
      %4983 = vmatpush2.msra.mxu0 %v4242
      %4984 = vmatprep.subr.mxu0 0.0
      %4985 = vmatpush2.msra.mxu0 %v4241
      %4986 = vmatprep.subr.mxu0 0.0
      %4987 = vmatpush2.msra.mxu0 %v4240
      %4988 = vmatprep.subr.mxu0 0.0
      %4989 = vmatpush2.msra.mxu0 %v4239
      %4990 = vmatprep.subr.mxu0 0.0
      %4991 = vmatpush2.msra.mxu0 %v4238
      %4992 = vmatprep.subr.mxu0 0.0
      %4993 = vmatpush2.msra.mxu0 %v4237
      %4994 = vmatprep.subr.mxu0 0.0
      %4995 = vmatpush2.msra.mxu0 %v4236
      %4996 = vmatprep.subr.mxu0 0.0
      %4997 = vmatpush2.msra.mxu0 %v4235
      %4998 = vmatprep.subr.mxu0 0.0
      %4999 = vmatpush2.msra.mxu0 %v4234
      %5000 = vmatprep.subr.mxu0 0.0
      %5001 = vmatpush2.msra.mxu0 %v4233
      %5002 = vmatprep.subr.mxu0 0.0
      %5003 = vmatpush2.msra.mxu0 %v4232
      %5004 = vmatprep.subr.mxu0 0.0
      %5005 = vmatpush2.msra.mxu0 %v4231
      %5006 = vmatprep.subr.mxu0 0.0
      %5007 = vmatpush2.msra.mxu0 %v4230
      %5008 = vmatprep.mubr.f32.mxu0 %v3837
      %5009 = vmatmul.mubr.f32.gmra.mxu0 %v3836
      %v5010 = vpop.f32.mrf.mxu0
      %v5011 = vadd.f32 %v4786, %v5010
      %v5012 = vpop.f32.mrf.mxu0
      %5013 = vmatprep.mubr.f32.mxu0 %v3846
      %5014 = vmatmul.mubr.f32.gmra.mxu0 %v3845
      %v5015 = vpop.f32.mrf.mxu0
      %v5016 = vadd.f32 %v4791, %v5015
      %v5017 = vpop.f32.mrf.mxu0
      %5018 = vmatprep.mubr.f32.mxu0 %v3855
      %5019 = vmatmul.mubr.f32.gmra.mxu0 %v3854
      %v5020 = vpop.f32.mrf.mxu0
      %v5021 = vadd.f32 %v4796, %v5020
      %v5022 = vpop.f32.mrf.mxu0
      %5023 = vmatprep.mubr.f32.mxu0 %v3864
      %5024 = vmatmul.mubr.f32.gmra.mxu0 %v3863
      %v5025 = vpop.f32.mrf.mxu0
      %v5026 = vadd.f32 %v4801, %v5025
      %v5027 = vpop.f32.mrf.mxu0
      %5028 = vmatprep.mubr.f32.mxu0 %v3873
      %5029 = vmatmul.mubr.f32.gmra.mxu0 %v3872
      %v5030 = vpop.f32.mrf.mxu0
      %v5031 = vadd.f32 %v4806, %v5030
      %v5032 = vpop.f32.mrf.mxu0
      %5033 = vmatprep.mubr.f32.mxu0 %v3882
      %5034 = vmatmul.mubr.f32.gmra.mxu0 %v3881
      %v5035 = vpop.f32.mrf.mxu0
      %v5036 = vadd.f32 %v4811, %v5035
      %v5037 = vpop.f32.mrf.mxu0
      %5038 = vmatprep.mubr.f32.mxu0 %v3891
      %5039 = vmatmul.mubr.f32.gmra.mxu0 %v3890
      %v5040 = vpop.f32.mrf.mxu0
      %v5041 = vadd.f32 %v4816, %v5040
      %v5042 = vpop.f32.mrf.mxu0
      %5043 = vmatprep.mubr.f32.mxu0 %v3900
      %5044 = vmatmul.mubr.f32.gmra.mxu0 %v3899
      %v5045 = vpop.f32.mrf.mxu0
      %v5046 = vadd.f32 %v4821, %v5045
      %v5047 = vpop.f32.mrf.mxu0
      %5048 = vmatprep.mubr.f32.mxu0 %v3909
      %5049 = vmatmul.mubr.f32.gmra.mxu0 %v3908
      %v5050 = vpop.f32.mrf.mxu0
      %v5051 = vadd.f32 %v4826, %v5050
      %v5052 = vpop.f32.mrf.mxu0
      %5053 = vmatprep.mubr.f32.mxu0 %v3918
      %5054 = vmatmul.mubr.f32.gmra.mxu0 %v3917
      %v5055 = vpop.f32.mrf.mxu0
      %v5056 = vadd.f32 %v4831, %v5055
      %v5057 = vpop.f32.mrf.mxu0
      %5058 = vmatprep.mubr.f32.mxu0 %v3927
      %5059 = vmatmul.mubr.f32.gmra.mxu0 %v3926
      %v5060 = vpop.f32.mrf.mxu0
      %v5061 = vadd.f32 %v4836, %v5060
      %v5062 = vpop.f32.mrf.mxu0
      %5063 = vmatprep.mubr.f32.mxu0 %v3936
      %5064 = vmatmul.mubr.f32.gmra.mxu0 %v3935
      %v5065 = vpop.f32.mrf.mxu0
      %v5066 = vadd.f32 %v4841, %v5065
      %v5067 = vpop.f32.mrf.mxu0
      %5068 = vmatprep.mubr.f32.mxu0 %v3945
      %5069 = vmatmul.mubr.f32.gmra.mxu0 %v3944
      %v5070 = vpop.f32.mrf.mxu0
      %v5071 = vadd.f32 %v4846, %v5070
      %v5072 = vpop.f32.mrf.mxu0
      %5073 = vmatprep.mubr.f32.mxu0 %v3954
      %5074 = vmatmul.mubr.f32.gmra.mxu0 %v3953
      %v5075 = vpop.f32.mrf.mxu0
      %v5076 = vadd.f32 %v4851, %v5075
      %v5077 = vpop.f32.mrf.mxu0
      %5078 = vmatprep.mubr.f32.mxu0 %v3963
      %5079 = vmatmul.mubr.f32.gmra.mxu0 %v3962
      %v5080 = vpop.f32.mrf.mxu0
      %v5081 = vadd.f32 %v4856, %v5080
      %v5082 = vpop.f32.mrf.mxu0
      %5083 = vmatprep.mubr.f32.mxu0 %v3972
      %5084 = vmatmul.mubr.f32.gmra.mxu0 %v3971
      %v5085 = vpop.f32.mrf.mxu0
      %v5086 = vadd.f32 %v4861, %v5085
      %v5087 = vpop.f32.mrf.mxu0
      %5088 = vmatprep.mubr.f32.mxu0 %v3981
      %5089 = vmatmul.mubr.f32.gmra.mxu0 %v3980
      %v5090 = vpop.f32.mrf.mxu0
      %v5091 = vadd.f32 %v4866, %v5090
      %v5092 = vpop.f32.mrf.mxu0
      %5093 = vmatprep.mubr.f32.mxu0 %v3990
      %5094 = vmatmul.mubr.f32.gmra.mxu0 %v3989
      %v5095 = vpop.f32.mrf.mxu0
      %v5096 = vadd.f32 %v4871, %v5095
      %v5097 = vpop.f32.mrf.mxu0
      %5098 = vmatprep.mubr.f32.mxu0 %v3999
      %5099 = vmatmul.mubr.f32.gmra.mxu0 %v3998
      %v5100 = vpop.f32.mrf.mxu0
      %v5101 = vadd.f32 %v4876, %v5100
      %v5102 = vpop.f32.mrf.mxu0
      %5103 = vmatprep.mubr.f32.mxu0 %v4008
      %5104 = vmatmul.mubr.f32.gmra.mxu0 %v4007
      %v5105 = vpop.f32.mrf.mxu0
      %v5106 = vadd.f32 %v4881, %v5105
      %v5107 = vpop.f32.mrf.mxu0
      %5108 = vmatprep.mubr.f32.mxu0 %v4017
      %5109 = vmatmul.mubr.f32.gmra.mxu0 %v4016
      %v5110 = vpop.f32.mrf.mxu0
      %v5111 = vadd.f32 %v4886, %v5110
      %v5112 = vpop.f32.mrf.mxu0
      %5113 = vmatprep.mubr.f32.mxu0 %v4026
      %5114 = vmatmul.mubr.f32.gmra.mxu0 %v4025
      %v5115 = vpop.f32.mrf.mxu0
      %v5116 = vadd.f32 %v4891, %v5115
      %v5117 = vpop.f32.mrf.mxu0
      %5118 = vmatprep.mubr.f32.mxu0 %v4035
      %5119 = vmatmul.mubr.f32.gmra.mxu0 %v4034
      %v5120 = vpop.f32.mrf.mxu0
      %v5121 = vadd.f32 %v4896, %v5120
      %v5122 = vpop.f32.mrf.mxu0
      %5123 = vmatprep.mubr.f32.mxu0 %v4044
      %5124 = vmatmul.mubr.f32.gmra.mxu0 %v4043
      %v5125 = vpop.f32.mrf.mxu0
      %v5126 = vadd.f32 %v4901, %v5125
      %v5127 = vpop.f32.mrf.mxu0
      %5128 = vmatprep.mubr.f32.mxu0 %v4053
      %5129 = vmatmul.mubr.f32.gmra.mxu0 %v4052
      %v5130 = vpop.f32.mrf.mxu0
      %v5131 = vadd.f32 %v4906, %v5130
      %v5132 = vpop.f32.mrf.mxu0
      %5133 = vmatprep.mubr.f32.mxu0 %v4062
      %5134 = vmatmul.mubr.f32.gmra.mxu0 %v4061
      %v5135 = vpop.f32.mrf.mxu0
      %v5136 = vadd.f32 %v4911, %v5135
      %v5137 = vpop.f32.mrf.mxu0
      %5138 = vmatprep.mubr.f32.mxu0 %v4071
      %5139 = vmatmul.mubr.f32.gmra.mxu0 %v4070
      %v5140 = vpop.f32.mrf.mxu0
      %v5141 = vadd.f32 %v4916, %v5140
      %v5142 = vpop.f32.mrf.mxu0
      %5143 = vmatprep.mubr.f32.mxu0 %v4080
      %5144 = vmatmul.mubr.f32.gmra.mxu0 %v4079
      %v5145 = vpop.f32.mrf.mxu0
      %v5146 = vadd.f32 %v4921, %v5145
      %v5147 = vpop.f32.mrf.mxu0
      %5148 = vmatprep.mubr.f32.mxu0 %v4089
      %5149 = vmatmul.mubr.f32.gmra.mxu0 %v4088
      %v5150 = vpop.f32.mrf.mxu0
      %v5151 = vadd.f32 %v4926, %v5150
      %v5152 = vpop.f32.mrf.mxu0
      %5153 = vmatprep.mubr.f32.mxu0 %v4098
      %5154 = vmatmul.mubr.f32.gmra.mxu0 %v4097
      %v5155 = vpop.f32.mrf.mxu0
      %v5156 = vadd.f32 %v4931, %v5155
      %v5157 = vpop.f32.mrf.mxu0
      %5158 = vmatprep.mubr.f32.mxu0 %v4107
      %5159 = vmatmul.mubr.f32.gmra.mxu0 %v4106
      %v5160 = vpop.f32.mrf.mxu0
      %v5161 = vadd.f32 %v4936, %v5160
      %v5162 = vpop.f32.mrf.mxu0
      %5163 = vmatprep.mubr.f32.mxu0 %v4116
      %5164 = vmatmul.mubr.f32.gmra.mxu0 %v4115
      %v5165 = vpop.f32.mrf.mxu0
      %v5166 = vadd.f32 %v4941, %v5165
      %v5167 = vpop.f32.mrf.mxu0
      %5168 = vdwg.mxu0
      %5169 = vmatprep.subr.mxu0 0.0
      %5170 = vmatpush1.msra.mxu0 %v4261
      %5171 = vmatprep.subr.mxu0 0.0
      %5172 = vmatpush1.msra.mxu0 %v4260
      %5173 = vmatprep.subr.mxu0 0.0
      %5174 = vmatpush1.msra.mxu0 %v4259
      %5175 = vmatprep.subr.mxu0 0.0
      %5176 = vmatpush1.msra.mxu0 %v4258
      %5177 = vmatprep.subr.mxu0 0.0
      %5178 = vmatpush1.msra.mxu0 %v4257
      %5179 = vmatprep.subr.mxu0 0.0
      %5180 = vmatpush1.msra.mxu0 %v4256
      %5181 = vmatprep.subr.mxu0 0.0
      %5182 = vmatpush1.msra.mxu0 %v4255
      %5183 = vmatprep.subr.mxu0 0.0
      %5184 = vmatpush1.msra.mxu0 %v4254
      %5185 = vmatprep.subr.mxu0 0.0
      %5186 = vmatpush1.msra.mxu0 %v4253
      %5187 = vmatprep.subr.mxu0 0.0
      %5188 = vmatpush1.msra.mxu0 %v4252
      %5189 = vmatprep.subr.mxu0 0.0
      %5190 = vmatpush1.msra.mxu0 %v4251
      %5191 = vmatprep.subr.mxu0 0.0
      %5192 = vmatpush1.msra.mxu0 %v4250
      %5193 = vmatprep.subr.mxu0 0.0
      %5194 = vmatpush1.msra.mxu0 %v4249
      %5195 = vmatprep.subr.mxu0 0.0
      %5196 = vmatpush1.msra.mxu0 %v4248
      %5197 = vmatprep.subr.mxu0 0.0
      %5198 = vmatpush1.msra.mxu0 %v4247
      %5199 = vmatprep.subr.mxu0 0.0
      %5200 = vmatpush1.msra.mxu0 %v4246
      %5201 = vmatprep.subr.mxu0 0.0
      %5202 = vmatpush2.msra.mxu0 0.0
      %5203 = vmatprep.subr.mxu0 0.0
      %5204 = vmatpush2.msra.mxu0 0.0
      %5205 = vmatprep.subr.mxu0 0.0
      %5206 = vmatpush2.msra.mxu0 0.0
      %5207 = vmatprep.subr.mxu0 0.0
      %5208 = vmatpush2.msra.mxu0 0.0
      %5209 = vmatprep.subr.mxu0 0.0
      %5210 = vmatpush2.msra.mxu0 0.0
      %5211 = vmatprep.subr.mxu0 0.0
      %5212 = vmatpush2.msra.mxu0 0.0
      %5213 = vmatprep.subr.mxu0 0.0
      %5214 = vmatpush2.msra.mxu0 0.0
      %5215 = vmatprep.subr.mxu0 0.0
      %5216 = vmatpush2.msra.mxu0 0.0
      %5217 = vmatprep.subr.mxu0 0.0
      %5218 = vmatpush2.msra.mxu0 0.0
      %5219 = vmatprep.subr.mxu0 0.0
      %5220 = vmatpush2.msra.mxu0 0.0
      %5221 = vmatprep.subr.mxu0 0.0
      %5222 = vmatpush2.msra.mxu0 0.0
      %5223 = vmatprep.subr.mxu0 0.0
      %5224 = vmatpush2.msra.mxu0 0.0
      %5225 = vmatprep.subr.mxu0 0.0
      %5226 = vmatpush2.msra.mxu0 0.0
      %5227 = vmatprep.subr.mxu0 0.0
      %5228 = vmatpush2.msra.mxu0 0.0
      %5229 = vmatprep.subr.mxu0 0.0
      %5230 = vmatpush2.msra.mxu0 0.0
      %5231 = vmatprep.subr.mxu0 0.0
      %5232 = vmatpush2.msra.mxu0 0.0
      %5233 = vmatprep.mubr.f32.mxu0 0.0
      %5234 = vmatmul.mubr.f32.gmra.mxu0 %v3838
      %v5235 = vpop.f32.mrf.mxu0
      %v5236 = vadd.f32 %v5011, %v5235
      %v5237 = vpop.f32.mrf.mxu0
      %5238 = vmatprep.mubr.f32.mxu0 0.0
      %5239 = vmatmul.mubr.f32.gmra.mxu0 %v3847
      %v5240 = vpop.f32.mrf.mxu0
      %v5241 = vadd.f32 %v5016, %v5240
      %v5242 = vpop.f32.mrf.mxu0
      %5243 = vmatprep.mubr.f32.mxu0 0.0
      %5244 = vmatmul.mubr.f32.gmra.mxu0 %v3856
      %v5245 = vpop.f32.mrf.mxu0
      %v5246 = vadd.f32 %v5021, %v5245
      %v5247 = vpop.f32.mrf.mxu0
      %5248 = vmatprep.mubr.f32.mxu0 0.0
      %5249 = vmatmul.mubr.f32.gmra.mxu0 %v3865
      %v5250 = vpop.f32.mrf.mxu0
      %v5251 = vadd.f32 %v5026, %v5250
      %v5252 = vpop.f32.mrf.mxu0
      %5253 = vmatprep.mubr.f32.mxu0 0.0
      %5254 = vmatmul.mubr.f32.gmra.mxu0 %v3874
      %v5255 = vpop.f32.mrf.mxu0
      %v5256 = vadd.f32 %v5031, %v5255
      %v5257 = vpop.f32.mrf.mxu0
      %5258 = vmatprep.mubr.f32.mxu0 0.0
      %5259 = vmatmul.mubr.f32.gmra.mxu0 %v3883
      %v5260 = vpop.f32.mrf.mxu0
      %v5261 = vadd.f32 %v5036, %v5260
      %v5262 = vpop.f32.mrf.mxu0
      %5263 = vmatprep.mubr.f32.mxu0 0.0
      %5264 = vmatmul.mubr.f32.gmra.mxu0 %v3892
      %v5265 = vpop.f32.mrf.mxu0
      %v5266 = vadd.f32 %v5041, %v5265
      %v5267 = vpop.f32.mrf.mxu0
      %5268 = vmatprep.mubr.f32.mxu0 0.0
      %5269 = vmatmul.mubr.f32.gmra.mxu0 %v3901
      %v5270 = vpop.f32.mrf.mxu0
      %v5271 = vadd.f32 %v5046, %v5270
      %v5272 = vpop.f32.mrf.mxu0
      %5273 = vmatprep.mubr.f32.mxu0 0.0
      %5274 = vmatmul.mubr.f32.gmra.mxu0 %v3910
      %v5275 = vpop.f32.mrf.mxu0
      %v5276 = vadd.f32 %v5051, %v5275
      %v5277 = vpop.f32.mrf.mxu0
      %5278 = vmatprep.mubr.f32.mxu0 0.0
      %5279 = vmatmul.mubr.f32.gmra.mxu0 %v3919
      %v5280 = vpop.f32.mrf.mxu0
      %v5281 = vadd.f32 %v5056, %v5280
      %v5282 = vpop.f32.mrf.mxu0
      %5283 = vmatprep.mubr.f32.mxu0 0.0
      %5284 = vmatmul.mubr.f32.gmra.mxu0 %v3928
      %v5285 = vpop.f32.mrf.mxu0
      %v5286 = vadd.f32 %v5061, %v5285
      %v5287 = vpop.f32.mrf.mxu0
      %5288 = vmatprep.mubr.f32.mxu0 0.0
      %5289 = vmatmul.mubr.f32.gmra.mxu0 %v3937
      %v5290 = vpop.f32.mrf.mxu0
      %v5291 = vadd.f32 %v5066, %v5290
      %v5292 = vpop.f32.mrf.mxu0
      %5293 = vmatprep.mubr.f32.mxu0 0.0
      %5294 = vmatmul.mubr.f32.gmra.mxu0 %v3946
      %v5295 = vpop.f32.mrf.mxu0
      %v5296 = vadd.f32 %v5071, %v5295
      %v5297 = vpop.f32.mrf.mxu0
      %5298 = vmatprep.mubr.f32.mxu0 0.0
      %5299 = vmatmul.mubr.f32.gmra.mxu0 %v3955
      %v5300 = vpop.f32.mrf.mxu0
      %v5301 = vadd.f32 %v5076, %v5300
      %v5302 = vpop.f32.mrf.mxu0
      %5303 = vmatprep.mubr.f32.mxu0 0.0
      %5304 = vmatmul.mubr.f32.gmra.mxu0 %v3964
      %v5305 = vpop.f32.mrf.mxu0
      %v5306 = vadd.f32 %v5081, %v5305
      %v5307 = vpop.f32.mrf.mxu0
      %5308 = vmatprep.mubr.f32.mxu0 0.0
      %5309 = vmatmul.mubr.f32.gmra.mxu0 %v3973
      %v5310 = vpop.f32.mrf.mxu0
      %v5311 = vadd.f32 %v5086, %v5310
      %v5312 = vpop.f32.mrf.mxu0
      %5313 = vmatprep.mubr.f32.mxu0 0.0
      %5314 = vmatmul.mubr.f32.gmra.mxu0 %v3982
      %v5315 = vpop.f32.mrf.mxu0
      %v5316 = vadd.f32 %v5091, %v5315
      %v5317 = vpop.f32.mrf.mxu0
      %5318 = vmatprep.mubr.f32.mxu0 0.0
      %5319 = vmatmul.mubr.f32.gmra.mxu0 %v3991
      %v5320 = vpop.f32.mrf.mxu0
      %v5321 = vadd.f32 %v5096, %v5320
      %v5322 = vpop.f32.mrf.mxu0
      %5323 = vmatprep.mubr.f32.mxu0 0.0
      %5324 = vmatmul.mubr.f32.gmra.mxu0 %v4000
      %v5325 = vpop.f32.mrf.mxu0
      %v5326 = vadd.f32 %v5101, %v5325
      %v5327 = vpop.f32.mrf.mxu0
      %5328 = vmatprep.mubr.f32.mxu0 0.0
      %5329 = vmatmul.mubr.f32.gmra.mxu0 %v4009
      %v5330 = vpop.f32.mrf.mxu0
      %v5331 = vadd.f32 %v5106, %v5330
      %v5332 = vpop.f32.mrf.mxu0
      %5333 = vmatprep.mubr.f32.mxu0 0.0
      %5334 = vmatmul.mubr.f32.gmra.mxu0 %v4018
      %v5335 = vpop.f32.mrf.mxu0
      %v5336 = vadd.f32 %v5111, %v5335
      %v5337 = vpop.f32.mrf.mxu0
      %5338 = vmatprep.mubr.f32.mxu0 0.0
      %5339 = vmatmul.mubr.f32.gmra.mxu0 %v4027
      %v5340 = vpop.f32.mrf.mxu0
      %v5341 = vadd.f32 %v5116, %v5340
      %v5342 = vpop.f32.mrf.mxu0
      %5343 = vmatprep.mubr.f32.mxu0 0.0
      %5344 = vmatmul.mubr.f32.gmra.mxu0 %v4036
      %v5345 = vpop.f32.mrf.mxu0
      %v5346 = vadd.f32 %v5121, %v5345
      %v5347 = vpop.f32.mrf.mxu0
      %5348 = vmatprep.mubr.f32.mxu0 0.0
      %5349 = vmatmul.mubr.f32.gmra.mxu0 %v4045
      %v5350 = vpop.f32.mrf.mxu0
      %v5351 = vadd.f32 %v5126, %v5350
      %v5352 = vpop.f32.mrf.mxu0
      %5353 = vmatprep.mubr.f32.mxu0 0.0
      %5354 = vmatmul.mubr.f32.gmra.mxu0 %v4054
      %v5355 = vpop.f32.mrf.mxu0
      %v5356 = vadd.f32 %v5131, %v5355
      %v5357 = vpop.f32.mrf.mxu0
      %5358 = vmatprep.mubr.f32.mxu0 0.0
      %5359 = vmatmul.mubr.f32.gmra.mxu0 %v4063
      %v5360 = vpop.f32.mrf.mxu0
      %v5361 = vadd.f32 %v5136, %v5360
      %v5362 = vpop.f32.mrf.mxu0
      %5363 = vmatprep.mubr.f32.mxu0 0.0
      %5364 = vmatmul.mubr.f32.gmra.mxu0 %v4072
      %v5365 = vpop.f32.mrf.mxu0
      %v5366 = vadd.f32 %v5141, %v5365
      %v5367 = vpop.f32.mrf.mxu0
      %5368 = vmatprep.mubr.f32.mxu0 0.0
      %5369 = vmatmul.mubr.f32.gmra.mxu0 %v4081
      %v5370 = vpop.f32.mrf.mxu0
      %v5371 = vadd.f32 %v5146, %v5370
      %v5372 = vpop.f32.mrf.mxu0
      %5373 = vmatprep.mubr.f32.mxu0 0.0
      %5374 = vmatmul.mubr.f32.gmra.mxu0 %v4090
      %v5375 = vpop.f32.mrf.mxu0
      %v5376 = vadd.f32 %v5151, %v5375
      %v5377 = vpop.f32.mrf.mxu0
      %5378 = vmatprep.mubr.f32.mxu0 0.0
      %5379 = vmatmul.mubr.f32.gmra.mxu0 %v4099
      %v5380 = vpop.f32.mrf.mxu0
      %v5381 = vadd.f32 %v5156, %v5380
      %v5382 = vpop.f32.mrf.mxu0
      %5383 = vmatprep.mubr.f32.mxu0 0.0
      %5384 = vmatmul.mubr.f32.gmra.mxu0 %v4108
      %v5385 = vpop.f32.mrf.mxu0
      %v5386 = vadd.f32 %v5161, %v5385
      %v5387 = vpop.f32.mrf.mxu0
      %5388 = vmatprep.mubr.f32.mxu0 0.0
      %5389 = vmatmul.mubr.f32.gmra.mxu0 %v4117
      %v5390 = vpop.f32.mrf.mxu0
      %v5391 = vadd.f32 %v5166, %v5390
      %v5392 = vpop.f32.mrf.mxu0
      %5393 = vdwg.mxu0
      %v5394 = vmul.f32 %v5236, 0.5
      %v5395 = vmul.f32 %v5241, 0.5
      %v5396 = vmul.f32 %v5246, 0.5
      %v5397 = vmul.f32 %v5251, 0.5
      %v5398 = vmul.f32 %v5256, 0.5
      %v5399 = vmul.f32 %v5261, 0.5
      %v5400 = vmul.f32 %v5266, 0.5
      %v5401 = vmul.f32 %v5271, 0.5
      %v5402 = vmul.f32 %v5276, 0.5
      %v5403 = vmul.f32 %v5281, 0.5
      %v5404 = vmul.f32 %v5286, 0.5
      %v5405 = vmul.f32 %v5291, 0.5
      %v5406 = vmul.f32 %v5296, 0.5
      %v5407 = vmul.f32 %v5301, 0.5
      %v5408 = vmul.f32 %v5306, 0.5
      %v5409 = vmul.f32 %v5311, 0.5
      %v5410 = vmul.f32 %v5316, 0.5
      %v5411 = vmul.f32 %v5321, 0.5
      %v5412 = vmul.f32 %v5326, 0.5
      %v5413 = vmul.f32 %v5331, 0.5
      %v5414 = vmul.f32 %v5336, 0.5
      %v5415 = vmul.f32 %v5341, 0.5
      %v5416 = vmul.f32 %v5346, 0.5
      %v5417 = vmul.f32 %v5351, 0.5
      %v5418 = vmul.f32 %v5356, 0.5
      %v5419 = vmul.f32 %v5361, 0.5
      %v5420 = vmul.f32 %v5366, 0.5
      %v5421 = vmul.f32 %v5371, 0.5
      %v5422 = vmul.f32 %v5376, 0.5
      %v5423 = vmul.f32 %v5381, 0.5
      %v5424 = vmul.f32 %v5386, 0.5
      %v5425 = vmul.f32 %v5391, 0.5
      %v5426 = vtanh.pop %v5394
      %v5427 = vtanh.pop %v5395
      %v5428 = vtanh.pop %v5396
      %v5429 = vtanh.pop %v5397
      %v5430 = vtanh.pop %v5398
      %v5431 = vtanh.pop %v5399
      %v5432 = vtanh.pop %v5400
      %v5433 = vtanh.pop %v5401
      %v5434 = vtanh.pop %v5402
      %v5435 = vtanh.pop %v5403
      %v5436 = vtanh.pop %v5404
      %v5437 = vtanh.pop %v5405
      %v5438 = vtanh.pop %v5406
      %v5439 = vtanh.pop %v5407
      %v5440 = vtanh.pop %v5408
      %v5441 = vtanh.pop %v5409
      %v5442 = vtanh.pop %v5410
      %v5443 = vtanh.pop %v5411
      %v5444 = vtanh.pop %v5412
      %v5445 = vtanh.pop %v5413
      %v5446 = vtanh.pop %v5414
      %v5447 = vtanh.pop %v5415
      %v5448 = vtanh.pop %v5416
      %v5449 = vtanh.pop %v5417
      %v5450 = vtanh.pop %v5418
      %v5451 = vtanh.pop %v5419
      %v5452 = vtanh.pop %v5420
      %v5453 = vtanh.pop %v5421
      %v5454 = vtanh.pop %v5422
      %v5455 = vtanh.pop %v5423
      %v5456 = vtanh.pop %v5424
      %v5457 = vtanh.pop %v5425
      %v5458 = vmul.f32 %v5426, 0.5
      %v5459 = vmul.f32 %v5427, 0.5
      %v5460 = vmul.f32 %v5428, 0.5
      %v5461 = vmul.f32 %v5429, 0.5
      %v5462 = vmul.f32 %v5430, 0.5
      %v5463 = vmul.f32 %v5431, 0.5
      %v5464 = vmul.f32 %v5432, 0.5
      %v5465 = vmul.f32 %v5433, 0.5
      %v5466 = vmul.f32 %v5434, 0.5
      %v5467 = vmul.f32 %v5435, 0.5
      %v5468 = vmul.f32 %v5436, 0.5
      %v5469 = vmul.f32 %v5437, 0.5
      %v5470 = vmul.f32 %v5438, 0.5
      %v5471 = vmul.f32 %v5439, 0.5
      %v5472 = vmul.f32 %v5440, 0.5
      %v5473 = vmul.f32 %v5441, 0.5
      %v5474 = vmul.f32 %v5442, 0.5
      %v5475 = vmul.f32 %v5443, 0.5
      %v5476 = vmul.f32 %v5444, 0.5
      %v5477 = vmul.f32 %v5445, 0.5
      %v5478 = vmul.f32 %v5446, 0.5
      %v5479 = vmul.f32 %v5447, 0.5
      %v5480 = vmul.f32 %v5448, 0.5
      %v5481 = vmul.f32 %v5449, 0.5
      %v5482 = vmul.f32 %v5450, 0.5
      %v5483 = vmul.f32 %v5451, 0.5
      %v5484 = vmul.f32 %v5452, 0.5
      %v5485 = vmul.f32 %v5453, 0.5
      %v5486 = vmul.f32 %v5454, 0.5
      %v5487 = vmul.f32 %v5455, 0.5
      %v5488 = vmul.f32 %v5456, 0.5
      %v5489 = vmul.f32 %v5457, 0.5
      %v5490 = vadd.f32 %v5458, 0.5
      %v5491 = vadd.f32 %v5459, 0.5
      %v5492 = vadd.f32 %v5460, 0.5
      %v5493 = vadd.f32 %v5461, 0.5
      %v5494 = vadd.f32 %v5462, 0.5
      %v5495 = vadd.f32 %v5463, 0.5
      %v5496 = vadd.f32 %v5464, 0.5
      %v5497 = vadd.f32 %v5465, 0.5
      %v5498 = vadd.f32 %v5466, 0.5
      %v5499 = vadd.f32 %v5467, 0.5
      %v5500 = vadd.f32 %v5468, 0.5
      %v5501 = vadd.f32 %v5469, 0.5
      %v5502 = vadd.f32 %v5470, 0.5
      %v5503 = vadd.f32 %v5471, 0.5
      %v5504 = vadd.f32 %v5472, 0.5
      %v5505 = vadd.f32 %v5473, 0.5
      %v5506 = vadd.f32 %v5474, 0.5
      %v5507 = vadd.f32 %v5475, 0.5
      %v5508 = vadd.f32 %v5476, 0.5
      %v5509 = vadd.f32 %v5477, 0.5
      %v5510 = vadd.f32 %v5478, 0.5
      %v5511 = vadd.f32 %v5479, 0.5
      %v5512 = vadd.f32 %v5480, 0.5
      %v5513 = vadd.f32 %v5481, 0.5
      %v5514 = vadd.f32 %v5482, 0.5
      %v5515 = vadd.f32 %v5483, 0.5
      %v5516 = vadd.f32 %v5484, 0.5
      %v5517 = vadd.f32 %v5485, 0.5
      %v5518 = vadd.f32 %v5486, 0.5
      %v5519 = vadd.f32 %v5487, 0.5
      %v5520 = vadd.f32 %v5488, 0.5
      %v5521 = vadd.f32 %v5489, 0.5
      %v5522 = vtanh.pop %v5236
      %v5523 = vtanh.pop %v5241
      %v5524 = vtanh.pop %v5246
      %v5525 = vtanh.pop %v5251
      %v5526 = vtanh.pop %v5256
      %v5527 = vtanh.pop %v5261
      %v5528 = vtanh.pop %v5266
      %v5529 = vtanh.pop %v5271
      %v5530 = vtanh.pop %v5276
      %v5531 = vtanh.pop %v5281
      %v5532 = vtanh.pop %v5286
      %v5533 = vtanh.pop %v5291
      %v5534 = vtanh.pop %v5296
      %v5535 = vtanh.pop %v5301
      %v5536 = vtanh.pop %v5306
      %v5537 = vtanh.pop %v5311
      %v5538 = vtanh.pop %v5316
      %v5539 = vtanh.pop %v5321
      %v5540 = vtanh.pop %v5326
      %v5541 = vtanh.pop %v5331
      %v5542 = vtanh.pop %v5336
      %v5543 = vtanh.pop %v5341
      %v5544 = vtanh.pop %v5346
      %v5545 = vtanh.pop %v5351
      %v5546 = vtanh.pop %v5356
      %v5547 = vtanh.pop %v5361
      %v5548 = vtanh.pop %v5366
      %v5549 = vtanh.pop %v5371
      %v5550 = vtanh.pop %v5376
      %v5551 = vtanh.pop %v5381
      %v5552 = vtanh.pop %v5386
      %v5553 = vtanh.pop %v5391
      %5586 = vrot.lane.b32.xlu0 %v5522, 64
      %v5587 = vpop.permute.xlu0 %5586
      %5588 = vrot.lane.b32.xlu0 %v5523, 64
      %v5589 = vpop.permute.xlu0 %5588
      %5590 = vrot.lane.b32.xlu0 %v5524, 64
      %v5591 = vpop.permute.xlu0 %5590
      %5592 = vrot.lane.b32.xlu0 %v5525, 64
      %v5593 = vpop.permute.xlu0 %5592
      %5594 = vrot.lane.b32.xlu0 %v5526, 64
      %v5595 = vpop.permute.xlu0 %5594
      %5596 = vrot.lane.b32.xlu0 %v5527, 64
      %v5597 = vpop.permute.xlu0 %5596
      %5598 = vrot.lane.b32.xlu0 %v5528, 64
      %v5599 = vpop.permute.xlu0 %5598
      %5600 = vrot.lane.b32.xlu0 %v5529, 64
      %v5601 = vpop.permute.xlu0 %5600
      %5602 = vrot.lane.b32.xlu0 %v5530, 64
      %v5603 = vpop.permute.xlu0 %5602
      %5604 = vrot.lane.b32.xlu0 %v5531, 64
      %v5605 = vpop.permute.xlu0 %5604
      %5606 = vrot.lane.b32.xlu0 %v5532, 64
      %v5607 = vpop.permute.xlu0 %5606
      %5608 = vrot.lane.b32.xlu0 %v5533, 64
      %v5609 = vpop.permute.xlu0 %5608
      %5610 = vrot.lane.b32.xlu0 %v5534, 64
      %v5611 = vpop.permute.xlu0 %5610
      %5612 = vrot.lane.b32.xlu0 %v5535, 64
      %v5613 = vpop.permute.xlu0 %5612
      %5614 = vrot.lane.b32.xlu0 %v5536, 64
      %v5615 = vpop.permute.xlu0 %5614
      %5616 = vrot.lane.b32.xlu0 %v5537, 64
      %v5617 = vpop.permute.xlu0 %5616
      %5618 = vrot.lane.b32.xlu0 %v5538, 64
      %v5619 = vpop.permute.xlu0 %5618
      %5620 = vrot.lane.b32.xlu0 %v5539, 64
      %v5621 = vpop.permute.xlu0 %5620
      %5622 = vrot.lane.b32.xlu0 %v5540, 64
      %v5623 = vpop.permute.xlu0 %5622
      %5624 = vrot.lane.b32.xlu0 %v5541, 64
      %v5625 = vpop.permute.xlu0 %5624
      %5626 = vrot.lane.b32.xlu0 %v5542, 64
      %v5627 = vpop.permute.xlu0 %5626
      %5628 = vrot.lane.b32.xlu0 %v5543, 64
      %v5629 = vpop.permute.xlu0 %5628
      %5630 = vrot.lane.b32.xlu0 %v5544, 64
      %v5631 = vpop.permute.xlu0 %5630
      %5632 = vrot.lane.b32.xlu0 %v5545, 64
      %v5633 = vpop.permute.xlu0 %5632
      %5634 = vrot.lane.b32.xlu0 %v5546, 64
      %v5635 = vpop.permute.xlu0 %5634
      %5636 = vrot.lane.b32.xlu0 %v5547, 64
      %v5637 = vpop.permute.xlu0 %5636
      %5638 = vrot.lane.b32.xlu0 %v5548, 64
      %v5639 = vpop.permute.xlu0 %5638
      %5640 = vrot.lane.b32.xlu0 %v5549, 64
      %v5641 = vpop.permute.xlu0 %5640
      %5642 = vrot.lane.b32.xlu0 %v5550, 64
      %v5643 = vpop.permute.xlu0 %5642
      %5644 = vrot.lane.b32.xlu0 %v5551, 64
      %v5645 = vpop.permute.xlu0 %5644
      %5646 = vrot.lane.b32.xlu0 %v5552, 64
      %v5647 = vpop.permute.xlu0 %5646
      %5648 = vrot.lane.b32.xlu0 %v5553, 64
      %v5649 = vpop.permute.xlu0 %5648
      %v5682 = vmul.f32 %v5490, %v5587
      %v5683 = vmul.f32 %v5491, %v5589
      %v5684 = vmul.f32 %v5492, %v5591
      %v5685 = vmul.f32 %v5493, %v5593
      %v5686 = vmul.f32 %v5494, %v5595
      %v5687 = vmul.f32 %v5495, %v5597
      %v5688 = vmul.f32 %v5496, %v5599
      %v5689 = vmul.f32 %v5497, %v5601
      %v5690 = vmul.f32 %v5498, %v5603
      %v5691 = vmul.f32 %v5499, %v5605
      %v5692 = vmul.f32 %v5500, %v5607
      %v5693 = vmul.f32 %v5501, %v5609
      %v5694 = vmul.f32 %v5502, %v5611
      %v5695 = vmul.f32 %v5503, %v5613
      %v5696 = vmul.f32 %v5504, %v5615
      %v5697 = vmul.f32 %v5505, %v5617
      %v5698 = vmul.f32 %v5506, %v5619
      %v5699 = vmul.f32 %v5507, %v5621
      %v5700 = vmul.f32 %v5508, %v5623
      %v5701 = vmul.f32 %v5509, %v5625
      %v5702 = vmul.f32 %v5510, %v5627
      %v5703 = vmul.f32 %v5511, %v5629
      %v5704 = vmul.f32 %v5512, %v5631
      %v5705 = vmul.f32 %v5513, %v5633
      %v5706 = vmul.f32 %v5514, %v5635
      %v5707 = vmul.f32 %v5515, %v5637
      %v5708 = vmul.f32 %v5516, %v5639
      %v5709 = vmul.f32 %v5517, %v5641
      %v5710 = vmul.f32 %v5518, %v5643
      %v5711 = vmul.f32 %v5519, %v5645
      %v5712 = vmul.f32 %v5520, %v5647
      %v5713 = vmul.f32 %v5521, %v5649
      %5746 = vrot.lane.b32.xlu0 %v5682, 32
      %v5747 = vpop.permute.xlu0 %5746
      %5748 = vrot.lane.b32.xlu0 %v5683, 32
      %v5749 = vpop.permute.xlu0 %5748
      %5750 = vrot.lane.b32.xlu0 %v5684, 32
      %v5751 = vpop.permute.xlu0 %5750
      %5752 = vrot.lane.b32.xlu0 %v5685, 32
      %v5753 = vpop.permute.xlu0 %5752
      %5754 = vrot.lane.b32.xlu0 %v5686, 32
      %v5755 = vpop.permute.xlu0 %5754
      %5756 = vrot.lane.b32.xlu0 %v5687, 32
      %v5757 = vpop.permute.xlu0 %5756
      %5758 = vrot.lane.b32.xlu0 %v5688, 32
      %v5759 = vpop.permute.xlu0 %5758
      %5760 = vrot.lane.b32.xlu0 %v5689, 32
      %v5761 = vpop.permute.xlu0 %5760
      %5762 = vrot.lane.b32.xlu0 %v5690, 32
      %v5763 = vpop.permute.xlu0 %5762
      %5764 = vrot.lane.b32.xlu0 %v5691, 32
      %v5765 = vpop.permute.xlu0 %5764
      %5766 = vrot.lane.b32.xlu0 %v5692, 32
      %v5767 = vpop.permute.xlu0 %5766
      %5768 = vrot.lane.b32.xlu0 %v5693, 32
      %v5769 = vpop.permute.xlu0 %5768
      %5770 = vrot.lane.b32.xlu0 %v5694, 32
      %v5771 = vpop.permute.xlu0 %5770
      %5772 = vrot.lane.b32.xlu0 %v5695, 32
      %v5773 = vpop.permute.xlu0 %5772
      %5774 = vrot.lane.b32.xlu0 %v5696, 32
      %v5775 = vpop.permute.xlu0 %5774
      %5776 = vrot.lane.b32.xlu0 %v5697, 32
      %v5777 = vpop.permute.xlu0 %5776
      %5778 = vrot.lane.b32.xlu0 %v5698, 32
      %v5779 = vpop.permute.xlu0 %5778
      %5780 = vrot.lane.b32.xlu0 %v5699, 32
      %v5781 = vpop.permute.xlu0 %5780
      %5782 = vrot.lane.b32.xlu0 %v5700, 32
      %v5783 = vpop.permute.xlu0 %5782
      %5784 = vrot.lane.b32.xlu0 %v5701, 32
      %v5785 = vpop.permute.xlu0 %5784
      %5786 = vrot.lane.b32.xlu0 %v5702, 32
      %v5787 = vpop.permute.xlu0 %5786
      %5788 = vrot.lane.b32.xlu0 %v5703, 32
      %v5789 = vpop.permute.xlu0 %5788
      %5790 = vrot.lane.b32.xlu0 %v5704, 32
      %v5791 = vpop.permute.xlu0 %5790
      %5792 = vrot.lane.b32.xlu0 %v5705, 32
      %v5793 = vpop.permute.xlu0 %5792
      %5794 = vrot.lane.b32.xlu0 %v5706, 32
      %v5795 = vpop.permute.xlu0 %5794
      %5796 = vrot.lane.b32.xlu0 %v5707, 32
      %v5797 = vpop.permute.xlu0 %5796
      %5798 = vrot.lane.b32.xlu0 %v5708, 32
      %v5799 = vpop.permute.xlu0 %5798
      %5800 = vrot.lane.b32.xlu0 %v5709, 32
      %v5801 = vpop.permute.xlu0 %5800
      %5802 = vrot.lane.b32.xlu0 %v5710, 32
      %v5803 = vpop.permute.xlu0 %5802
      %5804 = vrot.lane.b32.xlu0 %v5711, 32
      %v5805 = vpop.permute.xlu0 %5804
      %5806 = vrot.lane.b32.xlu0 %v5712, 32
      %v5807 = vpop.permute.xlu0 %5806
      %5808 = vrot.lane.b32.xlu0 %v5713, 32
      %v5809 = vpop.permute.xlu0 %5808
      %v5842 = vadd.f32 %v5682, %v5747
      %v5843 = vadd.f32 %v5683, %v5749
      %v5844 = vadd.f32 %v5684, %v5751
      %v5845 = vadd.f32 %v5685, %v5753
      %v5846 = vadd.f32 %v5686, %v5755
      %v5847 = vadd.f32 %v5687, %v5757
      %v5848 = vadd.f32 %v5688, %v5759
      %v5849 = vadd.f32 %v5689, %v5761
      %v5850 = vadd.f32 %v5690, %v5763
      %v5851 = vadd.f32 %v5691, %v5765
      %v5852 = vadd.f32 %v5692, %v5767
      %v5853 = vadd.f32 %v5693, %v5769
      %v5854 = vadd.f32 %v5694, %v5771
      %v5855 = vadd.f32 %v5695, %v5773
      %v5856 = vadd.f32 %v5696, %v5775
      %v5857 = vadd.f32 %v5697, %v5777
      %v5858 = vadd.f32 %v5698, %v5779
      %v5859 = vadd.f32 %v5699, %v5781
      %v5860 = vadd.f32 %v5700, %v5783
      %v5861 = vadd.f32 %v5701, %v5785
      %v5862 = vadd.f32 %v5702, %v5787
      %v5863 = vadd.f32 %v5703, %v5789
      %v5864 = vadd.f32 %v5704, %v5791
      %v5865 = vadd.f32 %v5705, %v5793
      %v5866 = vadd.f32 %v5706, %v5795
      %v5867 = vadd.f32 %v5707, %v5797
      %v5868 = vadd.f32 %v5708, %v5799
      %v5869 = vadd.f32 %v5709, %v5801
      %v5870 = vadd.f32 %v5710, %v5803
      %v5871 = vadd.f32 %v5711, %v5805
      %v5872 = vadd.f32 %v5712, %v5807
      %v5873 = vadd.f32 %v5713, %v5809
      %vm5874 = vcmask 523520
      %5875 = vst.msk [vmem:[%s279 + $0x8] sm:$0xff] %vm5874, %v5842
      %5876 = vst.msk [vmem:[%s279 + $0x10] sm:$0xff] %vm5874, %v5843
      %5877 = vst.msk [vmem:[%s279 + $0x28] sm:$0xff] %vm5874, %v5844
      %5878 = vst.msk [vmem:[%s279 + $0x30] sm:$0xff] %vm5874, %v5845
      %5879 = vst.msk [vmem:[%s279 + $0x48] sm:$0xff] %vm5874, %v5846
      %5880 = vst.msk [vmem:[%s279 + $0x50] sm:$0xff] %vm5874, %v5847
      %5881 = vst.msk [vmem:[%s279 + $0x68] sm:$0xff] %vm5874, %v5848
      %5882 = vst.msk [vmem:[%s279 + $0x70] sm:$0xff] %vm5874, %v5849
      %5883 = vst.msk [vmem:[%s279 + $0x88] sm:$0xff] %vm5874, %v5850
      %5884 = vst.msk [vmem:[%s279 + $0x90] sm:$0xff] %vm5874, %v5851
      %5885 = vst.msk [vmem:[%s279 + $0xa8] sm:$0xff] %vm5874, %v5852
      %5886 = vst.msk [vmem:[%s279 + $0xb0] sm:$0xff] %vm5874, %v5853
      %5887 = vst.msk [vmem:[%s279 + $0xc8] sm:$0xff] %vm5874, %v5854
      %5888 = vst.msk [vmem:[%s279 + $0xd0] sm:$0xff] %vm5874, %v5855
      %5889 = vst.msk [vmem:[%s279 + $0xe8] sm:$0xff] %vm5874, %v5856
      %5890 = vst.msk [vmem:[%s279 + $0xf0] sm:$0xff] %vm5874, %v5857
      %5891 = vst.msk [vmem:[%s279 + $0x108] sm:$0xff] %vm5874, %v5858
      %5892 = vst.msk [vmem:[%s279 + $0x110] sm:$0xff] %vm5874, %v5859
      %5893 = vst.msk [vmem:[%s279 + $0x128] sm:$0xff] %vm5874, %v5860
      %5894 = vst.msk [vmem:[%s279 + $0x130] sm:$0xff] %vm5874, %v5861
      %5895 = vst.msk [vmem:[%s279 + $0x148] sm:$0xff] %vm5874, %v5862
      %5896 = vst.msk [vmem:[%s279 + $0x150] sm:$0xff] %vm5874, %v5863
      %5897 = vst.msk [vmem:[%s279 + $0x168] sm:$0xff] %vm5874, %v5864
      %5898 = vst.msk [vmem:[%s279 + $0x170] sm:$0xff] %vm5874, %v5865
      %5899 = vst.msk [vmem:[%s279 + $0x188] sm:$0xff] %vm5874, %v5866
      %5900 = vst.msk [vmem:[%s279 + $0x190] sm:$0xff] %vm5874, %v5867
      %5901 = vst.msk [vmem:[%s279 + $0x1a8] sm:$0xff] %vm5874, %v5868
      %5902 = vst.msk [vmem:[%s279 + $0x1b0] sm:$0xff] %vm5874, %v5869
      %5903 = vst.msk [vmem:[%s279 + $0x1c8] sm:$0xff] %vm5874, %v5870
      %5904 = vst.msk [vmem:[%s279 + $0x1d0] sm:$0xff] %vm5874, %v5871
      %5905 = vst.msk [vmem:[%s279 + $0x1e8] sm:$0xff] %vm5874, %v5872
      %5906 = vst.msk [vmem:[%s279 + $0x1f0] sm:$0xff] %vm5874, %v5873
      %v5907 = vld [vmem:[%s273 + $0x7] sm:$0xff]
      %v5908 = vld [vmem:[%s273 + $0xf] sm:$0xff]
      %v5909 = vld [vmem:[%s273 + $0x27] sm:$0xff]
      %v5910 = vld [vmem:[%s273 + $0x2f] sm:$0xff]
      %v5911 = vld [vmem:[%s273 + $0x47] sm:$0xff]
      %v5912 = vld [vmem:[%s273 + $0x4f] sm:$0xff]
      %v5913 = vld [vmem:[%s273 + $0x67] sm:$0xff]
      %v5914 = vld [vmem:[%s273 + $0x6f] sm:$0xff]
      %v5915 = vld [vmem:[%s273 + $0x87] sm:$0xff]
      %v5916 = vld [vmem:[%s273 + $0x8f] sm:$0xff]
      %v5917 = vld [vmem:[%s273 + $0xa7] sm:$0xff]
      %v5918 = vld [vmem:[%s273 + $0xaf] sm:$0xff]
      %v5919 = vld [vmem:[%s273 + $0xc7] sm:$0xff]
      %v5920 = vld [vmem:[%s273 + $0xcf] sm:$0xff]
      %v5921 = vld [vmem:[%s273 + $0xe7] sm:$0xff]
      %v5922 = vld [vmem:[%s273 + $0xef] sm:$0xff]
      %v5923 = vld [vmem:[%s273 + $0x107] sm:$0xff]
      %v5924 = vld [vmem:[%s273 + $0x10f] sm:$0xff]
      %v5925 = vld [vmem:[%s273 + $0x127] sm:$0xff]
      %v5926 = vld [vmem:[%s273 + $0x12f] sm:$0xff]
      %v5927 = vld [vmem:[%s273 + $0x147] sm:$0xff]
      %v5928 = vld [vmem:[%s273 + $0x14f] sm:$0xff]
      %v5929 = vld [vmem:[%s273 + $0x167] sm:$0xff]
      %v5930 = vld [vmem:[%s273 + $0x16f] sm:$0xff]
      %v5931 = vld [vmem:[%s273 + $0x187] sm:$0xff]
      %v5932 = vld [vmem:[%s273 + $0x18f] sm:$0xff]
      %v5933 = vld [vmem:[%s273 + $0x1a7] sm:$0xff]
      %v5934 = vld [vmem:[%s273 + $0x1af] sm:$0xff]
      %v5935 = vld [vmem:[%s273 + $0x1c7] sm:$0xff]
      %v5936 = vld [vmem:[%s273 + $0x1cf] sm:$0xff]
      %v5937 = vld [vmem:[%s273 + $0x1e7] sm:$0xff]
      %v5938 = vld [vmem:[%s273 + $0x1ef] sm:$0xff]
      %5939 = vst [vmem:[#allocation2] sm:$0xff] %v5907
      %5940 = vst [vmem:[#allocation2 + $0x48] sm:$0xff] %v5908
      %5941 = vst [vmem:[#allocation2 + $0x90] sm:$0xff] %v5909
      %5942 = vst [vmem:[#allocation2 + $0xd8] sm:$0xff] %v5910
      %5943 = vst [vmem:[#allocation2 + $0x120] sm:$0xff] %v5911
      %5944 = vst [vmem:[#allocation2 + $0x168] sm:$0xff] %v5912
      %5945 = vst [vmem:[#allocation2 + $0x1b0] sm:$0xff] %v5913
      %5946 = vst [vmem:[#allocation2 + $0x1f8] sm:$0xff] %v5914
      %5947 = vst [vmem:[#allocation2 + $0x240] sm:$0xff] %v5915
      %5948 = vst [vmem:[#allocation2 + $0x288] sm:$0xff] %v5916
      %5949 = vst [vmem:[#allocation2 + $0x2d0] sm:$0xff] %v5917
      %5950 = vst [vmem:[#allocation2 + $0x318] sm:$0xff] %v5918
      %5951 = vst [vmem:[#allocation2 + $0x360] sm:$0xff] %v5919
      %5952 = vst [vmem:[#allocation2 + $0x3a8] sm:$0xff] %v5920
      %5953 = vst [vmem:[#allocation2 + $0x3f0] sm:$0xff] %v5921
      %5954 = vst [vmem:[#allocation2 + $0x438] sm:$0xff] %v5922
      %5955 = vst [vmem:[#allocation2 + $0x480] sm:$0xff] %v5923
      %5956 = vst [vmem:[#allocation2 + $0x4c8] sm:$0xff] %v5924
      %5957 = vst [vmem:[#allocation2 + $0x510] sm:$0xff] %v5925
      %5958 = vst [vmem:[#allocation2 + $0x558] sm:$0xff] %v5926
      %5959 = vst [vmem:[#allocation2 + $0x5a0] sm:$0xff] %v5927
      %5960 = vst [vmem:[#allocation2 + $0x5e8] sm:$0xff] %v5928
      %5961 = vst [vmem:[#allocation2 + $0x630] sm:$0xff] %v5929
      %5962 = vst [vmem:[#allocation2 + $0x678] sm:$0xff] %v5930
      %5963 = vst [vmem:[#allocation2 + $0x6c0] sm:$0xff] %v5931
      %5964 = vst [vmem:[#allocation2 + $0x708] sm:$0xff] %v5932
      %5965 = vst [vmem:[#allocation2 + $0x750] sm:$0xff] %v5933
      %5966 = vst [vmem:[#allocation2 + $0x798] sm:$0xff] %v5934
      %5967 = vst [vmem:[#allocation2 + $0x7e0] sm:$0xff] %v5935
      %5968 = vst [vmem:[#allocation2 + $0x828] sm:$0xff] %v5936
      %5969 = vst [vmem:[#allocation2 + $0x870] sm:$0xff] %v5937
      %5970 = vst [vmem:[#allocation2 + $0x8b8] sm:$0xff] %v5938
      %v5971 = vld [vmem:[%s273 + $0x8] sm:$0xff]
      %v5972 = vld [vmem:[%s273 + $0x10] sm:$0xff]
      %v5973 = vld [vmem:[%s273 + $0x28] sm:$0xff]
      %v5974 = vld [vmem:[%s273 + $0x30] sm:$0xff]
      %v5975 = vld [vmem:[%s273 + $0x48] sm:$0xff]
      %v5976 = vld [vmem:[%s273 + $0x50] sm:$0xff]
      %v5977 = vld [vmem:[%s273 + $0x68] sm:$0xff]
      %v5978 = vld [vmem:[%s273 + $0x70] sm:$0xff]
      %v5979 = vld [vmem:[%s273 + $0x88] sm:$0xff]
      %v5980 = vld [vmem:[%s273 + $0x90] sm:$0xff]
      %v5981 = vld [vmem:[%s273 + $0xa8] sm:$0xff]
      %v5982 = vld [vmem:[%s273 + $0xb0] sm:$0xff]
      %v5983 = vld [vmem:[%s273 + $0xc8] sm:$0xff]
      %v5984 = vld [vmem:[%s273 + $0xd0] sm:$0xff]
      %v5985 = vld [vmem:[%s273 + $0xe8] sm:$0xff]
      %v5986 = vld [vmem:[%s273 + $0xf0] sm:$0xff]
      %v5987 = vld [vmem:[%s273 + $0x108] sm:$0xff]
      %v5988 = vld [vmem:[%s273 + $0x110] sm:$0xff]
      %v5989 = vld [vmem:[%s273 + $0x128] sm:$0xff]
      %v5990 = vld [vmem:[%s273 + $0x130] sm:$0xff]
      %v5991 = vld [vmem:[%s273 + $0x148] sm:$0xff]
      %v5992 = vld [vmem:[%s273 + $0x150] sm:$0xff]
      %v5993 = vld [vmem:[%s273 + $0x168] sm:$0xff]
      %v5994 = vld [vmem:[%s273 + $0x170] sm:$0xff]
      %v5995 = vld [vmem:[%s273 + $0x188] sm:$0xff]
      %v5996 = vld [vmem:[%s273 + $0x190] sm:$0xff]
      %v5997 = vld [vmem:[%s273 + $0x1a8] sm:$0xff]
      %v5998 = vld [vmem:[%s273 + $0x1b0] sm:$0xff]
      %v5999 = vld [vmem:[%s273 + $0x1c8] sm:$0xff]
      %v6000 = vld [vmem:[%s273 + $0x1d0] sm:$0xff]
      %v6001 = vld [vmem:[%s273 + $0x1e8] sm:$0xff]
      %v6002 = vld [vmem:[%s273 + $0x1f0] sm:$0xff]
      %6003 = vst [vmem:[#allocation2 + $0x8] sm:$0xff] %v5971
      %6004 = vst [vmem:[#allocation2 + $0x50] sm:$0xff] %v5972
      %6005 = vst [vmem:[#allocation2 + $0x98] sm:$0xff] %v5973
      %6006 = vst [vmem:[#allocation2 + $0xe0] sm:$0xff] %v5974
      %6007 = vst [vmem:[#allocation2 + $0x128] sm:$0xff] %v5975
      %6008 = vst [vmem:[#allocation2 + $0x170] sm:$0xff] %v5976
      %6009 = vst [vmem:[#allocation2 + $0x1b8] sm:$0xff] %v5977
      %6010 = vst [vmem:[#allocation2 + $0x200] sm:$0xff] %v5978
      %6011 = vst [vmem:[#allocation2 + $0x248] sm:$0xff] %v5979
      %6012 = vst [vmem:[#allocation2 + $0x290] sm:$0xff] %v5980
      %6013 = vst [vmem:[#allocation2 + $0x2d8] sm:$0xff] %v5981
      %6014 = vst [vmem:[#allocation2 + $0x320] sm:$0xff] %v5982
      %6015 = vst [vmem:[#allocation2 + $0x368] sm:$0xff] %v5983
      %6016 = vst [vmem:[#allocation2 + $0x3b0] sm:$0xff] %v5984
      %6017 = vst [vmem:[#allocation2 + $0x3f8] sm:$0xff] %v5985
      %6018 = vst [vmem:[#allocation2 + $0x440] sm:$0xff] %v5986
      %6019 = vst [vmem:[#allocation2 + $0x488] sm:$0xff] %v5987
      %6020 = vst [vmem:[#allocation2 + $0x4d0] sm:$0xff] %v5988
      %6021 = vst [vmem:[#allocation2 + $0x518] sm:$0xff] %v5989
      %6022 = vst [vmem:[#allocation2 + $0x560] sm:$0xff] %v5990
      %6023 = vst [vmem:[#allocation2 + $0x5a8] sm:$0xff] %v5991
      %6024 = vst [vmem:[#allocation2 + $0x5f0] sm:$0xff] %v5992
      %6025 = vst [vmem:[#allocation2 + $0x638] sm:$0xff] %v5993
      %6026 = vst [vmem:[#allocation2 + $0x680] sm:$0xff] %v5994
      %6027 = vst [vmem:[#allocation2 + $0x6c8] sm:$0xff] %v5995
      %6028 = vst [vmem:[#allocation2 + $0x710] sm:$0xff] %v5996
      %6029 = vst [vmem:[#allocation2 + $0x758] sm:$0xff] %v5997
      %6030 = vst [vmem:[#allocation2 + $0x7a0] sm:$0xff] %v5998
      %6031 = vst [vmem:[#allocation2 + $0x7e8] sm:$0xff] %v5999
      %6032 = vst [vmem:[#allocation2 + $0x830] sm:$0xff] %v6000
      %6033 = vst [vmem:[#allocation2 + $0x878] sm:$0xff] %v6001
      %6034 = vst [vmem:[#allocation2 + $0x8c0] sm:$0xff] %v6002
      %v6035 = vld [vmem:[%s273 + $0x9] sm:$0xff]
      %v6036 = vld [vmem:[%s273 + $0x11] sm:$0xff]
      %v6037 = vld [vmem:[%s273 + $0x29] sm:$0xff]
      %v6038 = vld [vmem:[%s273 + $0x31] sm:$0xff]
      %v6039 = vld [vmem:[%s273 + $0x49] sm:$0xff]
      %v6040 = vld [vmem:[%s273 + $0x51] sm:$0xff]
      %v6041 = vld [vmem:[%s273 + $0x69] sm:$0xff]
      %v6042 = vld [vmem:[%s273 + $0x71] sm:$0xff]
      %v6043 = vld [vmem:[%s273 + $0x89] sm:$0xff]
      %v6044 = vld [vmem:[%s273 + $0x91] sm:$0xff]
      %v6045 = vld [vmem:[%s273 + $0xa9] sm:$0xff]
      %v6046 = vld [vmem:[%s273 + $0xb1] sm:$0xff]
      %v6047 = vld [vmem:[%s273 + $0xc9] sm:$0xff]
      %v6048 = vld [vmem:[%s273 + $0xd1] sm:$0xff]
      %v6049 = vld [vmem:[%s273 + $0xe9] sm:$0xff]
      %v6050 = vld [vmem:[%s273 + $0xf1] sm:$0xff]
      %v6051 = vld [vmem:[%s273 + $0x109] sm:$0xff]
      %v6052 = vld [vmem:[%s273 + $0x111] sm:$0xff]
      %v6053 = vld [vmem:[%s273 + $0x129] sm:$0xff]
      %v6054 = vld [vmem:[%s273 + $0x131] sm:$0xff]
      %v6055 = vld [vmem:[%s273 + $0x149] sm:$0xff]
      %v6056 = vld [vmem:[%s273 + $0x151] sm:$0xff]
      %v6057 = vld [vmem:[%s273 + $0x169] sm:$0xff]
      %v6058 = vld [vmem:[%s273 + $0x171] sm:$0xff]
      %v6059 = vld [vmem:[%s273 + $0x189] sm:$0xff]
      %v6060 = vld [vmem:[%s273 + $0x191] sm:$0xff]
      %v6061 = vld [vmem:[%s273 + $0x1a9] sm:$0xff]
      %v6062 = vld [vmem:[%s273 + $0x1b1] sm:$0xff]
      %v6063 = vld [vmem:[%s273 + $0x1c9] sm:$0xff]
      %v6064 = vld [vmem:[%s273 + $0x1d1] sm:$0xff]
      %v6065 = vld [vmem:[%s273 + $0x1e9] sm:$0xff]
      %v6066 = vld [vmem:[%s273 + $0x1f1] sm:$0xff]
      %6067 = vst [vmem:[#allocation2 + $0x10] sm:$0xff] %v6035
      %6068 = vst [vmem:[#allocation2 + $0x58] sm:$0xff] %v6036
      %6069 = vst [vmem:[#allocation2 + $0xa0] sm:$0xff] %v6037
      %6070 = vst [vmem:[#allocation2 + $0xe8] sm:$0xff] %v6038
      %6071 = vst [vmem:[#allocation2 + $0x130] sm:$0xff] %v6039
      %6072 = vst [vmem:[#allocation2 + $0x178] sm:$0xff] %v6040
      %6073 = vst [vmem:[#allocation2 + $0x1c0] sm:$0xff] %v6041
      %6074 = vst [vmem:[#allocation2 + $0x208] sm:$0xff] %v6042
      %6075 = vst [vmem:[#allocation2 + $0x250] sm:$0xff] %v6043
      %6076 = vst [vmem:[#allocation2 + $0x298] sm:$0xff] %v6044
      %6077 = vst [vmem:[#allocation2 + $0x2e0] sm:$0xff] %v6045
      %6078 = vst [vmem:[#allocation2 + $0x328] sm:$0xff] %v6046
      %6079 = vst [vmem:[#allocation2 + $0x370] sm:$0xff] %v6047
      %6080 = vst [vmem:[#allocation2 + $0x3b8] sm:$0xff] %v6048
      %6081 = vst [vmem:[#allocation2 + $0x400] sm:$0xff] %v6049
      %6082 = vst [vmem:[#allocation2 + $0x448] sm:$0xff] %v6050
      %6083 = vst [vmem:[#allocation2 + $0x490] sm:$0xff] %v6051
      %6084 = vst [vmem:[#allocation2 + $0x4d8] sm:$0xff] %v6052
      %6085 = vst [vmem:[#allocation2 + $0x520] sm:$0xff] %v6053
      %6086 = vst [vmem:[#allocation2 + $0x568] sm:$0xff] %v6054
      %6087 = vst [vmem:[#allocation2 + $0x5b0] sm:$0xff] %v6055
      %6088 = vst [vmem:[#allocation2 + $0x5f8] sm:$0xff] %v6056
      %6089 = vst [vmem:[#allocation2 + $0x640] sm:$0xff] %v6057
      %6090 = vst [vmem:[#allocation2 + $0x688] sm:$0xff] %v6058
      %6091 = vst [vmem:[#allocation2 + $0x6d0] sm:$0xff] %v6059
      %6092 = vst [vmem:[#allocation2 + $0x718] sm:$0xff] %v6060
      %6093 = vst [vmem:[#allocation2 + $0x760] sm:$0xff] %v6061
      %6094 = vst [vmem:[#allocation2 + $0x7a8] sm:$0xff] %v6062
      %6095 = vst [vmem:[#allocation2 + $0x7f0] sm:$0xff] %v6063
      %6096 = vst [vmem:[#allocation2 + $0x838] sm:$0xff] %v6064
      %6097 = vst [vmem:[#allocation2 + $0x880] sm:$0xff] %v6065
      %6098 = vst [vmem:[#allocation2 + $0x8c8] sm:$0xff] %v6066
      %v6099 = vld [vmem:[%s279 + $0x7] sm:$0xff]
      %v6100 = vld [vmem:[%s279 + $0xf] sm:$0xff]
      %v6101 = vld [vmem:[%s279 + $0x27] sm:$0xff]
      %v6102 = vld [vmem:[%s279 + $0x2f] sm:$0xff]
      %v6103 = vld [vmem:[%s279 + $0x47] sm:$0xff]
      %v6104 = vld [vmem:[%s279 + $0x4f] sm:$0xff]
      %v6105 = vld [vmem:[%s279 + $0x67] sm:$0xff]
      %v6106 = vld [vmem:[%s279 + $0x6f] sm:$0xff]
      %v6107 = vld [vmem:[%s279 + $0x87] sm:$0xff]
      %v6108 = vld [vmem:[%s279 + $0x8f] sm:$0xff]
      %v6109 = vld [vmem:[%s279 + $0xa7] sm:$0xff]
      %v6110 = vld [vmem:[%s279 + $0xaf] sm:$0xff]
      %v6111 = vld [vmem:[%s279 + $0xc7] sm:$0xff]
      %v6112 = vld [vmem:[%s279 + $0xcf] sm:$0xff]
      %v6113 = vld [vmem:[%s279 + $0xe7] sm:$0xff]
      %v6114 = vld [vmem:[%s279 + $0xef] sm:$0xff]
      %v6115 = vld [vmem:[%s279 + $0x107] sm:$0xff]
      %v6116 = vld [vmem:[%s279 + $0x10f] sm:$0xff]
      %v6117 = vld [vmem:[%s279 + $0x127] sm:$0xff]
      %v6118 = vld [vmem:[%s279 + $0x12f] sm:$0xff]
      %v6119 = vld [vmem:[%s279 + $0x147] sm:$0xff]
      %v6120 = vld [vmem:[%s279 + $0x14f] sm:$0xff]
      %v6121 = vld [vmem:[%s279 + $0x167] sm:$0xff]
      %v6122 = vld [vmem:[%s279 + $0x16f] sm:$0xff]
      %v6123 = vld [vmem:[%s279 + $0x187] sm:$0xff]
      %v6124 = vld [vmem:[%s279 + $0x18f] sm:$0xff]
      %v6125 = vld [vmem:[%s279 + $0x1a7] sm:$0xff]
      %v6126 = vld [vmem:[%s279 + $0x1af] sm:$0xff]
      %v6127 = vld [vmem:[%s279 + $0x1c7] sm:$0xff]
      %v6128 = vld [vmem:[%s279 + $0x1cf] sm:$0xff]
      %v6129 = vld [vmem:[%s279 + $0x1e7] sm:$0xff]
      %v6130 = vld [vmem:[%s279 + $0x1ef] sm:$0xff]
      %6131 = vst [vmem:[#allocation2 + $0x18] sm:$0xff] %v6099
      %6132 = vst [vmem:[#allocation2 + $0x60] sm:$0xff] %v6100
      %6133 = vst [vmem:[#allocation2 + $0xa8] sm:$0xff] %v6101
      %6134 = vst [vmem:[#allocation2 + $0xf0] sm:$0xff] %v6102
      %6135 = vst [vmem:[#allocation2 + $0x138] sm:$0xff] %v6103
      %6136 = vst [vmem:[#allocation2 + $0x180] sm:$0xff] %v6104
      %6137 = vst [vmem:[#allocation2 + $0x1c8] sm:$0xff] %v6105
      %6138 = vst [vmem:[#allocation2 + $0x210] sm:$0xff] %v6106
      %6139 = vst [vmem:[#allocation2 + $0x258] sm:$0xff] %v6107
      %6140 = vst [vmem:[#allocation2 + $0x2a0] sm:$0xff] %v6108
      %6141 = vst [vmem:[#allocation2 + $0x2e8] sm:$0xff] %v6109
      %6142 = vst [vmem:[#allocation2 + $0x330] sm:$0xff] %v6110
      %6143 = vst [vmem:[#allocation2 + $0x378] sm:$0xff] %v6111
      %6144 = vst [vmem:[#allocation2 + $0x3c0] sm:$0xff] %v6112
      %6145 = vst [vmem:[#allocation2 + $0x408] sm:$0xff] %v6113
      %6146 = vst [vmem:[#allocation2 + $0x450] sm:$0xff] %v6114
      %6147 = vst [vmem:[#allocation2 + $0x498] sm:$0xff] %v6115
      %6148 = vst [vmem:[#allocation2 + $0x4e0] sm:$0xff] %v6116
      %6149 = vst [vmem:[#allocation2 + $0x528] sm:$0xff] %v6117
      %6150 = vst [vmem:[#allocation2 + $0x570] sm:$0xff] %v6118
      %6151 = vst [vmem:[#allocation2 + $0x5b8] sm:$0xff] %v6119
      %6152 = vst [vmem:[#allocation2 + $0x600] sm:$0xff] %v6120
      %6153 = vst [vmem:[#allocation2 + $0x648] sm:$0xff] %v6121
      %6154 = vst [vmem:[#allocation2 + $0x690] sm:$0xff] %v6122
      %6155 = vst [vmem:[#allocation2 + $0x6d8] sm:$0xff] %v6123
      %6156 = vst [vmem:[#allocation2 + $0x720] sm:$0xff] %v6124
      %6157 = vst [vmem:[#allocation2 + $0x768] sm:$0xff] %v6125
      %6158 = vst [vmem:[#allocation2 + $0x7b0] sm:$0xff] %v6126
      %6159 = vst [vmem:[#allocation2 + $0x7f8] sm:$0xff] %v6127
      %6160 = vst [vmem:[#allocation2 + $0x840] sm:$0xff] %v6128
      %6161 = vst [vmem:[#allocation2 + $0x888] sm:$0xff] %v6129
      %6162 = vst [vmem:[#allocation2 + $0x8d0] sm:$0xff] %v6130
      %v6163 = vld [vmem:[%s279 + $0x8] sm:$0xff]
      %v6164 = vld [vmem:[%s279 + $0x10] sm:$0xff]
      %v6165 = vld [vmem:[%s279 + $0x28] sm:$0xff]
      %v6166 = vld [vmem:[%s279 + $0x30] sm:$0xff]
      %v6167 = vld [vmem:[%s279 + $0x48] sm:$0xff]
      %v6168 = vld [vmem:[%s279 + $0x50] sm:$0xff]
      %v6169 = vld [vmem:[%s279 + $0x68] sm:$0xff]
      %v6170 = vld [vmem:[%s279 + $0x70] sm:$0xff]
      %v6171 = vld [vmem:[%s279 + $0x88] sm:$0xff]
      %v6172 = vld [vmem:[%s279 + $0x90] sm:$0xff]
      %v6173 = vld [vmem:[%s279 + $0xa8] sm:$0xff]
      %v6174 = vld [vmem:[%s279 + $0xb0] sm:$0xff]
      %v6175 = vld [vmem:[%s279 + $0xc8] sm:$0xff]
      %v6176 = vld [vmem:[%s279 + $0xd0] sm:$0xff]
      %v6177 = vld [vmem:[%s279 + $0xe8] sm:$0xff]
      %v6178 = vld [vmem:[%s279 + $0xf0] sm:$0xff]
      %v6179 = vld [vmem:[%s279 + $0x108] sm:$0xff]
      %v6180 = vld [vmem:[%s279 + $0x110] sm:$0xff]
      %v6181 = vld [vmem:[%s279 + $0x128] sm:$0xff]
      %v6182 = vld [vmem:[%s279 + $0x130] sm:$0xff]
      %v6183 = vld [vmem:[%s279 + $0x148] sm:$0xff]
      %v6184 = vld [vmem:[%s279 + $0x150] sm:$0xff]
      %v6185 = vld [vmem:[%s279 + $0x168] sm:$0xff]
      %v6186 = vld [vmem:[%s279 + $0x170] sm:$0xff]
      %v6187 = vld [vmem:[%s279 + $0x188] sm:$0xff]
      %v6188 = vld [vmem:[%s279 + $0x190] sm:$0xff]
      %v6189 = vld [vmem:[%s279 + $0x1a8] sm:$0xff]
      %v6190 = vld [vmem:[%s279 + $0x1b0] sm:$0xff]
      %v6191 = vld [vmem:[%s279 + $0x1c8] sm:$0xff]
      %v6192 = vld [vmem:[%s279 + $0x1d0] sm:$0xff]
      %v6193 = vld [vmem:[%s279 + $0x1e8] sm:$0xff]
      %v6194 = vld [vmem:[%s279 + $0x1f0] sm:$0xff]
      %6195 = vst [vmem:[#allocation2 + $0x20] sm:$0xff] %v6163
      %6196 = vst [vmem:[#allocation2 + $0x68] sm:$0xff] %v6164
      %6197 = vst [vmem:[#allocation2 + $0xb0] sm:$0xff] %v6165
      %6198 = vst [vmem:[#allocation2 + $0xf8] sm:$0xff] %v6166
      %6199 = vst [vmem:[#allocation2 + $0x140] sm:$0xff] %v6167
      %6200 = vst [vmem:[#allocation2 + $0x188] sm:$0xff] %v6168
      %6201 = vst [vmem:[#allocation2 + $0x1d0] sm:$0xff] %v6169
      %6202 = vst [vmem:[#allocation2 + $0x218] sm:$0xff] %v6170
      %6203 = vst [vmem:[#allocation2 + $0x260] sm:$0xff] %v6171
      %6204 = vst [vmem:[#allocation2 + $0x2a8] sm:$0xff] %v6172
      %6205 = vst [vmem:[#allocation2 + $0x2f0] sm:$0xff] %v6173
      %6206 = vst [vmem:[#allocation2 + $0x338] sm:$0xff] %v6174
      %6207 = vst [vmem:[#allocation2 + $0x380] sm:$0xff] %v6175
      %6208 = vst [vmem:[#allocation2 + $0x3c8] sm:$0xff] %v6176
      %6209 = vst [vmem:[#allocation2 + $0x410] sm:$0xff] %v6177
      %6210 = vst [vmem:[#allocation2 + $0x458] sm:$0xff] %v6178
      %6211 = vst [vmem:[#allocation2 + $0x4a0] sm:$0xff] %v6179
      %6212 = vst [vmem:[#allocation2 + $0x4e8] sm:$0xff] %v6180
      %6213 = vst [vmem:[#allocation2 + $0x530] sm:$0xff] %v6181
      %6214 = vst [vmem:[#allocation2 + $0x578] sm:$0xff] %v6182
      %6215 = vst [vmem:[#allocation2 + $0x5c0] sm:$0xff] %v6183
      %6216 = vst [vmem:[#allocation2 + $0x608] sm:$0xff] %v6184
      %6217 = vst [vmem:[#allocation2 + $0x650] sm:$0xff] %v6185
      %6218 = vst [vmem:[#allocation2 + $0x698] sm:$0xff] %v6186
      %6219 = vst [vmem:[#allocation2 + $0x6e0] sm:$0xff] %v6187
      %6220 = vst [vmem:[#allocation2 + $0x728] sm:$0xff] %v6188
      %6221 = vst [vmem:[#allocation2 + $0x770] sm:$0xff] %v6189
      %6222 = vst [vmem:[#allocation2 + $0x7b8] sm:$0xff] %v6190
      %6223 = vst [vmem:[#allocation2 + $0x800] sm:$0xff] %v6191
      %6224 = vst [vmem:[#allocation2 + $0x848] sm:$0xff] %v6192
      %6225 = vst [vmem:[#allocation2 + $0x890] sm:$0xff] %v6193
      %6226 = vst [vmem:[#allocation2 + $0x8d8] sm:$0xff] %v6194
      %v6227 = vld [vmem:[%s279 + $0x9] sm:$0xff]
      %v6228 = vld [vmem:[%s279 + $0x11] sm:$0xff]
      %v6229 = vld [vmem:[%s279 + $0x29] sm:$0xff]
      %v6230 = vld [vmem:[%s279 + $0x31] sm:$0xff]
      %v6231 = vld [vmem:[%s279 + $0x49] sm:$0xff]
      %v6232 = vld [vmem:[%s279 + $0x51] sm:$0xff]
      %v6233 = vld [vmem:[%s279 + $0x69] sm:$0xff]
      %v6234 = vld [vmem:[%s279 + $0x71] sm:$0xff]
      %v6235 = vld [vmem:[%s279 + $0x89] sm:$0xff]
      %v6236 = vld [vmem:[%s279 + $0x91] sm:$0xff]
      %v6237 = vld [vmem:[%s279 + $0xa9] sm:$0xff]
      %v6238 = vld [vmem:[%s279 + $0xb1] sm:$0xff]
      %v6239 = vld [vmem:[%s279 + $0xc9] sm:$0xff]
      %v6240 = vld [vmem:[%s279 + $0xd1] sm:$0xff]
      %v6241 = vld [vmem:[%s279 + $0xe9] sm:$0xff]
      %v6242 = vld [vmem:[%s279 + $0xf1] sm:$0xff]
      %v6243 = vld [vmem:[%s279 + $0x109] sm:$0xff]
      %v6244 = vld [vmem:[%s279 + $0x111] sm:$0xff]
      %v6245 = vld [vmem:[%s279 + $0x129] sm:$0xff]
      %v6246 = vld [vmem:[%s279 + $0x131] sm:$0xff]
      %v6247 = vld [vmem:[%s279 + $0x149] sm:$0xff]
      %v6248 = vld [vmem:[%s279 + $0x151] sm:$0xff]
      %v6249 = vld [vmem:[%s279 + $0x169] sm:$0xff]
      %v6250 = vld [vmem:[%s279 + $0x171] sm:$0xff]
      %v6251 = vld [vmem:[%s279 + $0x189] sm:$0xff]
      %v6252 = vld [vmem:[%s279 + $0x191] sm:$0xff]
      %v6253 = vld [vmem:[%s279 + $0x1a9] sm:$0xff]
      %v6254 = vld [vmem:[%s279 + $0x1b1] sm:$0xff]
      %v6255 = vld [vmem:[%s279 + $0x1c9] sm:$0xff]
      %v6256 = vld [vmem:[%s279 + $0x1d1] sm:$0xff]
      %v6257 = vld [vmem:[%s279 + $0x1e9] sm:$0xff]
      %v6258 = vld [vmem:[%s279 + $0x1f1] sm:$0xff]
      %6259 = vst [vmem:[#allocation2 + $0x28] sm:$0xff] %v6227
      %6260 = vst [vmem:[#allocation2 + $0x70] sm:$0xff] %v6228
      %6261 = vst [vmem:[#allocation2 + $0xb8] sm:$0xff] %v6229
      %6262 = vst [vmem:[#allocation2 + $0x100] sm:$0xff] %v6230
      %6263 = vst [vmem:[#allocation2 + $0x148] sm:$0xff] %v6231
      %6264 = vst [vmem:[#allocation2 + $0x190] sm:$0xff] %v6232
      %6265 = vst [vmem:[#allocation2 + $0x1d8] sm:$0xff] %v6233
      %6266 = vst [vmem:[#allocation2 + $0x220] sm:$0xff] %v6234
      %6267 = vst [vmem:[#allocation2 + $0x268] sm:$0xff] %v6235
      %6268 = vst [vmem:[#allocation2 + $0x2b0] sm:$0xff] %v6236
      %6269 = vst [vmem:[#allocation2 + $0x2f8] sm:$0xff] %v6237
      %6270 = vst [vmem:[#allocation2 + $0x340] sm:$0xff] %v6238
      %6271 = vst [vmem:[#allocation2 + $0x388] sm:$0xff] %v6239
      %6272 = vst [vmem:[#allocation2 + $0x3d0] sm:$0xff] %v6240
      %6273 = vst [vmem:[#allocation2 + $0x418] sm:$0xff] %v6241
      %6274 = vst [vmem:[#allocation2 + $0x460] sm:$0xff] %v6242
      %6275 = vst [vmem:[#allocation2 + $0x4a8] sm:$0xff] %v6243
      %6276 = vst [vmem:[#allocation2 + $0x4f0] sm:$0xff] %v6244
      %6277 = vst [vmem:[#allocation2 + $0x538] sm:$0xff] %v6245
      %6278 = vst [vmem:[#allocation2 + $0x580] sm:$0xff] %v6246
      %6279 = vst [vmem:[#allocation2 + $0x5c8] sm:$0xff] %v6247
      %6280 = vst [vmem:[#allocation2 + $0x610] sm:$0xff] %v6248
      %6281 = vst [vmem:[#allocation2 + $0x658] sm:$0xff] %v6249
      %6282 = vst [vmem:[#allocation2 + $0x6a0] sm:$0xff] %v6250
      %6283 = vst [vmem:[#allocation2 + $0x6e8] sm:$0xff] %v6251
      %6284 = vst [vmem:[#allocation2 + $0x730] sm:$0xff] %v6252
      %6285 = vst [vmem:[#allocation2 + $0x778] sm:$0xff] %v6253
      %6286 = vst [vmem:[#allocation2 + $0x7c0] sm:$0xff] %v6254
      %6287 = vst [vmem:[#allocation2 + $0x808] sm:$0xff] %v6255
      %6288 = vst [vmem:[#allocation2 + $0x850] sm:$0xff] %v6256
      %6289 = vst [vmem:[#allocation2 + $0x898] sm:$0xff] %v6257
      %6290 = vst [vmem:[#allocation2 + $0x8e0] sm:$0xff] %v6258
      %v6291 = vld [vmem:[%s696 + $0x7] sm:$0xff]
      %v6292 = vld [vmem:[%s696 + $0xf] sm:$0xff]
      %v6293 = vld [vmem:[%s696 + $0x27] sm:$0xff]
      %v6294 = vld [vmem:[%s696 + $0x2f] sm:$0xff]
      %v6295 = vld [vmem:[%s696 + $0x47] sm:$0xff]
      %v6296 = vld [vmem:[%s696 + $0x4f] sm:$0xff]
      %v6297 = vld [vmem:[%s696 + $0x67] sm:$0xff]
      %v6298 = vld [vmem:[%s696 + $0x6f] sm:$0xff]
      %v6299 = vld [vmem:[%s696 + $0x87] sm:$0xff]
      %v6300 = vld [vmem:[%s696 + $0x8f] sm:$0xff]
      %v6301 = vld [vmem:[%s696 + $0xa7] sm:$0xff]
      %v6302 = vld [vmem:[%s696 + $0xaf] sm:$0xff]
      %v6303 = vld [vmem:[%s696 + $0xc7] sm:$0xff]
      %v6304 = vld [vmem:[%s696 + $0xcf] sm:$0xff]
      %v6305 = vld [vmem:[%s696 + $0xe7] sm:$0xff]
      %v6306 = vld [vmem:[%s696 + $0xef] sm:$0xff]
      %v6307 = vld [vmem:[%s696 + $0x107] sm:$0xff]
      %v6308 = vld [vmem:[%s696 + $0x10f] sm:$0xff]
      %v6309 = vld [vmem:[%s696 + $0x127] sm:$0xff]
      %v6310 = vld [vmem:[%s696 + $0x12f] sm:$0xff]
      %v6311 = vld [vmem:[%s696 + $0x147] sm:$0xff]
      %v6312 = vld [vmem:[%s696 + $0x14f] sm:$0xff]
      %v6313 = vld [vmem:[%s696 + $0x167] sm:$0xff]
      %v6314 = vld [vmem:[%s696 + $0x16f] sm:$0xff]
      %v6315 = vld [vmem:[%s696 + $0x187] sm:$0xff]
      %v6316 = vld [vmem:[%s696 + $0x18f] sm:$0xff]
      %v6317 = vld [vmem:[%s696 + $0x1a7] sm:$0xff]
      %v6318 = vld [vmem:[%s696 + $0x1af] sm:$0xff]
      %v6319 = vld [vmem:[%s696 + $0x1c7] sm:$0xff]
      %v6320 = vld [vmem:[%s696 + $0x1cf] sm:$0xff]
      %v6321 = vld [vmem:[%s696 + $0x1e7] sm:$0xff]
      %v6322 = vld [vmem:[%s696 + $0x1ef] sm:$0xff]
      %6323 = vst [vmem:[#allocation2 + $0x30] sm:$0xff] %v6291
      %6324 = vst [vmem:[#allocation2 + $0x78] sm:$0xff] %v6292
      %6325 = vst [vmem:[#allocation2 + $0xc0] sm:$0xff] %v6293
      %6326 = vst [vmem:[#allocation2 + $0x108] sm:$0xff] %v6294
      %6327 = vst [vmem:[#allocation2 + $0x150] sm:$0xff] %v6295
      %6328 = vst [vmem:[#allocation2 + $0x198] sm:$0xff] %v6296
      %6329 = vst [vmem:[#allocation2 + $0x1e0] sm:$0xff] %v6297
      %6330 = vst [vmem:[#allocation2 + $0x228] sm:$0xff] %v6298
      %6331 = vst [vmem:[#allocation2 + $0x270] sm:$0xff] %v6299
      %6332 = vst [vmem:[#allocation2 + $0x2b8] sm:$0xff] %v6300
      %6333 = vst [vmem:[#allocation2 + $0x300] sm:$0xff] %v6301
      %6334 = vst [vmem:[#allocation2 + $0x348] sm:$0xff] %v6302
      %6335 = vst [vmem:[#allocation2 + $0x390] sm:$0xff] %v6303
      %6336 = vst [vmem:[#allocation2 + $0x3d8] sm:$0xff] %v6304
      %6337 = vst [vmem:[#allocation2 + $0x420] sm:$0xff] %v6305
      %6338 = vst [vmem:[#allocation2 + $0x468] sm:$0xff] %v6306
      %6339 = vst [vmem:[#allocation2 + $0x4b0] sm:$0xff] %v6307
      %6340 = vst [vmem:[#allocation2 + $0x4f8] sm:$0xff] %v6308
      %6341 = vst [vmem:[#allocation2 + $0x540] sm:$0xff] %v6309
      %6342 = vst [vmem:[#allocation2 + $0x588] sm:$0xff] %v6310
      %6343 = vst [vmem:[#allocation2 + $0x5d0] sm:$0xff] %v6311
      %6344 = vst [vmem:[#allocation2 + $0x618] sm:$0xff] %v6312
      %6345 = vst [vmem:[#allocation2 + $0x660] sm:$0xff] %v6313
      %6346 = vst [vmem:[#allocation2 + $0x6a8] sm:$0xff] %v6314
      %6347 = vst [vmem:[#allocation2 + $0x6f0] sm:$0xff] %v6315
      %6348 = vst [vmem:[#allocation2 + $0x738] sm:$0xff] %v6316
      %6349 = vst [vmem:[#allocation2 + $0x780] sm:$0xff] %v6317
      %6350 = vst [vmem:[#allocation2 + $0x7c8] sm:$0xff] %v6318
      %6351 = vst [vmem:[#allocation2 + $0x810] sm:$0xff] %v6319
      %6352 = vst [vmem:[#allocation2 + $0x858] sm:$0xff] %v6320
      %6353 = vst [vmem:[#allocation2 + $0x8a0] sm:$0xff] %v6321
      %6354 = vst [vmem:[#allocation2 + $0x8e8] sm:$0xff] %v6322
      %v6355 = vld [vmem:[%s696 + $0x8] sm:$0xff]
      %v6356 = vld [vmem:[%s696 + $0x10] sm:$0xff]
      %v6357 = vld [vmem:[%s696 + $0x28] sm:$0xff]
      %v6358 = vld [vmem:[%s696 + $0x30] sm:$0xff]
      %v6359 = vld [vmem:[%s696 + $0x48] sm:$0xff]
      %v6360 = vld [vmem:[%s696 + $0x50] sm:$0xff]
      %v6361 = vld [vmem:[%s696 + $0x68] sm:$0xff]
      %v6362 = vld [vmem:[%s696 + $0x70] sm:$0xff]
      %v6363 = vld [vmem:[%s696 + $0x88] sm:$0xff]
      %v6364 = vld [vmem:[%s696 + $0x90] sm:$0xff]
      %v6365 = vld [vmem:[%s696 + $0xa8] sm:$0xff]
      %v6366 = vld [vmem:[%s696 + $0xb0] sm:$0xff]
      %v6367 = vld [vmem:[%s696 + $0xc8] sm:$0xff]
      %v6368 = vld [vmem:[%s696 + $0xd0] sm:$0xff]
      %v6369 = vld [vmem:[%s696 + $0xe8] sm:$0xff]
      %v6370 = vld [vmem:[%s696 + $0xf0] sm:$0xff]
      %v6371 = vld [vmem:[%s696 + $0x108] sm:$0xff]
      %v6372 = vld [vmem:[%s696 + $0x110] sm:$0xff]
      %v6373 = vld [vmem:[%s696 + $0x128] sm:$0xff]
      %v6374 = vld [vmem:[%s696 + $0x130] sm:$0xff]
      %v6375 = vld [vmem:[%s696 + $0x148] sm:$0xff]
      %v6376 = vld [vmem:[%s696 + $0x150] sm:$0xff]
      %v6377 = vld [vmem:[%s696 + $0x168] sm:$0xff]
      %v6378 = vld [vmem:[%s696 + $0x170] sm:$0xff]
      %v6379 = vld [vmem:[%s696 + $0x188] sm:$0xff]
      %v6380 = vld [vmem:[%s696 + $0x190] sm:$0xff]
      %v6381 = vld [vmem:[%s696 + $0x1a8] sm:$0xff]
      %v6382 = vld [vmem:[%s696 + $0x1b0] sm:$0xff]
      %v6383 = vld [vmem:[%s696 + $0x1c8] sm:$0xff]
      %v6384 = vld [vmem:[%s696 + $0x1d0] sm:$0xff]
      %v6385 = vld [vmem:[%s696 + $0x1e8] sm:$0xff]
      %v6386 = vld [vmem:[%s696 + $0x1f0] sm:$0xff]
      %6387 = vst [vmem:[#allocation2 + $0x38] sm:$0xff] %v6355
      %6388 = vst [vmem:[#allocation2 + $0x80] sm:$0xff] %v6356
      %6389 = vst [vmem:[#allocation2 + $0xc8] sm:$0xff] %v6357
      %6390 = vst [vmem:[#allocation2 + $0x110] sm:$0xff] %v6358
      %6391 = vst [vmem:[#allocation2 + $0x158] sm:$0xff] %v6359
      %6392 = vst [vmem:[#allocation2 + $0x1a0] sm:$0xff] %v6360
      %6393 = vst [vmem:[#allocation2 + $0x1e8] sm:$0xff] %v6361
      %6394 = vst [vmem:[#allocation2 + $0x230] sm:$0xff] %v6362
      %6395 = vst [vmem:[#allocation2 + $0x278] sm:$0xff] %v6363
      %6396 = vst [vmem:[#allocation2 + $0x2c0] sm:$0xff] %v6364
      %6397 = vst [vmem:[#allocation2 + $0x308] sm:$0xff] %v6365
      %6398 = vst [vmem:[#allocation2 + $0x350] sm:$0xff] %v6366
      %6399 = vst [vmem:[#allocation2 + $0x398] sm:$0xff] %v6367
      %6400 = vst [vmem:[#allocation2 + $0x3e0] sm:$0xff] %v6368
      %6401 = vst [vmem:[#allocation2 + $0x428] sm:$0xff] %v6369
      %6402 = vst [vmem:[#allocation2 + $0x470] sm:$0xff] %v6370
      %6403 = vst [vmem:[#allocation2 + $0x4b8] sm:$0xff] %v6371
      %6404 = vst [vmem:[#allocation2 + $0x500] sm:$0xff] %v6372
      %6405 = vst [vmem:[#allocation2 + $0x548] sm:$0xff] %v6373
      %6406 = vst [vmem:[#allocation2 + $0x590] sm:$0xff] %v6374
      %6407 = vst [vmem:[#allocation2 + $0x5d8] sm:$0xff] %v6375
      %6408 = vst [vmem:[#allocation2 + $0x620] sm:$0xff] %v6376
      %6409 = vst [vmem:[#allocation2 + $0x668] sm:$0xff] %v6377
      %6410 = vst [vmem:[#allocation2 + $0x6b0] sm:$0xff] %v6378
      %6411 = vst [vmem:[#allocation2 + $0x6f8] sm:$0xff] %v6379
      %6412 = vst [vmem:[#allocation2 + $0x740] sm:$0xff] %v6380
      %6413 = vst [vmem:[#allocation2 + $0x788] sm:$0xff] %v6381
      %6414 = vst [vmem:[#allocation2 + $0x7d0] sm:$0xff] %v6382
      %6415 = vst [vmem:[#allocation2 + $0x818] sm:$0xff] %v6383
      %6416 = vst [vmem:[#allocation2 + $0x860] sm:$0xff] %v6384
      %6417 = vst [vmem:[#allocation2 + $0x8a8] sm:$0xff] %v6385
      %6418 = vst [vmem:[#allocation2 + $0x8f0] sm:$0xff] %v6386
      %v6419 = vld [vmem:[%s696 + $0x9] sm:$0xff]
      %v6420 = vld [vmem:[%s696 + $0x11] sm:$0xff]
      %v6421 = vld [vmem:[%s696 + $0x29] sm:$0xff]
      %v6422 = vld [vmem:[%s696 + $0x31] sm:$0xff]
      %v6423 = vld [vmem:[%s696 + $0x49] sm:$0xff]
      %v6424 = vld [vmem:[%s696 + $0x51] sm:$0xff]
      %v6425 = vld [vmem:[%s696 + $0x69] sm:$0xff]
      %v6426 = vld [vmem:[%s696 + $0x71] sm:$0xff]
      %v6427 = vld [vmem:[%s696 + $0x89] sm:$0xff]
      %v6428 = vld [vmem:[%s696 + $0x91] sm:$0xff]
      %v6429 = vld [vmem:[%s696 + $0xa9] sm:$0xff]
      %v6430 = vld [vmem:[%s696 + $0xb1] sm:$0xff]
      %v6431 = vld [vmem:[%s696 + $0xc9] sm:$0xff]
      %v6432 = vld [vmem:[%s696 + $0xd1] sm:$0xff]
      %v6433 = vld [vmem:[%s696 + $0xe9] sm:$0xff]
      %v6434 = vld [vmem:[%s696 + $0xf1] sm:$0xff]
      %v6435 = vld [vmem:[%s696 + $0x109] sm:$0xff]
      %v6436 = vld [vmem:[%s696 + $0x111] sm:$0xff]
      %v6437 = vld [vmem:[%s696 + $0x129] sm:$0xff]
      %v6438 = vld [vmem:[%s696 + $0x131] sm:$0xff]
      %v6439 = vld [vmem:[%s696 + $0x149] sm:$0xff]
      %v6440 = vld [vmem:[%s696 + $0x151] sm:$0xff]
      %v6441 = vld [vmem:[%s696 + $0x169] sm:$0xff]
      %v6442 = vld [vmem:[%s696 + $0x171] sm:$0xff]
      %v6443 = vld [vmem:[%s696 + $0x189] sm:$0xff]
      %v6444 = vld [vmem:[%s696 + $0x191] sm:$0xff]
      %v6445 = vld [vmem:[%s696 + $0x1a9] sm:$0xff]
      %v6446 = vld [vmem:[%s696 + $0x1b1] sm:$0xff]
      %v6447 = vld [vmem:[%s696 + $0x1c9] sm:$0xff]
      %v6448 = vld [vmem:[%s696 + $0x1d1] sm:$0xff]
      %v6449 = vld [vmem:[%s696 + $0x1e9] sm:$0xff]
      %v6450 = vld [vmem:[%s696 + $0x1f1] sm:$0xff]
      %6451 = vst [vmem:[#allocation2 + $0x40] sm:$0xff] %v6419
      %6452 = vst [vmem:[#allocation2 + $0x88] sm:$0xff] %v6420
      %6453 = vst [vmem:[#allocation2 + $0xd0] sm:$0xff] %v6421
      %6454 = vst [vmem:[#allocation2 + $0x118] sm:$0xff] %v6422
      %6455 = vst [vmem:[#allocation2 + $0x160] sm:$0xff] %v6423
      %6456 = vst [vmem:[#allocation2 + $0x1a8] sm:$0xff] %v6424
      %6457 = vst [vmem:[#allocation2 + $0x1f0] sm:$0xff] %v6425
      %6458 = vst [vmem:[#allocation2 + $0x238] sm:$0xff] %v6426
      %6459 = vst [vmem:[#allocation2 + $0x280] sm:$0xff] %v6427
      %6460 = vst [vmem:[#allocation2 + $0x2c8] sm:$0xff] %v6428
      %6461 = vst [vmem:[#allocation2 + $0x310] sm:$0xff] %v6429
      %6462 = vst [vmem:[#allocation2 + $0x358] sm:$0xff] %v6430
      %6463 = vst [vmem:[#allocation2 + $0x3a0] sm:$0xff] %v6431
      %6464 = vst [vmem:[#allocation2 + $0x3e8] sm:$0xff] %v6432
      %6465 = vst [vmem:[#allocation2 + $0x430] sm:$0xff] %v6433
      %6466 = vst [vmem:[#allocation2 + $0x478] sm:$0xff] %v6434
      %6467 = vst [vmem:[#allocation2 + $0x4c0] sm:$0xff] %v6435
      %6468 = vst [vmem:[#allocation2 + $0x508] sm:$0xff] %v6436
      %6469 = vst [vmem:[#allocation2 + $0x550] sm:$0xff] %v6437
      %6470 = vst [vmem:[#allocation2 + $0x598] sm:$0xff] %v6438
      %6471 = vst [vmem:[#allocation2 + $0x5e0] sm:$0xff] %v6439
      %6472 = vst [vmem:[#allocation2 + $0x628] sm:$0xff] %v6440
      %6473 = vst [vmem:[#allocation2 + $0x670] sm:$0xff] %v6441
      %6474 = vst [vmem:[#allocation2 + $0x6b8] sm:$0xff] %v6442
      %6475 = vst [vmem:[#allocation2 + $0x700] sm:$0xff] %v6443
      %6476 = vst [vmem:[#allocation2 + $0x748] sm:$0xff] %v6444
      %6477 = vst [vmem:[#allocation2 + $0x790] sm:$0xff] %v6445
      %6478 = vst [vmem:[#allocation2 + $0x7d8] sm:$0xff] %v6446
      %6479 = vst [vmem:[#allocation2 + $0x820] sm:$0xff] %v6447
      %6480 = vst [vmem:[#allocation2 + $0x868] sm:$0xff] %v6448
      %6481 = vst [vmem:[#allocation2 + $0x8b0] sm:$0xff] %v6449
      %6482 = vst [vmem:[#allocation2 + $0x8f8] sm:$0xff] %v6450
      %v6483 = vld [vmem:[#allocation2] sm:$0xff]
      %v6484 = vld [vmem:[#allocation2 + $0x8] sm:$0xff]
      %v6485 = vld [vmem:[#allocation2 + $0x10] sm:$0xff]
      %v6486 = vld [vmem:[#allocation2 + $0x18] sm:$0xff]
      %v6487 = vld [vmem:[#allocation2 + $0x20] sm:$0xff]
      %v6488 = vld [vmem:[#allocation2 + $0x28] sm:$0xff]
      %v6489 = vld [vmem:[#allocation2 + $0x30] sm:$0xff]
      %v6490 = vld [vmem:[#allocation2 + $0x38] sm:$0xff]
      %v6491 = vld [vmem:[#allocation2 + $0x40] sm:$0xff]
      %v6492 = vld [vmem:[#allocation2 + $0x48] sm:$0xff]
      %v6493 = vld [vmem:[#allocation2 + $0x50] sm:$0xff]
      %v6494 = vld [vmem:[#allocation2 + $0x58] sm:$0xff]
      %v6495 = vld [vmem:[#allocation2 + $0x60] sm:$0xff]
      %v6496 = vld [vmem:[#allocation2 + $0x68] sm:$0xff]
      %v6497 = vld [vmem:[#allocation2 + $0x70] sm:$0xff]
      %v6498 = vld [vmem:[#allocation2 + $0x78] sm:$0xff]
      %v6499 = vld [vmem:[#allocation2 + $0x80] sm:$0xff]
      %v6500 = vld [vmem:[#allocation2 + $0x88] sm:$0xff]
      %v6501 = vld [vmem:[#allocation2 + $0x90] sm:$0xff]
      %v6502 = vld [vmem:[#allocation2 + $0x98] sm:$0xff]
      %v6503 = vld [vmem:[#allocation2 + $0xa0] sm:$0xff]
      %v6504 = vld [vmem:[#allocation2 + $0xa8] sm:$0xff]
      %v6505 = vld [vmem:[#allocation2 + $0xb0] sm:$0xff]
      %v6506 = vld [vmem:[#allocation2 + $0xb8] sm:$0xff]
      %v6507 = vld [vmem:[#allocation2 + $0xc0] sm:$0xff]
      %v6508 = vld [vmem:[#allocation2 + $0xc8] sm:$0xff]
      %v6509 = vld [vmem:[#allocation2 + $0xd0] sm:$0xff]
      %v6510 = vld [vmem:[#allocation2 + $0xd8] sm:$0xff]
      %v6511 = vld [vmem:[#allocation2 + $0xe0] sm:$0xff]
      %v6512 = vld [vmem:[#allocation2 + $0xe8] sm:$0xff]
      %v6513 = vld [vmem:[#allocation2 + $0xf0] sm:$0xff]
      %v6514 = vld [vmem:[#allocation2 + $0xf8] sm:$0xff]
      %v6515 = vld [vmem:[#allocation2 + $0x100] sm:$0xff]
      %v6516 = vld [vmem:[#allocation2 + $0x108] sm:$0xff]
      %v6517 = vld [vmem:[#allocation2 + $0x110] sm:$0xff]
      %v6518 = vld [vmem:[#allocation2 + $0x118] sm:$0xff]
      %v6519 = vld [vmem:[#allocation2 + $0x120] sm:$0xff]
      %v6520 = vld [vmem:[#allocation2 + $0x128] sm:$0xff]
      %v6521 = vld [vmem:[#allocation2 + $0x130] sm:$0xff]
      %v6522 = vld [vmem:[#allocation2 + $0x138] sm:$0xff]
      %v6523 = vld [vmem:[#allocation2 + $0x140] sm:$0xff]
      %v6524 = vld [vmem:[#allocation2 + $0x148] sm:$0xff]
      %v6525 = vld [vmem:[#allocation2 + $0x150] sm:$0xff]
      %v6526 = vld [vmem:[#allocation2 + $0x158] sm:$0xff]
      %v6527 = vld [vmem:[#allocation2 + $0x160] sm:$0xff]
      %v6528 = vld [vmem:[#allocation2 + $0x168] sm:$0xff]
      %v6529 = vld [vmem:[#allocation2 + $0x170] sm:$0xff]
      %v6530 = vld [vmem:[#allocation2 + $0x178] sm:$0xff]
      %v6531 = vld [vmem:[#allocation2 + $0x180] sm:$0xff]
      %v6532 = vld [vmem:[#allocation2 + $0x188] sm:$0xff]
      %v6533 = vld [vmem:[#allocation2 + $0x190] sm:$0xff]
      %v6534 = vld [vmem:[#allocation2 + $0x198] sm:$0xff]
      %v6535 = vld [vmem:[#allocation2 + $0x1a0] sm:$0xff]
      %v6536 = vld [vmem:[#allocation2 + $0x1a8] sm:$0xff]
      %v6537 = vld [vmem:[#allocation2 + $0x1b0] sm:$0xff]
      %v6538 = vld [vmem:[#allocation2 + $0x1b8] sm:$0xff]
      %v6539 = vld [vmem:[#allocation2 + $0x1c0] sm:$0xff]
      %v6540 = vld [vmem:[#allocation2 + $0x1c8] sm:$0xff]
      %v6541 = vld [vmem:[#allocation2 + $0x1d0] sm:$0xff]
      %v6542 = vld [vmem:[#allocation2 + $0x1d8] sm:$0xff]
      %v6543 = vld [vmem:[#allocation2 + $0x1e0] sm:$0xff]
      %v6544 = vld [vmem:[#allocation2 + $0x1e8] sm:$0xff]
      %v6545 = vld [vmem:[#allocation2 + $0x1f0] sm:$0xff]
      %v6546 = vld [vmem:[#allocation2 + $0x1f8] sm:$0xff]
      %v6547 = vld [vmem:[#allocation2 + $0x200] sm:$0xff]
      %v6548 = vld [vmem:[#allocation2 + $0x208] sm:$0xff]
      %v6549 = vld [vmem:[#allocation2 + $0x210] sm:$0xff]
      %v6550 = vld [vmem:[#allocation2 + $0x218] sm:$0xff]
      %v6551 = vld [vmem:[#allocation2 + $0x220] sm:$0xff]
      %v6552 = vld [vmem:[#allocation2 + $0x228] sm:$0xff]
      %v6553 = vld [vmem:[#allocation2 + $0x230] sm:$0xff]
      %v6554 = vld [vmem:[#allocation2 + $0x238] sm:$0xff]
      %v6555 = vld [vmem:[#allocation2 + $0x240] sm:$0xff]
      %v6556 = vld [vmem:[#allocation2 + $0x248] sm:$0xff]
      %v6557 = vld [vmem:[#allocation2 + $0x250] sm:$0xff]
      %v6558 = vld [vmem:[#allocation2 + $0x258] sm:$0xff]
      %v6559 = vld [vmem:[#allocation2 + $0x260] sm:$0xff]
      %v6560 = vld [vmem:[#allocation2 + $0x268] sm:$0xff]
      %v6561 = vld [vmem:[#allocation2 + $0x270] sm:$0xff]
      %v6562 = vld [vmem:[#allocation2 + $0x278] sm:$0xff]
      %v6563 = vld [vmem:[#allocation2 + $0x280] sm:$0xff]
      %v6564 = vld [vmem:[#allocation2 + $0x288] sm:$0xff]
      %v6565 = vld [vmem:[#allocation2 + $0x290] sm:$0xff]
      %v6566 = vld [vmem:[#allocation2 + $0x298] sm:$0xff]
      %v6567 = vld [vmem:[#allocation2 + $0x2a0] sm:$0xff]
      %v6568 = vld [vmem:[#allocation2 + $0x2a8] sm:$0xff]
      %v6569 = vld [vmem:[#allocation2 + $0x2b0] sm:$0xff]
      %v6570 = vld [vmem:[#allocation2 + $0x2b8] sm:$0xff]
      %v6571 = vld [vmem:[#allocation2 + $0x2c0] sm:$0xff]
      %v6572 = vld [vmem:[#allocation2 + $0x2c8] sm:$0xff]
      %v6573 = vld [vmem:[#allocation2 + $0x2d0] sm:$0xff]
      %v6574 = vld [vmem:[#allocation2 + $0x2d8] sm:$0xff]
      %v6575 = vld [vmem:[#allocation2 + $0x2e0] sm:$0xff]
      %v6576 = vld [vmem:[#allocation2 + $0x2e8] sm:$0xff]
      %v6577 = vld [vmem:[#allocation2 + $0x2f0] sm:$0xff]
      %v6578 = vld [vmem:[#allocation2 + $0x2f8] sm:$0xff]
      %v6579 = vld [vmem:[#allocation2 + $0x300] sm:$0xff]
      %v6580 = vld [vmem:[#allocation2 + $0x308] sm:$0xff]
      %v6581 = vld [vmem:[#allocation2 + $0x310] sm:$0xff]
      %v6582 = vld [vmem:[#allocation2 + $0x318] sm:$0xff]
      %v6583 = vld [vmem:[#allocation2 + $0x320] sm:$0xff]
      %v6584 = vld [vmem:[#allocation2 + $0x328] sm:$0xff]
      %v6585 = vld [vmem:[#allocation2 + $0x330] sm:$0xff]
      %v6586 = vld [vmem:[#allocation2 + $0x338] sm:$0xff]
      %v6587 = vld [vmem:[#allocation2 + $0x340] sm:$0xff]
      %v6588 = vld [vmem:[#allocation2 + $0x348] sm:$0xff]
      %v6589 = vld [vmem:[#allocation2 + $0x350] sm:$0xff]
      %v6590 = vld [vmem:[#allocation2 + $0x358] sm:$0xff]
      %v6591 = vld [vmem:[#allocation2 + $0x360] sm:$0xff]
      %v6592 = vld [vmem:[#allocation2 + $0x368] sm:$0xff]
      %v6593 = vld [vmem:[#allocation2 + $0x370] sm:$0xff]
      %v6594 = vld [vmem:[#allocation2 + $0x378] sm:$0xff]
      %v6595 = vld [vmem:[#allocation2 + $0x380] sm:$0xff]
      %v6596 = vld [vmem:[#allocation2 + $0x388] sm:$0xff]
      %v6597 = vld [vmem:[#allocation2 + $0x390] sm:$0xff]
      %v6598 = vld [vmem:[#allocation2 + $0x398] sm:$0xff]
      %v6599 = vld [vmem:[#allocation2 + $0x3a0] sm:$0xff]
      %v6600 = vld [vmem:[#allocation2 + $0x3a8] sm:$0xff]
      %v6601 = vld [vmem:[#allocation2 + $0x3b0] sm:$0xff]
      %v6602 = vld [vmem:[#allocation2 + $0x3b8] sm:$0xff]
      %v6603 = vld [vmem:[#allocation2 + $0x3c0] sm:$0xff]
      %v6604 = vld [vmem:[#allocation2 + $0x3c8] sm:$0xff]
      %v6605 = vld [vmem:[#allocation2 + $0x3d0] sm:$0xff]
      %v6606 = vld [vmem:[#allocation2 + $0x3d8] sm:$0xff]
      %v6607 = vld [vmem:[#allocation2 + $0x3e0] sm:$0xff]
      %v6608 = vld [vmem:[#allocation2 + $0x3e8] sm:$0xff]
      %v6609 = vld [vmem:[#allocation2 + $0x3f0] sm:$0xff]
      %v6610 = vld [vmem:[#allocation2 + $0x3f8] sm:$0xff]
      %v6611 = vld [vmem:[#allocation2 + $0x400] sm:$0xff]
      %v6612 = vld [vmem:[#allocation2 + $0x408] sm:$0xff]
      %v6613 = vld [vmem:[#allocation2 + $0x410] sm:$0xff]
      %v6614 = vld [vmem:[#allocation2 + $0x418] sm:$0xff]
      %v6615 = vld [vmem:[#allocation2 + $0x420] sm:$0xff]
      %v6616 = vld [vmem:[#allocation2 + $0x428] sm:$0xff]
      %v6617 = vld [vmem:[#allocation2 + $0x430] sm:$0xff]
      %v6618 = vld [vmem:[#allocation2 + $0x438] sm:$0xff]
      %v6619 = vld [vmem:[#allocation2 + $0x440] sm:$0xff]
      %v6620 = vld [vmem:[#allocation2 + $0x448] sm:$0xff]
      %v6621 = vld [vmem:[#allocation2 + $0x450] sm:$0xff]
      %v6622 = vld [vmem:[#allocation2 + $0x458] sm:$0xff]
      %v6623 = vld [vmem:[#allocation2 + $0x460] sm:$0xff]
      %v6624 = vld [vmem:[#allocation2 + $0x468] sm:$0xff]
      %v6625 = vld [vmem:[#allocation2 + $0x470] sm:$0xff]
      %v6626 = vld [vmem:[#allocation2 + $0x478] sm:$0xff]
      %v6627 = vld [vmem:[#allocation2 + $0x480] sm:$0xff]
      %v6628 = vld [vmem:[#allocation2 + $0x488] sm:$0xff]
      %v6629 = vld [vmem:[#allocation2 + $0x490] sm:$0xff]
      %v6630 = vld [vmem:[#allocation2 + $0x498] sm:$0xff]
      %v6631 = vld [vmem:[#allocation2 + $0x4a0] sm:$0xff]
      %v6632 = vld [vmem:[#allocation2 + $0x4a8] sm:$0xff]
      %v6633 = vld [vmem:[#allocation2 + $0x4b0] sm:$0xff]
      %v6634 = vld [vmem:[#allocation2 + $0x4b8] sm:$0xff]
      %v6635 = vld [vmem:[#allocation2 + $0x4c0] sm:$0xff]
      %v6636 = vld [vmem:[#allocation2 + $0x4c8] sm:$0xff]
      %v6637 = vld [vmem:[#allocation2 + $0x4d0] sm:$0xff]
      %v6638 = vld [vmem:[#allocation2 + $0x4d8] sm:$0xff]
      %v6639 = vld [vmem:[#allocation2 + $0x4e0] sm:$0xff]
      %v6640 = vld [vmem:[#allocation2 + $0x4e8] sm:$0xff]
      %v6641 = vld [vmem:[#allocation2 + $0x4f0] sm:$0xff]
      %v6642 = vld [vmem:[#allocation2 + $0x4f8] sm:$0xff]
      %v6643 = vld [vmem:[#allocation2 + $0x500] sm:$0xff]
      %v6644 = vld [vmem:[#allocation2 + $0x508] sm:$0xff]
      %v6645 = vld [vmem:[#allocation2 + $0x510] sm:$0xff]
      %v6646 = vld [vmem:[#allocation2 + $0x518] sm:$0xff]
      %v6647 = vld [vmem:[#allocation2 + $0x520] sm:$0xff]
      %v6648 = vld [vmem:[#allocation2 + $0x528] sm:$0xff]
      %v6649 = vld [vmem:[#allocation2 + $0x530] sm:$0xff]
      %v6650 = vld [vmem:[#allocation2 + $0x538] sm:$0xff]
      %v6651 = vld [vmem:[#allocation2 + $0x540] sm:$0xff]
      %v6652 = vld [vmem:[#allocation2 + $0x548] sm:$0xff]
      %v6653 = vld [vmem:[#allocation2 + $0x550] sm:$0xff]
      %v6654 = vld [vmem:[#allocation2 + $0x558] sm:$0xff]
      %v6655 = vld [vmem:[#allocation2 + $0x560] sm:$0xff]
      %v6656 = vld [vmem:[#allocation2 + $0x568] sm:$0xff]
      %v6657 = vld [vmem:[#allocation2 + $0x570] sm:$0xff]
      %v6658 = vld [vmem:[#allocation2 + $0x578] sm:$0xff]
      %v6659 = vld [vmem:[#allocation2 + $0x580] sm:$0xff]
      %v6660 = vld [vmem:[#allocation2 + $0x588] sm:$0xff]
      %v6661 = vld [vmem:[#allocation2 + $0x590] sm:$0xff]
      %v6662 = vld [vmem:[#allocation2 + $0x598] sm:$0xff]
      %v6663 = vld [vmem:[#allocation2 + $0x5a0] sm:$0xff]
      %v6664 = vld [vmem:[#allocation2 + $0x5a8] sm:$0xff]
      %v6665 = vld [vmem:[#allocation2 + $0x5b0] sm:$0xff]
      %v6666 = vld [vmem:[#allocation2 + $0x5b8] sm:$0xff]
      %v6667 = vld [vmem:[#allocation2 + $0x5c0] sm:$0xff]
      %v6668 = vld [vmem:[#allocation2 + $0x5c8] sm:$0xff]
      %v6669 = vld [vmem:[#allocation2 + $0x5d0] sm:$0xff]
      %v6670 = vld [vmem:[#allocation2 + $0x5d8] sm:$0xff]
      %v6671 = vld [vmem:[#allocation2 + $0x5e0] sm:$0xff]
      %v6672 = vld [vmem:[#allocation2 + $0x5e8] sm:$0xff]
      %v6673 = vld [vmem:[#allocation2 + $0x5f0] sm:$0xff]
      %v6674 = vld [vmem:[#allocation2 + $0x5f8] sm:$0xff]
      %v6675 = vld [vmem:[#allocation2 + $0x600] sm:$0xff]
      %v6676 = vld [vmem:[#allocation2 + $0x608] sm:$0xff]
      %v6677 = vld [vmem:[#allocation2 + $0x610] sm:$0xff]
      %v6678 = vld [vmem:[#allocation2 + $0x618] sm:$0xff]
      %v6679 = vld [vmem:[#allocation2 + $0x620] sm:$0xff]
      %v6680 = vld [vmem:[#allocation2 + $0x628] sm:$0xff]
      %v6681 = vld [vmem:[#allocation2 + $0x630] sm:$0xff]
      %v6682 = vld [vmem:[#allocation2 + $0x638] sm:$0xff]
      %v6683 = vld [vmem:[#allocation2 + $0x640] sm:$0xff]
      %v6684 = vld [vmem:[#allocation2 + $0x648] sm:$0xff]
      %v6685 = vld [vmem:[#allocation2 + $0x650] sm:$0xff]
      %v6686 = vld [vmem:[#allocation2 + $0x658] sm:$0xff]
      %v6687 = vld [vmem:[#allocation2 + $0x660] sm:$0xff]
      %v6688 = vld [vmem:[#allocation2 + $0x668] sm:$0xff]
      %v6689 = vld [vmem:[#allocation2 + $0x670] sm:$0xff]
      %v6690 = vld [vmem:[#allocation2 + $0x678] sm:$0xff]
      %v6691 = vld [vmem:[#allocation2 + $0x680] sm:$0xff]
      %v6692 = vld [vmem:[#allocation2 + $0x688] sm:$0xff]
      %v6693 = vld [vmem:[#allocation2 + $0x690] sm:$0xff]
      %v6694 = vld [vmem:[#allocation2 + $0x698] sm:$0xff]
      %v6695 = vld [vmem:[#allocation2 + $0x6a0] sm:$0xff]
      %v6696 = vld [vmem:[#allocation2 + $0x6a8] sm:$0xff]
      %v6697 = vld [vmem:[#allocation2 + $0x6b0] sm:$0xff]
      %v6698 = vld [vmem:[#allocation2 + $0x6b8] sm:$0xff]
      %v6699 = vld [vmem:[#allocation2 + $0x6c0] sm:$0xff]
      %v6700 = vld [vmem:[#allocation2 + $0x6c8] sm:$0xff]
      %v6701 = vld [vmem:[#allocation2 + $0x6d0] sm:$0xff]
      %v6702 = vld [vmem:[#allocation2 + $0x6d8] sm:$0xff]
      %v6703 = vld [vmem:[#allocation2 + $0x6e0] sm:$0xff]
      %v6704 = vld [vmem:[#allocation2 + $0x6e8] sm:$0xff]
      %v6705 = vld [vmem:[#allocation2 + $0x6f0] sm:$0xff]
      %v6706 = vld [vmem:[#allocation2 + $0x6f8] sm:$0xff]
      %v6707 = vld [vmem:[#allocation2 + $0x700] sm:$0xff]
      %v6708 = vld [vmem:[#allocation2 + $0x708] sm:$0xff]
      %v6709 = vld [vmem:[#allocation2 + $0x710] sm:$0xff]
      %v6710 = vld [vmem:[#allocation2 + $0x718] sm:$0xff]
      %v6711 = vld [vmem:[#allocation2 + $0x720] sm:$0xff]
      %v6712 = vld [vmem:[#allocation2 + $0x728] sm:$0xff]
      %v6713 = vld [vmem:[#allocation2 + $0x730] sm:$0xff]
      %v6714 = vld [vmem:[#allocation2 + $0x738] sm:$0xff]
      %v6715 = vld [vmem:[#allocation2 + $0x740] sm:$0xff]
      %v6716 = vld [vmem:[#allocation2 + $0x748] sm:$0xff]
      %v6717 = vld [vmem:[#allocation2 + $0x750] sm:$0xff]
      %v6718 = vld [vmem:[#allocation2 + $0x758] sm:$0xff]
      %v6719 = vld [vmem:[#allocation2 + $0x760] sm:$0xff]
      %v6720 = vld [vmem:[#allocation2 + $0x768] sm:$0xff]
      %v6721 = vld [vmem:[#allocation2 + $0x770] sm:$0xff]
      %v6722 = vld [vmem:[#allocation2 + $0x778] sm:$0xff]
      %v6723 = vld [vmem:[#allocation2 + $0x780] sm:$0xff]
      %v6724 = vld [vmem:[#allocation2 + $0x788] sm:$0xff]
      %v6725 = vld [vmem:[#allocation2 + $0x790] sm:$0xff]
      %v6726 = vld [vmem:[#allocation2 + $0x798] sm:$0xff]
      %v6727 = vld [vmem:[#allocation2 + $0x7a0] sm:$0xff]
      %v6728 = vld [vmem:[#allocation2 + $0x7a8] sm:$0xff]
      %v6729 = vld [vmem:[#allocation2 + $0x7b0] sm:$0xff]
      %v6730 = vld [vmem:[#allocation2 + $0x7b8] sm:$0xff]
      %v6731 = vld [vmem:[#allocation2 + $0x7c0] sm:$0xff]
      %v6732 = vld [vmem:[#allocation2 + $0x7c8] sm:$0xff]
      %v6733 = vld [vmem:[#allocation2 + $0x7d0] sm:$0xff]
      %v6734 = vld [vmem:[#allocation2 + $0x7d8] sm:$0xff]
      %v6735 = vld [vmem:[#allocation2 + $0x7e0] sm:$0xff]
      %v6736 = vld [vmem:[#allocation2 + $0x7e8] sm:$0xff]
      %v6737 = vld [vmem:[#allocation2 + $0x7f0] sm:$0xff]
      %v6738 = vld [vmem:[#allocation2 + $0x7f8] sm:$0xff]
      %v6739 = vld [vmem:[#allocation2 + $0x800] sm:$0xff]
      %v6740 = vld [vmem:[#allocation2 + $0x808] sm:$0xff]
      %v6741 = vld [vmem:[#allocation2 + $0x810] sm:$0xff]
      %v6742 = vld [vmem:[#allocation2 + $0x818] sm:$0xff]
      %v6743 = vld [vmem:[#allocation2 + $0x820] sm:$0xff]
      %v6744 = vld [vmem:[#allocation2 + $0x828] sm:$0xff]
      %v6745 = vld [vmem:[#allocation2 + $0x830] sm:$0xff]
      %v6746 = vld [vmem:[#allocation2 + $0x838] sm:$0xff]
      %v6747 = vld [vmem:[#allocation2 + $0x840] sm:$0xff]
      %v6748 = vld [vmem:[#allocation2 + $0x848] sm:$0xff]
      %v6749 = vld [vmem:[#allocation2 + $0x850] sm:$0xff]
      %v6750 = vld [vmem:[#allocation2 + $0x858] sm:$0xff]
      %v6751 = vld [vmem:[#allocation2 + $0x860] sm:$0xff]
      %v6752 = vld [vmem:[#allocation2 + $0x868] sm:$0xff]
      %v6753 = vld [vmem:[#allocation2 + $0x870] sm:$0xff]
      %v6754 = vld [vmem:[#allocation2 + $0x878] sm:$0xff]
      %v6755 = vld [vmem:[#allocation2 + $0x880] sm:$0xff]
      %v6756 = vld [vmem:[#allocation2 + $0x888] sm:$0xff]
      %v6757 = vld [vmem:[#allocation2 + $0x890] sm:$0xff]
      %v6758 = vld [vmem:[#allocation2 + $0x898] sm:$0xff]
      %v6759 = vld [vmem:[#allocation2 + $0x8a0] sm:$0xff]
      %v6760 = vld [vmem:[#allocation2 + $0x8a8] sm:$0xff]
      %v6761 = vld [vmem:[#allocation2 + $0x8b0] sm:$0xff]
      %v6762 = vld [vmem:[#allocation2 + $0x8b8] sm:$0xff]
      %v6763 = vld [vmem:[#allocation2 + $0x8c0] sm:$0xff]
      %v6764 = vld [vmem:[#allocation2 + $0x8c8] sm:$0xff]
      %v6765 = vld [vmem:[#allocation2 + $0x8d0] sm:$0xff]
      %v6766 = vld [vmem:[#allocation2 + $0x8d8] sm:$0xff]
      %v6767 = vld [vmem:[#allocation2 + $0x8e0] sm:$0xff]
      %v6768 = vld [vmem:[#allocation2 + $0x8e8] sm:$0xff]
      %v6769 = vld [vmem:[#allocation2 + $0x8f0] sm:$0xff]
      %v6770 = vld [vmem:[#allocation2 + $0x8f8] sm:$0xff]
      %v6771 = vld [vmem:[%s5] sm:$0xff]
      %v6772 = vld [vmem:[%s5 + $0x8] sm:$0xff]
      %v6773 = vld [vmem:[%s5 + $0x10] sm:$0xff]
      %v6774 = vld [vmem:[%s5 + $0x18] sm:$0xff]
      %v6775 = vld [vmem:[%s5 + $0x20] sm:$0xff]
      %v6776 = vld [vmem:[%s5 + $0x28] sm:$0xff]
      %v6777 = vld [vmem:[%s5 + $0x30] sm:$0xff]
      %v6778 = vld [vmem:[%s5 + $0x38] sm:$0xff]
      %v6779 = vld [vmem:[%s5 + $0x40] sm:$0xff]
      %v6780 = vld [vmem:[%s5 + $0x48] sm:$0xff]
      %v6781 = vld [vmem:[%s5 + $0x50] sm:$0xff]
      %v6782 = vld [vmem:[%s5 + $0x58] sm:$0xff]
      %v6783 = vld [vmem:[%s5 + $0x60] sm:$0xff]
      %v6784 = vld [vmem:[%s5 + $0x68] sm:$0xff]
      %v6785 = vld [vmem:[%s5 + $0x70] sm:$0xff]
      %v6786 = vld [vmem:[%s5 + $0x78] sm:$0xff]
      %v6787 = vld [vmem:[%s5 + $0x80] sm:$0xff]
      %v6788 = vld [vmem:[%s5 + $0x88] sm:$0xff]
      %v6789 = vld [vmem:[%s5 + $0x90] sm:$0xff]
      %v6790 = vld [vmem:[%s5 + $0x98] sm:$0xff]
      %v6791 = vld [vmem:[%s5 + $0xa0] sm:$0xff]
      %v6792 = vld [vmem:[%s5 + $0xa8] sm:$0xff]
      %v6793 = vld [vmem:[%s5 + $0xb0] sm:$0xff]
      %v6794 = vld [vmem:[%s5 + $0xb8] sm:$0xff]
      %v6795 = vld [vmem:[%s5 + $0xc0] sm:$0xff]
      %v6796 = vld [vmem:[%s5 + $0xc8] sm:$0xff]
      %v6797 = vld [vmem:[%s5 + $0xd0] sm:$0xff]
      %v6798 = vld [vmem:[%s5 + $0xd8] sm:$0xff]
      %v6799 = vld [vmem:[%s5 + $0xe0] sm:$0xff]
      %v6800 = vld [vmem:[%s5 + $0xe8] sm:$0xff]
      %v6801 = vld [vmem:[%s5 + $0xf0] sm:$0xff]
      %v6802 = vld [vmem:[%s5 + $0xf8] sm:$0xff]
      %v6803 = vld [vmem:[%s5 + $0x100] sm:$0xff]
      %v6804 = vld [vmem:[%s5 + $0x108] sm:$0xff]
      %v6805 = vld [vmem:[%s5 + $0x110] sm:$0xff]
      %v6806 = vld [vmem:[%s5 + $0x118] sm:$0xff]
      %v6807 = vld [vmem:[%s5 + $0x120] sm:$0xff]
      %v6808 = vld [vmem:[%s5 + $0x128] sm:$0xff]
      %v6809 = vld [vmem:[%s5 + $0x130] sm:$0xff]
      %v6810 = vld [vmem:[%s5 + $0x138] sm:$0xff]
      %v6811 = vld [vmem:[%s5 + $0x140] sm:$0xff]
      %v6812 = vld [vmem:[%s5 + $0x148] sm:$0xff]
      %v6813 = vld [vmem:[%s5 + $0x150] sm:$0xff]
      %v6814 = vld [vmem:[%s5 + $0x158] sm:$0xff]
      %v6815 = vld [vmem:[%s5 + $0x160] sm:$0xff]
      %v6816 = vld [vmem:[%s5 + $0x168] sm:$0xff]
      %v6817 = vld [vmem:[%s5 + $0x170] sm:$0xff]
      %v6818 = vld [vmem:[%s5 + $0x178] sm:$0xff]
      %v6819 = vld [vmem:[%s5 + $0x180] sm:$0xff]
      %v6820 = vld [vmem:[%s5 + $0x188] sm:$0xff]
      %v6821 = vld [vmem:[%s5 + $0x190] sm:$0xff]
      %v6822 = vld [vmem:[%s5 + $0x198] sm:$0xff]
      %v6823 = vld [vmem:[%s5 + $0x1a0] sm:$0xff]
      %v6824 = vld [vmem:[%s5 + $0x1a8] sm:$0xff]
      %v6825 = vld [vmem:[%s5 + $0x1b0] sm:$0xff]
      %v6826 = vld [vmem:[%s5 + $0x1b8] sm:$0xff]
      %v6827 = vld [vmem:[%s5 + $0x1c0] sm:$0xff]
      %v6828 = vld [vmem:[%s5 + $0x1c8] sm:$0xff]
      %v6829 = vld [vmem:[%s5 + $0x1d0] sm:$0xff]
      %v6830 = vld [vmem:[%s5 + $0x1d8] sm:$0xff]
      %v6831 = vld [vmem:[%s5 + $0x1e0] sm:$0xff]
      %v6832 = vld [vmem:[%s5 + $0x1e8] sm:$0xff]
      %v6833 = vld [vmem:[%s5 + $0x1f0] sm:$0xff]
      %v6834 = vld [vmem:[%s5 + $0x1f8] sm:$0xff]
      %v6835 = vld [vmem:[%s5 + $0x200] sm:$0xff]
      %v6836 = vld [vmem:[%s5 + $0x208] sm:$0xff]
      %v6837 = vld [vmem:[%s5 + $0x210] sm:$0xff]
      %v6838 = vld [vmem:[%s5 + $0x218] sm:$0xff]
      %v6839 = vld [vmem:[%s5 + $0x220] sm:$0xff]
      %v6840 = vld [vmem:[%s5 + $0x228] sm:$0xff]
      %v6841 = vld [vmem:[%s5 + $0x230] sm:$0xff]
      %v6842 = vld [vmem:[%s5 + $0x238] sm:$0xff]
      %v6843 = vld [vmem:[%s5 + $0x240] sm:$0xff]
      %v6844 = vld [vmem:[%s5 + $0x248] sm:$0xff]
      %v6845 = vld [vmem:[%s5 + $0x250] sm:$0xff]
      %v6846 = vld [vmem:[%s5 + $0x258] sm:$0xff]
      %v6847 = vld [vmem:[%s5 + $0x260] sm:$0xff]
      %v6848 = vld [vmem:[%s5 + $0x268] sm:$0xff]
      %v6849 = vld [vmem:[%s5 + $0x270] sm:$0xff]
      %v6850 = vld [vmem:[%s5 + $0x278] sm:$0xff]
      %v6851 = vld [vmem:[%s5 + $0x280] sm:$0xff]
      %v6852 = vld [vmem:[%s5 + $0x288] sm:$0xff]
      %v6853 = vld [vmem:[%s5 + $0x290] sm:$0xff]
      %v6854 = vld [vmem:[%s5 + $0x298] sm:$0xff]
      %v6855 = vld [vmem:[%s5 + $0x2a0] sm:$0xff]
      %v6856 = vld [vmem:[%s5 + $0x2a8] sm:$0xff]
      %v6857 = vld [vmem:[%s5 + $0x2b0] sm:$0xff]
      %v6858 = vld [vmem:[%s5 + $0x2b8] sm:$0xff]
      %v6859 = vld [vmem:[%s5 + $0x2c0] sm:$0xff]
      %v6860 = vld [vmem:[%s5 + $0x2c8] sm:$0xff]
      %v6861 = vld [vmem:[%s5 + $0x2d0] sm:$0xff]
      %v6862 = vld [vmem:[%s5 + $0x2d8] sm:$0xff]
      %v6863 = vld [vmem:[%s5 + $0x2e0] sm:$0xff]
      %v6864 = vld [vmem:[%s5 + $0x2e8] sm:$0xff]
      %v6865 = vld [vmem:[%s5 + $0x2f0] sm:$0xff]
      %v6866 = vld [vmem:[%s5 + $0x2f8] sm:$0xff]
      %v6867 = vld [vmem:[%s5 + $0x300] sm:$0xff]
      %v6868 = vld [vmem:[%s5 + $0x308] sm:$0xff]
      %v6869 = vld [vmem:[%s5 + $0x310] sm:$0xff]
      %v6870 = vld [vmem:[%s5 + $0x318] sm:$0xff]
      %v6871 = vld [vmem:[%s5 + $0x320] sm:$0xff]
      %v6872 = vld [vmem:[%s5 + $0x328] sm:$0xff]
      %v6873 = vld [vmem:[%s5 + $0x330] sm:$0xff]
      %v6874 = vld [vmem:[%s5 + $0x338] sm:$0xff]
      %v6875 = vld [vmem:[%s5 + $0x340] sm:$0xff]
      %v6876 = vld [vmem:[%s5 + $0x348] sm:$0xff]
      %v6877 = vld [vmem:[%s5 + $0x350] sm:$0xff]
      %v6878 = vld [vmem:[%s5 + $0x358] sm:$0xff]
      %v6879 = vld [vmem:[%s5 + $0x360] sm:$0xff]
      %v6880 = vld [vmem:[%s5 + $0x368] sm:$0xff]
      %v6881 = vld [vmem:[%s5 + $0x370] sm:$0xff]
      %v6882 = vld [vmem:[%s5 + $0x378] sm:$0xff]
      %v6883 = vld [vmem:[%s5 + $0x380] sm:$0xff]
      %v6884 = vld [vmem:[%s5 + $0x388] sm:$0xff]
      %v6885 = vld [vmem:[%s5 + $0x390] sm:$0xff]
      %v6886 = vld [vmem:[%s5 + $0x398] sm:$0xff]
      %v6887 = vld [vmem:[%s5 + $0x3a0] sm:$0xff]
      %v6888 = vld [vmem:[%s5 + $0x3a8] sm:$0xff]
      %v6889 = vld [vmem:[%s5 + $0x3b0] sm:$0xff]
      %v6890 = vld [vmem:[%s5 + $0x3b8] sm:$0xff]
      %v6891 = vld [vmem:[%s5 + $0x3c0] sm:$0xff]
      %v6892 = vld [vmem:[%s5 + $0x3c8] sm:$0xff]
      %v6893 = vld [vmem:[%s5 + $0x3d0] sm:$0xff]
      %v6894 = vld [vmem:[%s5 + $0x3d8] sm:$0xff]
      %v6895 = vld [vmem:[%s5 + $0x3e0] sm:$0xff]
      %v6896 = vld [vmem:[%s5 + $0x3e8] sm:$0xff]
      %v6897 = vld [vmem:[%s5 + $0x3f0] sm:$0xff]
      %v6898 = vld [vmem:[%s5 + $0x3f8] sm:$0xff]
      %v6899 = vld [vmem:[%s5 + $0x400] sm:$0xff]
      %v6900 = vld [vmem:[%s5 + $0x408] sm:$0xff]
      %v6901 = vld [vmem:[%s5 + $0x410] sm:$0xff]
      %v6902 = vld [vmem:[%s5 + $0x418] sm:$0xff]
      %v6903 = vld [vmem:[%s5 + $0x420] sm:$0xff]
      %v6904 = vld [vmem:[%s5 + $0x428] sm:$0xff]
      %v6905 = vld [vmem:[%s5 + $0x430] sm:$0xff]
      %v6906 = vld [vmem:[%s5 + $0x438] sm:$0xff]
      %v6907 = vld [vmem:[%s5 + $0x440] sm:$0xff]
      %v6908 = vld [vmem:[%s5 + $0x448] sm:$0xff]
      %v6909 = vld [vmem:[%s5 + $0x450] sm:$0xff]
      %v6910 = vld [vmem:[%s5 + $0x458] sm:$0xff]
      %v6911 = vld [vmem:[%s5 + $0x460] sm:$0xff]
      %v6912 = vld [vmem:[%s5 + $0x468] sm:$0xff]
      %v6913 = vld [vmem:[%s5 + $0x470] sm:$0xff]
      %v6914 = vld [vmem:[%s5 + $0x478] sm:$0xff]
      %v6915 = vld [vmem:[%s6] sm:$0x1]
      %v6917 = vlaneseq
      %v6918 = vshrl.u32 %v6917, 7
      %v6919 = vsub.s32 0, %v6918
      %v6920 = vrot.slane %v6915, %v6919
      %6922 = vmatprep.subr.mxu0 0.0
      %6923 = vmatpush1.msra.mxu0 %v6786
      %6924 = vmatprep.subr.mxu0 0.0
      %6925 = vmatpush1.msra.mxu0 %v6785
      %6926 = vmatprep.subr.mxu0 0.0
      %6927 = vmatpush1.msra.mxu0 %v6784
      %6928 = vmatprep.subr.mxu0 0.0
      %6929 = vmatpush1.msra.mxu0 %v6783
      %6930 = vmatprep.subr.mxu0 0.0
      %6931 = vmatpush1.msra.mxu0 %v6782
      %6932 = vmatprep.subr.mxu0 0.0
      %6933 = vmatpush1.msra.mxu0 %v6781
      %6934 = vmatprep.subr.mxu0 0.0
      %6935 = vmatpush1.msra.mxu0 %v6780
      %6936 = vmatprep.subr.mxu0 0.0
      %6937 = vmatpush1.msra.mxu0 %v6779
      %6938 = vmatprep.subr.mxu0 0.0
      %6939 = vmatpush1.msra.mxu0 %v6778
      %6940 = vmatprep.subr.mxu0 0.0
      %6941 = vmatpush1.msra.mxu0 %v6777
      %6942 = vmatprep.subr.mxu0 0.0
      %6943 = vmatpush1.msra.mxu0 %v6776
      %6944 = vmatprep.subr.mxu0 0.0
      %6945 = vmatpush1.msra.mxu0 %v6775
      %6946 = vmatprep.subr.mxu0 0.0
      %6947 = vmatpush1.msra.mxu0 %v6774
      %6948 = vmatprep.subr.mxu0 0.0
      %6949 = vmatpush1.msra.mxu0 %v6773
      %6950 = vmatprep.subr.mxu0 0.0
      %6951 = vmatpush1.msra.mxu0 %v6772
      %6952 = vmatprep.subr.mxu0 0.0
      %6953 = vmatpush1.msra.mxu0 %v6771
      %6954 = vmatprep.subr.mxu0 0.0
      %6955 = vmatpush2.msra.mxu0 %v6802
      %6956 = vmatprep.subr.mxu0 0.0
      %6957 = vmatpush2.msra.mxu0 %v6801
      %6958 = vmatprep.subr.mxu0 0.0
      %6959 = vmatpush2.msra.mxu0 %v6800
      %6960 = vmatprep.subr.mxu0 0.0
      %6961 = vmatpush2.msra.mxu0 %v6799
      %6962 = vmatprep.subr.mxu0 0.0
      %6963 = vmatpush2.msra.mxu0 %v6798
      %6964 = vmatprep.subr.mxu0 0.0
      %6965 = vmatpush2.msra.mxu0 %v6797
      %6966 = vmatprep.subr.mxu0 0.0
      %6967 = vmatpush2.msra.mxu0 %v6796
      %6968 = vmatprep.subr.mxu0 0.0
      %6969 = vmatpush2.msra.mxu0 %v6795
      %6970 = vmatprep.subr.mxu0 0.0
      %6971 = vmatpush2.msra.mxu0 %v6794
      %6972 = vmatprep.subr.mxu0 0.0
      %6973 = vmatpush2.msra.mxu0 %v6793
      %6974 = vmatprep.subr.mxu0 0.0
      %6975 = vmatpush2.msra.mxu0 %v6792
      %6976 = vmatprep.subr.mxu0 0.0
      %6977 = vmatpush2.msra.mxu0 %v6791
      %6978 = vmatprep.subr.mxu0 0.0
      %6979 = vmatpush2.msra.mxu0 %v6790
      %6980 = vmatprep.subr.mxu0 0.0
      %6981 = vmatpush2.msra.mxu0 %v6789
      %6982 = vmatprep.subr.mxu0 0.0
      %6983 = vmatpush2.msra.mxu0 %v6788
      %6984 = vmatprep.subr.mxu0 0.0
      %6985 = vmatpush2.msra.mxu0 %v6787
      %6986 = vmatprep.mubr.f32.mxu0 %v6484
      %6987 = vmatmul.mubr.f32.gmra.mxu0 %v6483
      %v6988 = vpop.f32.mrf.mxu0
      %v6989 = vadd.f32 %v6920, %v6988
      %v6990 = vpop.f32.mrf.mxu0
      %6991 = vmatprep.mubr.f32.mxu0 %v6493
      %6992 = vmatmul.mubr.f32.gmra.mxu0 %v6492
      %v6993 = vpop.f32.mrf.mxu0
      %v6994 = vadd.f32 %v6920, %v6993
      %v6995 = vpop.f32.mrf.mxu0
      %6996 = vmatprep.mubr.f32.mxu0 %v6502
      %6997 = vmatmul.mubr.f32.gmra.mxu0 %v6501
      %v6998 = vpop.f32.mrf.mxu0
      %v6999 = vadd.f32 %v6920, %v6998
      %v7000 = vpop.f32.mrf.mxu0
      %7001 = vmatprep.mubr.f32.mxu0 %v6511
      %7002 = vmatmul.mubr.f32.gmra.mxu0 %v6510
      %v7003 = vpop.f32.mrf.mxu0
      %v7004 = vadd.f32 %v6920, %v7003
      %v7005 = vpop.f32.mrf.mxu0
      %7006 = vmatprep.mubr.f32.mxu0 %v6520
      %7007 = vmatmul.mubr.f32.gmra.mxu0 %v6519
      %v7008 = vpop.f32.mrf.mxu0
      %v7009 = vadd.f32 %v6920, %v7008
      %v7010 = vpop.f32.mrf.mxu0
      %7011 = vmatprep.mubr.f32.mxu0 %v6529
      %7012 = vmatmul.mubr.f32.gmra.mxu0 %v6528
      %v7013 = vpop.f32.mrf.mxu0
      %v7014 = vadd.f32 %v6920, %v7013
      %v7015 = vpop.f32.mrf.mxu0
      %7016 = vmatprep.mubr.f32.mxu0 %v6538
      %7017 = vmatmul.mubr.f32.gmra.mxu0 %v6537
      %v7018 = vpop.f32.mrf.mxu0
      %v7019 = vadd.f32 %v6920, %v7018
      %v7020 = vpop.f32.mrf.mxu0
      %7021 = vmatprep.mubr.f32.mxu0 %v6547
      %7022 = vmatmul.mubr.f32.gmra.mxu0 %v6546
      %v7023 = vpop.f32.mrf.mxu0
      %v7024 = vadd.f32 %v6920, %v7023
      %v7025 = vpop.f32.mrf.mxu0
      %7026 = vmatprep.mubr.f32.mxu0 %v6556
      %7027 = vmatmul.mubr.f32.gmra.mxu0 %v6555
      %v7028 = vpop.f32.mrf.mxu0
      %v7029 = vadd.f32 %v6920, %v7028
      %v7030 = vpop.f32.mrf.mxu0
      %7031 = vmatprep.mubr.f32.mxu0 %v6565
      %7032 = vmatmul.mubr.f32.gmra.mxu0 %v6564
      %v7033 = vpop.f32.mrf.mxu0
      %v7034 = vadd.f32 %v6920, %v7033
      %v7035 = vpop.f32.mrf.mxu0
      %7036 = vmatprep.mubr.f32.mxu0 %v6574
      %7037 = vmatmul.mubr.f32.gmra.mxu0 %v6573
      %v7038 = vpop.f32.mrf.mxu0
      %v7039 = vadd.f32 %v6920, %v7038
      %v7040 = vpop.f32.mrf.mxu0
      %7041 = vmatprep.mubr.f32.mxu0 %v6583
      %7042 = vmatmul.mubr.f32.gmra.mxu0 %v6582
      %v7043 = vpop.f32.mrf.mxu0
      %v7044 = vadd.f32 %v6920, %v7043
      %v7045 = vpop.f32.mrf.mxu0
      %7046 = vmatprep.mubr.f32.mxu0 %v6592
      %7047 = vmatmul.mubr.f32.gmra.mxu0 %v6591
      %v7048 = vpop.f32.mrf.mxu0
      %v7049 = vadd.f32 %v6920, %v7048
      %v7050 = vpop.f32.mrf.mxu0
      %7051 = vmatprep.mubr.f32.mxu0 %v6601
      %7052 = vmatmul.mubr.f32.gmra.mxu0 %v6600
      %v7053 = vpop.f32.mrf.mxu0
      %v7054 = vadd.f32 %v6920, %v7053
      %v7055 = vpop.f32.mrf.mxu0
      %7056 = vmatprep.mubr.f32.mxu0 %v6610
      %7057 = vmatmul.mubr.f32.gmra.mxu0 %v6609
      %v7058 = vpop.f32.mrf.mxu0
      %v7059 = vadd.f32 %v6920, %v7058
      %v7060 = vpop.f32.mrf.mxu0
      %7061 = vmatprep.mubr.f32.mxu0 %v6619
      %7062 = vmatmul.mubr.f32.gmra.mxu0 %v6618
      %v7063 = vpop.f32.mrf.mxu0
      %v7064 = vadd.f32 %v6920, %v7063
      %v7065 = vpop.f32.mrf.mxu0
      %7066 = vmatprep.mubr.f32.mxu0 %v6628
      %7067 = vmatmul.mubr.f32.gmra.mxu0 %v6627
      %v7068 = vpop.f32.mrf.mxu0
      %v7069 = vadd.f32 %v6920, %v7068
      %v7070 = vpop.f32.mrf.mxu0
      %7071 = vmatprep.mubr.f32.mxu0 %v6637
      %7072 = vmatmul.mubr.f32.gmra.mxu0 %v6636
      %v7073 = vpop.f32.mrf.mxu0
      %v7074 = vadd.f32 %v6920, %v7073
      %v7075 = vpop.f32.mrf.mxu0
      %7076 = vmatprep.mubr.f32.mxu0 %v6646
      %7077 = vmatmul.mubr.f32.gmra.mxu0 %v6645
      %v7078 = vpop.f32.mrf.mxu0
      %v7079 = vadd.f32 %v6920, %v7078
      %v7080 = vpop.f32.mrf.mxu0
      %7081 = vmatprep.mubr.f32.mxu0 %v6655
      %7082 = vmatmul.mubr.f32.gmra.mxu0 %v6654
      %v7083 = vpop.f32.mrf.mxu0
      %v7084 = vadd.f32 %v6920, %v7083
      %v7085 = vpop.f32.mrf.mxu0
      %7086 = vmatprep.mubr.f32.mxu0 %v6664
      %7087 = vmatmul.mubr.f32.gmra.mxu0 %v6663
      %v7088 = vpop.f32.mrf.mxu0
      %v7089 = vadd.f32 %v6920, %v7088
      %v7090 = vpop.f32.mrf.mxu0
      %7091 = vmatprep.mubr.f32.mxu0 %v6673
      %7092 = vmatmul.mubr.f32.gmra.mxu0 %v6672
      %v7093 = vpop.f32.mrf.mxu0
      %v7094 = vadd.f32 %v6920, %v7093
      %v7095 = vpop.f32.mrf.mxu0
      %7096 = vmatprep.mubr.f32.mxu0 %v6682
      %7097 = vmatmul.mubr.f32.gmra.mxu0 %v6681
      %v7098 = vpop.f32.mrf.mxu0
      %v7099 = vadd.f32 %v6920, %v7098
      %v7100 = vpop.f32.mrf.mxu0
      %7101 = vmatprep.mubr.f32.mxu0 %v6691
      %7102 = vmatmul.mubr.f32.gmra.mxu0 %v6690
      %v7103 = vpop.f32.mrf.mxu0
      %v7104 = vadd.f32 %v6920, %v7103
      %v7105 = vpop.f32.mrf.mxu0
      %7106 = vmatprep.mubr.f32.mxu0 %v6700
      %7107 = vmatmul.mubr.f32.gmra.mxu0 %v6699
      %v7108 = vpop.f32.mrf.mxu0
      %v7109 = vadd.f32 %v6920, %v7108
      %v7110 = vpop.f32.mrf.mxu0
      %7111 = vmatprep.mubr.f32.mxu0 %v6709
      %7112 = vmatmul.mubr.f32.gmra.mxu0 %v6708
      %v7113 = vpop.f32.mrf.mxu0
      %v7114 = vadd.f32 %v6920, %v7113
      %v7115 = vpop.f32.mrf.mxu0
      %7116 = vmatprep.mubr.f32.mxu0 %v6718
      %7117 = vmatmul.mubr.f32.gmra.mxu0 %v6717
      %v7118 = vpop.f32.mrf.mxu0
      %v7119 = vadd.f32 %v6920, %v7118
      %v7120 = vpop.f32.mrf.mxu0
      %7121 = vmatprep.mubr.f32.mxu0 %v6727
      %7122 = vmatmul.mubr.f32.gmra.mxu0 %v6726
      %v7123 = vpop.f32.mrf.mxu0
      %v7124 = vadd.f32 %v6920, %v7123
      %v7125 = vpop.f32.mrf.mxu0
      %7126 = vmatprep.mubr.f32.mxu0 %v6736
      %7127 = vmatmul.mubr.f32.gmra.mxu0 %v6735
      %v7128 = vpop.f32.mrf.mxu0
      %v7129 = vadd.f32 %v6920, %v7128
      %v7130 = vpop.f32.mrf.mxu0
      %7131 = vmatprep.mubr.f32.mxu0 %v6745
      %7132 = vmatmul.mubr.f32.gmra.mxu0 %v6744
      %v7133 = vpop.f32.mrf.mxu0
      %v7134 = vadd.f32 %v6920, %v7133
      %v7135 = vpop.f32.mrf.mxu0
      %7136 = vmatprep.mubr.f32.mxu0 %v6754
      %7137 = vmatmul.mubr.f32.gmra.mxu0 %v6753
      %v7138 = vpop.f32.mrf.mxu0
      %v7139 = vadd.f32 %v6920, %v7138
      %v7140 = vpop.f32.mrf.mxu0
      %7141 = vmatprep.mubr.f32.mxu0 %v6763
      %7142 = vmatmul.mubr.f32.gmra.mxu0 %v6762
      %v7143 = vpop.f32.mrf.mxu0
      %v7144 = vadd.f32 %v6920, %v7143
      %v7145 = vpop.f32.mrf.mxu0
      %7146 = vdwg.mxu0
      %7147 = vmatprep.subr.mxu0 0.0
      %7148 = vmatpush1.msra.mxu0 %v6818
      %7149 = vmatprep.subr.mxu0 0.0
      %7150 = vmatpush1.msra.mxu0 %v6817
      %7151 = vmatprep.subr.mxu0 0.0
      %7152 = vmatpush1.msra.mxu0 %v6816
      %7153 = vmatprep.subr.mxu0 0.0
      %7154 = vmatpush1.msra.mxu0 %v6815
      %7155 = vmatprep.subr.mxu0 0.0
      %7156 = vmatpush1.msra.mxu0 %v6814
      %7157 = vmatprep.subr.mxu0 0.0
      %7158 = vmatpush1.msra.mxu0 %v6813
      %7159 = vmatprep.subr.mxu0 0.0
      %7160 = vmatpush1.msra.mxu0 %v6812
      %7161 = vmatprep.subr.mxu0 0.0
      %7162 = vmatpush1.msra.mxu0 %v6811
      %7163 = vmatprep.subr.mxu0 0.0
      %7164 = vmatpush1.msra.mxu0 %v6810
      %7165 = vmatprep.subr.mxu0 0.0
      %7166 = vmatpush1.msra.mxu0 %v6809
      %7167 = vmatprep.subr.mxu0 0.0
      %7168 = vmatpush1.msra.mxu0 %v6808
      %7169 = vmatprep.subr.mxu0 0.0
      %7170 = vmatpush1.msra.mxu0 %v6807
      %7171 = vmatprep.subr.mxu0 0.0
      %7172 = vmatpush1.msra.mxu0 %v6806
      %7173 = vmatprep.subr.mxu0 0.0
      %7174 = vmatpush1.msra.mxu0 %v6805
      %7175 = vmatprep.subr.mxu0 0.0
      %7176 = vmatpush1.msra.mxu0 %v6804
      %7177 = vmatprep.subr.mxu0 0.0
      %7178 = vmatpush1.msra.mxu0 %v6803
      %7179 = vmatprep.subr.mxu0 0.0
      %7180 = vmatpush2.msra.mxu0 %v6834
      %7181 = vmatprep.subr.mxu0 0.0
      %7182 = vmatpush2.msra.mxu0 %v6833
      %7183 = vmatprep.subr.mxu0 0.0
      %7184 = vmatpush2.msra.mxu0 %v6832
      %7185 = vmatprep.subr.mxu0 0.0
      %7186 = vmatpush2.msra.mxu0 %v6831
      %7187 = vmatprep.subr.mxu0 0.0
      %7188 = vmatpush2.msra.mxu0 %v6830
      %7189 = vmatprep.subr.mxu0 0.0
      %7190 = vmatpush2.msra.mxu0 %v6829
      %7191 = vmatprep.subr.mxu0 0.0
      %7192 = vmatpush2.msra.mxu0 %v6828
      %7193 = vmatprep.subr.mxu0 0.0
      %7194 = vmatpush2.msra.mxu0 %v6827
      %7195 = vmatprep.subr.mxu0 0.0
      %7196 = vmatpush2.msra.mxu0 %v6826
      %7197 = vmatprep.subr.mxu0 0.0
      %7198 = vmatpush2.msra.mxu0 %v6825
      %7199 = vmatprep.subr.mxu0 0.0
      %7200 = vmatpush2.msra.mxu0 %v6824
      %7201 = vmatprep.subr.mxu0 0.0
      %7202 = vmatpush2.msra.mxu0 %v6823
      %7203 = vmatprep.subr.mxu0 0.0
      %7204 = vmatpush2.msra.mxu0 %v6822
      %7205 = vmatprep.subr.mxu0 0.0
      %7206 = vmatpush2.msra.mxu0 %v6821
      %7207 = vmatprep.subr.mxu0 0.0
      %7208 = vmatpush2.msra.mxu0 %v6820
      %7209 = vmatprep.subr.mxu0 0.0
      %7210 = vmatpush2.msra.mxu0 %v6819
      %7211 = vmatprep.mubr.f32.mxu0 %v6486
      %7212 = vmatmul.mubr.f32.gmra.mxu0 %v6485
      %v7213 = vpop.f32.mrf.mxu0
      %v7214 = vadd.f32 %v6989, %v7213
      %v7215 = vpop.f32.mrf.mxu0
      %7216 = vmatprep.mubr.f32.mxu0 %v6495
      %7217 = vmatmul.mubr.f32.gmra.mxu0 %v6494
      %v7218 = vpop.f32.mrf.mxu0
      %v7219 = vadd.f32 %v6994, %v7218
      %v7220 = vpop.f32.mrf.mxu0
      %7221 = vmatprep.mubr.f32.mxu0 %v6504
      %7222 = vmatmul.mubr.f32.gmra.mxu0 %v6503
      %v7223 = vpop.f32.mrf.mxu0
      %v7224 = vadd.f32 %v6999, %v7223
      %v7225 = vpop.f32.mrf.mxu0
      %7226 = vmatprep.mubr.f32.mxu0 %v6513
      %7227 = vmatmul.mubr.f32.gmra.mxu0 %v6512
      %v7228 = vpop.f32.mrf.mxu0
      %v7229 = vadd.f32 %v7004, %v7228
      %v7230 = vpop.f32.mrf.mxu0
      %7231 = vmatprep.mubr.f32.mxu0 %v6522
      %7232 = vmatmul.mubr.f32.gmra.mxu0 %v6521
      %v7233 = vpop.f32.mrf.mxu0
      %v7234 = vadd.f32 %v7009, %v7233
      %v7235 = vpop.f32.mrf.mxu0
      %7236 = vmatprep.mubr.f32.mxu0 %v6531
      %7237 = vmatmul.mubr.f32.gmra.mxu0 %v6530
      %v7238 = vpop.f32.mrf.mxu0
      %v7239 = vadd.f32 %v7014, %v7238
      %v7240 = vpop.f32.mrf.mxu0
      %7241 = vmatprep.mubr.f32.mxu0 %v6540
      %7242 = vmatmul.mubr.f32.gmra.mxu0 %v6539
      %v7243 = vpop.f32.mrf.mxu0
      %v7244 = vadd.f32 %v7019, %v7243
      %v7245 = vpop.f32.mrf.mxu0
      %7246 = vmatprep.mubr.f32.mxu0 %v6549
      %7247 = vmatmul.mubr.f32.gmra.mxu0 %v6548
      %v7248 = vpop.f32.mrf.mxu0
      %v7249 = vadd.f32 %v7024, %v7248
      %v7250 = vpop.f32.mrf.mxu0
      %7251 = vmatprep.mubr.f32.mxu0 %v6558
      %7252 = vmatmul.mubr.f32.gmra.mxu0 %v6557
      %v7253 = vpop.f32.mrf.mxu0
      %v7254 = vadd.f32 %v7029, %v7253
      %v7255 = vpop.f32.mrf.mxu0
      %7256 = vmatprep.mubr.f32.mxu0 %v6567
      %7257 = vmatmul.mubr.f32.gmra.mxu0 %v6566
      %v7258 = vpop.f32.mrf.mxu0
      %v7259 = vadd.f32 %v7034, %v7258
      %v7260 = vpop.f32.mrf.mxu0
      %7261 = vmatprep.mubr.f32.mxu0 %v6576
      %7262 = vmatmul.mubr.f32.gmra.mxu0 %v6575
      %v7263 = vpop.f32.mrf.mxu0
      %v7264 = vadd.f32 %v7039, %v7263
      %v7265 = vpop.f32.mrf.mxu0
      %7266 = vmatprep.mubr.f32.mxu0 %v6585
      %7267 = vmatmul.mubr.f32.gmra.mxu0 %v6584
      %v7268 = vpop.f32.mrf.mxu0
      %v7269 = vadd.f32 %v7044, %v7268
      %v7270 = vpop.f32.mrf.mxu0
      %7271 = vmatprep.mubr.f32.mxu0 %v6594
      %7272 = vmatmul.mubr.f32.gmra.mxu0 %v6593
      %v7273 = vpop.f32.mrf.mxu0
      %v7274 = vadd.f32 %v7049, %v7273
      %v7275 = vpop.f32.mrf.mxu0
      %7276 = vmatprep.mubr.f32.mxu0 %v6603
      %7277 = vmatmul.mubr.f32.gmra.mxu0 %v6602
      %v7278 = vpop.f32.mrf.mxu0
      %v7279 = vadd.f32 %v7054, %v7278
      %v7280 = vpop.f32.mrf.mxu0
      %7281 = vmatprep.mubr.f32.mxu0 %v6612
      %7282 = vmatmul.mubr.f32.gmra.mxu0 %v6611
      %v7283 = vpop.f32.mrf.mxu0
      %v7284 = vadd.f32 %v7059, %v7283
      %v7285 = vpop.f32.mrf.mxu0
      %7286 = vmatprep.mubr.f32.mxu0 %v6621
      %7287 = vmatmul.mubr.f32.gmra.mxu0 %v6620
      %v7288 = vpop.f32.mrf.mxu0
      %v7289 = vadd.f32 %v7064, %v7288
      %v7290 = vpop.f32.mrf.mxu0
      %7291 = vmatprep.mubr.f32.mxu0 %v6630
      %7292 = vmatmul.mubr.f32.gmra.mxu0 %v6629
      %v7293 = vpop.f32.mrf.mxu0
      %v7294 = vadd.f32 %v7069, %v7293
      %v7295 = vpop.f32.mrf.mxu0
      %7296 = vmatprep.mubr.f32.mxu0 %v6639
      %7297 = vmatmul.mubr.f32.gmra.mxu0 %v6638
      %v7298 = vpop.f32.mrf.mxu0
      %v7299 = vadd.f32 %v7074, %v7298
      %v7300 = vpop.f32.mrf.mxu0
      %7301 = vmatprep.mubr.f32.mxu0 %v6648
      %7302 = vmatmul.mubr.f32.gmra.mxu0 %v6647
      %v7303 = vpop.f32.mrf.mxu0
      %v7304 = vadd.f32 %v7079, %v7303
      %v7305 = vpop.f32.mrf.mxu0
      %7306 = vmatprep.mubr.f32.mxu0 %v6657
      %7307 = vmatmul.mubr.f32.gmra.mxu0 %v6656
      %v7308 = vpop.f32.mrf.mxu0
      %v7309 = vadd.f32 %v7084, %v7308
      %v7310 = vpop.f32.mrf.mxu0
      %7311 = vmatprep.mubr.f32.mxu0 %v6666
      %7312 = vmatmul.mubr.f32.gmra.mxu0 %v6665
      %v7313 = vpop.f32.mrf.mxu0
      %v7314 = vadd.f32 %v7089, %v7313
      %v7315 = vpop.f32.mrf.mxu0
      %7316 = vmatprep.mubr.f32.mxu0 %v6675
      %7317 = vmatmul.mubr.f32.gmra.mxu0 %v6674
      %v7318 = vpop.f32.mrf.mxu0
      %v7319 = vadd.f32 %v7094, %v7318
      %v7320 = vpop.f32.mrf.mxu0
      %7321 = vmatprep.mubr.f32.mxu0 %v6684
      %7322 = vmatmul.mubr.f32.gmra.mxu0 %v6683
      %v7323 = vpop.f32.mrf.mxu0
      %v7324 = vadd.f32 %v7099, %v7323
      %v7325 = vpop.f32.mrf.mxu0
      %7326 = vmatprep.mubr.f32.mxu0 %v6693
      %7327 = vmatmul.mubr.f32.gmra.mxu0 %v6692
      %v7328 = vpop.f32.mrf.mxu0
      %v7329 = vadd.f32 %v7104, %v7328
      %v7330 = vpop.f32.mrf.mxu0
      %7331 = vmatprep.mubr.f32.mxu0 %v6702
      %7332 = vmatmul.mubr.f32.gmra.mxu0 %v6701
      %v7333 = vpop.f32.mrf.mxu0
      %v7334 = vadd.f32 %v7109, %v7333
      %v7335 = vpop.f32.mrf.mxu0
      %7336 = vmatprep.mubr.f32.mxu0 %v6711
      %7337 = vmatmul.mubr.f32.gmra.mxu0 %v6710
      %v7338 = vpop.f32.mrf.mxu0
      %v7339 = vadd.f32 %v7114, %v7338
      %v7340 = vpop.f32.mrf.mxu0
      %7341 = vmatprep.mubr.f32.mxu0 %v6720
      %7342 = vmatmul.mubr.f32.gmra.mxu0 %v6719
      %v7343 = vpop.f32.mrf.mxu0
      %v7344 = vadd.f32 %v7119, %v7343
      %v7345 = vpop.f32.mrf.mxu0
      %7346 = vmatprep.mubr.f32.mxu0 %v6729
      %7347 = vmatmul.mubr.f32.gmra.mxu0 %v6728
      %v7348 = vpop.f32.mrf.mxu0
      %v7349 = vadd.f32 %v7124, %v7348
      %v7350 = vpop.f32.mrf.mxu0
      %7351 = vmatprep.mubr.f32.mxu0 %v6738
      %7352 = vmatmul.mubr.f32.gmra.mxu0 %v6737
      %v7353 = vpop.f32.mrf.mxu0
      %v7354 = vadd.f32 %v7129, %v7353
      %v7355 = vpop.f32.mrf.mxu0
      %7356 = vmatprep.mubr.f32.mxu0 %v6747
      %7357 = vmatmul.mubr.f32.gmra.mxu0 %v6746
      %v7358 = vpop.f32.mrf.mxu0
      %v7359 = vadd.f32 %v7134, %v7358
      %v7360 = vpop.f32.mrf.mxu0
      %7361 = vmatprep.mubr.f32.mxu0 %v6756
      %7362 = vmatmul.mubr.f32.gmra.mxu0 %v6755
      %v7363 = vpop.f32.mrf.mxu0
      %v7364 = vadd.f32 %v7139, %v7363
      %v7365 = vpop.f32.mrf.mxu0
      %7366 = vmatprep.mubr.f32.mxu0 %v6765
      %7367 = vmatmul.mubr.f32.gmra.mxu0 %v6764
      %v7368 = vpop.f32.mrf.mxu0
      %v7369 = vadd.f32 %v7144, %v7368
      %v7370 = vpop.f32.mrf.mxu0
      %7371 = vdwg.mxu0
      %7372 = vmatprep.subr.mxu0 0.0
      %7373 = vmatpush1.msra.mxu0 %v6850
      %7374 = vmatprep.subr.mxu0 0.0
      %7375 = vmatpush1.msra.mxu0 %v6849
      %7376 = vmatprep.subr.mxu0 0.0
      %7377 = vmatpush1.msra.mxu0 %v6848
      %7378 = vmatprep.subr.mxu0 0.0
      %7379 = vmatpush1.msra.mxu0 %v6847
      %7380 = vmatprep.subr.mxu0 0.0
      %7381 = vmatpush1.msra.mxu0 %v6846
      %7382 = vmatprep.subr.mxu0 0.0
      %7383 = vmatpush1.msra.mxu0 %v6845
      %7384 = vmatprep.subr.mxu0 0.0
      %7385 = vmatpush1.msra.mxu0 %v6844
      %7386 = vmatprep.subr.mxu0 0.0
      %7387 = vmatpush1.msra.mxu0 %v6843
      %7388 = vmatprep.subr.mxu0 0.0
      %7389 = vmatpush1.msra.mxu0 %v6842
      %7390 = vmatprep.subr.mxu0 0.0
      %7391 = vmatpush1.msra.mxu0 %v6841
      %7392 = vmatprep.subr.mxu0 0.0
      %7393 = vmatpush1.msra.mxu0 %v6840
      %7394 = vmatprep.subr.mxu0 0.0
      %7395 = vmatpush1.msra.mxu0 %v6839
      %7396 = vmatprep.subr.mxu0 0.0
      %7397 = vmatpush1.msra.mxu0 %v6838
      %7398 = vmatprep.subr.mxu0 0.0
      %7399 = vmatpush1.msra.mxu0 %v6837
      %7400 = vmatprep.subr.mxu0 0.0
      %7401 = vmatpush1.msra.mxu0 %v6836
      %7402 = vmatprep.subr.mxu0 0.0
      %7403 = vmatpush1.msra.mxu0 %v6835
      %7404 = vmatprep.subr.mxu0 0.0
      %7405 = vmatpush2.msra.mxu0 %v6866
      %7406 = vmatprep.subr.mxu0 0.0
      %7407 = vmatpush2.msra.mxu0 %v6865
      %7408 = vmatprep.subr.mxu0 0.0
      %7409 = vmatpush2.msra.mxu0 %v6864
      %7410 = vmatprep.subr.mxu0 0.0
      %7411 = vmatpush2.msra.mxu0 %v6863
      %7412 = vmatprep.subr.mxu0 0.0
      %7413 = vmatpush2.msra.mxu0 %v6862
      %7414 = vmatprep.subr.mxu0 0.0
      %7415 = vmatpush2.msra.mxu0 %v6861
      %7416 = vmatprep.subr.mxu0 0.0
      %7417 = vmatpush2.msra.mxu0 %v6860
      %7418 = vmatprep.subr.mxu0 0.0
      %7419 = vmatpush2.msra.mxu0 %v6859
      %7420 = vmatprep.subr.mxu0 0.0
      %7421 = vmatpush2.msra.mxu0 %v6858
      %7422 = vmatprep.subr.mxu0 0.0
      %7423 = vmatpush2.msra.mxu0 %v6857
      %7424 = vmatprep.subr.mxu0 0.0
      %7425 = vmatpush2.msra.mxu0 %v6856
      %7426 = vmatprep.subr.mxu0 0.0
      %7427 = vmatpush2.msra.mxu0 %v6855
      %7428 = vmatprep.subr.mxu0 0.0
      %7429 = vmatpush2.msra.mxu0 %v6854
      %7430 = vmatprep.subr.mxu0 0.0
      %7431 = vmatpush2.msra.mxu0 %v6853
      %7432 = vmatprep.subr.mxu0 0.0
      %7433 = vmatpush2.msra.mxu0 %v6852
      %7434 = vmatprep.subr.mxu0 0.0
      %7435 = vmatpush2.msra.mxu0 %v6851
      %7436 = vmatprep.mubr.f32.mxu0 %v6488
      %7437 = vmatmul.mubr.f32.gmra.mxu0 %v6487
      %v7438 = vpop.f32.mrf.mxu0
      %v7439 = vadd.f32 %v7214, %v7438
      %v7440 = vpop.f32.mrf.mxu0
      %7441 = vmatprep.mubr.f32.mxu0 %v6497
      %7442 = vmatmul.mubr.f32.gmra.mxu0 %v6496
      %v7443 = vpop.f32.mrf.mxu0
      %v7444 = vadd.f32 %v7219, %v7443
      %v7445 = vpop.f32.mrf.mxu0
      %7446 = vmatprep.mubr.f32.mxu0 %v6506
      %7447 = vmatmul.mubr.f32.gmra.mxu0 %v6505
      %v7448 = vpop.f32.mrf.mxu0
      %v7449 = vadd.f32 %v7224, %v7448
      %v7450 = vpop.f32.mrf.mxu0
      %7451 = vmatprep.mubr.f32.mxu0 %v6515
      %7452 = vmatmul.mubr.f32.gmra.mxu0 %v6514
      %v7453 = vpop.f32.mrf.mxu0
      %v7454 = vadd.f32 %v7229, %v7453
      %v7455 = vpop.f32.mrf.mxu0
      %7456 = vmatprep.mubr.f32.mxu0 %v6524
      %7457 = vmatmul.mubr.f32.gmra.mxu0 %v6523
      %v7458 = vpop.f32.mrf.mxu0
      %v7459 = vadd.f32 %v7234, %v7458
      %v7460 = vpop.f32.mrf.mxu0
      %7461 = vmatprep.mubr.f32.mxu0 %v6533
      %7462 = vmatmul.mubr.f32.gmra.mxu0 %v6532
      %v7463 = vpop.f32.mrf.mxu0
      %v7464 = vadd.f32 %v7239, %v7463
      %v7465 = vpop.f32.mrf.mxu0
      %7466 = vmatprep.mubr.f32.mxu0 %v6542
      %7467 = vmatmul.mubr.f32.gmra.mxu0 %v6541
      %v7468 = vpop.f32.mrf.mxu0
      %v7469 = vadd.f32 %v7244, %v7468
      %v7470 = vpop.f32.mrf.mxu0
      %7471 = vmatprep.mubr.f32.mxu0 %v6551
      %7472 = vmatmul.mubr.f32.gmra.mxu0 %v6550
      %v7473 = vpop.f32.mrf.mxu0
      %v7474 = vadd.f32 %v7249, %v7473
      %v7475 = vpop.f32.mrf.mxu0
      %7476 = vmatprep.mubr.f32.mxu0 %v6560
      %7477 = vmatmul.mubr.f32.gmra.mxu0 %v6559
      %v7478 = vpop.f32.mrf.mxu0
      %v7479 = vadd.f32 %v7254, %v7478
      %v7480 = vpop.f32.mrf.mxu0
      %7481 = vmatprep.mubr.f32.mxu0 %v6569
      %7482 = vmatmul.mubr.f32.gmra.mxu0 %v6568
      %v7483 = vpop.f32.mrf.mxu0
      %v7484 = vadd.f32 %v7259, %v7483
      %v7485 = vpop.f32.mrf.mxu0
      %7486 = vmatprep.mubr.f32.mxu0 %v6578
      %7487 = vmatmul.mubr.f32.gmra.mxu0 %v6577
      %v7488 = vpop.f32.mrf.mxu0
      %v7489 = vadd.f32 %v7264, %v7488
      %v7490 = vpop.f32.mrf.mxu0
      %7491 = vmatprep.mubr.f32.mxu0 %v6587
      %7492 = vmatmul.mubr.f32.gmra.mxu0 %v6586
      %v7493 = vpop.f32.mrf.mxu0
      %v7494 = vadd.f32 %v7269, %v7493
      %v7495 = vpop.f32.mrf.mxu0
      %7496 = vmatprep.mubr.f32.mxu0 %v6596
      %7497 = vmatmul.mubr.f32.gmra.mxu0 %v6595
      %v7498 = vpop.f32.mrf.mxu0
      %v7499 = vadd.f32 %v7274, %v7498
      %v7500 = vpop.f32.mrf.mxu0
      %7501 = vmatprep.mubr.f32.mxu0 %v6605
      %7502 = vmatmul.mubr.f32.gmra.mxu0 %v6604
      %v7503 = vpop.f32.mrf.mxu0
      %v7504 = vadd.f32 %v7279, %v7503
      %v7505 = vpop.f32.mrf.mxu0
      %7506 = vmatprep.mubr.f32.mxu0 %v6614
      %7507 = vmatmul.mubr.f32.gmra.mxu0 %v6613
      %v7508 = vpop.f32.mrf.mxu0
      %v7509 = vadd.f32 %v7284, %v7508
      %v7510 = vpop.f32.mrf.mxu0
      %7511 = vmatprep.mubr.f32.mxu0 %v6623
      %7512 = vmatmul.mubr.f32.gmra.mxu0 %v6622
      %v7513 = vpop.f32.mrf.mxu0
      %v7514 = vadd.f32 %v7289, %v7513
      %v7515 = vpop.f32.mrf.mxu0
      %7516 = vmatprep.mubr.f32.mxu0 %v6632
      %7517 = vmatmul.mubr.f32.gmra.mxu0 %v6631
      %v7518 = vpop.f32.mrf.mxu0
      %v7519 = vadd.f32 %v7294, %v7518
      %v7520 = vpop.f32.mrf.mxu0
      %7521 = vmatprep.mubr.f32.mxu0 %v6641
      %7522 = vmatmul.mubr.f32.gmra.mxu0 %v6640
      %v7523 = vpop.f32.mrf.mxu0
      %v7524 = vadd.f32 %v7299, %v7523
      %v7525 = vpop.f32.mrf.mxu0
      %7526 = vmatprep.mubr.f32.mxu0 %v6650
      %7527 = vmatmul.mubr.f32.gmra.mxu0 %v6649
      %v7528 = vpop.f32.mrf.mxu0
      %v7529 = vadd.f32 %v7304, %v7528
      %v7530 = vpop.f32.mrf.mxu0
      %7531 = vmatprep.mubr.f32.mxu0 %v6659
      %7532 = vmatmul.mubr.f32.gmra.mxu0 %v6658
      %v7533 = vpop.f32.mrf.mxu0
      %v7534 = vadd.f32 %v7309, %v7533
      %v7535 = vpop.f32.mrf.mxu0
      %7536 = vmatprep.mubr.f32.mxu0 %v6668
      %7537 = vmatmul.mubr.f32.gmra.mxu0 %v6667
      %v7538 = vpop.f32.mrf.mxu0
      %v7539 = vadd.f32 %v7314, %v7538
      %v7540 = vpop.f32.mrf.mxu0
      %7541 = vmatprep.mubr.f32.mxu0 %v6677
      %7542 = vmatmul.mubr.f32.gmra.mxu0 %v6676
      %v7543 = vpop.f32.mrf.mxu0
      %v7544 = vadd.f32 %v7319, %v7543
      %v7545 = vpop.f32.mrf.mxu0
      %7546 = vmatprep.mubr.f32.mxu0 %v6686
      %7547 = vmatmul.mubr.f32.gmra.mxu0 %v6685
      %v7548 = vpop.f32.mrf.mxu0
      %v7549 = vadd.f32 %v7324, %v7548
      %v7550 = vpop.f32.mrf.mxu0
      %7551 = vmatprep.mubr.f32.mxu0 %v6695
      %7552 = vmatmul.mubr.f32.gmra.mxu0 %v6694
      %v7553 = vpop.f32.mrf.mxu0
      %v7554 = vadd.f32 %v7329, %v7553
      %v7555 = vpop.f32.mrf.mxu0
      %7556 = vmatprep.mubr.f32.mxu0 %v6704
      %7557 = vmatmul.mubr.f32.gmra.mxu0 %v6703
      %v7558 = vpop.f32.mrf.mxu0
      %v7559 = vadd.f32 %v7334, %v7558
      %v7560 = vpop.f32.mrf.mxu0
      %7561 = vmatprep.mubr.f32.mxu0 %v6713
      %7562 = vmatmul.mubr.f32.gmra.mxu0 %v6712
      %v7563 = vpop.f32.mrf.mxu0
      %v7564 = vadd.f32 %v7339, %v7563
      %v7565 = vpop.f32.mrf.mxu0
      %7566 = vmatprep.mubr.f32.mxu0 %v6722
      %7567 = vmatmul.mubr.f32.gmra.mxu0 %v6721
      %v7568 = vpop.f32.mrf.mxu0
      %v7569 = vadd.f32 %v7344, %v7568
      %v7570 = vpop.f32.mrf.mxu0
      %7571 = vmatprep.mubr.f32.mxu0 %v6731
      %7572 = vmatmul.mubr.f32.gmra.mxu0 %v6730
      %v7573 = vpop.f32.mrf.mxu0
      %v7574 = vadd.f32 %v7349, %v7573
      %v7575 = vpop.f32.mrf.mxu0
      %7576 = vmatprep.mubr.f32.mxu0 %v6740
      %7577 = vmatmul.mubr.f32.gmra.mxu0 %v6739
      %v7578 = vpop.f32.mrf.mxu0
      %v7579 = vadd.f32 %v7354, %v7578
      %v7580 = vpop.f32.mrf.mxu0
      %7581 = vmatprep.mubr.f32.mxu0 %v6749
      %7582 = vmatmul.mubr.f32.gmra.mxu0 %v6748
      %v7583 = vpop.f32.mrf.mxu0
      %v7584 = vadd.f32 %v7359, %v7583
      %v7585 = vpop.f32.mrf.mxu0
      %7586 = vmatprep.mubr.f32.mxu0 %v6758
      %7587 = vmatmul.mubr.f32.gmra.mxu0 %v6757
      %v7588 = vpop.f32.mrf.mxu0
      %v7589 = vadd.f32 %v7364, %v7588
      %v7590 = vpop.f32.mrf.mxu0
      %7591 = vmatprep.mubr.f32.mxu0 %v6767
      %7592 = vmatmul.mubr.f32.gmra.mxu0 %v6766
      %v7593 = vpop.f32.mrf.mxu0
      %v7594 = vadd.f32 %v7369, %v7593
      %v7595 = vpop.f32.mrf.mxu0
      %7596 = vdwg.mxu0
      %7597 = vmatprep.subr.mxu0 0.0
      %7598 = vmatpush1.msra.mxu0 %v6882
      %7599 = vmatprep.subr.mxu0 0.0
      %7600 = vmatpush1.msra.mxu0 %v6881
      %7601 = vmatprep.subr.mxu0 0.0
      %7602 = vmatpush1.msra.mxu0 %v6880
      %7603 = vmatprep.subr.mxu0 0.0
      %7604 = vmatpush1.msra.mxu0 %v6879
      %7605 = vmatprep.subr.mxu0 0.0
      %7606 = vmatpush1.msra.mxu0 %v6878
      %7607 = vmatprep.subr.mxu0 0.0
      %7608 = vmatpush1.msra.mxu0 %v6877
      %7609 = vmatprep.subr.mxu0 0.0
      %7610 = vmatpush1.msra.mxu0 %v6876
      %7611 = vmatprep.subr.mxu0 0.0
      %7612 = vmatpush1.msra.mxu0 %v6875
      %7613 = vmatprep.subr.mxu0 0.0
      %7614 = vmatpush1.msra.mxu0 %v6874
      %7615 = vmatprep.subr.mxu0 0.0
      %7616 = vmatpush1.msra.mxu0 %v6873
      %7617 = vmatprep.subr.mxu0 0.0
      %7618 = vmatpush1.msra.mxu0 %v6872
      %7619 = vmatprep.subr.mxu0 0.0
      %7620 = vmatpush1.msra.mxu0 %v6871
      %7621 = vmatprep.subr.mxu0 0.0
      %7622 = vmatpush1.msra.mxu0 %v6870
      %7623 = vmatprep.subr.mxu0 0.0
      %7624 = vmatpush1.msra.mxu0 %v6869
      %7625 = vmatprep.subr.mxu0 0.0
      %7626 = vmatpush1.msra.mxu0 %v6868
      %7627 = vmatprep.subr.mxu0 0.0
      %7628 = vmatpush1.msra.mxu0 %v6867
      %7629 = vmatprep.subr.mxu0 0.0
      %7630 = vmatpush2.msra.mxu0 %v6898
      %7631 = vmatprep.subr.mxu0 0.0
      %7632 = vmatpush2.msra.mxu0 %v6897
      %7633 = vmatprep.subr.mxu0 0.0
      %7634 = vmatpush2.msra.mxu0 %v6896
      %7635 = vmatprep.subr.mxu0 0.0
      %7636 = vmatpush2.msra.mxu0 %v6895
      %7637 = vmatprep.subr.mxu0 0.0
      %7638 = vmatpush2.msra.mxu0 %v6894
      %7639 = vmatprep.subr.mxu0 0.0
      %7640 = vmatpush2.msra.mxu0 %v6893
      %7641 = vmatprep.subr.mxu0 0.0
      %7642 = vmatpush2.msra.mxu0 %v6892
      %7643 = vmatprep.subr.mxu0 0.0
      %7644 = vmatpush2.msra.mxu0 %v6891
      %7645 = vmatprep.subr.mxu0 0.0
      %7646 = vmatpush2.msra.mxu0 %v6890
      %7647 = vmatprep.subr.mxu0 0.0
      %7648 = vmatpush2.msra.mxu0 %v6889
      %7649 = vmatprep.subr.mxu0 0.0
      %7650 = vmatpush2.msra.mxu0 %v6888
      %7651 = vmatprep.subr.mxu0 0.0
      %7652 = vmatpush2.msra.mxu0 %v6887
      %7653 = vmatprep.subr.mxu0 0.0
      %7654 = vmatpush2.msra.mxu0 %v6886
      %7655 = vmatprep.subr.mxu0 0.0
      %7656 = vmatpush2.msra.mxu0 %v6885
      %7657 = vmatprep.subr.mxu0 0.0
      %7658 = vmatpush2.msra.mxu0 %v6884
      %7659 = vmatprep.subr.mxu0 0.0
      %7660 = vmatpush2.msra.mxu0 %v6883
      %7661 = vmatprep.mubr.f32.mxu0 %v6490
      %7662 = vmatmul.mubr.f32.gmra.mxu0 %v6489
      %v7663 = vpop.f32.mrf.mxu0
      %v7664 = vadd.f32 %v7439, %v7663
      %v7665 = vpop.f32.mrf.mxu0
      %7666 = vmatprep.mubr.f32.mxu0 %v6499
      %7667 = vmatmul.mubr.f32.gmra.mxu0 %v6498
      %v7668 = vpop.f32.mrf.mxu0
      %v7669 = vadd.f32 %v7444, %v7668
      %v7670 = vpop.f32.mrf.mxu0
      %7671 = vmatprep.mubr.f32.mxu0 %v6508
      %7672 = vmatmul.mubr.f32.gmra.mxu0 %v6507
      %v7673 = vpop.f32.mrf.mxu0
      %v7674 = vadd.f32 %v7449, %v7673
      %v7675 = vpop.f32.mrf.mxu0
      %7676 = vmatprep.mubr.f32.mxu0 %v6517
      %7677 = vmatmul.mubr.f32.gmra.mxu0 %v6516
      %v7678 = vpop.f32.mrf.mxu0
      %v7679 = vadd.f32 %v7454, %v7678
      %v7680 = vpop.f32.mrf.mxu0
      %7681 = vmatprep.mubr.f32.mxu0 %v6526
      %7682 = vmatmul.mubr.f32.gmra.mxu0 %v6525
      %v7683 = vpop.f32.mrf.mxu0
      %v7684 = vadd.f32 %v7459, %v7683
      %v7685 = vpop.f32.mrf.mxu0
      %7686 = vmatprep.mubr.f32.mxu0 %v6535
      %7687 = vmatmul.mubr.f32.gmra.mxu0 %v6534
      %v7688 = vpop.f32.mrf.mxu0
      %v7689 = vadd.f32 %v7464, %v7688
      %v7690 = vpop.f32.mrf.mxu0
      %7691 = vmatprep.mubr.f32.mxu0 %v6544
      %7692 = vmatmul.mubr.f32.gmra.mxu0 %v6543
      %v7693 = vpop.f32.mrf.mxu0
      %v7694 = vadd.f32 %v7469, %v7693
      %v7695 = vpop.f32.mrf.mxu0
      %7696 = vmatprep.mubr.f32.mxu0 %v6553
      %7697 = vmatmul.mubr.f32.gmra.mxu0 %v6552
      %v7698 = vpop.f32.mrf.mxu0
      %v7699 = vadd.f32 %v7474, %v7698
      %v7700 = vpop.f32.mrf.mxu0
      %7701 = vmatprep.mubr.f32.mxu0 %v6562
      %7702 = vmatmul.mubr.f32.gmra.mxu0 %v6561
      %v7703 = vpop.f32.mrf.mxu0
      %v7704 = vadd.f32 %v7479, %v7703
      %v7705 = vpop.f32.mrf.mxu0
      %7706 = vmatprep.mubr.f32.mxu0 %v6571
      %7707 = vmatmul.mubr.f32.gmra.mxu0 %v6570
      %v7708 = vpop.f32.mrf.mxu0
      %v7709 = vadd.f32 %v7484, %v7708
      %v7710 = vpop.f32.mrf.mxu0
      %7711 = vmatprep.mubr.f32.mxu0 %v6580
      %7712 = vmatmul.mubr.f32.gmra.mxu0 %v6579
      %v7713 = vpop.f32.mrf.mxu0
      %v7714 = vadd.f32 %v7489, %v7713
      %v7715 = vpop.f32.mrf.mxu0
      %7716 = vmatprep.mubr.f32.mxu0 %v6589
      %7717 = vmatmul.mubr.f32.gmra.mxu0 %v6588
      %v7718 = vpop.f32.mrf.mxu0
      %v7719 = vadd.f32 %v7494, %v7718
      %v7720 = vpop.f32.mrf.mxu0
      %7721 = vmatprep.mubr.f32.mxu0 %v6598
      %7722 = vmatmul.mubr.f32.gmra.mxu0 %v6597
      %v7723 = vpop.f32.mrf.mxu0
      %v7724 = vadd.f32 %v7499, %v7723
      %v7725 = vpop.f32.mrf.mxu0
      %7726 = vmatprep.mubr.f32.mxu0 %v6607
      %7727 = vmatmul.mubr.f32.gmra.mxu0 %v6606
      %v7728 = vpop.f32.mrf.mxu0
      %v7729 = vadd.f32 %v7504, %v7728
      %v7730 = vpop.f32.mrf.mxu0
      %7731 = vmatprep.mubr.f32.mxu0 %v6616
      %7732 = vmatmul.mubr.f32.gmra.mxu0 %v6615
      %v7733 = vpop.f32.mrf.mxu0
      %v7734 = vadd.f32 %v7509, %v7733
      %v7735 = vpop.f32.mrf.mxu0
      %7736 = vmatprep.mubr.f32.mxu0 %v6625
      %7737 = vmatmul.mubr.f32.gmra.mxu0 %v6624
      %v7738 = vpop.f32.mrf.mxu0
      %v7739 = vadd.f32 %v7514, %v7738
      %v7740 = vpop.f32.mrf.mxu0
      %7741 = vmatprep.mubr.f32.mxu0 %v6634
      %7742 = vmatmul.mubr.f32.gmra.mxu0 %v6633
      %v7743 = vpop.f32.mrf.mxu0
      %v7744 = vadd.f32 %v7519, %v7743
      %v7745 = vpop.f32.mrf.mxu0
      %7746 = vmatprep.mubr.f32.mxu0 %v6643
      %7747 = vmatmul.mubr.f32.gmra.mxu0 %v6642
      %v7748 = vpop.f32.mrf.mxu0
      %v7749 = vadd.f32 %v7524, %v7748
      %v7750 = vpop.f32.mrf.mxu0
      %7751 = vmatprep.mubr.f32.mxu0 %v6652
      %7752 = vmatmul.mubr.f32.gmra.mxu0 %v6651
      %v7753 = vpop.f32.mrf.mxu0
      %v7754 = vadd.f32 %v7529, %v7753
      %v7755 = vpop.f32.mrf.mxu0
      %7756 = vmatprep.mubr.f32.mxu0 %v6661
      %7757 = vmatmul.mubr.f32.gmra.mxu0 %v6660
      %v7758 = vpop.f32.mrf.mxu0
      %v7759 = vadd.f32 %v7534, %v7758
      %v7760 = vpop.f32.mrf.mxu0
      %7761 = vmatprep.mubr.f32.mxu0 %v6670
      %7762 = vmatmul.mubr.f32.gmra.mxu0 %v6669
      %v7763 = vpop.f32.mrf.mxu0
      %v7764 = vadd.f32 %v7539, %v7763
      %v7765 = vpop.f32.mrf.mxu0
      %7766 = vmatprep.mubr.f32.mxu0 %v6679
      %7767 = vmatmul.mubr.f32.gmra.mxu0 %v6678
      %v7768 = vpop.f32.mrf.mxu0
      %v7769 = vadd.f32 %v7544, %v7768
      %v7770 = vpop.f32.mrf.mxu0
      %7771 = vmatprep.mubr.f32.mxu0 %v6688
      %7772 = vmatmul.mubr.f32.gmra.mxu0 %v6687
      %v7773 = vpop.f32.mrf.mxu0
      %v7774 = vadd.f32 %v7549, %v7773
      %v7775 = vpop.f32.mrf.mxu0
      %7776 = vmatprep.mubr.f32.mxu0 %v6697
      %7777 = vmatmul.mubr.f32.gmra.mxu0 %v6696
      %v7778 = vpop.f32.mrf.mxu0
      %v7779 = vadd.f32 %v7554, %v7778
      %v7780 = vpop.f32.mrf.mxu0
      %7781 = vmatprep.mubr.f32.mxu0 %v6706
      %7782 = vmatmul.mubr.f32.gmra.mxu0 %v6705
      %v7783 = vpop.f32.mrf.mxu0
      %v7784 = vadd.f32 %v7559, %v7783
      %v7785 = vpop.f32.mrf.mxu0
      %7786 = vmatprep.mubr.f32.mxu0 %v6715
      %7787 = vmatmul.mubr.f32.gmra.mxu0 %v6714
      %v7788 = vpop.f32.mrf.mxu0
      %v7789 = vadd.f32 %v7564, %v7788
      %v7790 = vpop.f32.mrf.mxu0
      %7791 = vmatprep.mubr.f32.mxu0 %v6724
      %7792 = vmatmul.mubr.f32.gmra.mxu0 %v6723
      %v7793 = vpop.f32.mrf.mxu0
      %v7794 = vadd.f32 %v7569, %v7793
      %v7795 = vpop.f32.mrf.mxu0
      %7796 = vmatprep.mubr.f32.mxu0 %v6733
      %7797 = vmatmul.mubr.f32.gmra.mxu0 %v6732
      %v7798 = vpop.f32.mrf.mxu0
      %v7799 = vadd.f32 %v7574, %v7798
      %v7800 = vpop.f32.mrf.mxu0
      %7801 = vmatprep.mubr.f32.mxu0 %v6742
      %7802 = vmatmul.mubr.f32.gmra.mxu0 %v6741
      %v7803 = vpop.f32.mrf.mxu0
      %v7804 = vadd.f32 %v7579, %v7803
      %v7805 = vpop.f32.mrf.mxu0
      %7806 = vmatprep.mubr.f32.mxu0 %v6751
      %7807 = vmatmul.mubr.f32.gmra.mxu0 %v6750
      %v7808 = vpop.f32.mrf.mxu0
      %v7809 = vadd.f32 %v7584, %v7808
      %v7810 = vpop.f32.mrf.mxu0
      %7811 = vmatprep.mubr.f32.mxu0 %v6760
      %7812 = vmatmul.mubr.f32.gmra.mxu0 %v6759
      %v7813 = vpop.f32.mrf.mxu0
      %v7814 = vadd.f32 %v7589, %v7813
      %v7815 = vpop.f32.mrf.mxu0
      %7816 = vmatprep.mubr.f32.mxu0 %v6769
      %7817 = vmatmul.mubr.f32.gmra.mxu0 %v6768
      %v7818 = vpop.f32.mrf.mxu0
      %v7819 = vadd.f32 %v7594, %v7818
      %v7820 = vpop.f32.mrf.mxu0
      %7821 = vdwg.mxu0
      %7822 = vmatprep.subr.mxu0 0.0
      %7823 = vmatpush1.msra.mxu0 %v6914
      %7824 = vmatprep.subr.mxu0 0.0
      %7825 = vmatpush1.msra.mxu0 %v6913
      %7826 = vmatprep.subr.mxu0 0.0
      %7827 = vmatpush1.msra.mxu0 %v6912
      %7828 = vmatprep.subr.mxu0 0.0
      %7829 = vmatpush1.msra.mxu0 %v6911
      %7830 = vmatprep.subr.mxu0 0.0
      %7831 = vmatpush1.msra.mxu0 %v6910
      %7832 = vmatprep.subr.mxu0 0.0
      %7833 = vmatpush1.msra.mxu0 %v6909
      %7834 = vmatprep.subr.mxu0 0.0
      %7835 = vmatpush1.msra.mxu0 %v6908
      %7836 = vmatprep.subr.mxu0 0.0
      %7837 = vmatpush1.msra.mxu0 %v6907
      %7838 = vmatprep.subr.mxu0 0.0
      %7839 = vmatpush1.msra.mxu0 %v6906
      %7840 = vmatprep.subr.mxu0 0.0
      %7841 = vmatpush1.msra.mxu0 %v6905
      %7842 = vmatprep.subr.mxu0 0.0
      %7843 = vmatpush1.msra.mxu0 %v6904
      %7844 = vmatprep.subr.mxu0 0.0
      %7845 = vmatpush1.msra.mxu0 %v6903
      %7846 = vmatprep.subr.mxu0 0.0
      %7847 = vmatpush1.msra.mxu0 %v6902
      %7848 = vmatprep.subr.mxu0 0.0
      %7849 = vmatpush1.msra.mxu0 %v6901
      %7850 = vmatprep.subr.mxu0 0.0
      %7851 = vmatpush1.msra.mxu0 %v6900
      %7852 = vmatprep.subr.mxu0 0.0
      %7853 = vmatpush1.msra.mxu0 %v6899
      %7854 = vmatprep.subr.mxu0 0.0
      %7855 = vmatpush2.msra.mxu0 0.0
      %7856 = vmatprep.subr.mxu0 0.0
      %7857 = vmatpush2.msra.mxu0 0.0
      %7858 = vmatprep.subr.mxu0 0.0
      %7859 = vmatpush2.msra.mxu0 0.0
      %7860 = vmatprep.subr.mxu0 0.0
      %7861 = vmatpush2.msra.mxu0 0.0
      %7862 = vmatprep.subr.mxu0 0.0
      %7863 = vmatpush2.msra.mxu0 0.0
      %7864 = vmatprep.subr.mxu0 0.0
      %7865 = vmatpush2.msra.mxu0 0.0
      %7866 = vmatprep.subr.mxu0 0.0
      %7867 = vmatpush2.msra.mxu0 0.0
      %7868 = vmatprep.subr.mxu0 0.0
      %7869 = vmatpush2.msra.mxu0 0.0
      %7870 = vmatprep.subr.mxu0 0.0
      %7871 = vmatpush2.msra.mxu0 0.0
      %7872 = vmatprep.subr.mxu0 0.0
      %7873 = vmatpush2.msra.mxu0 0.0
      %7874 = vmatprep.subr.mxu0 0.0
      %7875 = vmatpush2.msra.mxu0 0.0
      %7876 = vmatprep.subr.mxu0 0.0
      %7877 = vmatpush2.msra.mxu0 0.0
      %7878 = vmatprep.subr.mxu0 0.0
      %7879 = vmatpush2.msra.mxu0 0.0
      %7880 = vmatprep.subr.mxu0 0.0
      %7881 = vmatpush2.msra.mxu0 0.0
      %7882 = vmatprep.subr.mxu0 0.0
      %7883 = vmatpush2.msra.mxu0 0.0
      %7884 = vmatprep.subr.mxu0 0.0
      %7885 = vmatpush2.msra.mxu0 0.0
      %7886 = vmatprep.mubr.f32.mxu0 0.0
      %7887 = vmatmul.mubr.f32.gmra.mxu0 %v6491
      %v7888 = vpop.f32.mrf.mxu0
      %v7889 = vadd.f32 %v7664, %v7888
      %v7890 = vpop.f32.mrf.mxu0
      %7891 = vmatprep.mubr.f32.mxu0 0.0
      %7892 = vmatmul.mubr.f32.gmra.mxu0 %v6500
      %v7893 = vpop.f32.mrf.mxu0
      %v7894 = vadd.f32 %v7669, %v7893
      %v7895 = vpop.f32.mrf.mxu0
      %7896 = vmatprep.mubr.f32.mxu0 0.0
      %7897 = vmatmul.mubr.f32.gmra.mxu0 %v6509
      %v7898 = vpop.f32.mrf.mxu0
      %v7899 = vadd.f32 %v7674, %v7898
      %v7900 = vpop.f32.mrf.mxu0
      %7901 = vmatprep.mubr.f32.mxu0 0.0
      %7902 = vmatmul.mubr.f32.gmra.mxu0 %v6518
      %v7903 = vpop.f32.mrf.mxu0
      %v7904 = vadd.f32 %v7679, %v7903
      %v7905 = vpop.f32.mrf.mxu0
      %7906 = vmatprep.mubr.f32.mxu0 0.0
      %7907 = vmatmul.mubr.f32.gmra.mxu0 %v6527
      %v7908 = vpop.f32.mrf.mxu0
      %v7909 = vadd.f32 %v7684, %v7908
      %v7910 = vpop.f32.mrf.mxu0
      %7911 = vmatprep.mubr.f32.mxu0 0.0
      %7912 = vmatmul.mubr.f32.gmra.mxu0 %v6536
      %v7913 = vpop.f32.mrf.mxu0
      %v7914 = vadd.f32 %v7689, %v7913
      %v7915 = vpop.f32.mrf.mxu0
      %7916 = vmatprep.mubr.f32.mxu0 0.0
      %7917 = vmatmul.mubr.f32.gmra.mxu0 %v6545
      %v7918 = vpop.f32.mrf.mxu0
      %v7919 = vadd.f32 %v7694, %v7918
      %v7920 = vpop.f32.mrf.mxu0
      %7921 = vmatprep.mubr.f32.mxu0 0.0
      %7922 = vmatmul.mubr.f32.gmra.mxu0 %v6554
      %v7923 = vpop.f32.mrf.mxu0
      %v7924 = vadd.f32 %v7699, %v7923
      %v7925 = vpop.f32.mrf.mxu0
      %7926 = vmatprep.mubr.f32.mxu0 0.0
      %7927 = vmatmul.mubr.f32.gmra.mxu0 %v6563
      %v7928 = vpop.f32.mrf.mxu0
      %v7929 = vadd.f32 %v7704, %v7928
      %v7930 = vpop.f32.mrf.mxu0
      %7931 = vmatprep.mubr.f32.mxu0 0.0
      %7932 = vmatmul.mubr.f32.gmra.mxu0 %v6572
      %v7933 = vpop.f32.mrf.mxu0
      %v7934 = vadd.f32 %v7709, %v7933
      %v7935 = vpop.f32.mrf.mxu0
      %7936 = vmatprep.mubr.f32.mxu0 0.0
      %7937 = vmatmul.mubr.f32.gmra.mxu0 %v6581
      %v7938 = vpop.f32.mrf.mxu0
      %v7939 = vadd.f32 %v7714, %v7938
      %v7940 = vpop.f32.mrf.mxu0
      %7941 = vmatprep.mubr.f32.mxu0 0.0
      %7942 = vmatmul.mubr.f32.gmra.mxu0 %v6590
      %v7943 = vpop.f32.mrf.mxu0
      %v7944 = vadd.f32 %v7719, %v7943
      %v7945 = vpop.f32.mrf.mxu0
      %7946 = vmatprep.mubr.f32.mxu0 0.0
      %7947 = vmatmul.mubr.f32.gmra.mxu0 %v6599
      %v7948 = vpop.f32.mrf.mxu0
      %v7949 = vadd.f32 %v7724, %v7948
      %v7950 = vpop.f32.mrf.mxu0
      %7951 = vmatprep.mubr.f32.mxu0 0.0
      %7952 = vmatmul.mubr.f32.gmra.mxu0 %v6608
      %v7953 = vpop.f32.mrf.mxu0
      %v7954 = vadd.f32 %v7729, %v7953
      %v7955 = vpop.f32.mrf.mxu0
      %7956 = vmatprep.mubr.f32.mxu0 0.0
      %7957 = vmatmul.mubr.f32.gmra.mxu0 %v6617
      %v7958 = vpop.f32.mrf.mxu0
      %v7959 = vadd.f32 %v7734, %v7958
      %v7960 = vpop.f32.mrf.mxu0
      %7961 = vmatprep.mubr.f32.mxu0 0.0
      %7962 = vmatmul.mubr.f32.gmra.mxu0 %v6626
      %v7963 = vpop.f32.mrf.mxu0
      %v7964 = vadd.f32 %v7739, %v7963
      %v7965 = vpop.f32.mrf.mxu0
      %7966 = vmatprep.mubr.f32.mxu0 0.0
      %7967 = vmatmul.mubr.f32.gmra.mxu0 %v6635
      %v7968 = vpop.f32.mrf.mxu0
      %v7969 = vadd.f32 %v7744, %v7968
      %v7970 = vpop.f32.mrf.mxu0
      %7971 = vmatprep.mubr.f32.mxu0 0.0
      %7972 = vmatmul.mubr.f32.gmra.mxu0 %v6644
      %v7973 = vpop.f32.mrf.mxu0
      %v7974 = vadd.f32 %v7749, %v7973
      %v7975 = vpop.f32.mrf.mxu0
      %7976 = vmatprep.mubr.f32.mxu0 0.0
      %7977 = vmatmul.mubr.f32.gmra.mxu0 %v6653
      %v7978 = vpop.f32.mrf.mxu0
      %v7979 = vadd.f32 %v7754, %v7978
      %v7980 = vpop.f32.mrf.mxu0
      %7981 = vmatprep.mubr.f32.mxu0 0.0
      %7982 = vmatmul.mubr.f32.gmra.mxu0 %v6662
      %v7983 = vpop.f32.mrf.mxu0
      %v7984 = vadd.f32 %v7759, %v7983
      %v7985 = vpop.f32.mrf.mxu0
      %7986 = vmatprep.mubr.f32.mxu0 0.0
      %7987 = vmatmul.mubr.f32.gmra.mxu0 %v6671
      %v7988 = vpop.f32.mrf.mxu0
      %v7989 = vadd.f32 %v7764, %v7988
      %v7990 = vpop.f32.mrf.mxu0
      %7991 = vmatprep.mubr.f32.mxu0 0.0
      %7992 = vmatmul.mubr.f32.gmra.mxu0 %v6680
      %v7993 = vpop.f32.mrf.mxu0
      %v7994 = vadd.f32 %v7769, %v7993
      %v7995 = vpop.f32.mrf.mxu0
      %7996 = vmatprep.mubr.f32.mxu0 0.0
      %7997 = vmatmul.mubr.f32.gmra.mxu0 %v6689
      %v7998 = vpop.f32.mrf.mxu0
      %v7999 = vadd.f32 %v7774, %v7998
      %v8000 = vpop.f32.mrf.mxu0
      %8001 = vmatprep.mubr.f32.mxu0 0.0
      %8002 = vmatmul.mubr.f32.gmra.mxu0 %v6698
      %v8003 = vpop.f32.mrf.mxu0
      %v8004 = vadd.f32 %v7779, %v8003
      %v8005 = vpop.f32.mrf.mxu0
      %8006 = vmatprep.mubr.f32.mxu0 0.0
      %8007 = vmatmul.mubr.f32.gmra.mxu0 %v6707
      %v8008 = vpop.f32.mrf.mxu0
      %v8009 = vadd.f32 %v7784, %v8008
      %v8010 = vpop.f32.mrf.mxu0
      %8011 = vmatprep.mubr.f32.mxu0 0.0
      %8012 = vmatmul.mubr.f32.gmra.mxu0 %v6716
      %v8013 = vpop.f32.mrf.mxu0
      %v8014 = vadd.f32 %v7789, %v8013
      %v8015 = vpop.f32.mrf.mxu0
      %8016 = vmatprep.mubr.f32.mxu0 0.0
      %8017 = vmatmul.mubr.f32.gmra.mxu0 %v6725
      %v8018 = vpop.f32.mrf.mxu0
      %v8019 = vadd.f32 %v7794, %v8018
      %v8020 = vpop.f32.mrf.mxu0
      %8021 = vmatprep.mubr.f32.mxu0 0.0
      %8022 = vmatmul.mubr.f32.gmra.mxu0 %v6734
      %v8023 = vpop.f32.mrf.mxu0
      %v8024 = vadd.f32 %v7799, %v8023
      %v8025 = vpop.f32.mrf.mxu0
      %8026 = vmatprep.mubr.f32.mxu0 0.0
      %8027 = vmatmul.mubr.f32.gmra.mxu0 %v6743
      %v8028 = vpop.f32.mrf.mxu0
      %v8029 = vadd.f32 %v7804, %v8028
      %v8030 = vpop.f32.mrf.mxu0
      %8031 = vmatprep.mubr.f32.mxu0 0.0
      %8032 = vmatmul.mubr.f32.gmra.mxu0 %v6752
      %v8033 = vpop.f32.mrf.mxu0
      %v8034 = vadd.f32 %v7809, %v8033
      %v8035 = vpop.f32.mrf.mxu0
      %8036 = vmatprep.mubr.f32.mxu0 0.0
      %8037 = vmatmul.mubr.f32.gmra.mxu0 %v6761
      %v8038 = vpop.f32.mrf.mxu0
      %v8039 = vadd.f32 %v7814, %v8038
      %v8040 = vpop.f32.mrf.mxu0
      %8041 = vmatprep.mubr.f32.mxu0 0.0
      %8042 = vmatmul.mubr.f32.gmra.mxu0 %v6770
      %v8043 = vpop.f32.mrf.mxu0
      %v8044 = vadd.f32 %v7819, %v8043
      %v8045 = vpop.f32.mrf.mxu0
      %8046 = vdwg.mxu0
      %v8047 = vtanh.pop %v7889
      %v8048 = vtanh.pop %v7894
      %v8049 = vtanh.pop %v7899
      %v8050 = vtanh.pop %v7904
      %v8051 = vtanh.pop %v7909
      %v8052 = vtanh.pop %v7914
      %v8053 = vtanh.pop %v7919
      %v8054 = vtanh.pop %v7924
      %v8055 = vtanh.pop %v7929
      %v8056 = vtanh.pop %v7934
      %v8057 = vtanh.pop %v7939
      %v8058 = vtanh.pop %v7944
      %v8059 = vtanh.pop %v7949
      %v8060 = vtanh.pop %v7954
      %v8061 = vtanh.pop %v7959
      %v8062 = vtanh.pop %v7964
      %v8063 = vtanh.pop %v7969
      %v8064 = vtanh.pop %v7974
      %v8065 = vtanh.pop %v7979
      %v8066 = vtanh.pop %v7984
      %v8067 = vtanh.pop %v7989
      %v8068 = vtanh.pop %v7994
      %v8069 = vtanh.pop %v7999
      %v8070 = vtanh.pop %v8004
      %v8071 = vtanh.pop %v8009
      %v8072 = vtanh.pop %v8014
      %v8073 = vtanh.pop %v8019
      %v8074 = vtanh.pop %v8024
      %v8075 = vtanh.pop %v8029
      %v8076 = vtanh.pop %v8034
      %v8077 = vtanh.pop %v8039
      %v8078 = vtanh.pop %v8044
      %8111 = vrot.lane.b32.xlu0 %v8047, 96
      %v8112 = vpop.permute.xlu0 %8111
      %8113 = vrot.lane.b32.xlu0 %v8048, 96
      %v8114 = vpop.permute.xlu0 %8113
      %8115 = vrot.lane.b32.xlu0 %v8049, 96
      %v8116 = vpop.permute.xlu0 %8115
      %8117 = vrot.lane.b32.xlu0 %v8050, 96
      %v8118 = vpop.permute.xlu0 %8117
      %8119 = vrot.lane.b32.xlu0 %v8051, 96
      %v8120 = vpop.permute.xlu0 %8119
      %8121 = vrot.lane.b32.xlu0 %v8052, 96
      %v8122 = vpop.permute.xlu0 %8121
      %8123 = vrot.lane.b32.xlu0 %v8053, 96
      %v8124 = vpop.permute.xlu0 %8123
      %8125 = vrot.lane.b32.xlu0 %v8054, 96
      %v8126 = vpop.permute.xlu0 %8125
      %8127 = vrot.lane.b32.xlu0 %v8055, 96
      %v8128 = vpop.permute.xlu0 %8127
      %8129 = vrot.lane.b32.xlu0 %v8056, 96
      %v8130 = vpop.permute.xlu0 %8129
      %8131 = vrot.lane.b32.xlu0 %v8057, 96
      %v8132 = vpop.permute.xlu0 %8131
      %8133 = vrot.lane.b32.xlu0 %v8058, 96
      %v8134 = vpop.permute.xlu0 %8133
      %8135 = vrot.lane.b32.xlu0 %v8059, 96
      %v8136 = vpop.permute.xlu0 %8135
      %8137 = vrot.lane.b32.xlu0 %v8060, 96
      %v8138 = vpop.permute.xlu0 %8137
      %8139 = vrot.lane.b32.xlu0 %v8061, 96
      %v8140 = vpop.permute.xlu0 %8139
      %8141 = vrot.lane.b32.xlu0 %v8062, 96
      %v8142 = vpop.permute.xlu0 %8141
      %8143 = vrot.lane.b32.xlu0 %v8063, 96
      %v8144 = vpop.permute.xlu0 %8143
      %8145 = vrot.lane.b32.xlu0 %v8064, 96
      %v8146 = vpop.permute.xlu0 %8145
      %8147 = vrot.lane.b32.xlu0 %v8065, 96
      %v8148 = vpop.permute.xlu0 %8147
      %8149 = vrot.lane.b32.xlu0 %v8066, 96
      %v8150 = vpop.permute.xlu0 %8149
      %8151 = vrot.lane.b32.xlu0 %v8067, 96
      %v8152 = vpop.permute.xlu0 %8151
      %8153 = vrot.lane.b32.xlu0 %v8068, 96
      %v8154 = vpop.permute.xlu0 %8153
      %8155 = vrot.lane.b32.xlu0 %v8069, 96
      %v8156 = vpop.permute.xlu0 %8155
      %8157 = vrot.lane.b32.xlu0 %v8070, 96
      %v8158 = vpop.permute.xlu0 %8157
      %8159 = vrot.lane.b32.xlu0 %v8071, 96
      %v8160 = vpop.permute.xlu0 %8159
      %8161 = vrot.lane.b32.xlu0 %v8072, 96
      %v8162 = vpop.permute.xlu0 %8161
      %8163 = vrot.lane.b32.xlu0 %v8073, 96
      %v8164 = vpop.permute.xlu0 %8163
      %8165 = vrot.lane.b32.xlu0 %v8074, 96
      %v8166 = vpop.permute.xlu0 %8165
      %8167 = vrot.lane.b32.xlu0 %v8075, 96
      %v8168 = vpop.permute.xlu0 %8167
      %8169 = vrot.lane.b32.xlu0 %v8076, 96
      %v8170 = vpop.permute.xlu0 %8169
      %8171 = vrot.lane.b32.xlu0 %v8077, 96
      %v8172 = vpop.permute.xlu0 %8171
      %8173 = vrot.lane.b32.xlu0 %v8078, 96
      %v8174 = vpop.permute.xlu0 %8173
      %v8207 = vmul.f32 %v8047, %v8112
      %v8208 = vmul.f32 %v8048, %v8114
      %v8209 = vmul.f32 %v8049, %v8116
      %v8210 = vmul.f32 %v8050, %v8118
      %v8211 = vmul.f32 %v8051, %v8120
      %v8212 = vmul.f32 %v8052, %v8122
      %v8213 = vmul.f32 %v8053, %v8124
      %v8214 = vmul.f32 %v8054, %v8126
      %v8215 = vmul.f32 %v8055, %v8128
      %v8216 = vmul.f32 %v8056, %v8130
      %v8217 = vmul.f32 %v8057, %v8132
      %v8218 = vmul.f32 %v8058, %v8134
      %v8219 = vmul.f32 %v8059, %v8136
      %v8220 = vmul.f32 %v8060, %v8138
      %v8221 = vmul.f32 %v8061, %v8140
      %v8222 = vmul.f32 %v8062, %v8142
      %v8223 = vmul.f32 %v8063, %v8144
      %v8224 = vmul.f32 %v8064, %v8146
      %v8225 = vmul.f32 %v8065, %v8148
      %v8226 = vmul.f32 %v8066, %v8150
      %v8227 = vmul.f32 %v8067, %v8152
      %v8228 = vmul.f32 %v8068, %v8154
      %v8229 = vmul.f32 %v8069, %v8156
      %v8230 = vmul.f32 %v8070, %v8158
      %v8231 = vmul.f32 %v8071, %v8160
      %v8232 = vmul.f32 %v8072, %v8162
      %v8233 = vmul.f32 %v8073, %v8164
      %v8234 = vmul.f32 %v8074, %v8166
      %v8235 = vmul.f32 %v8075, %v8168
      %v8236 = vmul.f32 %v8076, %v8170
      %v8237 = vmul.f32 %v8077, %v8172
      %v8238 = vmul.f32 %v8078, %v8174
      %8271 = vrot.lane.b32.xlu0 %v5842, 32
      %v8272 = vpop.permute.xlu0 %8271
      %8273 = vrot.lane.b32.xlu0 %v5843, 32
      %v8274 = vpop.permute.xlu0 %8273
      %8275 = vrot.lane.b32.xlu0 %v5844, 32
      %v8276 = vpop.permute.xlu0 %8275
      %8277 = vrot.lane.b32.xlu0 %v5845, 32
      %v8278 = vpop.permute.xlu0 %8277
      %8279 = vrot.lane.b32.xlu0 %v5846, 32
      %v8280 = vpop.permute.xlu0 %8279
      %8281 = vrot.lane.b32.xlu0 %v5847, 32
      %v8282 = vpop.permute.xlu0 %8281
      %8283 = vrot.lane.b32.xlu0 %v5848, 32
      %v8284 = vpop.permute.xlu0 %8283
      %8285 = vrot.lane.b32.xlu0 %v5849, 32
      %v8286 = vpop.permute.xlu0 %8285
      %8287 = vrot.lane.b32.xlu0 %v5850, 32
      %v8288 = vpop.permute.xlu0 %8287
      %8289 = vrot.lane.b32.xlu0 %v5851, 32
      %v8290 = vpop.permute.xlu0 %8289
      %8291 = vrot.lane.b32.xlu0 %v5852, 32
      %v8292 = vpop.permute.xlu0 %8291
      %8293 = vrot.lane.b32.xlu0 %v5853, 32
      %v8294 = vpop.permute.xlu0 %8293
      %8295 = vrot.lane.b32.xlu0 %v5854, 32
      %v8296 = vpop.permute.xlu0 %8295
      %8297 = vrot.lane.b32.xlu0 %v5855, 32
      %v8298 = vpop.permute.xlu0 %8297
      %8299 = vrot.lane.b32.xlu0 %v5856, 32
      %v8300 = vpop.permute.xlu0 %8299
      %8301 = vrot.lane.b32.xlu0 %v5857, 32
      %v8302 = vpop.permute.xlu0 %8301
      %8303 = vrot.lane.b32.xlu0 %v5858, 32
      %v8304 = vpop.permute.xlu0 %8303
      %8305 = vrot.lane.b32.xlu0 %v5859, 32
      %v8306 = vpop.permute.xlu0 %8305
      %8307 = vrot.lane.b32.xlu0 %v5860, 32
      %v8308 = vpop.permute.xlu0 %8307
      %8309 = vrot.lane.b32.xlu0 %v5861, 32
      %v8310 = vpop.permute.xlu0 %8309
      %8311 = vrot.lane.b32.xlu0 %v5862, 32
      %v8312 = vpop.permute.xlu0 %8311
      %8313 = vrot.lane.b32.xlu0 %v5863, 32
      %v8314 = vpop.permute.xlu0 %8313
      %8315 = vrot.lane.b32.xlu0 %v5864, 32
      %v8316 = vpop.permute.xlu0 %8315
      %8317 = vrot.lane.b32.xlu0 %v5865, 32
      %v8318 = vpop.permute.xlu0 %8317
      %8319 = vrot.lane.b32.xlu0 %v5866, 32
      %v8320 = vpop.permute.xlu0 %8319
      %8321 = vrot.lane.b32.xlu0 %v5867, 32
      %v8322 = vpop.permute.xlu0 %8321
      %8323 = vrot.lane.b32.xlu0 %v5868, 32
      %v8324 = vpop.permute.xlu0 %8323
      %8325 = vrot.lane.b32.xlu0 %v5869, 32
      %v8326 = vpop.permute.xlu0 %8325
      %8327 = vrot.lane.b32.xlu0 %v5870, 32
      %v8328 = vpop.permute.xlu0 %8327
      %8329 = vrot.lane.b32.xlu0 %v5871, 32
      %v8330 = vpop.permute.xlu0 %8329
      %8331 = vrot.lane.b32.xlu0 %v5872, 32
      %v8332 = vpop.permute.xlu0 %8331
      %8333 = vrot.lane.b32.xlu0 %v5873, 32
      %v8334 = vpop.permute.xlu0 %8333
      %v8367 = vsel %vm3221, %v8207, %v3061
      %v8368 = vsel %vm3221, %v8208, %v3062
      %v8369 = vsel %vm3221, %v8209, %v3063
      %v8370 = vsel %vm3221, %v8210, %v3064
      %v8371 = vsel %vm3221, %v8211, %v3065
      %v8372 = vsel %vm3221, %v8212, %v3066
      %v8373 = vsel %vm3221, %v8213, %v3067
      %v8374 = vsel %vm3221, %v8214, %v3068
      %v8375 = vsel %vm3221, %v8215, %v3069
      %v8376 = vsel %vm3221, %v8216, %v3070
      %v8377 = vsel %vm3221, %v8217, %v3071
      %v8378 = vsel %vm3221, %v8218, %v3072
      %v8379 = vsel %vm3221, %v8219, %v3073
      %v8380 = vsel %vm3221, %v8220, %v3074
      %v8381 = vsel %vm3221, %v8221, %v3075
      %v8382 = vsel %vm3221, %v8222, %v3076
      %v8383 = vsel %vm3221, %v8223, %v3077
      %v8384 = vsel %vm3221, %v8224, %v3078
      %v8385 = vsel %vm3221, %v8225, %v3079
      %v8386 = vsel %vm3221, %v8226, %v3080
      %v8387 = vsel %vm3221, %v8227, %v3081
      %v8388 = vsel %vm3221, %v8228, %v3082
      %v8389 = vsel %vm3221, %v8229, %v3083
      %v8390 = vsel %vm3221, %v8230, %v3084
      %v8391 = vsel %vm3221, %v8231, %v3085
      %v8392 = vsel %vm3221, %v8232, %v3086
      %v8393 = vsel %vm3221, %v8233, %v3087
      %v8394 = vsel %vm3221, %v8234, %v3088
      %v8395 = vsel %vm3221, %v8235, %v3089
      %v8396 = vsel %vm3221, %v8236, %v3090
      %v8397 = vsel %vm3221, %v8237, %v3091
      %v8398 = vsel %vm3221, %v8238, %v3092
      %vm8399 = vcmask 523264
      %v8400 = vsel %vm8399, %v8367, %v8272
      %v8401 = vsel %vm8399, %v8368, %v8274
      %v8402 = vsel %vm8399, %v8369, %v8276
      %v8403 = vsel %vm8399, %v8370, %v8278
      %v8404 = vsel %vm8399, %v8371, %v8280
      %v8405 = vsel %vm8399, %v8372, %v8282
      %v8406 = vsel %vm8399, %v8373, %v8284
      %v8407 = vsel %vm8399, %v8374, %v8286
      %v8408 = vsel %vm8399, %v8375, %v8288
      %v8409 = vsel %vm8399, %v8376, %v8290
      %v8410 = vsel %vm8399, %v8377, %v8292
      %v8411 = vsel %vm8399, %v8378, %v8294
      %v8412 = vsel %vm8399, %v8379, %v8296
      %v8413 = vsel %vm8399, %v8380, %v8298
      %v8414 = vsel %vm8399, %v8381, %v8300
      %v8415 = vsel %vm8399, %v8382, %v8302
      %v8416 = vsel %vm8399, %v8383, %v8304
      %v8417 = vsel %vm8399, %v8384, %v8306
      %v8418 = vsel %vm8399, %v8385, %v8308
      %v8419 = vsel %vm8399, %v8386, %v8310
      %v8420 = vsel %vm8399, %v8387, %v8312
      %v8421 = vsel %vm8399, %v8388, %v8314
      %v8422 = vsel %vm8399, %v8389, %v8316
      %v8423 = vsel %vm8399, %v8390, %v8318
      %v8424 = vsel %vm8399, %v8391, %v8320
      %v8425 = vsel %vm8399, %v8392, %v8322
      %v8426 = vsel %vm8399, %v8393, %v8324
      %v8427 = vsel %vm8399, %v8394, %v8326
      %v8428 = vsel %vm8399, %v8395, %v8328
      %v8429 = vsel %vm8399, %v8396, %v8330
      %v8430 = vsel %vm8399, %v8397, %v8332
      %v8431 = vsel %vm8399, %v8398, %v8334
      %vm8432 = vcmask 785408
      %8433 = vst.msk [vmem:[%s278] sm:$0xff] %vm8432, %v8400
      %8434 = vst.msk [vmem:[%s278 + $0x8] sm:$0xff] %vm8432, %v8401
      %8435 = vst.msk [vmem:[%s278 + $0x10] sm:$0xff] %vm8432, %v8402
      %8436 = vst.msk [vmem:[%s278 + $0x18] sm:$0xff] %vm8432, %v8403
      %8437 = vst.msk [vmem:[%s278 + $0x20] sm:$0xff] %vm8432, %v8404
      %8438 = vst.msk [vmem:[%s278 + $0x28] sm:$0xff] %vm8432, %v8405
      %8439 = vst.msk [vmem:[%s278 + $0x30] sm:$0xff] %vm8432, %v8406
      %8440 = vst.msk [vmem:[%s278 + $0x38] sm:$0xff] %vm8432, %v8407
      %8441 = vst.msk [vmem:[%s278 + $0x40] sm:$0xff] %vm8432, %v8408
      %8442 = vst.msk [vmem:[%s278 + $0x48] sm:$0xff] %vm8432, %v8409
      %8443 = vst.msk [vmem:[%s278 + $0x50] sm:$0xff] %vm8432, %v8410
      %8444 = vst.msk [vmem:[%s278 + $0x58] sm:$0xff] %vm8432, %v8411
      %8445 = vst.msk [vmem:[%s278 + $0x60] sm:$0xff] %vm8432, %v8412
      %8446 = vst.msk [vmem:[%s278 + $0x68] sm:$0xff] %vm8432, %v8413
      %8447 = vst.msk [vmem:[%s278 + $0x70] sm:$0xff] %vm8432, %v8414
      %8448 = vst.msk [vmem:[%s278 + $0x78] sm:$0xff] %vm8432, %v8415
      %8449 = vst.msk [vmem:[%s278 + $0x80] sm:$0xff] %vm8432, %v8416
      %8450 = vst.msk [vmem:[%s278 + $0x88] sm:$0xff] %vm8432, %v8417
      %8451 = vst.msk [vmem:[%s278 + $0x90] sm:$0xff] %vm8432, %v8418
      %8452 = vst.msk [vmem:[%s278 + $0x98] sm:$0xff] %vm8432, %v8419
      %8453 = vst.msk [vmem:[%s278 + $0xa0] sm:$0xff] %vm8432, %v8420
      %8454 = vst.msk [vmem:[%s278 + $0xa8] sm:$0xff] %vm8432, %v8421
      %8455 = vst.msk [vmem:[%s278 + $0xb0] sm:$0xff] %vm8432, %v8422
      %8456 = vst.msk [vmem:[%s278 + $0xb8] sm:$0xff] %vm8432, %v8423
      %8457 = vst.msk [vmem:[%s278 + $0xc0] sm:$0xff] %vm8432, %v8424
      %8458 = vst.msk [vmem:[%s278 + $0xc8] sm:$0xff] %vm8432, %v8425
      %8459 = vst.msk [vmem:[%s278 + $0xd0] sm:$0xff] %vm8432, %v8426
      %8460 = vst.msk [vmem:[%s278 + $0xd8] sm:$0xff] %vm8432, %v8427
      %8461 = vst.msk [vmem:[%s278 + $0xe0] sm:$0xff] %vm8432, %v8428
      %8462 = vst.msk [vmem:[%s278 + $0xe8] sm:$0xff] %vm8432, %v8429
      %8463 = vst.msk [vmem:[%s278 + $0xf0] sm:$0xff] %vm8432, %v8430
      %8464 = vst.msk [vmem:[%s278 + $0xf8] sm:$0xff] %vm8432, %v8431
      %p8465 = scmp.lt.s32.totalorder %s18, 1
      %s8466 = scalar_select %p8465, %s18, 1
      %s8467 = smul.addr %s8466, 32
      %s8468 = smul.addr %s8467, 8
      %s8469 = scalar_lea.vmem %s7, %s8468
      // Predicated region
      $region49: #{tpu_custom_call.1} parent=47 // pred_check
        %p8470 = pneg %p188
      $region50: #{tpu_custom_call.1} parent=47 // pred_check_branch
        %8472 = sbr.rel (%p8470) target = $region52
      $region51: #{tpu_custom_call.1} parent=47 // pred_region
        _
      $region52: #{tpu_custom_call.1} parent=47 // pred_fallthru
        _
    $region48: #{tpu_custom_call.1} parent=5 // pred_fallthru
      _
    %p8473 = scmp.le.s32.totalorder 2, %s13
    // Predicated region
    $region53: #{tpu_custom_call.1} parent=5 // pred_check
      %p8474 = pneg %p8473
    $region54: #{tpu_custom_call.1} parent=5 // pred_check_branch
      %8476 = sbr.rel (%p8474) target = $region56
    $region55: #{tpu_custom_call.1} parent=5 // pred_region
      %s8477 = ssub.s32 %s13, 2
      // Predicated region
      $region57: #{tpu_custom_call.1} parent=55 // pred_check
        %p8478 = pneg %p194
      $region58: #{tpu_custom_call.1} parent=55 // pred_check_branch
        %8480 = sbr.rel (%p8478) target = $region60
      $region59: #{tpu_custom_call.1} parent=55 // pred_region
        %p8481 = scmp.lt.s32.totalorder %s19, 1
        %s8482 = scalar_select %p8481, %s19, 1
        %s8483 = smul.addr %s8482, 32
        %s8484 = smul.addr %s8483, 8
        %s8485 = scalar_lea.vmem %s7, %s8484
      $region60: #{tpu_custom_call.1} parent=55 // pred_fallthru
        _
    $region56: #{tpu_custom_call.1} parent=5 // pred_fallthru
      _
  $region6: #{tpu_custom_call.1} parent=0 // loop_footer
    %s17 = sadd.s32 1, %s13
  $region7: #{tpu_custom_call.1} parent=0 // loop_footer_branch
    %12 = sbr.rel target = $region3
  $region8: #{tpu_custom_call.1} parent=0 // loop_exit
    _

</llo_original>
